<compile_context>
chip_gen: v5e
topology: v5e:2x2
jax: 0.10.0
libtpu: 0.0.40
codegen_flags: <defaults>
</compile_context>

<pallas_src>
import functools

import numpy as np
import jax
import jax.numpy as jnp
from jax import lax
from jax.experimental import pallas as pl
from jax.experimental.pallas import tpu as pltpu

IN_CH = 3
CH = 16
ATTN_CH = 2 * CH          # 32
IMSIZE = 16
FEAT_K = 4
N_CLASSES = 10
CIN_PAD = 8               # conv0 input channels padded 3 -> 8 (sublane-aligned K)

_VMEM = pl.BlockSpec(memory_space=pltpu.MemorySpace.VMEM)


# ------------------- trace-time (numpy) pool / scatter matrices ----------------
# Flat-padded indexing convention for a layer with input spatial H x W:
#   padded row rp(b, yp, xp) = (b*(H+2) + yp)*(W+2) + xp ,  yp,xp in [0, H+2)
# A conv output row r encodes (b, y, x) with the SAME formula (y, x in [0, H));
# tap (dy, dx) then reads padded row r + dy*(W+2) + dx, so each tap is a single
# contiguous static slice.  Rows whose decoded (y, x) land in the padding are
# garbage and carry zero weight in every downstream pool / sum matrix.
def _conv_span(bsz, h, w):
    return bsz * (h + 2) * (w + 2) - 2 * (w + 2) - 2


def _pool_to_padded(bsz, h, w):
    """2x2 avg-pool of the flat conv output, scattered into the NEXT layer's
    zero-padded flat grid (padding rows come out as exact zeros)."""
    ho, wo = h // 2, w // 2
    hp, wp = h + 2, w + 2
    hop, wop = ho + 2, wo + 2
    span = _conv_span(bsz, h, w)
    m = np.zeros((bsz * hop * wop, span), np.float32)
    for b in range(bsz):
        for yo in range(ho):
            for xo in range(wo):
                r1 = (b * hop + yo + 1) * wop + xo + 1
                for ry in range(2):
                    for rx in range(2):
                        m[r1, (b * hp + 2 * yo + ry) * wp + 2 * xo + rx] = 0.25
    return m


def _pool_to_rows(bsz, h, w):
    """2x2 avg-pool of the flat conv output into clean row-major (b, y, x) rows
    (the layout the self-attention block consumes)."""
    ho, wo = h // 2, w // 2
    hp, wp = h + 2, w + 2
    span = _conv_span(bsz, h, w)
    m = np.zeros((bsz * ho * wo, span), np.float32)
    for b in range(bsz):
        for yo in range(ho):
            for xo in range(wo):
                r1 = (b * ho + yo) * wo + xo
                for ry in range(2):
                    for rx in range(2):
                        m[r1, (b * hp + 2 * yo + ry) * wp + 2 * xo + rx] = 0.25
    return m


def _rows_to_padded(bsz, h, w):
    """Scatter clean (b, y, x) rows into a zero-padded flat grid."""
    hp, wp = h + 2, w + 2
    m = np.zeros((bsz * hp * wp, bsz * h * w), np.float32)
    for b in range(bsz):
        for y in range(h):
            for x in range(w):
                m[(b * hp + y + 1) * wp + x + 1, (b * h + y) * w + x] = 1.0
    return m


def _spatial_sum(bsz, h, w):
    """Per-batch sum over the valid spatial rows of the flat conv output."""
    hp, wp = h + 2, w + 2
    span = _conv_span(bsz, h, w)
    m = np.zeros((bsz, span), np.float32)
    for b in range(bsz):
        for y in range(h):
            for x in range(w):
                m[b, (b * hp + y) * wp + x] = 1.0
    return m


# ------------------------------ fused Pallas kernel ----------------------------
def _fused_disc_kernel(x0_ref, w0_ref, b0_ref, w1_ref, b1_ref, w2_ref, b2_ref,
                       wqkv_ref, bqkv_ref, gamma_ref, wlin_ref, blin_ref, wy_ref,
                       pool0_ref, pool1_ref, scat2_ref, ssum_ref, out_ref, *, bsz):
    f32 = jnp.float32

    def conv3x3(pad_flat, w, bias, h, w_sp, cin, relu):
        # pad_flat: (bsz*(h+2)*(w_sp+2), cin) zero-padded flat activation value.
        # 9 taps = 9 static row-slices + 9 small MXU dots, accumulated in f32.
        wp = w_sp + 2
        span = bsz * (h + 2) * wp - 2 * wp - 2
        acc = None
        for dy in range(3):
            for dx in range(3):
                off = dy * wp + dx
                tap = pad_flat[off:off + span, :]                      # (span, cin)
                wt = w[(dy * 3 + dx) * cin:(dy * 3 + dx + 1) * cin, :]
                d = jnp.dot(tap, wt, preferred_element_type=f32)
                acc = d if acc is None else acc + d
        acc = acc + bias
        if relu:
            acc = jnp.maximum(acc, 0.0)
        return acc

    hw = FEAT_K * FEAT_K          # 16 attention positions per image
    cqk = ATTN_CH // 8            # 4

    # ---- block 0: conv3x3(3->16) + ReLU, fused 2x2 avg-pool (-> padded grid) ----
    h0 = conv3x3(x0_ref[...], w0_ref[...], b0_ref[...],
                 IMSIZE, IMSIZE, CIN_PAD, True)                        # (610, 16)
    pad1 = jnp.dot(pool0_ref[...], h0, preferred_element_type=f32)     # (200, 16)

    # ---- block 1: conv3x3(16->32) + ReLU, fused 2x2 avg-pool (-> clean rows) ----
    h1 = conv3x3(pad1, w1_ref[...], b1_ref[...],
                 IMSIZE // 2, IMSIZE // 2, CH, True)                   # (178, 32)
    xa = jnp.dot(pool1_ref[...], h1, preferred_element_type=f32)       # (bsz*16, 32)

    # ---- self-attention: fused q/k/v 1x1 conv, softmax, gamma-residual ----
    qkv = jnp.dot(xa, wqkv_ref[...], preferred_element_type=f32) + bqkv_ref[...]
    gamma = gamma_ref[...]                                             # (1, 1)
    scat2 = scat2_ref[...]                                             # (72, bsz*16)
    pad2 = None
    for b in range(bsz):                                               # unrolled (B=2)
        rows = slice(b * hw, (b + 1) * hw)
        q = qkv[rows, 0:cqk]
        k = qkv[rows, cqk:2 * cqk]
        v = qkv[rows, 2 * cqk:2 * cqk + ATTN_CH]
        energy = lax.dot_general(q, k, (((1,), (1,)), ((), ())),
                                 preferred_element_type=f32)           # (hw, hw)
        energy = energy - jnp.max(energy, axis=-1, keepdims=True)
        p = jnp.exp(energy)
        attn = p * pl.reciprocal(jnp.sum(p, axis=-1, keepdims=True), approx=True)
        ob = gamma * jnp.dot(attn, v, preferred_element_type=f32) + xa[rows, :]
        contrib = jnp.dot(scat2[:, rows], ob, preferred_element_type=f32)
        pad2 = contrib if pad2 is None else pad2 + contrib             # (72, 32)

    # ---- block 2: conv3x3(32->64), no in-block ReLU ----
    h2 = conv3x3(pad2, w2_ref[...], b2_ref[...], FEAT_K, FEAT_K, ATTN_CH, False)

    # ---- head: F.relu, spatial sum, linear + class projection (pure VPU form) ----
    pooled = jnp.dot(ssum_ref[...], jnp.maximum(h2, 0.0),
                     preferred_element_type=f32)                       # (bsz, 64)
    w_eff = wlin_ref[...] + wy_ref[...]                                # (bsz, 64)
    out_ref[...] = jnp.sum(pooled * w_eff, axis=1, keepdims=True) + blin_ref[...]


# ---------------------------------- wrapper ------------------------------------
def discriminator_forward(params, x_nchw, y=None):
    bsz = x_nchw.shape[0]
    blocks = params["blocks"]
    assert len(blocks) == 3 and x_nchw.shape[1:] == (IN_CH, IMSIZE, IMSIZE)

    # TODO(synk): input layout prep (NCHW->NHWC transpose, zero-pad to the flat
    # padded grid), weight packing and the class-embedding gather stay as tiny
    # one-shot XLA ops on <20 KiB tensors; everything activation-sized runs in
    # the single fused Pallas kernel below.
    x = jnp.transpose(x_nchw, (0, 2, 3, 1)).astype(jnp.float32)        # NHWC
    xpad = jnp.pad(x, ((0, 0), (1, 1), (1, 1), (0, CIN_PAD - IN_CH)))  # (B,18,18,8)
    x0 = xpad.reshape(bsz * (IMSIZE + 2) * (IMSIZE + 2), CIN_PAD)

    w0 = jnp.pad(blocks[0]["w"], ((0, 0), (0, 0), (0, CIN_PAD - IN_CH), (0, 0)))
    w0 = w0.reshape(9 * CIN_PAD, CH)
    b0 = blocks[0]["b"].reshape(1, CH)
    w1 = blocks[1]["w"].reshape(9 * CH, 2 * CH)
    b1 = blocks[1]["b"].reshape(1, 2 * CH)
    w2 = blocks[2]["w"].reshape(9 * 2 * CH, 4 * CH)
    b2 = blocks[2]["b"].reshape(1, 4 * CH)

    a = params["attn"]
    wqkv = jnp.concatenate([a["wq"], a["wk"], a["wv"]], axis=1)        # (32, 40)
    bqkv = jnp.concatenate([a["bq"], a["bk"], a["bv"]]).reshape(1, -1)
    gamma = a["gamma"].reshape(1, 1)

    wlin = params["w_lin"].reshape(1, 4 * CH)
    blin = params["b_lin"].reshape(1, 1)
    if y is not None:
        wy = params["embed"][y]                                        # (B, 64)
    else:
        wy = jnp.zeros((bsz, 4 * CH), jnp.float32)

    # Constant pool / scatter / sum matrices (built with numpy at trace time).
    pool0 = jnp.asarray(_pool_to_padded(bsz, IMSIZE, IMSIZE))          # (B*100, 610)
    pool1 = jnp.asarray(_pool_to_rows(bsz, IMSIZE // 2, IMSIZE // 2))  # (B*16, 178)
    scat2 = jnp.asarray(_rows_to_padded(bsz, FEAT_K, FEAT_K))          # (B*36, B*16)
    ssum = jnp.asarray(_spatial_sum(bsz, FEAT_K, FEAT_K))              # (B, 58)

    kernel = functools.partial(_fused_disc_kernel, bsz=bsz)
    return pl.pallas_call(
        kernel,
        out_shape=jax.ShapeDtypeStruct((bsz, 1), jnp.float32),
        in_specs=[_VMEM] * 17,
        out_specs=_VMEM,
    )(x0, w0, b0, w1, b1, w2, b2, wqkv, bqkv, gamma, wlin, blin, wy,
      pool0, pool1, scat2, ssum)


# --------------------------- pure-JAX reference --------------------------------
def im2col_3x3(x_nhwc):   # reference-only helper
    b, h, w, c = x_nhwc.shape
    xp = jnp.pad(x_nhwc, ((0, 0), (1, 1), (1, 1), (0, 0)))
    cols = [xp[:, dy:dy + h, dx:dx + w, :] for dy in range(3) for dx in range(3)]
    return jnp.concatenate(cols, axis=-1).reshape(b * h * w, 9 * c)


def avg_pool_2x2(x_nhwc):  # reference-only helper
    b, h, w, c = x_nhwc.shape
    return x_nhwc.reshape(b, h // 2, 2, w // 2, 2, c).mean(axis=(2, 4))


def forward_reference(params, x_nchw, y):
    h = jnp.transpose(x_nchw, (0, 2, 3, 1)).astype(jnp.float32)
    n_down = int(np.log2(IMSIZE) - np.log2(FEAT_K))
    blocks = params["blocks"]

    def conv_ref(x, w, bias, relu):
        b, hh, ww, cin = x.shape
        cout = w.shape[-1]
        out = im2col_3x3(x) @ w.reshape(9 * cin, cout) + bias
        if relu:
            out = jnp.maximum(out, 0.0)
        return out.reshape(b, hh, ww, cout)

    for i in range(n_down):
        h = avg_pool_2x2(conv_ref(h, blocks[i]["w"], blocks[i]["b"], True))
    p = params["attn"]
    b, hh, ww, c = h.shape
    xf = h.reshape(b, hh * ww, c)
    q = xf @ p["wq"] + p["bq"]
    k = xf @ p["wk"] + p["bk"]
    v = xf @ p["wv"] + p["bv"]
    attn = jax.nn.softmax(jnp.einsum("bqc,bkc->bqk", q, k), axis=-1)
    h = (p["gamma"] * jnp.einsum("bqk,bkc->bqc", attn, v) + xf).reshape(b, hh, ww, c)
    for i in range(n_down, len(blocks)):
        h = conv_ref(h, blocks[i]["w"], blocks[i]["b"], False)
    h = jnp.maximum(h, 0.0)
    pooled = h.sum(axis=(1, 2))
    out = pooled @ params["w_lin"] + params["b_lin"]
    w_y = params["embed"][y]
    return out + jnp.sum(w_y * pooled, axis=1, keepdims=True)


# ------------------------------ parameters -------------------------------------
def init_params(key):
    keys = jax.random.split(key, 16)
    scale = 0.1

    def nrm(k, shape):
        return jax.random.normal(k, shape, jnp.float32) * scale

    blocks = [
        {"w": nrm(keys[0], (3, 3, IN_CH, CH)), "b": nrm(keys[1], (CH,))},
        {"w": nrm(keys[2], (3, 3, CH, 2 * CH)), "b": nrm(keys[3], (2 * CH,))},
        {"w": nrm(keys[4], (3, 3, 2 * CH, 4 * CH)), "b": nrm(keys[5], (4 * CH,))},
    ]
    attn = {
        "wq": nrm(keys[6], (ATTN_CH, ATTN_CH // 8)), "bq": nrm(keys[7], (ATTN_CH // 8,)),
        "wk": nrm(keys[8], (ATTN_CH, ATTN_CH // 8)), "bk": nrm(keys[9], (ATTN_CH // 8,)),
        "wv": nrm(keys[10], (ATTN_CH, ATTN_CH)), "bv": nrm(keys[11], (ATTN_CH,)),
        # PyTorch inits gamma=0; use 0.5 so the attention path is actually exercised.
        "gamma": jnp.array(0.5, jnp.float32),
    }
    return {
        "blocks": blocks,
        "attn": attn,
        "w_lin": nrm(keys[12], (4 * CH, 1)),
        "b_lin": nrm(keys[13], (1,)),
        "embed": nrm(keys[14], (N_CLASSES, 4 * CH)),
    }


if __name__ == "__main__":
    key = jax.random.PRNGKey(0)
    kx, ky, kp = jax.random.split(key, 3)
    x = jax.random.normal(kx, (2, IN_CH, IMSIZE, IMSIZE), jnp.float32)  # NCHW
    y = jax.random.randint(ky, (2,), 0, N_CLASSES)
    params = init_params(kp)

    out = jax.jit(discriminator_forward)(params, x, y)
    out = jax.block_until_ready(out)

    ref = forward_reference(params, x, y)
    np.testing.assert_allclose(np.asarray(out), np.asarray(ref), rtol=2e-2, atol=2e-2)
    assert out.shape == (2, 1)
    print("KERNEL_OK")
</pallas_src>

<mosaic_0001>
module attributes {stable_mosaic.version = 11 : i64} {
  func.func @_fused_disc_kernel(%arg0: memref<648x8xf32, #tpu.memory_space<vmem>>, %arg1: memref<72x16xf32, #tpu.memory_space<vmem>>, %arg2: memref<1x16xf32, #tpu.memory_space<vmem>>, %arg3: memref<144x32xf32, #tpu.memory_space<vmem>>, %arg4: memref<1x32xf32, #tpu.memory_space<vmem>>, %arg5: memref<288x64xf32, #tpu.memory_space<vmem>>, %arg6: memref<1x64xf32, #tpu.memory_space<vmem>>, %arg7: memref<32x40xf32, #tpu.memory_space<vmem>>, %arg8: memref<1x40xf32, #tpu.memory_space<vmem>>, %arg9: memref<1x1xf32, #tpu.memory_space<vmem>>, %arg10: memref<1x64xf32, #tpu.memory_space<vmem>>, %arg11: memref<1x1xf32, #tpu.memory_space<vmem>>, %arg12: memref<2x64xf32, #tpu.memory_space<vmem>>, %arg13: memref<200x610xf32, #tpu.memory_space<vmem>>, %arg14: memref<32x178xf32, #tpu.memory_space<vmem>>, %arg15: memref<72x32xf32, #tpu.memory_space<vmem>>, %arg16: memref<2x58xf32, #tpu.memory_space<vmem>>, %arg17: memref<2x1xf32, #tpu.memory_space<vmem>>) attributes {dimension_semantics = [], scalar_prefetch = 0 : i64, scratch_operands = 0 : i64, tpu.core_type = #tpu.core_type<tc>} {
    %c0 = arith.constant 0 : index
    %c0_0 = arith.constant 0 : index
    %0 = vector.load %arg0[%c0, %c0_0] : memref<648x8xf32, #tpu.memory_space<vmem>>, vector<648x8xf32>
    %c0_1 = arith.constant 0 : index
    %c0_2 = arith.constant 0 : index
    %1 = vector.load %arg1[%c0_1, %c0_2] : memref<72x16xf32, #tpu.memory_space<vmem>>, vector<72x16xf32>
    %c0_3 = arith.constant 0 : index
    %c0_4 = arith.constant 0 : index
    %2 = vector.load %arg2[%c0_3, %c0_4] : memref<1x16xf32, #tpu.memory_space<vmem>>, vector<1x16xf32>
    %3 = vector.extract_strided_slice %0 {offsets = [0, 0], sizes = [610, 8], strides = [1, 1]} : vector<648x8xf32> to vector<610x8xf32>
    %4 = vector.extract_strided_slice %1 {offsets = [0, 0], sizes = [8, 16], strides = [1, 1]} : vector<72x16xf32> to vector<8x16xf32>
    %cst = arith.constant dense<0.000000e+00> : vector<610x16xf32>
    %5 = tpu.matmul %3, %4, %cst {dimension_numbers = #tpu.dot_dimension_numbers<[1], [0], [0], [1], [0, 0, 1, 1], [], []>} : vector<610x8xf32>, vector<8x16xf32>, vector<610x16xf32> -> vector<610x16xf32>
    %6 = vector.extract_strided_slice %0 {offsets = [1, 0], sizes = [610, 8], strides = [1, 1]} : vector<648x8xf32> to vector<610x8xf32>
    %7 = vector.extract_strided_slice %1 {offsets = [8, 0], sizes = [8, 16], strides = [1, 1]} : vector<72x16xf32> to vector<8x16xf32>
    %cst_5 = arith.constant dense<0.000000e+00> : vector<610x16xf32>
    %8 = tpu.matmul %6, %7, %cst_5 {dimension_numbers = #tpu.dot_dimension_numbers<[1], [0], [0], [1], [0, 0, 1, 1], [], []>} : vector<610x8xf32>, vector<8x16xf32>, vector<610x16xf32> -> vector<610x16xf32>
    %9 = arith.addf %5, %8 : vector<610x16xf32>
    %10 = vector.extract_strided_slice %0 {offsets = [2, 0], sizes = [610, 8], strides = [1, 1]} : vector<648x8xf32> to vector<610x8xf32>
    %11 = vector.extract_strided_slice %1 {offsets = [16, 0], sizes = [8, 16], strides = [1, 1]} : vector<72x16xf32> to vector<8x16xf32>
    %cst_6 = arith.constant dense<0.000000e+00> : vector<610x16xf32>
    %12 = tpu.matmul %10, %11, %cst_6 {dimension_numbers = #tpu.dot_dimension_numbers<[1], [0], [0], [1], [0, 0, 1, 1], [], []>} : vector<610x8xf32>, vector<8x16xf32>, vector<610x16xf32> -> vector<610x16xf32>
    %13 = arith.addf %9, %12 : vector<610x16xf32>
    %14 = vector.extract_strided_slice %0 {offsets = [18, 0], sizes = [610, 8], strides = [1, 1]} : vector<648x8xf32> to vector<610x8xf32>
    %15 = vector.extract_strided_slice %1 {offsets = [24, 0], sizes = [8, 16], strides = [1, 1]} : vector<72x16xf32> to vector<8x16xf32>
    %cst_7 = arith.constant dense<0.000000e+00> : vector<610x16xf32>
    %16 = tpu.matmul %14, %15, %cst_7 {dimension_numbers = #tpu.dot_dimension_numbers<[1], [0], [0], [1], [0, 0, 1, 1], [], []>} : vector<610x8xf32>, vector<8x16xf32>, vector<610x16xf32> -> vector<610x16xf32>
    %17 = arith.addf %13, %16 : vector<610x16xf32>
    %18 = vector.extract_strided_slice %0 {offsets = [19, 0], sizes = [610, 8], strides = [1, 1]} : vector<648x8xf32> to vector<610x8xf32>
    %19 = vector.extract_strided_slice %1 {offsets = [32, 0], sizes = [8, 16], strides = [1, 1]} : vector<72x16xf32> to vector<8x16xf32>
    %cst_8 = arith.constant dense<0.000000e+00> : vector<610x16xf32>
    %20 = tpu.matmul %18, %19, %cst_8 {dimension_numbers = #tpu.dot_dimension_numbers<[1], [0], [0], [1], [0, 0, 1, 1], [], []>} : vector<610x8xf32>, vector<8x16xf32>, vector<610x16xf32> -> vector<610x16xf32>
    %21 = arith.addf %17, %20 : vector<610x16xf32>
    %22 = vector.extract_strided_slice %0 {offsets = [20, 0], sizes = [610, 8], strides = [1, 1]} : vector<648x8xf32> to vector<610x8xf32>
    %23 = vector.extract_strided_slice %1 {offsets = [40, 0], sizes = [8, 16], strides = [1, 1]} : vector<72x16xf32> to vector<8x16xf32>
    %cst_9 = arith.constant dense<0.000000e+00> : vector<610x16xf32>
    %24 = tpu.matmul %22, %23, %cst_9 {dimension_numbers = #tpu.dot_dimension_numbers<[1], [0], [0], [1], [0, 0, 1, 1], [], []>} : vector<610x8xf32>, vector<8x16xf32>, vector<610x16xf32> -> vector<610x16xf32>
    %25 = arith.addf %21, %24 : vector<610x16xf32>
    %26 = vector.extract_strided_slice %0 {offsets = [36, 0], sizes = [610, 8], strides = [1, 1]} : vector<648x8xf32> to vector<610x8xf32>
    %27 = vector.extract_strided_slice %1 {offsets = [48, 0], sizes = [8, 16], strides = [1, 1]} : vector<72x16xf32> to vector<8x16xf32>
    %cst_10 = arith.constant dense<0.000000e+00> : vector<610x16xf32>
    %28 = tpu.matmul %26, %27, %cst_10 {dimension_numbers = #tpu.dot_dimension_numbers<[1], [0], [0], [1], [0, 0, 1, 1], [], []>} : vector<610x8xf32>, vector<8x16xf32>, vector<610x16xf32> -> vector<610x16xf32>
    %29 = arith.addf %25, %28 : vector<610x16xf32>
    %30 = vector.extract_strided_slice %0 {offsets = [37, 0], sizes = [610, 8], strides = [1, 1]} : vector<648x8xf32> to vector<610x8xf32>
    %31 = vector.extract_strided_slice %1 {offsets = [56, 0], sizes = [8, 16], strides = [1, 1]} : vector<72x16xf32> to vector<8x16xf32>
    %cst_11 = arith.constant dense<0.000000e+00> : vector<610x16xf32>
    %32 = tpu.matmul %30, %31, %cst_11 {dimension_numbers = #tpu.dot_dimension_numbers<[1], [0], [0], [1], [0, 0, 1, 1], [], []>} : vector<610x8xf32>, vector<8x16xf32>, vector<610x16xf32> -> vector<610x16xf32>
    %33 = arith.addf %29, %32 : vector<610x16xf32>
    %34 = vector.extract_strided_slice %0 {offsets = [38, 0], sizes = [610, 8], strides = [1, 1]} : vector<648x8xf32> to vector<610x8xf32>
    %35 = vector.extract_strided_slice %1 {offsets = [64, 0], sizes = [8, 16], strides = [1, 1]} : vector<72x16xf32> to vector<8x16xf32>
    %cst_12 = arith.constant dense<0.000000e+00> : vector<610x16xf32>
    %36 = tpu.matmul %34, %35, %cst_12 {dimension_numbers = #tpu.dot_dimension_numbers<[1], [0], [0], [1], [0, 0, 1, 1], [], []>} : vector<610x8xf32>, vector<8x16xf32>, vector<610x16xf32> -> vector<610x16xf32>
    %37 = arith.addf %33, %36 : vector<610x16xf32>
    %38 = vector.broadcast %2 : vector<1x16xf32> to vector<610x16xf32>
    %39 = arith.addf %37, %38 : vector<610x16xf32>
    %cst_13 = arith.constant 0.000000e+00 : f32
    %40 = vector.broadcast %cst_13 : f32 to vector<610x16xf32>
    %41 = arith.maximumf %39, %40 : vector<610x16xf32>
    %c0_14 = arith.constant 0 : index
    %c0_15 = arith.constant 0 : index
    %42 = vector.load %arg13[%c0_14, %c0_15] : memref<200x610xf32, #tpu.memory_space<vmem>>, vector<200x610xf32>
    %cst_16 = arith.constant dense<0.000000e+00> : vector<200x16xf32>
    %43 = tpu.matmul %42, %41, %cst_16 {dimension_numbers = #tpu.dot_dimension_numbers<[1], [0], [0], [1], [0, 0, 1, 1], [], []>} : vector<200x610xf32>, vector<610x16xf32>, vector<200x16xf32> -> vector<200x16xf32>
    %c0_17 = arith.constant 0 : index
    %c0_18 = arith.constant 0 : index
    %44 = vector.load %arg3[%c0_17, %c0_18] : memref<144x32xf32, #tpu.memory_space<vmem>>, vector<144x32xf32>
    %c0_19 = arith.constant 0 : index
    %c0_20 = arith.constant 0 : index
    %45 = vector.load %arg4[%c0_19, %c0_20] : memref<1x32xf32, #tpu.memory_space<vmem>>, vector<1x32xf32>
    %46 = vector.extract_strided_slice %43 {offsets = [0, 0], sizes = [178, 16], strides = [1, 1]} : vector<200x16xf32> to vector<178x16xf32>
    %47 = vector.extract_strided_slice %44 {offsets = [0, 0], sizes = [16, 32], strides = [1, 1]} : vector<144x32xf32> to vector<16x32xf32>
    %cst_21 = arith.constant dense<0.000000e+00> : vector<178x32xf32>
    %48 = tpu.matmul %46, %47, %cst_21 {dimension_numbers = #tpu.dot_dimension_numbers<[1], [0], [0], [1], [0, 0, 1, 1], [], []>} : vector<178x16xf32>, vector<16x32xf32>, vector<178x32xf32> -> vector<178x32xf32>
    %49 = vector.extract_strided_slice %43 {offsets = [1, 0], sizes = [178, 16], strides = [1, 1]} : vector<200x16xf32> to vector<178x16xf32>
    %50 = vector.extract_strided_slice %44 {offsets = [16, 0], sizes = [16, 32], strides = [1, 1]} : vector<144x32xf32> to vector<16x32xf32>
    %cst_22 = arith.constant dense<0.000000e+00> : vector<178x32xf32>
    %51 = tpu.matmul %49, %50, %cst_22 {dimension_numbers = #tpu.dot_dimension_numbers<[1], [0], [0], [1], [0, 0, 1, 1], [], []>} : vector<178x16xf32>, vector<16x32xf32>, vector<178x32xf32> -> vector<178x32xf32>
    %52 = arith.addf %48, %51 : vector<178x32xf32>
    %53 = vector.extract_strided_slice %43 {offsets = [2, 0], sizes = [178, 16], strides = [1, 1]} : vector<200x16xf32> to vector<178x16xf32>
    %54 = vector.extract_strided_slice %44 {offsets = [32, 0], sizes = [16, 32], strides = [1, 1]} : vector<144x32xf32> to vector<16x32xf32>
    %cst_23 = arith.constant dense<0.000000e+00> : vector<178x32xf32>
    %55 = tpu.matmul %53, %54, %cst_23 {dimension_numbers = #tpu.dot_dimension_numbers<[1], [0], [0], [1], [0, 0, 1, 1], [], []>} : vector<178x16xf32>, vector<16x32xf32>, vector<178x32xf32> -> vector<178x32xf32>
    %56 = arith.addf %52, %55 : vector<178x32xf32>
    %57 = vector.extract_strided_slice %43 {offsets = [10, 0], sizes = [178, 16], strides = [1, 1]} : vector<200x16xf32> to vector<178x16xf32>
    %58 = vector.extract_strided_slice %44 {offsets = [48, 0], sizes = [16, 32], strides = [1, 1]} : vector<144x32xf32> to vector<16x32xf32>
    %cst_24 = arith.constant dense<0.000000e+00> : vector<178x32xf32>
    %59 = tpu.matmul %57, %58, %cst_24 {dimension_numbers = #tpu.dot_dimension_numbers<[1], [0], [0], [1], [0, 0, 1, 1], [], []>} : vector<178x16xf32>, vector<16x32xf32>, vector<178x32xf32> -> vector<178x32xf32>
    %60 = arith.addf %56, %59 : vector<178x32xf32>
    %61 = vector.extract_strided_slice %43 {offsets = [11, 0], sizes = [178, 16], strides = [1, 1]} : vector<200x16xf32> to vector<178x16xf32>
    %62 = vector.extract_strided_slice %44 {offsets = [64, 0], sizes = [16, 32], strides = [1, 1]} : vector<144x32xf32> to vector<16x32xf32>
    %cst_25 = arith.constant dense<0.000000e+00> : vector<178x32xf32>
    %63 = tpu.matmul %61, %62, %cst_25 {dimension_numbers = #tpu.dot_dimension_numbers<[1], [0], [0], [1], [0, 0, 1, 1], [], []>} : vector<178x16xf32>, vector<16x32xf32>, vector<178x32xf32> -> vector<178x32xf32>
    %64 = arith.addf %60, %63 : vector<178x32xf32>
    %65 = vector.extract_strided_slice %43 {offsets = [12, 0], sizes = [178, 16], strides = [1, 1]} : vector<200x16xf32> to vector<178x16xf32>
    %66 = vector.extract_strided_slice %44 {offsets = [80, 0], sizes = [16, 32], strides = [1, 1]} : vector<144x32xf32> to vector<16x32xf32>
    %cst_26 = arith.constant dense<0.000000e+00> : vector<178x32xf32>
    %67 = tpu.matmul %65, %66, %cst_26 {dimension_numbers = #tpu.dot_dimension_numbers<[1], [0], [0], [1], [0, 0, 1, 1], [], []>} : vector<178x16xf32>, vector<16x32xf32>, vector<178x32xf32> -> vector<178x32xf32>
    %68 = arith.addf %64, %67 : vector<178x32xf32>
    %69 = vector.extract_strided_slice %43 {offsets = [20, 0], sizes = [178, 16], strides = [1, 1]} : vector<200x16xf32> to vector<178x16xf32>
    %70 = vector.extract_strided_slice %44 {offsets = [96, 0], sizes = [16, 32], strides = [1, 1]} : vector<144x32xf32> to vector<16x32xf32>
    %cst_27 = arith.constant dense<0.000000e+00> : vector<178x32xf32>
    %71 = tpu.matmul %69, %70, %cst_27 {dimension_numbers = #tpu.dot_dimension_numbers<[1], [0], [0], [1], [0, 0, 1, 1], [], []>} : vector<178x16xf32>, vector<16x32xf32>, vector<178x32xf32> -> vector<178x32xf32>
    %72 = arith.addf %68, %71 : vector<178x32xf32>
    %73 = vector.extract_strided_slice %43 {offsets = [21, 0], sizes = [178, 16], strides = [1, 1]} : vector<200x16xf32> to vector<178x16xf32>
    %74 = vector.extract_strided_slice %44 {offsets = [112, 0], sizes = [16, 32], strides = [1, 1]} : vector<144x32xf32> to vector<16x32xf32>
    %cst_28 = arith.constant dense<0.000000e+00> : vector<178x32xf32>
    %75 = tpu.matmul %73, %74, %cst_28 {dimension_numbers = #tpu.dot_dimension_numbers<[1], [0], [0], [1], [0, 0, 1, 1], [], []>} : vector<178x16xf32>, vector<16x32xf32>, vector<178x32xf32> -> vector<178x32xf32>
    %76 = arith.addf %72, %75 : vector<178x32xf32>
    %77 = vector.extract_strided_slice %43 {offsets = [22, 0], sizes = [178, 16], strides = [1, 1]} : vector<200x16xf32> to vector<178x16xf32>
    %78 = vector.extract_strided_slice %44 {offsets = [128, 0], sizes = [16, 32], strides = [1, 1]} : vector<144x32xf32> to vector<16x32xf32>
    %cst_29 = arith.constant dense<0.000000e+00> : vector<178x32xf32>
    %79 = tpu.matmul %77, %78, %cst_29 {dimension_numbers = #tpu.dot_dimension_numbers<[1], [0], [0], [1], [0, 0, 1, 1], [], []>} : vector<178x16xf32>, vector<16x32xf32>, vector<178x32xf32> -> vector<178x32xf32>
    %80 = arith.addf %76, %79 : vector<178x32xf32>
    %81 = vector.broadcast %45 : vector<1x32xf32> to vector<178x32xf32>
    %82 = arith.addf %80, %81 : vector<178x32xf32>
    %cst_30 = arith.constant 0.000000e+00 : f32
    %83 = vector.broadcast %cst_30 : f32 to vector<178x32xf32>
    %84 = arith.maximumf %82, %83 : vector<178x32xf32>
    %c0_31 = arith.constant 0 : index
    %c0_32 = arith.constant 0 : index
    %85 = vector.load %arg14[%c0_31, %c0_32] : memref<32x178xf32, #tpu.memory_space<vmem>>, vector<32x178xf32>
    %cst_33 = arith.constant dense<0.000000e+00> : vector<32x32xf32>
    %86 = tpu.matmul %85, %84, %cst_33 {dimension_numbers = #tpu.dot_dimension_numbers<[1], [0], [0], [1], [0, 0, 1, 1], [], []>} : vector<32x178xf32>, vector<178x32xf32>, vector<32x32xf32> -> vector<32x32xf32>
    %c0_34 = arith.constant 0 : index
    %c0_35 = arith.constant 0 : index
    %87 = vector.load %arg7[%c0_34, %c0_35] : memref<32x40xf32, #tpu.memory_space<vmem>>, vector<32x40xf32>
    %cst_36 = arith.constant dense<0.000000e+00> : vector<32x40xf32>
    %88 = tpu.matmul %86, %87, %cst_36 {dimension_numbers = #tpu.dot_dimension_numbers<[1], [0], [0], [1], [0, 0, 1, 1], [], []>} : vector<32x32xf32>, vector<32x40xf32>, vector<32x40xf32> -> vector<32x40xf32>
    %c0_37 = arith.constant 0 : index
    %c0_38 = arith.constant 0 : index
    %89 = vector.load %arg8[%c0_37, %c0_38] : memref<1x40xf32, #tpu.memory_space<vmem>>, vector<1x40xf32>
    %90 = vector.broadcast %89 : vector<1x40xf32> to vector<32x40xf32>
    %91 = arith.addf %88, %90 : vector<32x40xf32>
    %c0_39 = arith.constant 0 : index
    %c0_40 = arith.constant 0 : index
    %92 = vector.load %arg9[%c0_39, %c0_40] : memref<1x1xf32, #tpu.memory_space<vmem>>, vector<1x1xf32>
    %c0_41 = arith.constant 0 : index
    %c0_42 = arith.constant 0 : index
    %93 = vector.load %arg15[%c0_41, %c0_42] : memref<72x32xf32, #tpu.memory_space<vmem>>, vector<72x32xf32>
    %94 = vector.extract_strided_slice %91 {offsets = [0, 0], sizes = [16, 4], strides = [1, 1]} : vector<32x40xf32> to vector<16x4xf32>
    %95 = vector.extract_strided_slice %91 {offsets = [0, 4], sizes = [16, 4], strides = [1, 1]} : vector<32x40xf32> to vector<16x4xf32>
    %96 = vector.extract_strided_slice %91 {offsets = [0, 8], sizes = [16, 32], strides = [1, 1]} : vector<32x40xf32> to vector<16x32xf32>
    %cst_43 = arith.constant dense<0.000000e+00> : vector<16x16xf32>
    %97 = tpu.matmul %94, %95, %cst_43 {dimension_numbers = #tpu.dot_dimension_numbers<[1], [1], [0], [0], [0, 0, 1, 0], [], []>} : vector<16x4xf32>, vector<16x4xf32>, vector<16x16xf32> -> vector<16x16xf32>
    %cst_44 = arith.constant dense<0xFF800000> : vector<16xf32>
    %98 = vector.multi_reduction <maximumf>, %97, %cst_44 [1] : vector<16x16xf32> to vector<16xf32>
    %99 = vector.shape_cast %98 : vector<16xf32> to vector<16x1xf32>
    %100 = vector.broadcast %99 : vector<16x1xf32> to vector<16x16xf32>
    %101 = arith.subf %97, %100 : vector<16x16xf32>
    %102 = math.exp %101 : vector<16x16xf32>
    %cst_45 = arith.constant dense<0.000000e+00> : vector<16xf32>
    %103 = vector.multi_reduction <add>, %102, %cst_45 [1] : vector<16x16xf32> to vector<16xf32>
    %104 = vector.shape_cast %103 : vector<16xf32> to vector<16x1xf32>
    %105 = tpu.reciprocal %104 {approx = true} : vector<16x1xf32> -> vector<16x1xf32>
    %106 = vector.broadcast %105 : vector<16x1xf32> to vector<16x16xf32>
    %107 = arith.mulf %102, %106 : vector<16x16xf32>
    %cst_46 = arith.constant dense<0.000000e+00> : vector<16x32xf32>
    %108 = tpu.matmul %107, %96, %cst_46 {dimension_numbers = #tpu.dot_dimension_numbers<[1], [0], [0], [1], [0, 0, 1, 1], [], []>} : vector<16x16xf32>, vector<16x32xf32>, vector<16x32xf32> -> vector<16x32xf32>
    %109 = vector.broadcast %92 : vector<1x1xf32> to vector<16x32xf32>
    %110 = arith.mulf %109, %108 : vector<16x32xf32>
    %111 = vector.extract_strided_slice %86 {offsets = [0, 0], sizes = [16, 32], strides = [1, 1]} : vector<32x32xf32> to vector<16x32xf32>
    %112 = arith.addf %110, %111 : vector<16x32xf32>
    %113 = vector.extract_strided_slice %93 {offsets = [0, 0], sizes = [72, 16], strides = [1, 1]} : vector<72x32xf32> to vector<72x16xf32>
    %cst_47 = arith.constant dense<0.000000e+00> : vector<72x32xf32>
    %114 = tpu.matmul %113, %112, %cst_47 {dimension_numbers = #tpu.dot_dimension_numbers<[1], [0], [0], [1], [0, 0, 1, 1], [], []>} : vector<72x16xf32>, vector<16x32xf32>, vector<72x32xf32> -> vector<72x32xf32>
    %115 = vector.extract_strided_slice %91 {offsets = [16, 0], sizes = [16, 4], strides = [1, 1]} : vector<32x40xf32> to vector<16x4xf32>
    %116 = vector.extract_strided_slice %91 {offsets = [16, 4], sizes = [16, 4], strides = [1, 1]} : vector<32x40xf32> to vector<16x4xf32>
    %117 = vector.extract_strided_slice %91 {offsets = [16, 8], sizes = [16, 32], strides = [1, 1]} : vector<32x40xf32> to vector<16x32xf32>
    %cst_48 = arith.constant dense<0.000000e+00> : vector<16x16xf32>
    %118 = tpu.matmul %115, %116, %cst_48 {dimension_numbers = #tpu.dot_dimension_numbers<[1], [1], [0], [0], [0, 0, 1, 0], [], []>} : vector<16x4xf32>, vector<16x4xf32>, vector<16x16xf32> -> vector<16x16xf32>
    %cst_49 = arith.constant dense<0xFF800000> : vector<16xf32>
    %119 = vector.multi_reduction <maximumf>, %118, %cst_49 [1] : vector<16x16xf32> to vector<16xf32>
    %120 = vector.shape_cast %119 : vector<16xf32> to vector<16x1xf32>
    %121 = vector.broadcast %120 : vector<16x1xf32> to vector<16x16xf32>
    %122 = arith.subf %118, %121 : vector<16x16xf32>
    %123 = math.exp %122 : vector<16x16xf32>
    %cst_50 = arith.constant dense<0.000000e+00> : vector<16xf32>
    %124 = vector.multi_reduction <add>, %123, %cst_50 [1] : vector<16x16xf32> to vector<16xf32>
    %125 = vector.shape_cast %124 : vector<16xf32> to vector<16x1xf32>
    %126 = tpu.reciprocal %125 {approx = true} : vector<16x1xf32> -> vector<16x1xf32>
    %127 = vector.broadcast %126 : vector<16x1xf32> to vector<16x16xf32>
    %128 = arith.mulf %123, %127 : vector<16x16xf32>
    %cst_51 = arith.constant dense<0.000000e+00> : vector<16x32xf32>
    %129 = tpu.matmul %128, %117, %cst_51 {dimension_numbers = #tpu.dot_dimension_numbers<[1], [0], [0], [1], [0, 0, 1, 1], [], []>} : vector<16x16xf32>, vector<16x32xf32>, vector<16x32xf32> -> vector<16x32xf32>
    %130 = vector.broadcast %92 : vector<1x1xf32> to vector<16x32xf32>
    %131 = arith.mulf %130, %129 : vector<16x32xf32>
    %132 = vector.extract_strided_slice %86 {offsets = [16, 0], sizes = [16, 32], strides = [1, 1]} : vector<32x32xf32> to vector<16x32xf32>
    %133 = arith.addf %131, %132 : vector<16x32xf32>
    %134 = vector.extract_strided_slice %93 {offsets = [0, 16], sizes = [72, 16], strides = [1, 1]} : vector<72x32xf32> to vector<72x16xf32>
    %cst_52 = arith.constant dense<0.000000e+00> : vector<72x32xf32>
    %135 = tpu.matmul %134, %133, %cst_52 {dimension_numbers = #tpu.dot_dimension_numbers<[1], [0], [0], [1], [0, 0, 1, 1], [], []>} : vector<72x16xf32>, vector<16x32xf32>, vector<72x32xf32> -> vector<72x32xf32>
    %136 = arith.addf %114, %135 : vector<72x32xf32>
    %c0_53 = arith.constant 0 : index
    %c0_54 = arith.constant 0 : index
    %137 = vector.load %arg5[%c0_53, %c0_54] : memref<288x64xf32, #tpu.memory_space<vmem>>, vector<288x64xf32>
    %c0_55 = arith.constant 0 : index
    %c0_56 = arith.constant 0 : index
    %138 = vector.load %arg6[%c0_55, %c0_56] : memref<1x64xf32, #tpu.memory_space<vmem>>, vector<1x64xf32>
    %139 = vector.extract_strided_slice %136 {offsets = [0, 0], sizes = [58, 32], strides = [1, 1]} : vector<72x32xf32> to vector<58x32xf32>
    %140 = vector.extract_strided_slice %137 {offsets = [0, 0], sizes = [32, 64], strides = [1, 1]} : vector<288x64xf32> to vector<32x64xf32>
    %cst_57 = arith.constant dense<0.000000e+00> : vector<58x64xf32>
    %141 = tpu.matmul %139, %140, %cst_57 {dimension_numbers = #tpu.dot_dimension_numbers<[1], [0], [0], [1], [0, 0, 1, 1], [], []>} : vector<58x32xf32>, vector<32x64xf32>, vector<58x64xf32> -> vector<58x64xf32>
    %142 = vector.extract_strided_slice %136 {offsets = [1, 0], sizes = [58, 32], strides = [1, 1]} : vector<72x32xf32> to vector<58x32xf32>
    %143 = vector.extract_strided_slice %137 {offsets = [32, 0], sizes = [32, 64], strides = [1, 1]} : vector<288x64xf32> to vector<32x64xf32>
    %cst_58 = arith.constant dense<0.000000e+00> : vector<58x64xf32>
    %144 = tpu.matmul %142, %143, %cst_58 {dimension_numbers = #tpu.dot_dimension_numbers<[1], [0], [0], [1], [0, 0, 1, 1], [], []>} : vector<58x32xf32>, vector<32x64xf32>, vector<58x64xf32> -> vector<58x64xf32>
    %145 = arith.addf %141, %144 : vector<58x64xf32>
    %146 = vector.extract_strided_slice %136 {offsets = [2, 0], sizes = [58, 32], strides = [1, 1]} : vector<72x32xf32> to vector<58x32xf32>
    %147 = vector.extract_strided_slice %137 {offsets = [64, 0], sizes = [32, 64], strides = [1, 1]} : vector<288x64xf32> to vector<32x64xf32>
    %cst_59 = arith.constant dense<0.000000e+00> : vector<58x64xf32>
    %148 = tpu.matmul %146, %147, %cst_59 {dimension_numbers = #tpu.dot_dimension_numbers<[1], [0], [0], [1], [0, 0, 1, 1], [], []>} : vector<58x32xf32>, vector<32x64xf32>, vector<58x64xf32> -> vector<58x64xf32>
    %149 = arith.addf %145, %148 : vector<58x64xf32>
    %150 = vector.extract_strided_slice %136 {offsets = [6, 0], sizes = [58, 32], strides = [1, 1]} : vector<72x32xf32> to vector<58x32xf32>
    %151 = vector.extract_strided_slice %137 {offsets = [96, 0], sizes = [32, 64], strides = [1, 1]} : vector<288x64xf32> to vector<32x64xf32>
    %cst_60 = arith.constant dense<0.000000e+00> : vector<58x64xf32>
    %152 = tpu.matmul %150, %151, %cst_60 {dimension_numbers = #tpu.dot_dimension_numbers<[1], [0], [0], [1], [0, 0, 1, 1], [], []>} : vector<58x32xf32>, vector<32x64xf32>, vector<58x64xf32> -> vector<58x64xf32>
    %153 = arith.addf %149, %152 : vector<58x64xf32>
    %154 = vector.extract_strided_slice %136 {offsets = [7, 0], sizes = [58, 32], strides = [1, 1]} : vector<72x32xf32> to vector<58x32xf32>
    %155 = vector.extract_strided_slice %137 {offsets = [128, 0], sizes = [32, 64], strides = [1, 1]} : vector<288x64xf32> to vector<32x64xf32>
    %cst_61 = arith.constant dense<0.000000e+00> : vector<58x64xf32>
    %156 = tpu.matmul %154, %155, %cst_61 {dimension_numbers = #tpu.dot_dimension_numbers<[1], [0], [0], [1], [0, 0, 1, 1], [], []>} : vector<58x32xf32>, vector<32x64xf32>, vector<58x64xf32> -> vector<58x64xf32>
    %157 = arith.addf %153, %156 : vector<58x64xf32>
    %158 = vector.extract_strided_slice %136 {offsets = [8, 0], sizes = [58, 32], strides = [1, 1]} : vector<72x32xf32> to vector<58x32xf32>
    %159 = vector.extract_strided_slice %137 {offsets = [160, 0], sizes = [32, 64], strides = [1, 1]} : vector<288x64xf32> to vector<32x64xf32>
    %cst_62 = arith.constant dense<0.000000e+00> : vector<58x64xf32>
    %160 = tpu.matmul %158, %159, %cst_62 {dimension_numbers = #tpu.dot_dimension_numbers<[1], [0], [0], [1], [0, 0, 1, 1], [], []>} : vector<58x32xf32>, vector<32x64xf32>, vector<58x64xf32> -> vector<58x64xf32>
    %161 = arith.addf %157, %160 : vector<58x64xf32>
    %162 = vector.extract_strided_slice %136 {offsets = [12, 0], sizes = [58, 32], strides = [1, 1]} : vector<72x32xf32> to vector<58x32xf32>
    %163 = vector.extract_strided_slice %137 {offsets = [192, 0], sizes = [32, 64], strides = [1, 1]} : vector<288x64xf32> to vector<32x64xf32>
    %cst_63 = arith.constant dense<0.000000e+00> : vector<58x64xf32>
    %164 = tpu.matmul %162, %163, %cst_63 {dimension_numbers = #tpu.dot_dimension_numbers<[1], [0], [0], [1], [0, 0, 1, 1], [], []>} : vector<58x32xf32>, vector<32x64xf32>, vector<58x64xf32> -> vector<58x64xf32>
    %165 = arith.addf %161, %164 : vector<58x64xf32>
    %166 = vector.extract_strided_slice %136 {offsets = [13, 0], sizes = [58, 32], strides = [1, 1]} : vector<72x32xf32> to vector<58x32xf32>
    %167 = vector.extract_strided_slice %137 {offsets = [224, 0], sizes = [32, 64], strides = [1, 1]} : vector<288x64xf32> to vector<32x64xf32>
    %cst_64 = arith.constant dense<0.000000e+00> : vector<58x64xf32>
    %168 = tpu.matmul %166, %167, %cst_64 {dimension_numbers = #tpu.dot_dimension_numbers<[1], [0], [0], [1], [0, 0, 1, 1], [], []>} : vector<58x32xf32>, vector<32x64xf32>, vector<58x64xf32> -> vector<58x64xf32>
    %169 = arith.addf %165, %168 : vector<58x64xf32>
    %170 = vector.extract_strided_slice %136 {offsets = [14, 0], sizes = [58, 32], strides = [1, 1]} : vector<72x32xf32> to vector<58x32xf32>
    %171 = vector.extract_strided_slice %137 {offsets = [256, 0], sizes = [32, 64], strides = [1, 1]} : vector<288x64xf32> to vector<32x64xf32>
    %cst_65 = arith.constant dense<0.000000e+00> : vector<58x64xf32>
    %172 = tpu.matmul %170, %171, %cst_65 {dimension_numbers = #tpu.dot_dimension_numbers<[1], [0], [0], [1], [0, 0, 1, 1], [], []>} : vector<58x32xf32>, vector<32x64xf32>, vector<58x64xf32> -> vector<58x64xf32>
    %173 = arith.addf %169, %172 : vector<58x64xf32>
    %174 = vector.broadcast %138 : vector<1x64xf32> to vector<58x64xf32>
    %175 = arith.addf %173, %174 : vector<58x64xf32>
    %c0_66 = arith.constant 0 : index
    %c0_67 = arith.constant 0 : index
    %176 = vector.load %arg16[%c0_66, %c0_67] : memref<2x58xf32, #tpu.memory_space<vmem>>, vector<2x58xf32>
    %cst_68 = arith.constant 0.000000e+00 : f32
    %177 = vector.broadcast %cst_68 : f32 to vector<58x64xf32>
    %178 = arith.maximumf %175, %177 : vector<58x64xf32>
    %cst_69 = arith.constant dense<0.000000e+00> : vector<2x64xf32>
    %179 = tpu.matmul %176, %178, %cst_69 {dimension_numbers = #tpu.dot_dimension_numbers<[1], [0], [0], [1], [0, 0, 1, 1], [], []>} : vector<2x58xf32>, vector<58x64xf32>, vector<2x64xf32> -> vector<2x64xf32>
    %c0_70 = arith.constant 0 : index
    %c0_71 = arith.constant 0 : index
    %180 = vector.load %arg10[%c0_70, %c0_71] : memref<1x64xf32, #tpu.memory_space<vmem>>, vector<1x64xf32>
    %c0_72 = arith.constant 0 : index
    %c0_73 = arith.constant 0 : index
    %181 = vector.load %arg12[%c0_72, %c0_73] : memref<2x64xf32, #tpu.memory_space<vmem>>, vector<2x64xf32>
    %182 = vector.broadcast %180 : vector<1x64xf32> to vector<2x64xf32>
    %183 = arith.addf %182, %181 : vector<2x64xf32>
    %184 = arith.mulf %179, %183 : vector<2x64xf32>
    %cst_74 = arith.constant dense<0.000000e+00> : vector<2xf32>
    %185 = vector.multi_reduction <add>, %184, %cst_74 [1] : vector<2x64xf32> to vector<2xf32>
    %186 = vector.shape_cast %185 : vector<2xf32> to vector<2x1xf32>
    %c0_75 = arith.constant 0 : index
    %c0_76 = arith.constant 0 : index
    %187 = vector.load %arg11[%c0_75, %c0_76] : memref<1x1xf32, #tpu.memory_space<vmem>>, vector<1x1xf32>
    %188 = vector.broadcast %187 : vector<1x1xf32> to vector<2x1xf32>
    %189 = arith.addf %186, %188 : vector<2x1xf32>
    %c0_77 = arith.constant 0 : index
    %c0_78 = arith.constant 0 : index
    %190 = vector.load %arg17[%c0_77, %c0_78] : memref<2x1xf32, #tpu.memory_space<vmem>>, vector<2x1xf32>
    tpu.vector_store %arg17[%c0_77, %c0_78], %189 {strides = array<i32>} : memref<2x1xf32, #tpu.memory_space<vmem>>, vector<2x1xf32>,
    return
  }
}

</mosaic_0001>

<llo_original>
// kernel: discriminator_forward.1
$region0: #{discriminator_forward.1}
  #allocation0 [shape = 'u32[]', space=smem, size = 0x4, offset = 0x4, fixed_abs, tag = 'smem constant byte address 0x4 - core index']
  #allocation1 [shape = 'u32[72,128]{1,0:T(1,128)}', space=vmem, size = 0x9000, scoped, tag = 'internal scratch']
  #allocation2 [shape = 'f32[1,1]{1,0:T(1,128)S(1)}', space=vmem, size = 0x200, scoped, tag = 'scoped memory for discriminator_forward.1']
  #allocation3 [shape = 'f32[1,1]{1,0:T(1,128)S(1)}', space=vmem, size = 0x200, scoped, tag = 'scoped memory for discriminator_forward.1']
  %s0 = inlined_call_operand.vmem [shape: f32[648,8], index: 0, kind: input, shape index: {}]
  %s1 = inlined_call_operand.vmem [shape: f32[72,16], index: 1, kind: input, shape index: {}]
  %s2 = inlined_call_operand.vmem [shape: f32[1,16], index: 2, kind: input, shape index: {}]
  %s3 = inlined_call_operand.vmem [shape: f32[144,32], index: 3, kind: input, shape index: {}]
  %s4 = inlined_call_operand.vmem [shape: f32[1,32], index: 4, kind: input, shape index: {}]
  %s5 = inlined_call_operand.vmem [shape: f32[288,64], index: 5, kind: input, shape index: {}]
  %s6 = inlined_call_operand.vmem [shape: f32[1,64], index: 6, kind: input, shape index: {}]
  %s7 = inlined_call_operand.vmem [shape: f32[32,40], index: 7, kind: input, shape index: {}]
  %s8 = inlined_call_operand.vmem [shape: f32[1,40], index: 8, kind: input, shape index: {}]
  %s9 = inlined_call_operand.<no memory space> [shape: f32[1,1], index: 9, kind: input, shape index: {}]
  %s10 = inlined_call_operand.vmem [shape: f32[1,64], index: 10, kind: input, shape index: {}]
  %s11 = inlined_call_operand.<no memory space> [shape: f32[1,1], index: 11, kind: input, shape index: {}]
  %s12 = inlined_call_operand.vmem [shape: f32[2,64], index: 12, kind: input, shape index: {}]
  %s13 = inlined_call_operand.vmem [shape: f32[200,610], index: 13, kind: input, shape index: {}]
  %s14 = inlined_call_operand.vmem [shape: f32[32,178], index: 14, kind: input, shape index: {}]
  %s15 = inlined_call_operand.vmem [shape: f32[72,32], index: 15, kind: input, shape index: {}]
  %s16 = inlined_call_operand.vmem [shape: f32[2,58], index: 16, kind: input, shape index: {}]
  %s17 = inlined_call_operand.vmem [shape: f32[2,1], index: 17, kind: output, shape index: {}]
  %s18 = sld [smem:[#allocation0]]
  $region78: #{discriminator_forward.1} parent=0
    _
  %s20 = ssub.s32 1, %s18
  %s21 = scalar_select 0, %s20, %s18
  %v22 = vstv %s9
  %23 = vst [vmem:[#allocation2] sm:$0x1] %v22
  %v24 = vstv %s11
  %25 = vst [vmem:[#allocation3] sm:$0x1] %v24
  // Predicated region
  $region2: #{discriminator_forward.1} parent=0 // pred_check
    _
  $region3: #{discriminator_forward.1} parent=0 // pred_check_branch
    %27 = sbr.rel (0) target = $region5
  $region4: #{discriminator_forward.1} parent=0 // pred_region
    _
  $region5: #{discriminator_forward.1} parent=0 // pred_fallthru
    _
  // Predicated region
  $region6: #{discriminator_forward.1} parent=0 // pred_check
    _
  $region7: #{discriminator_forward.1} parent=0 // pred_check_branch
    %29 = sbr.rel (0) target = $region9
  $region8: #{discriminator_forward.1} parent=0 // pred_region
    _
  $region9: #{discriminator_forward.1} parent=0 // pred_fallthru
    _
  // Predicated region
  $region10: #{discriminator_forward.1} parent=0 // pred_check
    _
  $region11: #{discriminator_forward.1} parent=0 // pred_check_branch
    %31 = sbr.rel (0) target = $region13
  $region12: #{discriminator_forward.1} parent=0 // pred_region
    _
  $region13: #{discriminator_forward.1} parent=0 // pred_fallthru
    _
  // Predicated region
  $region14: #{discriminator_forward.1} parent=0 // pred_check
    _
  $region15: #{discriminator_forward.1} parent=0 // pred_check_branch
    %33 = sbr.rel (0) target = $region17
  $region16: #{discriminator_forward.1} parent=0 // pred_region
    _
  $region17: #{discriminator_forward.1} parent=0 // pred_fallthru
    _
  // Predicated region
  $region18: #{discriminator_forward.1} parent=0 // pred_check
    _
  $region19: #{discriminator_forward.1} parent=0 // pred_check_branch
    %35 = sbr.rel (0) target = $region21
  $region20: #{discriminator_forward.1} parent=0 // pred_region
    _
  $region21: #{discriminator_forward.1} parent=0 // pred_fallthru
    _
  // Predicated region
  $region22: #{discriminator_forward.1} parent=0 // pred_check
    _
  $region23: #{discriminator_forward.1} parent=0 // pred_check_branch
    %37 = sbr.rel (0) target = $region25
  $region24: #{discriminator_forward.1} parent=0 // pred_region
    _
  $region25: #{discriminator_forward.1} parent=0 // pred_fallthru
    _
  // Predicated region
  $region26: #{discriminator_forward.1} parent=0 // pred_check
    _
  $region27: #{discriminator_forward.1} parent=0 // pred_check_branch
    %39 = sbr.rel (0) target = $region29
  $region28: #{discriminator_forward.1} parent=0 // pred_region
    _
  $region29: #{discriminator_forward.1} parent=0 // pred_fallthru
    _
  // Predicated region
  $region30: #{discriminator_forward.1} parent=0 // pred_check
    _
  $region31: #{discriminator_forward.1} parent=0 // pred_check_branch
    %41 = sbr.rel (0) target = $region33
  $region32: #{discriminator_forward.1} parent=0 // pred_region
    _
  $region33: #{discriminator_forward.1} parent=0 // pred_fallthru
    _
  // Predicated region
  $region34: #{discriminator_forward.1} parent=0 // pred_check
    _
  $region35: #{discriminator_forward.1} parent=0 // pred_check_branch
    %43 = sbr.rel (0) target = $region37
  $region36: #{discriminator_forward.1} parent=0 // pred_region
    _
  $region37: #{discriminator_forward.1} parent=0 // pred_fallthru
    _
  // Predicated region
  $region38: #{discriminator_forward.1} parent=0 // pred_check
    _
  $region39: #{discriminator_forward.1} parent=0 // pred_check_branch
    %45 = sbr.rel (0) target = $region41
  $region40: #{discriminator_forward.1} parent=0 // pred_region
    _
  $region41: #{discriminator_forward.1} parent=0 // pred_fallthru
    _
  // Predicated region
  $region42: #{discriminator_forward.1} parent=0 // pred_check
    _
  $region43: #{discriminator_forward.1} parent=0 // pred_check_branch
    %47 = sbr.rel (0) target = $region45
  $region44: #{discriminator_forward.1} parent=0 // pred_region
    _
  $region45: #{discriminator_forward.1} parent=0 // pred_fallthru
    _
  // Predicated region
  $region46: #{discriminator_forward.1} parent=0 // pred_check
    _
  $region47: #{discriminator_forward.1} parent=0 // pred_check_branch
    %49 = sbr.rel (0) target = $region49
  $region48: #{discriminator_forward.1} parent=0 // pred_region
    _
  $region49: #{discriminator_forward.1} parent=0 // pred_fallthru
    _
  // Predicated region
  $region50: #{discriminator_forward.1} parent=0 // pred_check
    _
  $region51: #{discriminator_forward.1} parent=0 // pred_check_branch
    %51 = sbr.rel (0) target = $region53
  $region52: #{discriminator_forward.1} parent=0 // pred_region
    _
  $region53: #{discriminator_forward.1} parent=0 // pred_fallthru
    _
  // Predicated region
  $region54: #{discriminator_forward.1} parent=0 // pred_check
    _
  $region55: #{discriminator_forward.1} parent=0 // pred_check_branch
    %53 = sbr.rel (0) target = $region57
  $region56: #{discriminator_forward.1} parent=0 // pred_region
    _
  $region57: #{discriminator_forward.1} parent=0 // pred_fallthru
    _
  // Predicated region
  $region58: #{discriminator_forward.1} parent=0 // pred_check
    _
  $region59: #{discriminator_forward.1} parent=0 // pred_check_branch
    %55 = sbr.rel (0) target = $region61
  $region60: #{discriminator_forward.1} parent=0 // pred_region
    _
  $region61: #{discriminator_forward.1} parent=0 // pred_fallthru
    _
  // Predicated region
  $region62: #{discriminator_forward.1} parent=0 // pred_check
    _
  $region63: #{discriminator_forward.1} parent=0 // pred_check_branch
    %57 = sbr.rel (0) target = $region65
  $region64: #{discriminator_forward.1} parent=0 // pred_region
    _
  $region65: #{discriminator_forward.1} parent=0 // pred_fallthru
    _
  // Predicated region
  $region66: #{discriminator_forward.1} parent=0 // pred_check
    _
  $region67: #{discriminator_forward.1} parent=0 // pred_check_branch
    %59 = sbr.rel (0) target = $region69
  $region68: #{discriminator_forward.1} parent=0 // pred_region
    _
  $region69: #{discriminator_forward.1} parent=0 // pred_fallthru
    _
  %v60 = vld [vmem:[%s0] sm:$0xff]
  %v61 = vld [vmem:[%s0 + $0x8] sm:$0xff]
  %v62 = vld [vmem:[%s0 + $0x10] sm:$0xff]
  %v63 = vld [vmem:[%s0 + $0x18] sm:$0xff]
  %v64 = vld [vmem:[%s0 + $0x20] sm:$0xff]
  %v65 = vld [vmem:[%s0 + $0x28] sm:$0xff]
  %v66 = vld [vmem:[%s0 + $0x30] sm:$0xff]
  %v67 = vld [vmem:[%s0 + $0x38] sm:$0xff]
  %v68 = vld [vmem:[%s0 + $0x40] sm:$0xff]
  %v69 = vld [vmem:[%s0 + $0x48] sm:$0xff]
  %v70 = vld [vmem:[%s0 + $0x50] sm:$0xff]
  %v71 = vld [vmem:[%s0 + $0x58] sm:$0xff]
  %v72 = vld [vmem:[%s0 + $0x60] sm:$0xff]
  %v73 = vld [vmem:[%s0 + $0x68] sm:$0xff]
  %v74 = vld [vmem:[%s0 + $0x70] sm:$0xff]
  %v75 = vld [vmem:[%s0 + $0x78] sm:$0xff]
  %v76 = vld [vmem:[%s0 + $0x80] sm:$0xff]
  %v77 = vld [vmem:[%s0 + $0x88] sm:$0xff]
  %v78 = vld [vmem:[%s0 + $0x90] sm:$0xff]
  %v79 = vld [vmem:[%s0 + $0x98] sm:$0xff]
  %v80 = vld [vmem:[%s0 + $0xa0] sm:$0xff]
  %v81 = vld [vmem:[%s0 + $0xa8] sm:$0xff]
  %v82 = vld [vmem:[%s0 + $0xb0] sm:$0xff]
  %v83 = vld [vmem:[%s0 + $0xb8] sm:$0xff]
  %v84 = vld [vmem:[%s0 + $0xc0] sm:$0xff]
  %v85 = vld [vmem:[%s0 + $0xc8] sm:$0xff]
  %v86 = vld [vmem:[%s0 + $0xd0] sm:$0xff]
  %v87 = vld [vmem:[%s0 + $0xd8] sm:$0xff]
  %v88 = vld [vmem:[%s0 + $0xe0] sm:$0xff]
  %v89 = vld [vmem:[%s0 + $0xe8] sm:$0xff]
  %v90 = vld [vmem:[%s0 + $0xf0] sm:$0xff]
  %v91 = vld [vmem:[%s0 + $0xf8] sm:$0xff]
  %v92 = vld [vmem:[%s0 + $0x100] sm:$0xff]
  %v93 = vld [vmem:[%s0 + $0x108] sm:$0xff]
  %v94 = vld [vmem:[%s0 + $0x110] sm:$0xff]
  %v95 = vld [vmem:[%s0 + $0x118] sm:$0xff]
  %v96 = vld [vmem:[%s0 + $0x120] sm:$0xff]
  %v97 = vld [vmem:[%s0 + $0x128] sm:$0xff]
  %v98 = vld [vmem:[%s0 + $0x130] sm:$0xff]
  %v99 = vld [vmem:[%s0 + $0x138] sm:$0xff]
  %v100 = vld [vmem:[%s0 + $0x140] sm:$0xff]
  %v101 = vld [vmem:[%s0 + $0x148] sm:$0xff]
  %v102 = vld [vmem:[%s0 + $0x150] sm:$0xff]
  %v103 = vld [vmem:[%s0 + $0x158] sm:$0xff]
  %v104 = vld [vmem:[%s0 + $0x160] sm:$0xff]
  %v105 = vld [vmem:[%s0 + $0x168] sm:$0xff]
  %v106 = vld [vmem:[%s0 + $0x170] sm:$0xff]
  %v107 = vld [vmem:[%s0 + $0x178] sm:$0xff]
  %v108 = vld [vmem:[%s0 + $0x180] sm:$0xff]
  %v109 = vld [vmem:[%s0 + $0x188] sm:$0xff]
  %v110 = vld [vmem:[%s0 + $0x190] sm:$0xff]
  %v111 = vld [vmem:[%s0 + $0x198] sm:$0xff]
  %v112 = vld [vmem:[%s0 + $0x1a0] sm:$0xff]
  %v113 = vld [vmem:[%s0 + $0x1a8] sm:$0xff]
  %v114 = vld [vmem:[%s0 + $0x1b0] sm:$0xff]
  %v115 = vld [vmem:[%s0 + $0x1b8] sm:$0xff]
  %v116 = vld [vmem:[%s0 + $0x1c0] sm:$0xff]
  %v117 = vld [vmem:[%s0 + $0x1c8] sm:$0xff]
  %v118 = vld [vmem:[%s0 + $0x1d0] sm:$0xff]
  %v119 = vld [vmem:[%s0 + $0x1d8] sm:$0xff]
  %v120 = vld [vmem:[%s0 + $0x1e0] sm:$0xff]
  %v121 = vld [vmem:[%s0 + $0x1e8] sm:$0xff]
  %v122 = vld [vmem:[%s0 + $0x1f0] sm:$0xff]
  %v123 = vld [vmem:[%s0 + $0x1f8] sm:$0xff]
  %v124 = vld [vmem:[%s0 + $0x200] sm:$0xff]
  %v125 = vld [vmem:[%s0 + $0x208] sm:$0xff]
  %v126 = vld [vmem:[%s0 + $0x210] sm:$0xff]
  %v127 = vld [vmem:[%s0 + $0x218] sm:$0xff]
  %v128 = vld [vmem:[%s0 + $0x220] sm:$0xff]
  %v129 = vld [vmem:[%s0 + $0x228] sm:$0xff]
  %v130 = vld [vmem:[%s0 + $0x230] sm:$0xff]
  %v131 = vld [vmem:[%s0 + $0x238] sm:$0xff]
  %v132 = vld [vmem:[%s0 + $0x240] sm:$0xff]
  %v133 = vld [vmem:[%s0 + $0x248] sm:$0xff]
  %v134 = vld [vmem:[%s0 + $0x250] sm:$0xff]
  %v135 = vld [vmem:[%s0 + $0x258] sm:$0xff]
  %v136 = vld [vmem:[%s0 + $0x260] sm:$0xff]
  %v137 = vld [vmem:[%s0 + $0x268] sm:$0xff]
  %v138 = vld [vmem:[%s0 + $0x270] sm:$0xff]
  %v139 = vld [vmem:[%s0 + $0x278] sm:$0xff]
  %v140 = vld [vmem:[%s0 + $0x280] sm:$0xff]
  %v141 = vld [vmem:[%s1] sm:$0xff]
  %v142 = vld [vmem:[%s1 + $0x8] sm:$0xff]
  %v143 = vld [vmem:[%s1 + $0x10] sm:$0xff]
  %v144 = vld [vmem:[%s1 + $0x18] sm:$0xff]
  %v145 = vld [vmem:[%s1 + $0x20] sm:$0xff]
  %v146 = vld [vmem:[%s1 + $0x28] sm:$0xff]
  %v147 = vld [vmem:[%s1 + $0x30] sm:$0xff]
  %v148 = vld [vmem:[%s1 + $0x38] sm:$0xff]
  %v149 = vld [vmem:[%s1 + $0x40] sm:$0xff]
  %v150 = vld [vmem:[%s2] sm:$0x1]
  %vm228 = vcmask 1046528
  %v229 = vrot.slane %v60, 1
  %v230 = vrot.slane %v61, 1
  %v231 = vsel %vm228, %v229, %v230
  %v232 = vrot.slane %v62, 1
  %v233 = vsel %vm228, %v230, %v232
  %v234 = vrot.slane %v63, 1
  %v235 = vsel %vm228, %v232, %v234
  %v236 = vrot.slane %v64, 1
  %v237 = vsel %vm228, %v234, %v236
  %v238 = vrot.slane %v65, 1
  %v239 = vsel %vm228, %v236, %v238
  %v240 = vrot.slane %v66, 1
  %v241 = vsel %vm228, %v238, %v240
  %v242 = vrot.slane %v67, 1
  %v243 = vsel %vm228, %v240, %v242
  %v244 = vrot.slane %v68, 1
  %v245 = vsel %vm228, %v242, %v244
  %v246 = vrot.slane %v69, 1
  %v247 = vsel %vm228, %v244, %v246
  %v248 = vrot.slane %v70, 1
  %v249 = vsel %vm228, %v246, %v248
  %v250 = vrot.slane %v71, 1
  %v251 = vsel %vm228, %v248, %v250
  %v252 = vrot.slane %v72, 1
  %v253 = vsel %vm228, %v250, %v252
  %v254 = vrot.slane %v73, 1
  %v255 = vsel %vm228, %v252, %v254
  %v256 = vrot.slane %v74, 1
  %v257 = vsel %vm228, %v254, %v256
  %v258 = vrot.slane %v75, 1
  %v259 = vsel %vm228, %v256, %v258
  %v260 = vrot.slane %v76, 1
  %v261 = vsel %vm228, %v258, %v260
  %v262 = vrot.slane %v77, 1
  %v263 = vsel %vm228, %v260, %v262
  %v264 = vrot.slane %v78, 1
  %v265 = vsel %vm228, %v262, %v264
  %v266 = vrot.slane %v79, 1
  %v267 = vsel %vm228, %v264, %v266
  %v268 = vrot.slane %v80, 1
  %v269 = vsel %vm228, %v266, %v268
  %v270 = vrot.slane %v81, 1
  %v271 = vsel %vm228, %v268, %v270
  %v272 = vrot.slane %v82, 1
  %v273 = vsel %vm228, %v270, %v272
  %v274 = vrot.slane %v83, 1
  %v275 = vsel %vm228, %v272, %v274
  %v276 = vrot.slane %v84, 1
  %v277 = vsel %vm228, %v274, %v276
  %v278 = vrot.slane %v85, 1
  %v279 = vsel %vm228, %v276, %v278
  %v280 = vrot.slane %v86, 1
  %v281 = vsel %vm228, %v278, %v280
  %v282 = vrot.slane %v87, 1
  %v283 = vsel %vm228, %v280, %v282
  %v284 = vrot.slane %v88, 1
  %v285 = vsel %vm228, %v282, %v284
  %v286 = vrot.slane %v89, 1
  %v287 = vsel %vm228, %v284, %v286
  %v288 = vrot.slane %v90, 1
  %v289 = vsel %vm228, %v286, %v288
  %v290 = vrot.slane %v91, 1
  %v291 = vsel %vm228, %v288, %v290
  %v292 = vrot.slane %v92, 1
  %v293 = vsel %vm228, %v290, %v292
  %v294 = vrot.slane %v93, 1
  %v295 = vsel %vm228, %v292, %v294
  %v296 = vrot.slane %v94, 1
  %v297 = vsel %vm228, %v294, %v296
  %v298 = vrot.slane %v95, 1
  %v299 = vsel %vm228, %v296, %v298
  %v300 = vrot.slane %v96, 1
  %v301 = vsel %vm228, %v298, %v300
  %v302 = vrot.slane %v97, 1
  %v303 = vsel %vm228, %v300, %v302
  %v304 = vrot.slane %v98, 1
  %v305 = vsel %vm228, %v302, %v304
  %v306 = vrot.slane %v99, 1
  %v307 = vsel %vm228, %v304, %v306
  %v308 = vrot.slane %v100, 1
  %v309 = vsel %vm228, %v306, %v308
  %v310 = vrot.slane %v101, 1
  %v311 = vsel %vm228, %v308, %v310
  %v312 = vrot.slane %v102, 1
  %v313 = vsel %vm228, %v310, %v312
  %v314 = vrot.slane %v103, 1
  %v315 = vsel %vm228, %v312, %v314
  %v316 = vrot.slane %v104, 1
  %v317 = vsel %vm228, %v314, %v316
  %v318 = vrot.slane %v105, 1
  %v319 = vsel %vm228, %v316, %v318
  %v320 = vrot.slane %v106, 1
  %v321 = vsel %vm228, %v318, %v320
  %v322 = vrot.slane %v107, 1
  %v323 = vsel %vm228, %v320, %v322
  %v324 = vrot.slane %v108, 1
  %v325 = vsel %vm228, %v322, %v324
  %v326 = vrot.slane %v109, 1
  %v327 = vsel %vm228, %v324, %v326
  %v328 = vrot.slane %v110, 1
  %v329 = vsel %vm228, %v326, %v328
  %v330 = vrot.slane %v111, 1
  %v331 = vsel %vm228, %v328, %v330
  %v332 = vrot.slane %v112, 1
  %v333 = vsel %vm228, %v330, %v332
  %v334 = vrot.slane %v113, 1
  %v335 = vsel %vm228, %v332, %v334
  %v336 = vrot.slane %v114, 1
  %v337 = vsel %vm228, %v334, %v336
  %v338 = vrot.slane %v115, 1
  %v339 = vsel %vm228, %v336, %v338
  %v340 = vrot.slane %v116, 1
  %v341 = vsel %vm228, %v338, %v340
  %v342 = vrot.slane %v117, 1
  %v343 = vsel %vm228, %v340, %v342
  %v344 = vrot.slane %v118, 1
  %v345 = vsel %vm228, %v342, %v344
  %v346 = vrot.slane %v119, 1
  %v347 = vsel %vm228, %v344, %v346
  %v348 = vrot.slane %v120, 1
  %v349 = vsel %vm228, %v346, %v348
  %v350 = vrot.slane %v121, 1
  %v351 = vsel %vm228, %v348, %v350
  %v352 = vrot.slane %v122, 1
  %v353 = vsel %vm228, %v350, %v352
  %v354 = vrot.slane %v123, 1
  %v355 = vsel %vm228, %v352, %v354
  %v356 = vrot.slane %v124, 1
  %v357 = vsel %vm228, %v354, %v356
  %v358 = vrot.slane %v125, 1
  %v359 = vsel %vm228, %v356, %v358
  %v360 = vrot.slane %v126, 1
  %v361 = vsel %vm228, %v358, %v360
  %v362 = vrot.slane %v127, 1
  %v363 = vsel %vm228, %v360, %v362
  %v364 = vrot.slane %v128, 1
  %v365 = vsel %vm228, %v362, %v364
  %v366 = vrot.slane %v129, 1
  %v367 = vsel %vm228, %v364, %v366
  %v368 = vrot.slane %v130, 1
  %v369 = vsel %vm228, %v366, %v368
  %v370 = vrot.slane %v131, 1
  %v371 = vsel %vm228, %v368, %v370
  %v372 = vrot.slane %v132, 1
  %v373 = vsel %vm228, %v370, %v372
  %v374 = vrot.slane %v133, 1
  %v375 = vsel %vm228, %v372, %v374
  %v376 = vrot.slane %v134, 1
  %v377 = vsel %vm228, %v374, %v376
  %v378 = vrot.slane %v135, 1
  %v379 = vsel %vm228, %v376, %v378
  %v380 = vrot.slane %v136, 1
  %v381 = vsel %vm228, %v378, %v380
  %vm382 = vcmask 64512
  %v383 = vsel %vm382, %v231, 0
  %v385 = vsel %vm382, %v233, 0
  %v387 = vsel %vm382, %v235, 0
  %v389 = vsel %vm382, %v237, 0
  %v391 = vsel %vm382, %v239, 0
  %v393 = vsel %vm382, %v241, 0
  %v395 = vsel %vm382, %v243, 0
  %v397 = vsel %vm382, %v245, 0
  %v399 = vsel %vm382, %v247, 0
  %v401 = vsel %vm382, %v249, 0
  %v403 = vsel %vm382, %v251, 0
  %v405 = vsel %vm382, %v253, 0
  %v407 = vsel %vm382, %v255, 0
  %v409 = vsel %vm382, %v257, 0
  %v411 = vsel %vm382, %v259, 0
  %v413 = vsel %vm382, %v261, 0
  %v415 = vsel %vm382, %v263, 0
  %v417 = vsel %vm382, %v265, 0
  %v419 = vsel %vm382, %v267, 0
  %v421 = vsel %vm382, %v269, 0
  %v423 = vsel %vm382, %v271, 0
  %v425 = vsel %vm382, %v273, 0
  %v427 = vsel %vm382, %v275, 0
  %v429 = vsel %vm382, %v277, 0
  %v431 = vsel %vm382, %v279, 0
  %v433 = vsel %vm382, %v281, 0
  %v435 = vsel %vm382, %v283, 0
  %v437 = vsel %vm382, %v285, 0
  %v439 = vsel %vm382, %v287, 0
  %v441 = vsel %vm382, %v289, 0
  %v443 = vsel %vm382, %v291, 0
  %v445 = vsel %vm382, %v293, 0
  %v447 = vsel %vm382, %v295, 0
  %v449 = vsel %vm382, %v297, 0
  %v451 = vsel %vm382, %v299, 0
  %v453 = vsel %vm382, %v301, 0
  %v455 = vsel %vm382, %v303, 0
  %v457 = vsel %vm382, %v305, 0
  %v459 = vsel %vm382, %v307, 0
  %v461 = vsel %vm382, %v309, 0
  %v463 = vsel %vm382, %v311, 0
  %v465 = vsel %vm382, %v313, 0
  %v467 = vsel %vm382, %v315, 0
  %v469 = vsel %vm382, %v317, 0
  %v471 = vsel %vm382, %v319, 0
  %v473 = vsel %vm382, %v321, 0
  %v475 = vsel %vm382, %v323, 0
  %v477 = vsel %vm382, %v325, 0
  %v479 = vsel %vm382, %v327, 0
  %v481 = vsel %vm382, %v329, 0
  %v483 = vsel %vm382, %v331, 0
  %v485 = vsel %vm382, %v333, 0
  %v487 = vsel %vm382, %v335, 0
  %v489 = vsel %vm382, %v337, 0
  %v491 = vsel %vm382, %v339, 0
  %v493 = vsel %vm382, %v341, 0
  %v495 = vsel %vm382, %v343, 0
  %v497 = vsel %vm382, %v345, 0
  %v499 = vsel %vm382, %v347, 0
  %v501 = vsel %vm382, %v349, 0
  %v503 = vsel %vm382, %v351, 0
  %v505 = vsel %vm382, %v353, 0
  %v507 = vsel %vm382, %v355, 0
  %v509 = vsel %vm382, %v357, 0
  %v511 = vsel %vm382, %v359, 0
  %v513 = vsel %vm382, %v361, 0
  %v515 = vsel %vm382, %v363, 0
  %v517 = vsel %vm382, %v365, 0
  %v519 = vsel %vm382, %v367, 0
  %v521 = vsel %vm382, %v369, 0
  %v523 = vsel %vm382, %v371, 0
  %v525 = vsel %vm382, %v373, 0
  %v527 = vsel %vm382, %v375, 0
  %v529 = vsel %vm382, %v377, 0
  %v531 = vsel %vm382, %v379, 0
  %v533 = vsel %vm382, %v381, 0
  %v535 = vsel %vm382, %v380, 0
  %537 = vmatpush.msra.mxu0 0.0
  %538 = vmatpush.msra.mxu0 0.0
  %539 = vmatpush.msra.mxu0 0.0
  %540 = vmatpush.msra.mxu0 0.0
  %541 = vmatpush.msra.mxu0 0.0
  %542 = vmatpush.msra.mxu0 0.0
  %543 = vmatpush.msra.mxu0 0.0
  %544 = vmatpush.msra.mxu0 0.0
  %545 = vmatpush.msra.mxu0 0.0
  %546 = vmatpush.msra.mxu0 0.0
  %547 = vmatpush.msra.mxu0 0.0
  %548 = vmatpush.msra.mxu0 0.0
  %549 = vmatpush.msra.mxu0 0.0
  %550 = vmatpush.msra.mxu0 0.0
  %551 = vmatpush.msra.mxu0 0.0
  %552 = vmatpush.msra.mxu0 %v142
  %553 = vmatmul.f32.gmra.mxu0 %v383
  %v554 = vpop.f32.mrf.mxu0
  %v555 = vadd.f32 0.0, %v554
  %556 = vmatmul.f32.gmra.mxu0 %v385
  %v557 = vpop.f32.mrf.mxu0
  %v558 = vadd.f32 0.0, %v557
  %559 = vmatmul.f32.gmra.mxu0 %v387
  %v560 = vpop.f32.mrf.mxu0
  %v561 = vadd.f32 0.0, %v560
  %562 = vmatmul.f32.gmra.mxu0 %v389
  %v563 = vpop.f32.mrf.mxu0
  %v564 = vadd.f32 0.0, %v563
  %565 = vmatmul.f32.gmra.mxu0 %v391
  %v566 = vpop.f32.mrf.mxu0
  %v567 = vadd.f32 0.0, %v566
  %568 = vmatmul.f32.gmra.mxu0 %v393
  %v569 = vpop.f32.mrf.mxu0
  %v570 = vadd.f32 0.0, %v569
  %571 = vmatmul.f32.gmra.mxu0 %v395
  %v572 = vpop.f32.mrf.mxu0
  %v573 = vadd.f32 0.0, %v572
  %574 = vmatmul.f32.gmra.mxu0 %v397
  %v575 = vpop.f32.mrf.mxu0
  %v576 = vadd.f32 0.0, %v575
  %577 = vmatmul.f32.gmra.mxu0 %v399
  %v578 = vpop.f32.mrf.mxu0
  %v579 = vadd.f32 0.0, %v578
  %580 = vmatmul.f32.gmra.mxu0 %v401
  %v581 = vpop.f32.mrf.mxu0
  %v582 = vadd.f32 0.0, %v581
  %583 = vmatmul.f32.gmra.mxu0 %v403
  %v584 = vpop.f32.mrf.mxu0
  %v585 = vadd.f32 0.0, %v584
  %586 = vmatmul.f32.gmra.mxu0 %v405
  %v587 = vpop.f32.mrf.mxu0
  %v588 = vadd.f32 0.0, %v587
  %589 = vmatmul.f32.gmra.mxu0 %v407
  %v590 = vpop.f32.mrf.mxu0
  %v591 = vadd.f32 0.0, %v590
  %592 = vmatmul.f32.gmra.mxu0 %v409
  %v593 = vpop.f32.mrf.mxu0
  %v594 = vadd.f32 0.0, %v593
  %595 = vmatmul.f32.gmra.mxu0 %v411
  %v596 = vpop.f32.mrf.mxu0
  %v597 = vadd.f32 0.0, %v596
  %598 = vmatmul.f32.gmra.mxu0 %v413
  %v599 = vpop.f32.mrf.mxu0
  %v600 = vadd.f32 0.0, %v599
  %601 = vmatmul.f32.gmra.mxu0 %v415
  %v602 = vpop.f32.mrf.mxu0
  %v603 = vadd.f32 0.0, %v602
  %604 = vmatmul.f32.gmra.mxu0 %v417
  %v605 = vpop.f32.mrf.mxu0
  %v606 = vadd.f32 0.0, %v605
  %607 = vmatmul.f32.gmra.mxu0 %v419
  %v608 = vpop.f32.mrf.mxu0
  %v609 = vadd.f32 0.0, %v608
  %610 = vmatmul.f32.gmra.mxu0 %v421
  %v611 = vpop.f32.mrf.mxu0
  %v612 = vadd.f32 0.0, %v611
  %613 = vmatmul.f32.gmra.mxu0 %v423
  %v614 = vpop.f32.mrf.mxu0
  %v615 = vadd.f32 0.0, %v614
  %616 = vmatmul.f32.gmra.mxu0 %v425
  %v617 = vpop.f32.mrf.mxu0
  %v618 = vadd.f32 0.0, %v617
  %619 = vmatmul.f32.gmra.mxu0 %v427
  %v620 = vpop.f32.mrf.mxu0
  %v621 = vadd.f32 0.0, %v620
  %622 = vmatmul.f32.gmra.mxu0 %v429
  %v623 = vpop.f32.mrf.mxu0
  %v624 = vadd.f32 0.0, %v623
  %625 = vmatmul.f32.gmra.mxu0 %v431
  %v626 = vpop.f32.mrf.mxu0
  %v627 = vadd.f32 0.0, %v626
  %628 = vmatmul.f32.gmra.mxu0 %v433
  %v629 = vpop.f32.mrf.mxu0
  %v630 = vadd.f32 0.0, %v629
  %631 = vmatmul.f32.gmra.mxu0 %v435
  %v632 = vpop.f32.mrf.mxu0
  %v633 = vadd.f32 0.0, %v632
  %634 = vmatmul.f32.gmra.mxu0 %v437
  %v635 = vpop.f32.mrf.mxu0
  %v636 = vadd.f32 0.0, %v635
  %637 = vmatmul.f32.gmra.mxu0 %v439
  %v638 = vpop.f32.mrf.mxu0
  %v639 = vadd.f32 0.0, %v638
  %640 = vmatmul.f32.gmra.mxu0 %v441
  %v641 = vpop.f32.mrf.mxu0
  %v642 = vadd.f32 0.0, %v641
  %643 = vmatmul.f32.gmra.mxu0 %v443
  %v644 = vpop.f32.mrf.mxu0
  %v645 = vadd.f32 0.0, %v644
  %646 = vmatmul.f32.gmra.mxu0 %v445
  %v647 = vpop.f32.mrf.mxu0
  %v648 = vadd.f32 0.0, %v647
  %649 = vmatmul.f32.gmra.mxu0 %v447
  %v650 = vpop.f32.mrf.mxu0
  %v651 = vadd.f32 0.0, %v650
  %652 = vmatmul.f32.gmra.mxu0 %v449
  %v653 = vpop.f32.mrf.mxu0
  %v654 = vadd.f32 0.0, %v653
  %655 = vmatmul.f32.gmra.mxu0 %v451
  %v656 = vpop.f32.mrf.mxu0
  %v657 = vadd.f32 0.0, %v656
  %658 = vmatmul.f32.gmra.mxu0 %v453
  %v659 = vpop.f32.mrf.mxu0
  %v660 = vadd.f32 0.0, %v659
  %661 = vmatmul.f32.gmra.mxu0 %v455
  %v662 = vpop.f32.mrf.mxu0
  %v663 = vadd.f32 0.0, %v662
  %664 = vmatmul.f32.gmra.mxu0 %v457
  %v665 = vpop.f32.mrf.mxu0
  %v666 = vadd.f32 0.0, %v665
  %667 = vmatmul.f32.gmra.mxu0 %v459
  %v668 = vpop.f32.mrf.mxu0
  %v669 = vadd.f32 0.0, %v668
  %670 = vmatmul.f32.gmra.mxu0 %v461
  %v671 = vpop.f32.mrf.mxu0
  %v672 = vadd.f32 0.0, %v671
  %673 = vmatmul.f32.gmra.mxu0 %v463
  %v674 = vpop.f32.mrf.mxu0
  %v675 = vadd.f32 0.0, %v674
  %676 = vmatmul.f32.gmra.mxu0 %v465
  %v677 = vpop.f32.mrf.mxu0
  %v678 = vadd.f32 0.0, %v677
  %679 = vmatmul.f32.gmra.mxu0 %v467
  %v680 = vpop.f32.mrf.mxu0
  %v681 = vadd.f32 0.0, %v680
  %682 = vmatmul.f32.gmra.mxu0 %v469
  %v683 = vpop.f32.mrf.mxu0
  %v684 = vadd.f32 0.0, %v683
  %685 = vmatmul.f32.gmra.mxu0 %v471
  %v686 = vpop.f32.mrf.mxu0
  %v687 = vadd.f32 0.0, %v686
  %688 = vmatmul.f32.gmra.mxu0 %v473
  %v689 = vpop.f32.mrf.mxu0
  %v690 = vadd.f32 0.0, %v689
  %691 = vmatmul.f32.gmra.mxu0 %v475
  %v692 = vpop.f32.mrf.mxu0
  %v693 = vadd.f32 0.0, %v692
  %694 = vmatmul.f32.gmra.mxu0 %v477
  %v695 = vpop.f32.mrf.mxu0
  %v696 = vadd.f32 0.0, %v695
  %697 = vmatmul.f32.gmra.mxu0 %v479
  %v698 = vpop.f32.mrf.mxu0
  %v699 = vadd.f32 0.0, %v698
  %700 = vmatmul.f32.gmra.mxu0 %v481
  %v701 = vpop.f32.mrf.mxu0
  %v702 = vadd.f32 0.0, %v701
  %703 = vmatmul.f32.gmra.mxu0 %v483
  %v704 = vpop.f32.mrf.mxu0
  %v705 = vadd.f32 0.0, %v704
  %706 = vmatmul.f32.gmra.mxu0 %v485
  %v707 = vpop.f32.mrf.mxu0
  %v708 = vadd.f32 0.0, %v707
  %709 = vmatmul.f32.gmra.mxu0 %v487
  %v710 = vpop.f32.mrf.mxu0
  %v711 = vadd.f32 0.0, %v710
  %712 = vmatmul.f32.gmra.mxu0 %v489
  %v713 = vpop.f32.mrf.mxu0
  %v714 = vadd.f32 0.0, %v713
  %715 = vmatmul.f32.gmra.mxu0 %v491
  %v716 = vpop.f32.mrf.mxu0
  %v717 = vadd.f32 0.0, %v716
  %718 = vmatmul.f32.gmra.mxu0 %v493
  %v719 = vpop.f32.mrf.mxu0
  %v720 = vadd.f32 0.0, %v719
  %721 = vmatmul.f32.gmra.mxu0 %v495
  %v722 = vpop.f32.mrf.mxu0
  %v723 = vadd.f32 0.0, %v722
  %724 = vmatmul.f32.gmra.mxu0 %v497
  %v725 = vpop.f32.mrf.mxu0
  %v726 = vadd.f32 0.0, %v725
  %727 = vmatmul.f32.gmra.mxu0 %v499
  %v728 = vpop.f32.mrf.mxu0
  %v729 = vadd.f32 0.0, %v728
  %730 = vmatmul.f32.gmra.mxu0 %v501
  %v731 = vpop.f32.mrf.mxu0
  %v732 = vadd.f32 0.0, %v731
  %733 = vmatmul.f32.gmra.mxu0 %v503
  %v734 = vpop.f32.mrf.mxu0
  %v735 = vadd.f32 0.0, %v734
  %736 = vmatmul.f32.gmra.mxu0 %v505
  %v737 = vpop.f32.mrf.mxu0
  %v738 = vadd.f32 0.0, %v737
  %739 = vmatmul.f32.gmra.mxu0 %v507
  %v740 = vpop.f32.mrf.mxu0
  %v741 = vadd.f32 0.0, %v740
  %742 = vmatmul.f32.gmra.mxu0 %v509
  %v743 = vpop.f32.mrf.mxu0
  %v744 = vadd.f32 0.0, %v743
  %745 = vmatmul.f32.gmra.mxu0 %v511
  %v746 = vpop.f32.mrf.mxu0
  %v747 = vadd.f32 0.0, %v746
  %748 = vmatmul.f32.gmra.mxu0 %v513
  %v749 = vpop.f32.mrf.mxu0
  %v750 = vadd.f32 0.0, %v749
  %751 = vmatmul.f32.gmra.mxu0 %v515
  %v752 = vpop.f32.mrf.mxu0
  %v753 = vadd.f32 0.0, %v752
  %754 = vmatmul.f32.gmra.mxu0 %v517
  %v755 = vpop.f32.mrf.mxu0
  %v756 = vadd.f32 0.0, %v755
  %757 = vmatmul.f32.gmra.mxu0 %v519
  %v758 = vpop.f32.mrf.mxu0
  %v759 = vadd.f32 0.0, %v758
  %760 = vmatmul.f32.gmra.mxu0 %v521
  %v761 = vpop.f32.mrf.mxu0
  %v762 = vadd.f32 0.0, %v761
  %763 = vmatmul.f32.gmra.mxu0 %v523
  %v764 = vpop.f32.mrf.mxu0
  %v765 = vadd.f32 0.0, %v764
  %766 = vmatmul.f32.gmra.mxu0 %v525
  %v767 = vpop.f32.mrf.mxu0
  %v768 = vadd.f32 0.0, %v767
  %769 = vmatmul.f32.gmra.mxu0 %v527
  %v770 = vpop.f32.mrf.mxu0
  %v771 = vadd.f32 0.0, %v770
  %772 = vmatmul.f32.gmra.mxu0 %v529
  %v773 = vpop.f32.mrf.mxu0
  %v774 = vadd.f32 0.0, %v773
  %775 = vmatmul.f32.gmra.mxu0 %v531
  %v776 = vpop.f32.mrf.mxu0
  %v777 = vadd.f32 0.0, %v776
  %778 = vmatmul.f32.gmra.mxu0 %v533
  %v779 = vpop.f32.mrf.mxu0
  %v780 = vadd.f32 0.0, %v779
  %781 = vmatmul.f32.gmra.mxu0 %v535
  %v782 = vpop.f32.mrf.mxu0
  %v783 = vadd.f32 0.0, %v782
  %784 = vdwg.mxu0
  %v785 = vsel %vm382, %v60, 0
  %v787 = vsel %vm382, %v61, 0
  %v789 = vsel %vm382, %v62, 0
  %v791 = vsel %vm382, %v63, 0
  %v793 = vsel %vm382, %v64, 0
  %v795 = vsel %vm382, %v65, 0
  %v797 = vsel %vm382, %v66, 0
  %v799 = vsel %vm382, %v67, 0
  %v801 = vsel %vm382, %v68, 0
  %v803 = vsel %vm382, %v69, 0
  %v805 = vsel %vm382, %v70, 0
  %v807 = vsel %vm382, %v71, 0
  %v809 = vsel %vm382, %v72, 0
  %v811 = vsel %vm382, %v73, 0
  %v813 = vsel %vm382, %v74, 0
  %v815 = vsel %vm382, %v75, 0
  %v817 = vsel %vm382, %v76, 0
  %v819 = vsel %vm382, %v77, 0
  %v821 = vsel %vm382, %v78, 0
  %v823 = vsel %vm382, %v79, 0
  %v825 = vsel %vm382, %v80, 0
  %v827 = vsel %vm382, %v81, 0
  %v829 = vsel %vm382, %v82, 0
  %v831 = vsel %vm382, %v83, 0
  %v833 = vsel %vm382, %v84, 0
  %v835 = vsel %vm382, %v85, 0
  %v837 = vsel %vm382, %v86, 0
  %v839 = vsel %vm382, %v87, 0
  %v841 = vsel %vm382, %v88, 0
  %v843 = vsel %vm382, %v89, 0
  %v845 = vsel %vm382, %v90, 0
  %v847 = vsel %vm382, %v91, 0
  %v849 = vsel %vm382, %v92, 0
  %v851 = vsel %vm382, %v93, 0
  %v853 = vsel %vm382, %v94, 0
  %v855 = vsel %vm382, %v95, 0
  %v857 = vsel %vm382, %v96, 0
  %v859 = vsel %vm382, %v97, 0
  %v861 = vsel %vm382, %v98, 0
  %v863 = vsel %vm382, %v99, 0
  %v865 = vsel %vm382, %v100, 0
  %v867 = vsel %vm382, %v101, 0
  %v869 = vsel %vm382, %v102, 0
  %v871 = vsel %vm382, %v103, 0
  %v873 = vsel %vm382, %v104, 0
  %v875 = vsel %vm382, %v105, 0
  %v877 = vsel %vm382, %v106, 0
  %v879 = vsel %vm382, %v107, 0
  %v881 = vsel %vm382, %v108, 0
  %v883 = vsel %vm382, %v109, 0
  %v885 = vsel %vm382, %v110, 0
  %v887 = vsel %vm382, %v111, 0
  %v889 = vsel %vm382, %v112, 0
  %v891 = vsel %vm382, %v113, 0
  %v893 = vsel %vm382, %v114, 0
  %v895 = vsel %vm382, %v115, 0
  %v897 = vsel %vm382, %v116, 0
  %v899 = vsel %vm382, %v117, 0
  %v901 = vsel %vm382, %v118, 0
  %v903 = vsel %vm382, %v119, 0
  %v905 = vsel %vm382, %v120, 0
  %v907 = vsel %vm382, %v121, 0
  %v909 = vsel %vm382, %v122, 0
  %v911 = vsel %vm382, %v123, 0
  %v913 = vsel %vm382, %v124, 0
  %v915 = vsel %vm382, %v125, 0
  %v917 = vsel %vm382, %v126, 0
  %v919 = vsel %vm382, %v127, 0
  %v921 = vsel %vm382, %v128, 0
  %v923 = vsel %vm382, %v129, 0
  %v925 = vsel %vm382, %v130, 0
  %v927 = vsel %vm382, %v131, 0
  %v929 = vsel %vm382, %v132, 0
  %v931 = vsel %vm382, %v133, 0
  %v933 = vsel %vm382, %v134, 0
  %v935 = vsel %vm382, %v135, 0
  %v937 = vsel %vm382, %v136, 0
  %939 = vmatpush.msra.mxu0 0.0
  %940 = vmatpush.msra.mxu0 0.0
  %941 = vmatpush.msra.mxu0 0.0
  %942 = vmatpush.msra.mxu0 0.0
  %943 = vmatpush.msra.mxu0 0.0
  %944 = vmatpush.msra.mxu0 0.0
  %945 = vmatpush.msra.mxu0 0.0
  %946 = vmatpush.msra.mxu0 0.0
  %947 = vmatpush.msra.mxu0 0.0
  %948 = vmatpush.msra.mxu0 0.0
  %949 = vmatpush.msra.mxu0 0.0
  %950 = vmatpush.msra.mxu0 0.0
  %951 = vmatpush.msra.mxu0 0.0
  %952 = vmatpush.msra.mxu0 0.0
  %953 = vmatpush.msra.mxu0 0.0
  %954 = vmatpush.msra.mxu0 %v141
  %955 = vmatmul.f32.gmra.mxu0 %v785
  %v956 = vpop.f32.mrf.mxu0
  %v957 = vadd.f32 %v555, %v956
  %958 = vmatmul.f32.gmra.mxu0 %v787
  %v959 = vpop.f32.mrf.mxu0
  %v960 = vadd.f32 %v558, %v959
  %961 = vmatmul.f32.gmra.mxu0 %v789
  %v962 = vpop.f32.mrf.mxu0
  %v963 = vadd.f32 %v561, %v962
  %964 = vmatmul.f32.gmra.mxu0 %v791
  %v965 = vpop.f32.mrf.mxu0
  %v966 = vadd.f32 %v564, %v965
  %967 = vmatmul.f32.gmra.mxu0 %v793
  %v968 = vpop.f32.mrf.mxu0
  %v969 = vadd.f32 %v567, %v968
  %970 = vmatmul.f32.gmra.mxu0 %v795
  %v971 = vpop.f32.mrf.mxu0
  %v972 = vadd.f32 %v570, %v971
  %973 = vmatmul.f32.gmra.mxu0 %v797
  %v974 = vpop.f32.mrf.mxu0
  %v975 = vadd.f32 %v573, %v974
  %976 = vmatmul.f32.gmra.mxu0 %v799
  %v977 = vpop.f32.mrf.mxu0
  %v978 = vadd.f32 %v576, %v977
  %979 = vmatmul.f32.gmra.mxu0 %v801
  %v980 = vpop.f32.mrf.mxu0
  %v981 = vadd.f32 %v579, %v980
  %982 = vmatmul.f32.gmra.mxu0 %v803
  %v983 = vpop.f32.mrf.mxu0
  %v984 = vadd.f32 %v582, %v983
  %985 = vmatmul.f32.gmra.mxu0 %v805
  %v986 = vpop.f32.mrf.mxu0
  %v987 = vadd.f32 %v585, %v986
  %988 = vmatmul.f32.gmra.mxu0 %v807
  %v989 = vpop.f32.mrf.mxu0
  %v990 = vadd.f32 %v588, %v989
  %991 = vmatmul.f32.gmra.mxu0 %v809
  %v992 = vpop.f32.mrf.mxu0
  %v993 = vadd.f32 %v591, %v992
  %994 = vmatmul.f32.gmra.mxu0 %v811
  %v995 = vpop.f32.mrf.mxu0
  %v996 = vadd.f32 %v594, %v995
  %997 = vmatmul.f32.gmra.mxu0 %v813
  %v998 = vpop.f32.mrf.mxu0
  %v999 = vadd.f32 %v597, %v998
  %1000 = vmatmul.f32.gmra.mxu0 %v815
  %v1001 = vpop.f32.mrf.mxu0
  %v1002 = vadd.f32 %v600, %v1001
  %1003 = vmatmul.f32.gmra.mxu0 %v817
  %v1004 = vpop.f32.mrf.mxu0
  %v1005 = vadd.f32 %v603, %v1004
  %1006 = vmatmul.f32.gmra.mxu0 %v819
  %v1007 = vpop.f32.mrf.mxu0
  %v1008 = vadd.f32 %v606, %v1007
  %1009 = vmatmul.f32.gmra.mxu0 %v821
  %v1010 = vpop.f32.mrf.mxu0
  %v1011 = vadd.f32 %v609, %v1010
  %1012 = vmatmul.f32.gmra.mxu0 %v823
  %v1013 = vpop.f32.mrf.mxu0
  %v1014 = vadd.f32 %v612, %v1013
  %1015 = vmatmul.f32.gmra.mxu0 %v825
  %v1016 = vpop.f32.mrf.mxu0
  %v1017 = vadd.f32 %v615, %v1016
  %1018 = vmatmul.f32.gmra.mxu0 %v827
  %v1019 = vpop.f32.mrf.mxu0
  %v1020 = vadd.f32 %v618, %v1019
  %1021 = vmatmul.f32.gmra.mxu0 %v829
  %v1022 = vpop.f32.mrf.mxu0
  %v1023 = vadd.f32 %v621, %v1022
  %1024 = vmatmul.f32.gmra.mxu0 %v831
  %v1025 = vpop.f32.mrf.mxu0
  %v1026 = vadd.f32 %v624, %v1025
  %1027 = vmatmul.f32.gmra.mxu0 %v833
  %v1028 = vpop.f32.mrf.mxu0
  %v1029 = vadd.f32 %v627, %v1028
  %1030 = vmatmul.f32.gmra.mxu0 %v835
  %v1031 = vpop.f32.mrf.mxu0
  %v1032 = vadd.f32 %v630, %v1031
  %1033 = vmatmul.f32.gmra.mxu0 %v837
  %v1034 = vpop.f32.mrf.mxu0
  %v1035 = vadd.f32 %v633, %v1034
  %1036 = vmatmul.f32.gmra.mxu0 %v839
  %v1037 = vpop.f32.mrf.mxu0
  %v1038 = vadd.f32 %v636, %v1037
  %1039 = vmatmul.f32.gmra.mxu0 %v841
  %v1040 = vpop.f32.mrf.mxu0
  %v1041 = vadd.f32 %v639, %v1040
  %1042 = vmatmul.f32.gmra.mxu0 %v843
  %v1043 = vpop.f32.mrf.mxu0
  %v1044 = vadd.f32 %v642, %v1043
  %1045 = vmatmul.f32.gmra.mxu0 %v845
  %v1046 = vpop.f32.mrf.mxu0
  %v1047 = vadd.f32 %v645, %v1046
  %1048 = vmatmul.f32.gmra.mxu0 %v847
  %v1049 = vpop.f32.mrf.mxu0
  %v1050 = vadd.f32 %v648, %v1049
  %1051 = vmatmul.f32.gmra.mxu0 %v849
  %v1052 = vpop.f32.mrf.mxu0
  %v1053 = vadd.f32 %v651, %v1052
  %1054 = vmatmul.f32.gmra.mxu0 %v851
  %v1055 = vpop.f32.mrf.mxu0
  %v1056 = vadd.f32 %v654, %v1055
  %1057 = vmatmul.f32.gmra.mxu0 %v853
  %v1058 = vpop.f32.mrf.mxu0
  %v1059 = vadd.f32 %v657, %v1058
  %1060 = vmatmul.f32.gmra.mxu0 %v855
  %v1061 = vpop.f32.mrf.mxu0
  %v1062 = vadd.f32 %v660, %v1061
  %1063 = vmatmul.f32.gmra.mxu0 %v857
  %v1064 = vpop.f32.mrf.mxu0
  %v1065 = vadd.f32 %v663, %v1064
  %1066 = vmatmul.f32.gmra.mxu0 %v859
  %v1067 = vpop.f32.mrf.mxu0
  %v1068 = vadd.f32 %v666, %v1067
  %1069 = vmatmul.f32.gmra.mxu0 %v861
  %v1070 = vpop.f32.mrf.mxu0
  %v1071 = vadd.f32 %v669, %v1070
  %1072 = vmatmul.f32.gmra.mxu0 %v863
  %v1073 = vpop.f32.mrf.mxu0
  %v1074 = vadd.f32 %v672, %v1073
  %1075 = vmatmul.f32.gmra.mxu0 %v865
  %v1076 = vpop.f32.mrf.mxu0
  %v1077 = vadd.f32 %v675, %v1076
  %1078 = vmatmul.f32.gmra.mxu0 %v867
  %v1079 = vpop.f32.mrf.mxu0
  %v1080 = vadd.f32 %v678, %v1079
  %1081 = vmatmul.f32.gmra.mxu0 %v869
  %v1082 = vpop.f32.mrf.mxu0
  %v1083 = vadd.f32 %v681, %v1082
  %1084 = vmatmul.f32.gmra.mxu0 %v871
  %v1085 = vpop.f32.mrf.mxu0
  %v1086 = vadd.f32 %v684, %v1085
  %1087 = vmatmul.f32.gmra.mxu0 %v873
  %v1088 = vpop.f32.mrf.mxu0
  %v1089 = vadd.f32 %v687, %v1088
  %1090 = vmatmul.f32.gmra.mxu0 %v875
  %v1091 = vpop.f32.mrf.mxu0
  %v1092 = vadd.f32 %v690, %v1091
  %1093 = vmatmul.f32.gmra.mxu0 %v877
  %v1094 = vpop.f32.mrf.mxu0
  %v1095 = vadd.f32 %v693, %v1094
  %1096 = vmatmul.f32.gmra.mxu0 %v879
  %v1097 = vpop.f32.mrf.mxu0
  %v1098 = vadd.f32 %v696, %v1097
  %1099 = vmatmul.f32.gmra.mxu0 %v881
  %v1100 = vpop.f32.mrf.mxu0
  %v1101 = vadd.f32 %v699, %v1100
  %1102 = vmatmul.f32.gmra.mxu0 %v883
  %v1103 = vpop.f32.mrf.mxu0
  %v1104 = vadd.f32 %v702, %v1103
  %1105 = vmatmul.f32.gmra.mxu0 %v885
  %v1106 = vpop.f32.mrf.mxu0
  %v1107 = vadd.f32 %v705, %v1106
  %1108 = vmatmul.f32.gmra.mxu0 %v887
  %v1109 = vpop.f32.mrf.mxu0
  %v1110 = vadd.f32 %v708, %v1109
  %1111 = vmatmul.f32.gmra.mxu0 %v889
  %v1112 = vpop.f32.mrf.mxu0
  %v1113 = vadd.f32 %v711, %v1112
  %1114 = vmatmul.f32.gmra.mxu0 %v891
  %v1115 = vpop.f32.mrf.mxu0
  %v1116 = vadd.f32 %v714, %v1115
  %1117 = vmatmul.f32.gmra.mxu0 %v893
  %v1118 = vpop.f32.mrf.mxu0
  %v1119 = vadd.f32 %v717, %v1118
  %1120 = vmatmul.f32.gmra.mxu0 %v895
  %v1121 = vpop.f32.mrf.mxu0
  %v1122 = vadd.f32 %v720, %v1121
  %1123 = vmatmul.f32.gmra.mxu0 %v897
  %v1124 = vpop.f32.mrf.mxu0
  %v1125 = vadd.f32 %v723, %v1124
  %1126 = vmatmul.f32.gmra.mxu0 %v899
  %v1127 = vpop.f32.mrf.mxu0
  %v1128 = vadd.f32 %v726, %v1127
  %1129 = vmatmul.f32.gmra.mxu0 %v901
  %v1130 = vpop.f32.mrf.mxu0
  %v1131 = vadd.f32 %v729, %v1130
  %1132 = vmatmul.f32.gmra.mxu0 %v903
  %v1133 = vpop.f32.mrf.mxu0
  %v1134 = vadd.f32 %v732, %v1133
  %1135 = vmatmul.f32.gmra.mxu0 %v905
  %v1136 = vpop.f32.mrf.mxu0
  %v1137 = vadd.f32 %v735, %v1136
  %1138 = vmatmul.f32.gmra.mxu0 %v907
  %v1139 = vpop.f32.mrf.mxu0
  %v1140 = vadd.f32 %v738, %v1139
  %1141 = vmatmul.f32.gmra.mxu0 %v909
  %v1142 = vpop.f32.mrf.mxu0
  %v1143 = vadd.f32 %v741, %v1142
  %1144 = vmatmul.f32.gmra.mxu0 %v911
  %v1145 = vpop.f32.mrf.mxu0
  %v1146 = vadd.f32 %v744, %v1145
  %1147 = vmatmul.f32.gmra.mxu0 %v913
  %v1148 = vpop.f32.mrf.mxu0
  %v1149 = vadd.f32 %v747, %v1148
  %1150 = vmatmul.f32.gmra.mxu0 %v915
  %v1151 = vpop.f32.mrf.mxu0
  %v1152 = vadd.f32 %v750, %v1151
  %1153 = vmatmul.f32.gmra.mxu0 %v917
  %v1154 = vpop.f32.mrf.mxu0
  %v1155 = vadd.f32 %v753, %v1154
  %1156 = vmatmul.f32.gmra.mxu0 %v919
  %v1157 = vpop.f32.mrf.mxu0
  %v1158 = vadd.f32 %v756, %v1157
  %1159 = vmatmul.f32.gmra.mxu0 %v921
  %v1160 = vpop.f32.mrf.mxu0
  %v1161 = vadd.f32 %v759, %v1160
  %1162 = vmatmul.f32.gmra.mxu0 %v923
  %v1163 = vpop.f32.mrf.mxu0
  %v1164 = vadd.f32 %v762, %v1163
  %1165 = vmatmul.f32.gmra.mxu0 %v925
  %v1166 = vpop.f32.mrf.mxu0
  %v1167 = vadd.f32 %v765, %v1166
  %1168 = vmatmul.f32.gmra.mxu0 %v927
  %v1169 = vpop.f32.mrf.mxu0
  %v1170 = vadd.f32 %v768, %v1169
  %1171 = vmatmul.f32.gmra.mxu0 %v929
  %v1172 = vpop.f32.mrf.mxu0
  %v1173 = vadd.f32 %v771, %v1172
  %1174 = vmatmul.f32.gmra.mxu0 %v931
  %v1175 = vpop.f32.mrf.mxu0
  %v1176 = vadd.f32 %v774, %v1175
  %1177 = vmatmul.f32.gmra.mxu0 %v933
  %v1178 = vpop.f32.mrf.mxu0
  %v1179 = vadd.f32 %v777, %v1178
  %1180 = vmatmul.f32.gmra.mxu0 %v935
  %v1181 = vpop.f32.mrf.mxu0
  %v1182 = vadd.f32 %v780, %v1181
  %1183 = vmatmul.f32.gmra.mxu0 %v937
  %v1184 = vpop.f32.mrf.mxu0
  %v1185 = vadd.f32 %v783, %v1184
  %1186 = vdwg.mxu0
  %vm1187 = vcmask 1045504
  %v1188 = vrot.slane %v60, 2
  %v1189 = vrot.slane %v61, 2
  %v1190 = vsel %vm1187, %v1188, %v1189
  %v1191 = vrot.slane %v62, 2
  %v1192 = vsel %vm1187, %v1189, %v1191
  %v1193 = vrot.slane %v63, 2
  %v1194 = vsel %vm1187, %v1191, %v1193
  %v1195 = vrot.slane %v64, 2
  %v1196 = vsel %vm1187, %v1193, %v1195
  %v1197 = vrot.slane %v65, 2
  %v1198 = vsel %vm1187, %v1195, %v1197
  %v1199 = vrot.slane %v66, 2
  %v1200 = vsel %vm1187, %v1197, %v1199
  %v1201 = vrot.slane %v67, 2
  %v1202 = vsel %vm1187, %v1199, %v1201
  %v1203 = vrot.slane %v68, 2
  %v1204 = vsel %vm1187, %v1201, %v1203
  %v1205 = vrot.slane %v69, 2
  %v1206 = vsel %vm1187, %v1203, %v1205
  %v1207 = vrot.slane %v70, 2
  %v1208 = vsel %vm1187, %v1205, %v1207
  %v1209 = vrot.slane %v71, 2
  %v1210 = vsel %vm1187, %v1207, %v1209
  %v1211 = vrot.slane %v72, 2
  %v1212 = vsel %vm1187, %v1209, %v1211
  %v1213 = vrot.slane %v73, 2
  %v1214 = vsel %vm1187, %v1211, %v1213
  %v1215 = vrot.slane %v74, 2
  %v1216 = vsel %vm1187, %v1213, %v1215
  %v1217 = vrot.slane %v75, 2
  %v1218 = vsel %vm1187, %v1215, %v1217
  %v1219 = vrot.slane %v76, 2
  %v1220 = vsel %vm1187, %v1217, %v1219
  %v1221 = vrot.slane %v77, 2
  %v1222 = vsel %vm1187, %v1219, %v1221
  %v1223 = vrot.slane %v78, 2
  %v1224 = vsel %vm1187, %v1221, %v1223
  %v1225 = vrot.slane %v79, 2
  %v1226 = vsel %vm1187, %v1223, %v1225
  %v1227 = vrot.slane %v80, 2
  %v1228 = vsel %vm1187, %v1225, %v1227
  %v1229 = vrot.slane %v81, 2
  %v1230 = vsel %vm1187, %v1227, %v1229
  %v1231 = vrot.slane %v82, 2
  %v1232 = vsel %vm1187, %v1229, %v1231
  %v1233 = vrot.slane %v83, 2
  %v1234 = vsel %vm1187, %v1231, %v1233
  %v1235 = vrot.slane %v84, 2
  %v1236 = vsel %vm1187, %v1233, %v1235
  %v1237 = vrot.slane %v85, 2
  %v1238 = vsel %vm1187, %v1235, %v1237
  %v1239 = vrot.slane %v86, 2
  %v1240 = vsel %vm1187, %v1237, %v1239
  %v1241 = vrot.slane %v87, 2
  %v1242 = vsel %vm1187, %v1239, %v1241
  %v1243 = vrot.slane %v88, 2
  %v1244 = vsel %vm1187, %v1241, %v1243
  %v1245 = vrot.slane %v89, 2
  %v1246 = vsel %vm1187, %v1243, %v1245
  %v1247 = vrot.slane %v90, 2
  %v1248 = vsel %vm1187, %v1245, %v1247
  %v1249 = vrot.slane %v91, 2
  %v1250 = vsel %vm1187, %v1247, %v1249
  %v1251 = vrot.slane %v92, 2
  %v1252 = vsel %vm1187, %v1249, %v1251
  %v1253 = vrot.slane %v93, 2
  %v1254 = vsel %vm1187, %v1251, %v1253
  %v1255 = vrot.slane %v94, 2
  %v1256 = vsel %vm1187, %v1253, %v1255
  %v1257 = vrot.slane %v95, 2
  %v1258 = vsel %vm1187, %v1255, %v1257
  %v1259 = vrot.slane %v96, 2
  %v1260 = vsel %vm1187, %v1257, %v1259
  %v1261 = vrot.slane %v97, 2
  %v1262 = vsel %vm1187, %v1259, %v1261
  %v1263 = vrot.slane %v98, 2
  %v1264 = vsel %vm1187, %v1261, %v1263
  %v1265 = vrot.slane %v99, 2
  %v1266 = vsel %vm1187, %v1263, %v1265
  %v1267 = vrot.slane %v100, 2
  %v1268 = vsel %vm1187, %v1265, %v1267
  %v1269 = vrot.slane %v101, 2
  %v1270 = vsel %vm1187, %v1267, %v1269
  %v1271 = vrot.slane %v102, 2
  %v1272 = vsel %vm1187, %v1269, %v1271
  %v1273 = vrot.slane %v103, 2
  %v1274 = vsel %vm1187, %v1271, %v1273
  %v1275 = vrot.slane %v104, 2
  %v1276 = vsel %vm1187, %v1273, %v1275
  %v1277 = vrot.slane %v105, 2
  %v1278 = vsel %vm1187, %v1275, %v1277
  %v1279 = vrot.slane %v106, 2
  %v1280 = vsel %vm1187, %v1277, %v1279
  %v1281 = vrot.slane %v107, 2
  %v1282 = vsel %vm1187, %v1279, %v1281
  %v1283 = vrot.slane %v108, 2
  %v1284 = vsel %vm1187, %v1281, %v1283
  %v1285 = vrot.slane %v109, 2
  %v1286 = vsel %vm1187, %v1283, %v1285
  %v1287 = vrot.slane %v110, 2
  %v1288 = vsel %vm1187, %v1285, %v1287
  %v1289 = vrot.slane %v111, 2
  %v1290 = vsel %vm1187, %v1287, %v1289
  %v1291 = vrot.slane %v112, 2
  %v1292 = vsel %vm1187, %v1289, %v1291
  %v1293 = vrot.slane %v113, 2
  %v1294 = vsel %vm1187, %v1291, %v1293
  %v1295 = vrot.slane %v114, 2
  %v1296 = vsel %vm1187, %v1293, %v1295
  %v1297 = vrot.slane %v115, 2
  %v1298 = vsel %vm1187, %v1295, %v1297
  %v1299 = vrot.slane %v116, 2
  %v1300 = vsel %vm1187, %v1297, %v1299
  %v1301 = vrot.slane %v117, 2
  %v1302 = vsel %vm1187, %v1299, %v1301
  %v1303 = vrot.slane %v118, 2
  %v1304 = vsel %vm1187, %v1301, %v1303
  %v1305 = vrot.slane %v119, 2
  %v1306 = vsel %vm1187, %v1303, %v1305
  %v1307 = vrot.slane %v120, 2
  %v1308 = vsel %vm1187, %v1305, %v1307
  %v1309 = vrot.slane %v121, 2
  %v1310 = vsel %vm1187, %v1307, %v1309
  %v1311 = vrot.slane %v122, 2
  %v1312 = vsel %vm1187, %v1309, %v1311
  %v1313 = vrot.slane %v123, 2
  %v1314 = vsel %vm1187, %v1311, %v1313
  %v1315 = vrot.slane %v124, 2
  %v1316 = vsel %vm1187, %v1313, %v1315
  %v1317 = vrot.slane %v125, 2
  %v1318 = vsel %vm1187, %v1315, %v1317
  %v1319 = vrot.slane %v126, 2
  %v1320 = vsel %vm1187, %v1317, %v1319
  %v1321 = vrot.slane %v127, 2
  %v1322 = vsel %vm1187, %v1319, %v1321
  %v1323 = vrot.slane %v128, 2
  %v1324 = vsel %vm1187, %v1321, %v1323
  %v1325 = vrot.slane %v129, 2
  %v1326 = vsel %vm1187, %v1323, %v1325
  %v1327 = vrot.slane %v130, 2
  %v1328 = vsel %vm1187, %v1325, %v1327
  %v1329 = vrot.slane %v131, 2
  %v1330 = vsel %vm1187, %v1327, %v1329
  %v1331 = vrot.slane %v132, 2
  %v1332 = vsel %vm1187, %v1329, %v1331
  %v1333 = vrot.slane %v133, 2
  %v1334 = vsel %vm1187, %v1331, %v1333
  %v1335 = vrot.slane %v134, 2
  %v1336 = vsel %vm1187, %v1333, %v1335
  %v1337 = vrot.slane %v135, 2
  %v1338 = vsel %vm1187, %v1335, %v1337
  %v1339 = vrot.slane %v136, 2
  %v1340 = vsel %vm1187, %v1337, %v1339
  %v1341 = vsel %vm382, %v1190, 0
  %v1343 = vsel %vm382, %v1192, 0
  %v1345 = vsel %vm382, %v1194, 0
  %v1347 = vsel %vm382, %v1196, 0
  %v1349 = vsel %vm382, %v1198, 0
  %v1351 = vsel %vm382, %v1200, 0
  %v1353 = vsel %vm382, %v1202, 0
  %v1355 = vsel %vm382, %v1204, 0
  %v1357 = vsel %vm382, %v1206, 0
  %v1359 = vsel %vm382, %v1208, 0
  %v1361 = vsel %vm382, %v1210, 0
  %v1363 = vsel %vm382, %v1212, 0
  %v1365 = vsel %vm382, %v1214, 0
  %v1367 = vsel %vm382, %v1216, 0
  %v1369 = vsel %vm382, %v1218, 0
  %v1371 = vsel %vm382, %v1220, 0
  %v1373 = vsel %vm382, %v1222, 0
  %v1375 = vsel %vm382, %v1224, 0
  %v1377 = vsel %vm382, %v1226, 0
  %v1379 = vsel %vm382, %v1228, 0
  %v1381 = vsel %vm382, %v1230, 0
  %v1383 = vsel %vm382, %v1232, 0
  %v1385 = vsel %vm382, %v1234, 0
  %v1387 = vsel %vm382, %v1236, 0
  %v1389 = vsel %vm382, %v1238, 0
  %v1391 = vsel %vm382, %v1240, 0
  %v1393 = vsel %vm382, %v1242, 0
  %v1395 = vsel %vm382, %v1244, 0
  %v1397 = vsel %vm382, %v1246, 0
  %v1399 = vsel %vm382, %v1248, 0
  %v1401 = vsel %vm382, %v1250, 0
  %v1403 = vsel %vm382, %v1252, 0
  %v1405 = vsel %vm382, %v1254, 0
  %v1407 = vsel %vm382, %v1256, 0
  %v1409 = vsel %vm382, %v1258, 0
  %v1411 = vsel %vm382, %v1260, 0
  %v1413 = vsel %vm382, %v1262, 0
  %v1415 = vsel %vm382, %v1264, 0
  %v1417 = vsel %vm382, %v1266, 0
  %v1419 = vsel %vm382, %v1268, 0
  %v1421 = vsel %vm382, %v1270, 0
  %v1423 = vsel %vm382, %v1272, 0
  %v1425 = vsel %vm382, %v1274, 0
  %v1427 = vsel %vm382, %v1276, 0
  %v1429 = vsel %vm382, %v1278, 0
  %v1431 = vsel %vm382, %v1280, 0
  %v1433 = vsel %vm382, %v1282, 0
  %v1435 = vsel %vm382, %v1284, 0
  %v1437 = vsel %vm382, %v1286, 0
  %v1439 = vsel %vm382, %v1288, 0
  %v1441 = vsel %vm382, %v1290, 0
  %v1443 = vsel %vm382, %v1292, 0
  %v1445 = vsel %vm382, %v1294, 0
  %v1447 = vsel %vm382, %v1296, 0
  %v1449 = vsel %vm382, %v1298, 0
  %v1451 = vsel %vm382, %v1300, 0
  %v1453 = vsel %vm382, %v1302, 0
  %v1455 = vsel %vm382, %v1304, 0
  %v1457 = vsel %vm382, %v1306, 0
  %v1459 = vsel %vm382, %v1308, 0
  %v1461 = vsel %vm382, %v1310, 0
  %v1463 = vsel %vm382, %v1312, 0
  %v1465 = vsel %vm382, %v1314, 0
  %v1467 = vsel %vm382, %v1316, 0
  %v1469 = vsel %vm382, %v1318, 0
  %v1471 = vsel %vm382, %v1320, 0
  %v1473 = vsel %vm382, %v1322, 0
  %v1475 = vsel %vm382, %v1324, 0
  %v1477 = vsel %vm382, %v1326, 0
  %v1479 = vsel %vm382, %v1328, 0
  %v1481 = vsel %vm382, %v1330, 0
  %v1483 = vsel %vm382, %v1332, 0
  %v1485 = vsel %vm382, %v1334, 0
  %v1487 = vsel %vm382, %v1336, 0
  %v1489 = vsel %vm382, %v1338, 0
  %v1491 = vsel %vm382, %v1340, 0
  %v1493 = vsel %vm382, %v1339, 0
  %1495 = vmatpush.msra.mxu0 0.0
  %1496 = vmatpush.msra.mxu0 0.0
  %1497 = vmatpush.msra.mxu0 0.0
  %1498 = vmatpush.msra.mxu0 0.0
  %1499 = vmatpush.msra.mxu0 0.0
  %1500 = vmatpush.msra.mxu0 0.0
  %1501 = vmatpush.msra.mxu0 0.0
  %1502 = vmatpush.msra.mxu0 0.0
  %1503 = vmatpush.msra.mxu0 0.0
  %1504 = vmatpush.msra.mxu0 0.0
  %1505 = vmatpush.msra.mxu0 0.0
  %1506 = vmatpush.msra.mxu0 0.0
  %1507 = vmatpush.msra.mxu0 0.0
  %1508 = vmatpush.msra.mxu0 0.0
  %1509 = vmatpush.msra.mxu0 0.0
  %1510 = vmatpush.msra.mxu0 %v143
  %1511 = vmatmul.f32.gmra.mxu0 %v1341
  %v1512 = vpop.f32.mrf.mxu0
  %v1513 = vadd.f32 0.0, %v1512
  %1514 = vmatmul.f32.gmra.mxu0 %v1343
  %v1515 = vpop.f32.mrf.mxu0
  %v1516 = vadd.f32 0.0, %v1515
  %1517 = vmatmul.f32.gmra.mxu0 %v1345
  %v1518 = vpop.f32.mrf.mxu0
  %v1519 = vadd.f32 0.0, %v1518
  %1520 = vmatmul.f32.gmra.mxu0 %v1347
  %v1521 = vpop.f32.mrf.mxu0
  %v1522 = vadd.f32 0.0, %v1521
  %1523 = vmatmul.f32.gmra.mxu0 %v1349
  %v1524 = vpop.f32.mrf.mxu0
  %v1525 = vadd.f32 0.0, %v1524
  %1526 = vmatmul.f32.gmra.mxu0 %v1351
  %v1527 = vpop.f32.mrf.mxu0
  %v1528 = vadd.f32 0.0, %v1527
  %1529 = vmatmul.f32.gmra.mxu0 %v1353
  %v1530 = vpop.f32.mrf.mxu0
  %v1531 = vadd.f32 0.0, %v1530
  %1532 = vmatmul.f32.gmra.mxu0 %v1355
  %v1533 = vpop.f32.mrf.mxu0
  %v1534 = vadd.f32 0.0, %v1533
  %1535 = vmatmul.f32.gmra.mxu0 %v1357
  %v1536 = vpop.f32.mrf.mxu0
  %v1537 = vadd.f32 0.0, %v1536
  %1538 = vmatmul.f32.gmra.mxu0 %v1359
  %v1539 = vpop.f32.mrf.mxu0
  %v1540 = vadd.f32 0.0, %v1539
  %1541 = vmatmul.f32.gmra.mxu0 %v1361
  %v1542 = vpop.f32.mrf.mxu0
  %v1543 = vadd.f32 0.0, %v1542
  %1544 = vmatmul.f32.gmra.mxu0 %v1363
  %v1545 = vpop.f32.mrf.mxu0
  %v1546 = vadd.f32 0.0, %v1545
  %1547 = vmatmul.f32.gmra.mxu0 %v1365
  %v1548 = vpop.f32.mrf.mxu0
  %v1549 = vadd.f32 0.0, %v1548
  %1550 = vmatmul.f32.gmra.mxu0 %v1367
  %v1551 = vpop.f32.mrf.mxu0
  %v1552 = vadd.f32 0.0, %v1551
  %1553 = vmatmul.f32.gmra.mxu0 %v1369
  %v1554 = vpop.f32.mrf.mxu0
  %v1555 = vadd.f32 0.0, %v1554
  %1556 = vmatmul.f32.gmra.mxu0 %v1371
  %v1557 = vpop.f32.mrf.mxu0
  %v1558 = vadd.f32 0.0, %v1557
  %1559 = vmatmul.f32.gmra.mxu0 %v1373
  %v1560 = vpop.f32.mrf.mxu0
  %v1561 = vadd.f32 0.0, %v1560
  %1562 = vmatmul.f32.gmra.mxu0 %v1375
  %v1563 = vpop.f32.mrf.mxu0
  %v1564 = vadd.f32 0.0, %v1563
  %1565 = vmatmul.f32.gmra.mxu0 %v1377
  %v1566 = vpop.f32.mrf.mxu0
  %v1567 = vadd.f32 0.0, %v1566
  %1568 = vmatmul.f32.gmra.mxu0 %v1379
  %v1569 = vpop.f32.mrf.mxu0
  %v1570 = vadd.f32 0.0, %v1569
  %1571 = vmatmul.f32.gmra.mxu0 %v1381
  %v1572 = vpop.f32.mrf.mxu0
  %v1573 = vadd.f32 0.0, %v1572
  %1574 = vmatmul.f32.gmra.mxu0 %v1383
  %v1575 = vpop.f32.mrf.mxu0
  %v1576 = vadd.f32 0.0, %v1575
  %1577 = vmatmul.f32.gmra.mxu0 %v1385
  %v1578 = vpop.f32.mrf.mxu0
  %v1579 = vadd.f32 0.0, %v1578
  %1580 = vmatmul.f32.gmra.mxu0 %v1387
  %v1581 = vpop.f32.mrf.mxu0
  %v1582 = vadd.f32 0.0, %v1581
  %1583 = vmatmul.f32.gmra.mxu0 %v1389
  %v1584 = vpop.f32.mrf.mxu0
  %v1585 = vadd.f32 0.0, %v1584
  %1586 = vmatmul.f32.gmra.mxu0 %v1391
  %v1587 = vpop.f32.mrf.mxu0
  %v1588 = vadd.f32 0.0, %v1587
  %1589 = vmatmul.f32.gmra.mxu0 %v1393
  %v1590 = vpop.f32.mrf.mxu0
  %v1591 = vadd.f32 0.0, %v1590
  %1592 = vmatmul.f32.gmra.mxu0 %v1395
  %v1593 = vpop.f32.mrf.mxu0
  %v1594 = vadd.f32 0.0, %v1593
  %1595 = vmatmul.f32.gmra.mxu0 %v1397
  %v1596 = vpop.f32.mrf.mxu0
  %v1597 = vadd.f32 0.0, %v1596
  %1598 = vmatmul.f32.gmra.mxu0 %v1399
  %v1599 = vpop.f32.mrf.mxu0
  %v1600 = vadd.f32 0.0, %v1599
  %1601 = vmatmul.f32.gmra.mxu0 %v1401
  %v1602 = vpop.f32.mrf.mxu0
  %v1603 = vadd.f32 0.0, %v1602
  %1604 = vmatmul.f32.gmra.mxu0 %v1403
  %v1605 = vpop.f32.mrf.mxu0
  %v1606 = vadd.f32 0.0, %v1605
  %1607 = vmatmul.f32.gmra.mxu0 %v1405
  %v1608 = vpop.f32.mrf.mxu0
  %v1609 = vadd.f32 0.0, %v1608
  %1610 = vmatmul.f32.gmra.mxu0 %v1407
  %v1611 = vpop.f32.mrf.mxu0
  %v1612 = vadd.f32 0.0, %v1611
  %1613 = vmatmul.f32.gmra.mxu0 %v1409
  %v1614 = vpop.f32.mrf.mxu0
  %v1615 = vadd.f32 0.0, %v1614
  %1616 = vmatmul.f32.gmra.mxu0 %v1411
  %v1617 = vpop.f32.mrf.mxu0
  %v1618 = vadd.f32 0.0, %v1617
  %1619 = vmatmul.f32.gmra.mxu0 %v1413
  %v1620 = vpop.f32.mrf.mxu0
  %v1621 = vadd.f32 0.0, %v1620
  %1622 = vmatmul.f32.gmra.mxu0 %v1415
  %v1623 = vpop.f32.mrf.mxu0
  %v1624 = vadd.f32 0.0, %v1623
  %1625 = vmatmul.f32.gmra.mxu0 %v1417
  %v1626 = vpop.f32.mrf.mxu0
  %v1627 = vadd.f32 0.0, %v1626
  %1628 = vmatmul.f32.gmra.mxu0 %v1419
  %v1629 = vpop.f32.mrf.mxu0
  %v1630 = vadd.f32 0.0, %v1629
  %1631 = vmatmul.f32.gmra.mxu0 %v1421
  %v1632 = vpop.f32.mrf.mxu0
  %v1633 = vadd.f32 0.0, %v1632
  %1634 = vmatmul.f32.gmra.mxu0 %v1423
  %v1635 = vpop.f32.mrf.mxu0
  %v1636 = vadd.f32 0.0, %v1635
  %1637 = vmatmul.f32.gmra.mxu0 %v1425
  %v1638 = vpop.f32.mrf.mxu0
  %v1639 = vadd.f32 0.0, %v1638
  %1640 = vmatmul.f32.gmra.mxu0 %v1427
  %v1641 = vpop.f32.mrf.mxu0
  %v1642 = vadd.f32 0.0, %v1641
  %1643 = vmatmul.f32.gmra.mxu0 %v1429
  %v1644 = vpop.f32.mrf.mxu0
  %v1645 = vadd.f32 0.0, %v1644
  %1646 = vmatmul.f32.gmra.mxu0 %v1431
  %v1647 = vpop.f32.mrf.mxu0
  %v1648 = vadd.f32 0.0, %v1647
  %1649 = vmatmul.f32.gmra.mxu0 %v1433
  %v1650 = vpop.f32.mrf.mxu0
  %v1651 = vadd.f32 0.0, %v1650
  %1652 = vmatmul.f32.gmra.mxu0 %v1435
  %v1653 = vpop.f32.mrf.mxu0
  %v1654 = vadd.f32 0.0, %v1653
  %1655 = vmatmul.f32.gmra.mxu0 %v1437
  %v1656 = vpop.f32.mrf.mxu0
  %v1657 = vadd.f32 0.0, %v1656
  %1658 = vmatmul.f32.gmra.mxu0 %v1439
  %v1659 = vpop.f32.mrf.mxu0
  %v1660 = vadd.f32 0.0, %v1659
  %1661 = vmatmul.f32.gmra.mxu0 %v1441
  %v1662 = vpop.f32.mrf.mxu0
  %v1663 = vadd.f32 0.0, %v1662
  %1664 = vmatmul.f32.gmra.mxu0 %v1443
  %v1665 = vpop.f32.mrf.mxu0
  %v1666 = vadd.f32 0.0, %v1665
  %1667 = vmatmul.f32.gmra.mxu0 %v1445
  %v1668 = vpop.f32.mrf.mxu0
  %v1669 = vadd.f32 0.0, %v1668
  %1670 = vmatmul.f32.gmra.mxu0 %v1447
  %v1671 = vpop.f32.mrf.mxu0
  %v1672 = vadd.f32 0.0, %v1671
  %1673 = vmatmul.f32.gmra.mxu0 %v1449
  %v1674 = vpop.f32.mrf.mxu0
  %v1675 = vadd.f32 0.0, %v1674
  %1676 = vmatmul.f32.gmra.mxu0 %v1451
  %v1677 = vpop.f32.mrf.mxu0
  %v1678 = vadd.f32 0.0, %v1677
  %1679 = vmatmul.f32.gmra.mxu0 %v1453
  %v1680 = vpop.f32.mrf.mxu0
  %v1681 = vadd.f32 0.0, %v1680
  %1682 = vmatmul.f32.gmra.mxu0 %v1455
  %v1683 = vpop.f32.mrf.mxu0
  %v1684 = vadd.f32 0.0, %v1683
  %1685 = vmatmul.f32.gmra.mxu0 %v1457
  %v1686 = vpop.f32.mrf.mxu0
  %v1687 = vadd.f32 0.0, %v1686
  %1688 = vmatmul.f32.gmra.mxu0 %v1459
  %v1689 = vpop.f32.mrf.mxu0
  %v1690 = vadd.f32 0.0, %v1689
  %1691 = vmatmul.f32.gmra.mxu0 %v1461
  %v1692 = vpop.f32.mrf.mxu0
  %v1693 = vadd.f32 0.0, %v1692
  %1694 = vmatmul.f32.gmra.mxu0 %v1463
  %v1695 = vpop.f32.mrf.mxu0
  %v1696 = vadd.f32 0.0, %v1695
  %1697 = vmatmul.f32.gmra.mxu0 %v1465
  %v1698 = vpop.f32.mrf.mxu0
  %v1699 = vadd.f32 0.0, %v1698
  %1700 = vmatmul.f32.gmra.mxu0 %v1467
  %v1701 = vpop.f32.mrf.mxu0
  %v1702 = vadd.f32 0.0, %v1701
  %1703 = vmatmul.f32.gmra.mxu0 %v1469
  %v1704 = vpop.f32.mrf.mxu0
  %v1705 = vadd.f32 0.0, %v1704
  %1706 = vmatmul.f32.gmra.mxu0 %v1471
  %v1707 = vpop.f32.mrf.mxu0
  %v1708 = vadd.f32 0.0, %v1707
  %1709 = vmatmul.f32.gmra.mxu0 %v1473
  %v1710 = vpop.f32.mrf.mxu0
  %v1711 = vadd.f32 0.0, %v1710
  %1712 = vmatmul.f32.gmra.mxu0 %v1475
  %v1713 = vpop.f32.mrf.mxu0
  %v1714 = vadd.f32 0.0, %v1713
  %1715 = vmatmul.f32.gmra.mxu0 %v1477
  %v1716 = vpop.f32.mrf.mxu0
  %v1717 = vadd.f32 0.0, %v1716
  %1718 = vmatmul.f32.gmra.mxu0 %v1479
  %v1719 = vpop.f32.mrf.mxu0
  %v1720 = vadd.f32 0.0, %v1719
  %1721 = vmatmul.f32.gmra.mxu0 %v1481
  %v1722 = vpop.f32.mrf.mxu0
  %v1723 = vadd.f32 0.0, %v1722
  %1724 = vmatmul.f32.gmra.mxu0 %v1483
  %v1725 = vpop.f32.mrf.mxu0
  %v1726 = vadd.f32 0.0, %v1725
  %1727 = vmatmul.f32.gmra.mxu0 %v1485
  %v1728 = vpop.f32.mrf.mxu0
  %v1729 = vadd.f32 0.0, %v1728
  %1730 = vmatmul.f32.gmra.mxu0 %v1487
  %v1731 = vpop.f32.mrf.mxu0
  %v1732 = vadd.f32 0.0, %v1731
  %1733 = vmatmul.f32.gmra.mxu0 %v1489
  %v1734 = vpop.f32.mrf.mxu0
  %v1735 = vadd.f32 0.0, %v1734
  %1736 = vmatmul.f32.gmra.mxu0 %v1491
  %v1737 = vpop.f32.mrf.mxu0
  %v1738 = vadd.f32 0.0, %v1737
  %1739 = vmatmul.f32.gmra.mxu0 %v1493
  %v1740 = vpop.f32.mrf.mxu0
  %v1741 = vadd.f32 0.0, %v1740
  %1742 = vdwg.mxu0
  %v1743 = vadd.f32 %v957, %v1513
  %v1744 = vadd.f32 %v960, %v1516
  %v1745 = vadd.f32 %v963, %v1519
  %v1746 = vadd.f32 %v966, %v1522
  %v1747 = vadd.f32 %v969, %v1525
  %v1748 = vadd.f32 %v972, %v1528
  %v1749 = vadd.f32 %v975, %v1531
  %v1750 = vadd.f32 %v978, %v1534
  %v1751 = vadd.f32 %v981, %v1537
  %v1752 = vadd.f32 %v984, %v1540
  %v1753 = vadd.f32 %v987, %v1543
  %v1754 = vadd.f32 %v990, %v1546
  %v1755 = vadd.f32 %v993, %v1549
  %v1756 = vadd.f32 %v996, %v1552
  %v1757 = vadd.f32 %v999, %v1555
  %v1758 = vadd.f32 %v1002, %v1558
  %v1759 = vadd.f32 %v1005, %v1561
  %v1760 = vadd.f32 %v1008, %v1564
  %v1761 = vadd.f32 %v1011, %v1567
  %v1762 = vadd.f32 %v1014, %v1570
  %v1763 = vadd.f32 %v1017, %v1573
  %v1764 = vadd.f32 %v1020, %v1576
  %v1765 = vadd.f32 %v1023, %v1579
  %v1766 = vadd.f32 %v1026, %v1582
  %v1767 = vadd.f32 %v1029, %v1585
  %v1768 = vadd.f32 %v1032, %v1588
  %v1769 = vadd.f32 %v1035, %v1591
  %v1770 = vadd.f32 %v1038, %v1594
  %v1771 = vadd.f32 %v1041, %v1597
  %v1772 = vadd.f32 %v1044, %v1600
  %v1773 = vadd.f32 %v1047, %v1603
  %v1774 = vadd.f32 %v1050, %v1606
  %v1775 = vadd.f32 %v1053, %v1609
  %v1776 = vadd.f32 %v1056, %v1612
  %v1777 = vadd.f32 %v1059, %v1615
  %v1778 = vadd.f32 %v1062, %v1618
  %v1779 = vadd.f32 %v1065, %v1621
  %v1780 = vadd.f32 %v1068, %v1624
  %v1781 = vadd.f32 %v1071, %v1627
  %v1782 = vadd.f32 %v1074, %v1630
  %v1783 = vadd.f32 %v1077, %v1633
  %v1784 = vadd.f32 %v1080, %v1636
  %v1785 = vadd.f32 %v1083, %v1639
  %v1786 = vadd.f32 %v1086, %v1642
  %v1787 = vadd.f32 %v1089, %v1645
  %v1788 = vadd.f32 %v1092, %v1648
  %v1789 = vadd.f32 %v1095, %v1651
  %v1790 = vadd.f32 %v1098, %v1654
  %v1791 = vadd.f32 %v1101, %v1657
  %v1792 = vadd.f32 %v1104, %v1660
  %v1793 = vadd.f32 %v1107, %v1663
  %v1794 = vadd.f32 %v1110, %v1666
  %v1795 = vadd.f32 %v1113, %v1669
  %v1796 = vadd.f32 %v1116, %v1672
  %v1797 = vadd.f32 %v1119, %v1675
  %v1798 = vadd.f32 %v1122, %v1678
  %v1799 = vadd.f32 %v1125, %v1681
  %v1800 = vadd.f32 %v1128, %v1684
  %v1801 = vadd.f32 %v1131, %v1687
  %v1802 = vadd.f32 %v1134, %v1690
  %v1803 = vadd.f32 %v1137, %v1693
  %v1804 = vadd.f32 %v1140, %v1696
  %v1805 = vadd.f32 %v1143, %v1699
  %v1806 = vadd.f32 %v1146, %v1702
  %v1807 = vadd.f32 %v1149, %v1705
  %v1808 = vadd.f32 %v1152, %v1708
  %v1809 = vadd.f32 %v1155, %v1711
  %v1810 = vadd.f32 %v1158, %v1714
  %v1811 = vadd.f32 %v1161, %v1717
  %v1812 = vadd.f32 %v1164, %v1720
  %v1813 = vadd.f32 %v1167, %v1723
  %v1814 = vadd.f32 %v1170, %v1726
  %v1815 = vadd.f32 %v1173, %v1729
  %v1816 = vadd.f32 %v1176, %v1732
  %v1817 = vadd.f32 %v1179, %v1735
  %v1818 = vadd.f32 %v1182, %v1738
  %v1819 = vadd.f32 %v1185, %v1741
  %v1822 = vrot.slane %v137, 2
  %v1823 = vsel %vm1187, %v1339, %v1822
  %v1824 = vrot.slane %v138, 2
  %v1825 = vsel %vm1187, %v1822, %v1824
  %v1826 = vsel %vm382, %v1823, 0
  %v1828 = vsel %vm382, %v1825, 0
  %v1830 = vsel %vm382, %v1824, 0
  %1832 = vmatpush.msra.mxu0 0.0
  %1833 = vmatpush.msra.mxu0 0.0
  %1834 = vmatpush.msra.mxu0 0.0
  %1835 = vmatpush.msra.mxu0 0.0
  %1836 = vmatpush.msra.mxu0 0.0
  %1837 = vmatpush.msra.mxu0 0.0
  %1838 = vmatpush.msra.mxu0 0.0
  %1839 = vmatpush.msra.mxu0 0.0
  %1840 = vmatpush.msra.mxu0 0.0
  %1841 = vmatpush.msra.mxu0 0.0
  %1842 = vmatpush.msra.mxu0 0.0
  %1843 = vmatpush.msra.mxu0 0.0
  %1844 = vmatpush.msra.mxu0 0.0
  %1845 = vmatpush.msra.mxu0 0.0
  %1846 = vmatpush.msra.mxu0 0.0
  %1847 = vmatpush.msra.mxu0 %v144
  %1848 = vmatmul.f32.gmra.mxu0 %v1345
  %v1849 = vpop.f32.mrf.mxu0
  %v1850 = vadd.f32 0.0, %v1849
  %1851 = vmatmul.f32.gmra.mxu0 %v1347
  %v1852 = vpop.f32.mrf.mxu0
  %v1853 = vadd.f32 0.0, %v1852
  %1854 = vmatmul.f32.gmra.mxu0 %v1349
  %v1855 = vpop.f32.mrf.mxu0
  %v1856 = vadd.f32 0.0, %v1855
  %1857 = vmatmul.f32.gmra.mxu0 %v1351
  %v1858 = vpop.f32.mrf.mxu0
  %v1859 = vadd.f32 0.0, %v1858
  %1860 = vmatmul.f32.gmra.mxu0 %v1353
  %v1861 = vpop.f32.mrf.mxu0
  %v1862 = vadd.f32 0.0, %v1861
  %1863 = vmatmul.f32.gmra.mxu0 %v1355
  %v1864 = vpop.f32.mrf.mxu0
  %v1865 = vadd.f32 0.0, %v1864
  %1866 = vmatmul.f32.gmra.mxu0 %v1357
  %v1867 = vpop.f32.mrf.mxu0
  %v1868 = vadd.f32 0.0, %v1867
  %1869 = vmatmul.f32.gmra.mxu0 %v1359
  %v1870 = vpop.f32.mrf.mxu0
  %v1871 = vadd.f32 0.0, %v1870
  %1872 = vmatmul.f32.gmra.mxu0 %v1361
  %v1873 = vpop.f32.mrf.mxu0
  %v1874 = vadd.f32 0.0, %v1873
  %1875 = vmatmul.f32.gmra.mxu0 %v1363
  %v1876 = vpop.f32.mrf.mxu0
  %v1877 = vadd.f32 0.0, %v1876
  %1878 = vmatmul.f32.gmra.mxu0 %v1365
  %v1879 = vpop.f32.mrf.mxu0
  %v1880 = vadd.f32 0.0, %v1879
  %1881 = vmatmul.f32.gmra.mxu0 %v1367
  %v1882 = vpop.f32.mrf.mxu0
  %v1883 = vadd.f32 0.0, %v1882
  %1884 = vmatmul.f32.gmra.mxu0 %v1369
  %v1885 = vpop.f32.mrf.mxu0
  %v1886 = vadd.f32 0.0, %v1885
  %1887 = vmatmul.f32.gmra.mxu0 %v1371
  %v1888 = vpop.f32.mrf.mxu0
  %v1889 = vadd.f32 0.0, %v1888
  %1890 = vmatmul.f32.gmra.mxu0 %v1373
  %v1891 = vpop.f32.mrf.mxu0
  %v1892 = vadd.f32 0.0, %v1891
  %1893 = vmatmul.f32.gmra.mxu0 %v1375
  %v1894 = vpop.f32.mrf.mxu0
  %v1895 = vadd.f32 0.0, %v1894
  %1896 = vmatmul.f32.gmra.mxu0 %v1377
  %v1897 = vpop.f32.mrf.mxu0
  %v1898 = vadd.f32 0.0, %v1897
  %1899 = vmatmul.f32.gmra.mxu0 %v1379
  %v1900 = vpop.f32.mrf.mxu0
  %v1901 = vadd.f32 0.0, %v1900
  %1902 = vmatmul.f32.gmra.mxu0 %v1381
  %v1903 = vpop.f32.mrf.mxu0
  %v1904 = vadd.f32 0.0, %v1903
  %1905 = vmatmul.f32.gmra.mxu0 %v1383
  %v1906 = vpop.f32.mrf.mxu0
  %v1907 = vadd.f32 0.0, %v1906
  %1908 = vmatmul.f32.gmra.mxu0 %v1385
  %v1909 = vpop.f32.mrf.mxu0
  %v1910 = vadd.f32 0.0, %v1909
  %1911 = vmatmul.f32.gmra.mxu0 %v1387
  %v1912 = vpop.f32.mrf.mxu0
  %v1913 = vadd.f32 0.0, %v1912
  %1914 = vmatmul.f32.gmra.mxu0 %v1389
  %v1915 = vpop.f32.mrf.mxu0
  %v1916 = vadd.f32 0.0, %v1915
  %1917 = vmatmul.f32.gmra.mxu0 %v1391
  %v1918 = vpop.f32.mrf.mxu0
  %v1919 = vadd.f32 0.0, %v1918
  %1920 = vmatmul.f32.gmra.mxu0 %v1393
  %v1921 = vpop.f32.mrf.mxu0
  %v1922 = vadd.f32 0.0, %v1921
  %1923 = vmatmul.f32.gmra.mxu0 %v1395
  %v1924 = vpop.f32.mrf.mxu0
  %v1925 = vadd.f32 0.0, %v1924
  %1926 = vmatmul.f32.gmra.mxu0 %v1397
  %v1927 = vpop.f32.mrf.mxu0
  %v1928 = vadd.f32 0.0, %v1927
  %1929 = vmatmul.f32.gmra.mxu0 %v1399
  %v1930 = vpop.f32.mrf.mxu0
  %v1931 = vadd.f32 0.0, %v1930
  %1932 = vmatmul.f32.gmra.mxu0 %v1401
  %v1933 = vpop.f32.mrf.mxu0
  %v1934 = vadd.f32 0.0, %v1933
  %1935 = vmatmul.f32.gmra.mxu0 %v1403
  %v1936 = vpop.f32.mrf.mxu0
  %v1937 = vadd.f32 0.0, %v1936
  %1938 = vmatmul.f32.gmra.mxu0 %v1405
  %v1939 = vpop.f32.mrf.mxu0
  %v1940 = vadd.f32 0.0, %v1939
  %1941 = vmatmul.f32.gmra.mxu0 %v1407
  %v1942 = vpop.f32.mrf.mxu0
  %v1943 = vadd.f32 0.0, %v1942
  %1944 = vmatmul.f32.gmra.mxu0 %v1409
  %v1945 = vpop.f32.mrf.mxu0
  %v1946 = vadd.f32 0.0, %v1945
  %1947 = vmatmul.f32.gmra.mxu0 %v1411
  %v1948 = vpop.f32.mrf.mxu0
  %v1949 = vadd.f32 0.0, %v1948
  %1950 = vmatmul.f32.gmra.mxu0 %v1413
  %v1951 = vpop.f32.mrf.mxu0
  %v1952 = vadd.f32 0.0, %v1951
  %1953 = vmatmul.f32.gmra.mxu0 %v1415
  %v1954 = vpop.f32.mrf.mxu0
  %v1955 = vadd.f32 0.0, %v1954
  %1956 = vmatmul.f32.gmra.mxu0 %v1417
  %v1957 = vpop.f32.mrf.mxu0
  %v1958 = vadd.f32 0.0, %v1957
  %1959 = vmatmul.f32.gmra.mxu0 %v1419
  %v1960 = vpop.f32.mrf.mxu0
  %v1961 = vadd.f32 0.0, %v1960
  %1962 = vmatmul.f32.gmra.mxu0 %v1421
  %v1963 = vpop.f32.mrf.mxu0
  %v1964 = vadd.f32 0.0, %v1963
  %1965 = vmatmul.f32.gmra.mxu0 %v1423
  %v1966 = vpop.f32.mrf.mxu0
  %v1967 = vadd.f32 0.0, %v1966
  %1968 = vmatmul.f32.gmra.mxu0 %v1425
  %v1969 = vpop.f32.mrf.mxu0
  %v1970 = vadd.f32 0.0, %v1969
  %1971 = vmatmul.f32.gmra.mxu0 %v1427
  %v1972 = vpop.f32.mrf.mxu0
  %v1973 = vadd.f32 0.0, %v1972
  %1974 = vmatmul.f32.gmra.mxu0 %v1429
  %v1975 = vpop.f32.mrf.mxu0
  %v1976 = vadd.f32 0.0, %v1975
  %1977 = vmatmul.f32.gmra.mxu0 %v1431
  %v1978 = vpop.f32.mrf.mxu0
  %v1979 = vadd.f32 0.0, %v1978
  %1980 = vmatmul.f32.gmra.mxu0 %v1433
  %v1981 = vpop.f32.mrf.mxu0
  %v1982 = vadd.f32 0.0, %v1981
  %1983 = vmatmul.f32.gmra.mxu0 %v1435
  %v1984 = vpop.f32.mrf.mxu0
  %v1985 = vadd.f32 0.0, %v1984
  %1986 = vmatmul.f32.gmra.mxu0 %v1437
  %v1987 = vpop.f32.mrf.mxu0
  %v1988 = vadd.f32 0.0, %v1987
  %1989 = vmatmul.f32.gmra.mxu0 %v1439
  %v1990 = vpop.f32.mrf.mxu0
  %v1991 = vadd.f32 0.0, %v1990
  %1992 = vmatmul.f32.gmra.mxu0 %v1441
  %v1993 = vpop.f32.mrf.mxu0
  %v1994 = vadd.f32 0.0, %v1993
  %1995 = vmatmul.f32.gmra.mxu0 %v1443
  %v1996 = vpop.f32.mrf.mxu0
  %v1997 = vadd.f32 0.0, %v1996
  %1998 = vmatmul.f32.gmra.mxu0 %v1445
  %v1999 = vpop.f32.mrf.mxu0
  %v2000 = vadd.f32 0.0, %v1999
  %2001 = vmatmul.f32.gmra.mxu0 %v1447
  %v2002 = vpop.f32.mrf.mxu0
  %v2003 = vadd.f32 0.0, %v2002
  %2004 = vmatmul.f32.gmra.mxu0 %v1449
  %v2005 = vpop.f32.mrf.mxu0
  %v2006 = vadd.f32 0.0, %v2005
  %2007 = vmatmul.f32.gmra.mxu0 %v1451
  %v2008 = vpop.f32.mrf.mxu0
  %v2009 = vadd.f32 0.0, %v2008
  %2010 = vmatmul.f32.gmra.mxu0 %v1453
  %v2011 = vpop.f32.mrf.mxu0
  %v2012 = vadd.f32 0.0, %v2011
  %2013 = vmatmul.f32.gmra.mxu0 %v1455
  %v2014 = vpop.f32.mrf.mxu0
  %v2015 = vadd.f32 0.0, %v2014
  %2016 = vmatmul.f32.gmra.mxu0 %v1457
  %v2017 = vpop.f32.mrf.mxu0
  %v2018 = vadd.f32 0.0, %v2017
  %2019 = vmatmul.f32.gmra.mxu0 %v1459
  %v2020 = vpop.f32.mrf.mxu0
  %v2021 = vadd.f32 0.0, %v2020
  %2022 = vmatmul.f32.gmra.mxu0 %v1461
  %v2023 = vpop.f32.mrf.mxu0
  %v2024 = vadd.f32 0.0, %v2023
  %2025 = vmatmul.f32.gmra.mxu0 %v1463
  %v2026 = vpop.f32.mrf.mxu0
  %v2027 = vadd.f32 0.0, %v2026
  %2028 = vmatmul.f32.gmra.mxu0 %v1465
  %v2029 = vpop.f32.mrf.mxu0
  %v2030 = vadd.f32 0.0, %v2029
  %2031 = vmatmul.f32.gmra.mxu0 %v1467
  %v2032 = vpop.f32.mrf.mxu0
  %v2033 = vadd.f32 0.0, %v2032
  %2034 = vmatmul.f32.gmra.mxu0 %v1469
  %v2035 = vpop.f32.mrf.mxu0
  %v2036 = vadd.f32 0.0, %v2035
  %2037 = vmatmul.f32.gmra.mxu0 %v1471
  %v2038 = vpop.f32.mrf.mxu0
  %v2039 = vadd.f32 0.0, %v2038
  %2040 = vmatmul.f32.gmra.mxu0 %v1473
  %v2041 = vpop.f32.mrf.mxu0
  %v2042 = vadd.f32 0.0, %v2041
  %2043 = vmatmul.f32.gmra.mxu0 %v1475
  %v2044 = vpop.f32.mrf.mxu0
  %v2045 = vadd.f32 0.0, %v2044
  %2046 = vmatmul.f32.gmra.mxu0 %v1477
  %v2047 = vpop.f32.mrf.mxu0
  %v2048 = vadd.f32 0.0, %v2047
  %2049 = vmatmul.f32.gmra.mxu0 %v1479
  %v2050 = vpop.f32.mrf.mxu0
  %v2051 = vadd.f32 0.0, %v2050
  %2052 = vmatmul.f32.gmra.mxu0 %v1481
  %v2053 = vpop.f32.mrf.mxu0
  %v2054 = vadd.f32 0.0, %v2053
  %2055 = vmatmul.f32.gmra.mxu0 %v1483
  %v2056 = vpop.f32.mrf.mxu0
  %v2057 = vadd.f32 0.0, %v2056
  %2058 = vmatmul.f32.gmra.mxu0 %v1485
  %v2059 = vpop.f32.mrf.mxu0
  %v2060 = vadd.f32 0.0, %v2059
  %2061 = vmatmul.f32.gmra.mxu0 %v1487
  %v2062 = vpop.f32.mrf.mxu0
  %v2063 = vadd.f32 0.0, %v2062
  %2064 = vmatmul.f32.gmra.mxu0 %v1489
  %v2065 = vpop.f32.mrf.mxu0
  %v2066 = vadd.f32 0.0, %v2065
  %2067 = vmatmul.f32.gmra.mxu0 %v1491
  %v2068 = vpop.f32.mrf.mxu0
  %v2069 = vadd.f32 0.0, %v2068
  %2070 = vmatmul.f32.gmra.mxu0 %v1826
  %v2071 = vpop.f32.mrf.mxu0
  %v2072 = vadd.f32 0.0, %v2071
  %2073 = vmatmul.f32.gmra.mxu0 %v1828
  %v2074 = vpop.f32.mrf.mxu0
  %v2075 = vadd.f32 0.0, %v2074
  %2076 = vmatmul.f32.gmra.mxu0 %v1830
  %v2077 = vpop.f32.mrf.mxu0
  %v2078 = vadd.f32 0.0, %v2077
  %2079 = vdwg.mxu0
  %v2080 = vadd.f32 %v1743, %v1850
  %v2081 = vadd.f32 %v1744, %v1853
  %v2082 = vadd.f32 %v1745, %v1856
  %v2083 = vadd.f32 %v1746, %v1859
  %v2084 = vadd.f32 %v1747, %v1862
  %v2085 = vadd.f32 %v1748, %v1865
  %v2086 = vadd.f32 %v1749, %v1868
  %v2087 = vadd.f32 %v1750, %v1871
  %v2088 = vadd.f32 %v1751, %v1874
  %v2089 = vadd.f32 %v1752, %v1877
  %v2090 = vadd.f32 %v1753, %v1880
  %v2091 = vadd.f32 %v1754, %v1883
  %v2092 = vadd.f32 %v1755, %v1886
  %v2093 = vadd.f32 %v1756, %v1889
  %v2094 = vadd.f32 %v1757, %v1892
  %v2095 = vadd.f32 %v1758, %v1895
  %v2096 = vadd.f32 %v1759, %v1898
  %v2097 = vadd.f32 %v1760, %v1901
  %v2098 = vadd.f32 %v1761, %v1904
  %v2099 = vadd.f32 %v1762, %v1907
  %v2100 = vadd.f32 %v1763, %v1910
  %v2101 = vadd.f32 %v1764, %v1913
  %v2102 = vadd.f32 %v1765, %v1916
  %v2103 = vadd.f32 %v1766, %v1919
  %v2104 = vadd.f32 %v1767, %v1922
  %v2105 = vadd.f32 %v1768, %v1925
  %v2106 = vadd.f32 %v1769, %v1928
  %v2107 = vadd.f32 %v1770, %v1931
  %v2108 = vadd.f32 %v1771, %v1934
  %v2109 = vadd.f32 %v1772, %v1937
  %v2110 = vadd.f32 %v1773, %v1940
  %v2111 = vadd.f32 %v1774, %v1943
  %v2112 = vadd.f32 %v1775, %v1946
  %v2113 = vadd.f32 %v1776, %v1949
  %v2114 = vadd.f32 %v1777, %v1952
  %v2115 = vadd.f32 %v1778, %v1955
  %v2116 = vadd.f32 %v1779, %v1958
  %v2117 = vadd.f32 %v1780, %v1961
  %v2118 = vadd.f32 %v1781, %v1964
  %v2119 = vadd.f32 %v1782, %v1967
  %v2120 = vadd.f32 %v1783, %v1970
  %v2121 = vadd.f32 %v1784, %v1973
  %v2122 = vadd.f32 %v1785, %v1976
  %v2123 = vadd.f32 %v1786, %v1979
  %v2124 = vadd.f32 %v1787, %v1982
  %v2125 = vadd.f32 %v1788, %v1985
  %v2126 = vadd.f32 %v1789, %v1988
  %v2127 = vadd.f32 %v1790, %v1991
  %v2128 = vadd.f32 %v1791, %v1994
  %v2129 = vadd.f32 %v1792, %v1997
  %v2130 = vadd.f32 %v1793, %v2000
  %v2131 = vadd.f32 %v1794, %v2003
  %v2132 = vadd.f32 %v1795, %v2006
  %v2133 = vadd.f32 %v1796, %v2009
  %v2134 = vadd.f32 %v1797, %v2012
  %v2135 = vadd.f32 %v1798, %v2015
  %v2136 = vadd.f32 %v1799, %v2018
  %v2137 = vadd.f32 %v1800, %v2021
  %v2138 = vadd.f32 %v1801, %v2024
  %v2139 = vadd.f32 %v1802, %v2027
  %v2140 = vadd.f32 %v1803, %v2030
  %v2141 = vadd.f32 %v1804, %v2033
  %v2142 = vadd.f32 %v1805, %v2036
  %v2143 = vadd.f32 %v1806, %v2039
  %v2144 = vadd.f32 %v1807, %v2042
  %v2145 = vadd.f32 %v1808, %v2045
  %v2146 = vadd.f32 %v1809, %v2048
  %v2147 = vadd.f32 %v1810, %v2051
  %v2148 = vadd.f32 %v1811, %v2054
  %v2149 = vadd.f32 %v1812, %v2057
  %v2150 = vadd.f32 %v1813, %v2060
  %v2151 = vadd.f32 %v1814, %v2063
  %v2152 = vadd.f32 %v1815, %v2066
  %v2153 = vadd.f32 %v1816, %v2069
  %v2154 = vadd.f32 %v1817, %v2072
  %v2155 = vadd.f32 %v1818, %v2075
  %v2156 = vadd.f32 %v1819, %v2078
  %vm2157 = vcmask 1044480
  %v2158 = vrot.slane %v62, 3
  %v2159 = vrot.slane %v63, 3
  %v2160 = vsel %vm2157, %v2158, %v2159
  %v2161 = vrot.slane %v64, 3
  %v2162 = vsel %vm2157, %v2159, %v2161
  %v2163 = vrot.slane %v65, 3
  %v2164 = vsel %vm2157, %v2161, %v2163
  %v2165 = vrot.slane %v66, 3
  %v2166 = vsel %vm2157, %v2163, %v2165
  %v2167 = vrot.slane %v67, 3
  %v2168 = vsel %vm2157, %v2165, %v2167
  %v2169 = vrot.slane %v68, 3
  %v2170 = vsel %vm2157, %v2167, %v2169
  %v2171 = vrot.slane %v69, 3
  %v2172 = vsel %vm2157, %v2169, %v2171
  %v2173 = vrot.slane %v70, 3
  %v2174 = vsel %vm2157, %v2171, %v2173
  %v2175 = vrot.slane %v71, 3
  %v2176 = vsel %vm2157, %v2173, %v2175
  %v2177 = vrot.slane %v72, 3
  %v2178 = vsel %vm2157, %v2175, %v2177
  %v2179 = vrot.slane %v73, 3
  %v2180 = vsel %vm2157, %v2177, %v2179
  %v2181 = vrot.slane %v74, 3
  %v2182 = vsel %vm2157, %v2179, %v2181
  %v2183 = vrot.slane %v75, 3
  %v2184 = vsel %vm2157, %v2181, %v2183
  %v2185 = vrot.slane %v76, 3
  %v2186 = vsel %vm2157, %v2183, %v2185
  %v2187 = vrot.slane %v77, 3
  %v2188 = vsel %vm2157, %v2185, %v2187
  %v2189 = vrot.slane %v78, 3
  %v2190 = vsel %vm2157, %v2187, %v2189
  %v2191 = vrot.slane %v79, 3
  %v2192 = vsel %vm2157, %v2189, %v2191
  %v2193 = vrot.slane %v80, 3
  %v2194 = vsel %vm2157, %v2191, %v2193
  %v2195 = vrot.slane %v81, 3
  %v2196 = vsel %vm2157, %v2193, %v2195
  %v2197 = vrot.slane %v82, 3
  %v2198 = vsel %vm2157, %v2195, %v2197
  %v2199 = vrot.slane %v83, 3
  %v2200 = vsel %vm2157, %v2197, %v2199
  %v2201 = vrot.slane %v84, 3
  %v2202 = vsel %vm2157, %v2199, %v2201
  %v2203 = vrot.slane %v85, 3
  %v2204 = vsel %vm2157, %v2201, %v2203
  %v2205 = vrot.slane %v86, 3
  %v2206 = vsel %vm2157, %v2203, %v2205
  %v2207 = vrot.slane %v87, 3
  %v2208 = vsel %vm2157, %v2205, %v2207
  %v2209 = vrot.slane %v88, 3
  %v2210 = vsel %vm2157, %v2207, %v2209
  %v2211 = vrot.slane %v89, 3
  %v2212 = vsel %vm2157, %v2209, %v2211
  %v2213 = vrot.slane %v90, 3
  %v2214 = vsel %vm2157, %v2211, %v2213
  %v2215 = vrot.slane %v91, 3
  %v2216 = vsel %vm2157, %v2213, %v2215
  %v2217 = vrot.slane %v92, 3
  %v2218 = vsel %vm2157, %v2215, %v2217
  %v2219 = vrot.slane %v93, 3
  %v2220 = vsel %vm2157, %v2217, %v2219
  %v2221 = vrot.slane %v94, 3
  %v2222 = vsel %vm2157, %v2219, %v2221
  %v2223 = vrot.slane %v95, 3
  %v2224 = vsel %vm2157, %v2221, %v2223
  %v2225 = vrot.slane %v96, 3
  %v2226 = vsel %vm2157, %v2223, %v2225
  %v2227 = vrot.slane %v97, 3
  %v2228 = vsel %vm2157, %v2225, %v2227
  %v2229 = vrot.slane %v98, 3
  %v2230 = vsel %vm2157, %v2227, %v2229
  %v2231 = vrot.slane %v99, 3
  %v2232 = vsel %vm2157, %v2229, %v2231
  %v2233 = vrot.slane %v100, 3
  %v2234 = vsel %vm2157, %v2231, %v2233
  %v2235 = vrot.slane %v101, 3
  %v2236 = vsel %vm2157, %v2233, %v2235
  %v2237 = vrot.slane %v102, 3
  %v2238 = vsel %vm2157, %v2235, %v2237
  %v2239 = vrot.slane %v103, 3
  %v2240 = vsel %vm2157, %v2237, %v2239
  %v2241 = vrot.slane %v104, 3
  %v2242 = vsel %vm2157, %v2239, %v2241
  %v2243 = vrot.slane %v105, 3
  %v2244 = vsel %vm2157, %v2241, %v2243
  %v2245 = vrot.slane %v106, 3
  %v2246 = vsel %vm2157, %v2243, %v2245
  %v2247 = vrot.slane %v107, 3
  %v2248 = vsel %vm2157, %v2245, %v2247
  %v2249 = vrot.slane %v108, 3
  %v2250 = vsel %vm2157, %v2247, %v2249
  %v2251 = vrot.slane %v109, 3
  %v2252 = vsel %vm2157, %v2249, %v2251
  %v2253 = vrot.slane %v110, 3
  %v2254 = vsel %vm2157, %v2251, %v2253
  %v2255 = vrot.slane %v111, 3
  %v2256 = vsel %vm2157, %v2253, %v2255
  %v2257 = vrot.slane %v112, 3
  %v2258 = vsel %vm2157, %v2255, %v2257
  %v2259 = vrot.slane %v113, 3
  %v2260 = vsel %vm2157, %v2257, %v2259
  %v2261 = vrot.slane %v114, 3
  %v2262 = vsel %vm2157, %v2259, %v2261
  %v2263 = vrot.slane %v115, 3
  %v2264 = vsel %vm2157, %v2261, %v2263
  %v2265 = vrot.slane %v116, 3
  %v2266 = vsel %vm2157, %v2263, %v2265
  %v2267 = vrot.slane %v117, 3
  %v2268 = vsel %vm2157, %v2265, %v2267
  %v2269 = vrot.slane %v118, 3
  %v2270 = vsel %vm2157, %v2267, %v2269
  %v2271 = vrot.slane %v119, 3
  %v2272 = vsel %vm2157, %v2269, %v2271
  %v2273 = vrot.slane %v120, 3
  %v2274 = vsel %vm2157, %v2271, %v2273
  %v2275 = vrot.slane %v121, 3
  %v2276 = vsel %vm2157, %v2273, %v2275
  %v2277 = vrot.slane %v122, 3
  %v2278 = vsel %vm2157, %v2275, %v2277
  %v2279 = vrot.slane %v123, 3
  %v2280 = vsel %vm2157, %v2277, %v2279
  %v2281 = vrot.slane %v124, 3
  %v2282 = vsel %vm2157, %v2279, %v2281
  %v2283 = vrot.slane %v125, 3
  %v2284 = vsel %vm2157, %v2281, %v2283
  %v2285 = vrot.slane %v126, 3
  %v2286 = vsel %vm2157, %v2283, %v2285
  %v2287 = vrot.slane %v127, 3
  %v2288 = vsel %vm2157, %v2285, %v2287
  %v2289 = vrot.slane %v128, 3
  %v2290 = vsel %vm2157, %v2287, %v2289
  %v2291 = vrot.slane %v129, 3
  %v2292 = vsel %vm2157, %v2289, %v2291
  %v2293 = vrot.slane %v130, 3
  %v2294 = vsel %vm2157, %v2291, %v2293
  %v2295 = vrot.slane %v131, 3
  %v2296 = vsel %vm2157, %v2293, %v2295
  %v2297 = vrot.slane %v132, 3
  %v2298 = vsel %vm2157, %v2295, %v2297
  %v2299 = vrot.slane %v133, 3
  %v2300 = vsel %vm2157, %v2297, %v2299
  %v2301 = vrot.slane %v134, 3
  %v2302 = vsel %vm2157, %v2299, %v2301
  %v2303 = vrot.slane %v135, 3
  %v2304 = vsel %vm2157, %v2301, %v2303
  %v2305 = vrot.slane %v136, 3
  %v2306 = vsel %vm2157, %v2303, %v2305
  %v2307 = vrot.slane %v137, 3
  %v2308 = vsel %vm2157, %v2305, %v2307
  %v2309 = vrot.slane %v138, 3
  %v2310 = vsel %vm2157, %v2307, %v2309
  %v2311 = vsel %vm382, %v2160, 0
  %v2313 = vsel %vm382, %v2162, 0
  %v2315 = vsel %vm382, %v2164, 0
  %v2317 = vsel %vm382, %v2166, 0
  %v2319 = vsel %vm382, %v2168, 0
  %v2321 = vsel %vm382, %v2170, 0
  %v2323 = vsel %vm382, %v2172, 0
  %v2325 = vsel %vm382, %v2174, 0
  %v2327 = vsel %vm382, %v2176, 0
  %v2329 = vsel %vm382, %v2178, 0
  %v2331 = vsel %vm382, %v2180, 0
  %v2333 = vsel %vm382, %v2182, 0
  %v2335 = vsel %vm382, %v2184, 0
  %v2337 = vsel %vm382, %v2186, 0
  %v2339 = vsel %vm382, %v2188, 0
  %v2341 = vsel %vm382, %v2190, 0
  %v2343 = vsel %vm382, %v2192, 0
  %v2345 = vsel %vm382, %v2194, 0
  %v2347 = vsel %vm382, %v2196, 0
  %v2349 = vsel %vm382, %v2198, 0
  %v2351 = vsel %vm382, %v2200, 0
  %v2353 = vsel %vm382, %v2202, 0
  %v2355 = vsel %vm382, %v2204, 0
  %v2357 = vsel %vm382, %v2206, 0
  %v2359 = vsel %vm382, %v2208, 0
  %v2361 = vsel %vm382, %v2210, 0
  %v2363 = vsel %vm382, %v2212, 0
  %v2365 = vsel %vm382, %v2214, 0
  %v2367 = vsel %vm382, %v2216, 0
  %v2369 = vsel %vm382, %v2218, 0
  %v2371 = vsel %vm382, %v2220, 0
  %v2373 = vsel %vm382, %v2222, 0
  %v2375 = vsel %vm382, %v2224, 0
  %v2377 = vsel %vm382, %v2226, 0
  %v2379 = vsel %vm382, %v2228, 0
  %v2381 = vsel %vm382, %v2230, 0
  %v2383 = vsel %vm382, %v2232, 0
  %v2385 = vsel %vm382, %v2234, 0
  %v2387 = vsel %vm382, %v2236, 0
  %v2389 = vsel %vm382, %v2238, 0
  %v2391 = vsel %vm382, %v2240, 0
  %v2393 = vsel %vm382, %v2242, 0
  %v2395 = vsel %vm382, %v2244, 0
  %v2397 = vsel %vm382, %v2246, 0
  %v2399 = vsel %vm382, %v2248, 0
  %v2401 = vsel %vm382, %v2250, 0
  %v2403 = vsel %vm382, %v2252, 0
  %v2405 = vsel %vm382, %v2254, 0
  %v2407 = vsel %vm382, %v2256, 0
  %v2409 = vsel %vm382, %v2258, 0
  %v2411 = vsel %vm382, %v2260, 0
  %v2413 = vsel %vm382, %v2262, 0
  %v2415 = vsel %vm382, %v2264, 0
  %v2417 = vsel %vm382, %v2266, 0
  %v2419 = vsel %vm382, %v2268, 0
  %v2421 = vsel %vm382, %v2270, 0
  %v2423 = vsel %vm382, %v2272, 0
  %v2425 = vsel %vm382, %v2274, 0
  %v2427 = vsel %vm382, %v2276, 0
  %v2429 = vsel %vm382, %v2278, 0
  %v2431 = vsel %vm382, %v2280, 0
  %v2433 = vsel %vm382, %v2282, 0
  %v2435 = vsel %vm382, %v2284, 0
  %v2437 = vsel %vm382, %v2286, 0
  %v2439 = vsel %vm382, %v2288, 0
  %v2441 = vsel %vm382, %v2290, 0
  %v2443 = vsel %vm382, %v2292, 0
  %v2445 = vsel %vm382, %v2294, 0
  %v2447 = vsel %vm382, %v2296, 0
  %v2449 = vsel %vm382, %v2298, 0
  %v2451 = vsel %vm382, %v2300, 0
  %v2453 = vsel %vm382, %v2302, 0
  %v2455 = vsel %vm382, %v2304, 0
  %v2457 = vsel %vm382, %v2306, 0
  %v2459 = vsel %vm382, %v2308, 0
  %v2461 = vsel %vm382, %v2310, 0
  %v2463 = vsel %vm382, %v2309, 0
  %2465 = vmatpush.msra.mxu0 0.0
  %2466 = vmatpush.msra.mxu0 0.0
  %2467 = vmatpush.msra.mxu0 0.0
  %2468 = vmatpush.msra.mxu0 0.0
  %2469 = vmatpush.msra.mxu0 0.0
  %2470 = vmatpush.msra.mxu0 0.0
  %2471 = vmatpush.msra.mxu0 0.0
  %2472 = vmatpush.msra.mxu0 0.0
  %2473 = vmatpush.msra.mxu0 0.0
  %2474 = vmatpush.msra.mxu0 0.0
  %2475 = vmatpush.msra.mxu0 0.0
  %2476 = vmatpush.msra.mxu0 0.0
  %2477 = vmatpush.msra.mxu0 0.0
  %2478 = vmatpush.msra.mxu0 0.0
  %2479 = vmatpush.msra.mxu0 0.0
  %2480 = vmatpush.msra.mxu0 %v145
  %2481 = vmatmul.f32.gmra.mxu0 %v2311
  %v2482 = vpop.f32.mrf.mxu0
  %v2483 = vadd.f32 0.0, %v2482
  %2484 = vmatmul.f32.gmra.mxu0 %v2313
  %v2485 = vpop.f32.mrf.mxu0
  %v2486 = vadd.f32 0.0, %v2485
  %2487 = vmatmul.f32.gmra.mxu0 %v2315
  %v2488 = vpop.f32.mrf.mxu0
  %v2489 = vadd.f32 0.0, %v2488
  %2490 = vmatmul.f32.gmra.mxu0 %v2317
  %v2491 = vpop.f32.mrf.mxu0
  %v2492 = vadd.f32 0.0, %v2491
  %2493 = vmatmul.f32.gmra.mxu0 %v2319
  %v2494 = vpop.f32.mrf.mxu0
  %v2495 = vadd.f32 0.0, %v2494
  %2496 = vmatmul.f32.gmra.mxu0 %v2321
  %v2497 = vpop.f32.mrf.mxu0
  %v2498 = vadd.f32 0.0, %v2497
  %2499 = vmatmul.f32.gmra.mxu0 %v2323
  %v2500 = vpop.f32.mrf.mxu0
  %v2501 = vadd.f32 0.0, %v2500
  %2502 = vmatmul.f32.gmra.mxu0 %v2325
  %v2503 = vpop.f32.mrf.mxu0
  %v2504 = vadd.f32 0.0, %v2503
  %2505 = vmatmul.f32.gmra.mxu0 %v2327
  %v2506 = vpop.f32.mrf.mxu0
  %v2507 = vadd.f32 0.0, %v2506
  %2508 = vmatmul.f32.gmra.mxu0 %v2329
  %v2509 = vpop.f32.mrf.mxu0
  %v2510 = vadd.f32 0.0, %v2509
  %2511 = vmatmul.f32.gmra.mxu0 %v2331
  %v2512 = vpop.f32.mrf.mxu0
  %v2513 = vadd.f32 0.0, %v2512
  %2514 = vmatmul.f32.gmra.mxu0 %v2333
  %v2515 = vpop.f32.mrf.mxu0
  %v2516 = vadd.f32 0.0, %v2515
  %2517 = vmatmul.f32.gmra.mxu0 %v2335
  %v2518 = vpop.f32.mrf.mxu0
  %v2519 = vadd.f32 0.0, %v2518
  %2520 = vmatmul.f32.gmra.mxu0 %v2337
  %v2521 = vpop.f32.mrf.mxu0
  %v2522 = vadd.f32 0.0, %v2521
  %2523 = vmatmul.f32.gmra.mxu0 %v2339
  %v2524 = vpop.f32.mrf.mxu0
  %v2525 = vadd.f32 0.0, %v2524
  %2526 = vmatmul.f32.gmra.mxu0 %v2341
  %v2527 = vpop.f32.mrf.mxu0
  %v2528 = vadd.f32 0.0, %v2527
  %2529 = vmatmul.f32.gmra.mxu0 %v2343
  %v2530 = vpop.f32.mrf.mxu0
  %v2531 = vadd.f32 0.0, %v2530
  %2532 = vmatmul.f32.gmra.mxu0 %v2345
  %v2533 = vpop.f32.mrf.mxu0
  %v2534 = vadd.f32 0.0, %v2533
  %2535 = vmatmul.f32.gmra.mxu0 %v2347
  %v2536 = vpop.f32.mrf.mxu0
  %v2537 = vadd.f32 0.0, %v2536
  %2538 = vmatmul.f32.gmra.mxu0 %v2349
  %v2539 = vpop.f32.mrf.mxu0
  %v2540 = vadd.f32 0.0, %v2539
  %2541 = vmatmul.f32.gmra.mxu0 %v2351
  %v2542 = vpop.f32.mrf.mxu0
  %v2543 = vadd.f32 0.0, %v2542
  %2544 = vmatmul.f32.gmra.mxu0 %v2353
  %v2545 = vpop.f32.mrf.mxu0
  %v2546 = vadd.f32 0.0, %v2545
  %2547 = vmatmul.f32.gmra.mxu0 %v2355
  %v2548 = vpop.f32.mrf.mxu0
  %v2549 = vadd.f32 0.0, %v2548
  %2550 = vmatmul.f32.gmra.mxu0 %v2357
  %v2551 = vpop.f32.mrf.mxu0
  %v2552 = vadd.f32 0.0, %v2551
  %2553 = vmatmul.f32.gmra.mxu0 %v2359
  %v2554 = vpop.f32.mrf.mxu0
  %v2555 = vadd.f32 0.0, %v2554
  %2556 = vmatmul.f32.gmra.mxu0 %v2361
  %v2557 = vpop.f32.mrf.mxu0
  %v2558 = vadd.f32 0.0, %v2557
  %2559 = vmatmul.f32.gmra.mxu0 %v2363
  %v2560 = vpop.f32.mrf.mxu0
  %v2561 = vadd.f32 0.0, %v2560
  %2562 = vmatmul.f32.gmra.mxu0 %v2365
  %v2563 = vpop.f32.mrf.mxu0
  %v2564 = vadd.f32 0.0, %v2563
  %2565 = vmatmul.f32.gmra.mxu0 %v2367
  %v2566 = vpop.f32.mrf.mxu0
  %v2567 = vadd.f32 0.0, %v2566
  %2568 = vmatmul.f32.gmra.mxu0 %v2369
  %v2569 = vpop.f32.mrf.mxu0
  %v2570 = vadd.f32 0.0, %v2569
  %2571 = vmatmul.f32.gmra.mxu0 %v2371
  %v2572 = vpop.f32.mrf.mxu0
  %v2573 = vadd.f32 0.0, %v2572
  %2574 = vmatmul.f32.gmra.mxu0 %v2373
  %v2575 = vpop.f32.mrf.mxu0
  %v2576 = vadd.f32 0.0, %v2575
  %2577 = vmatmul.f32.gmra.mxu0 %v2375
  %v2578 = vpop.f32.mrf.mxu0
  %v2579 = vadd.f32 0.0, %v2578
  %2580 = vmatmul.f32.gmra.mxu0 %v2377
  %v2581 = vpop.f32.mrf.mxu0
  %v2582 = vadd.f32 0.0, %v2581
  %2583 = vmatmul.f32.gmra.mxu0 %v2379
  %v2584 = vpop.f32.mrf.mxu0
  %v2585 = vadd.f32 0.0, %v2584
  %2586 = vmatmul.f32.gmra.mxu0 %v2381
  %v2587 = vpop.f32.mrf.mxu0
  %v2588 = vadd.f32 0.0, %v2587
  %2589 = vmatmul.f32.gmra.mxu0 %v2383
  %v2590 = vpop.f32.mrf.mxu0
  %v2591 = vadd.f32 0.0, %v2590
  %2592 = vmatmul.f32.gmra.mxu0 %v2385
  %v2593 = vpop.f32.mrf.mxu0
  %v2594 = vadd.f32 0.0, %v2593
  %2595 = vmatmul.f32.gmra.mxu0 %v2387
  %v2596 = vpop.f32.mrf.mxu0
  %v2597 = vadd.f32 0.0, %v2596
  %2598 = vmatmul.f32.gmra.mxu0 %v2389
  %v2599 = vpop.f32.mrf.mxu0
  %v2600 = vadd.f32 0.0, %v2599
  %2601 = vmatmul.f32.gmra.mxu0 %v2391
  %v2602 = vpop.f32.mrf.mxu0
  %v2603 = vadd.f32 0.0, %v2602
  %2604 = vmatmul.f32.gmra.mxu0 %v2393
  %v2605 = vpop.f32.mrf.mxu0
  %v2606 = vadd.f32 0.0, %v2605
  %2607 = vmatmul.f32.gmra.mxu0 %v2395
  %v2608 = vpop.f32.mrf.mxu0
  %v2609 = vadd.f32 0.0, %v2608
  %2610 = vmatmul.f32.gmra.mxu0 %v2397
  %v2611 = vpop.f32.mrf.mxu0
  %v2612 = vadd.f32 0.0, %v2611
  %2613 = vmatmul.f32.gmra.mxu0 %v2399
  %v2614 = vpop.f32.mrf.mxu0
  %v2615 = vadd.f32 0.0, %v2614
  %2616 = vmatmul.f32.gmra.mxu0 %v2401
  %v2617 = vpop.f32.mrf.mxu0
  %v2618 = vadd.f32 0.0, %v2617
  %2619 = vmatmul.f32.gmra.mxu0 %v2403
  %v2620 = vpop.f32.mrf.mxu0
  %v2621 = vadd.f32 0.0, %v2620
  %2622 = vmatmul.f32.gmra.mxu0 %v2405
  %v2623 = vpop.f32.mrf.mxu0
  %v2624 = vadd.f32 0.0, %v2623
  %2625 = vmatmul.f32.gmra.mxu0 %v2407
  %v2626 = vpop.f32.mrf.mxu0
  %v2627 = vadd.f32 0.0, %v2626
  %2628 = vmatmul.f32.gmra.mxu0 %v2409
  %v2629 = vpop.f32.mrf.mxu0
  %v2630 = vadd.f32 0.0, %v2629
  %2631 = vmatmul.f32.gmra.mxu0 %v2411
  %v2632 = vpop.f32.mrf.mxu0
  %v2633 = vadd.f32 0.0, %v2632
  %2634 = vmatmul.f32.gmra.mxu0 %v2413
  %v2635 = vpop.f32.mrf.mxu0
  %v2636 = vadd.f32 0.0, %v2635
  %2637 = vmatmul.f32.gmra.mxu0 %v2415
  %v2638 = vpop.f32.mrf.mxu0
  %v2639 = vadd.f32 0.0, %v2638
  %2640 = vmatmul.f32.gmra.mxu0 %v2417
  %v2641 = vpop.f32.mrf.mxu0
  %v2642 = vadd.f32 0.0, %v2641
  %2643 = vmatmul.f32.gmra.mxu0 %v2419
  %v2644 = vpop.f32.mrf.mxu0
  %v2645 = vadd.f32 0.0, %v2644
  %2646 = vmatmul.f32.gmra.mxu0 %v2421
  %v2647 = vpop.f32.mrf.mxu0
  %v2648 = vadd.f32 0.0, %v2647
  %2649 = vmatmul.f32.gmra.mxu0 %v2423
  %v2650 = vpop.f32.mrf.mxu0
  %v2651 = vadd.f32 0.0, %v2650
  %2652 = vmatmul.f32.gmra.mxu0 %v2425
  %v2653 = vpop.f32.mrf.mxu0
  %v2654 = vadd.f32 0.0, %v2653
  %2655 = vmatmul.f32.gmra.mxu0 %v2427
  %v2656 = vpop.f32.mrf.mxu0
  %v2657 = vadd.f32 0.0, %v2656
  %2658 = vmatmul.f32.gmra.mxu0 %v2429
  %v2659 = vpop.f32.mrf.mxu0
  %v2660 = vadd.f32 0.0, %v2659
  %2661 = vmatmul.f32.gmra.mxu0 %v2431
  %v2662 = vpop.f32.mrf.mxu0
  %v2663 = vadd.f32 0.0, %v2662
  %2664 = vmatmul.f32.gmra.mxu0 %v2433
  %v2665 = vpop.f32.mrf.mxu0
  %v2666 = vadd.f32 0.0, %v2665
  %2667 = vmatmul.f32.gmra.mxu0 %v2435
  %v2668 = vpop.f32.mrf.mxu0
  %v2669 = vadd.f32 0.0, %v2668
  %2670 = vmatmul.f32.gmra.mxu0 %v2437
  %v2671 = vpop.f32.mrf.mxu0
  %v2672 = vadd.f32 0.0, %v2671
  %2673 = vmatmul.f32.gmra.mxu0 %v2439
  %v2674 = vpop.f32.mrf.mxu0
  %v2675 = vadd.f32 0.0, %v2674
  %2676 = vmatmul.f32.gmra.mxu0 %v2441
  %v2677 = vpop.f32.mrf.mxu0
  %v2678 = vadd.f32 0.0, %v2677
  %2679 = vmatmul.f32.gmra.mxu0 %v2443
  %v2680 = vpop.f32.mrf.mxu0
  %v2681 = vadd.f32 0.0, %v2680
  %2682 = vmatmul.f32.gmra.mxu0 %v2445
  %v2683 = vpop.f32.mrf.mxu0
  %v2684 = vadd.f32 0.0, %v2683
  %2685 = vmatmul.f32.gmra.mxu0 %v2447
  %v2686 = vpop.f32.mrf.mxu0
  %v2687 = vadd.f32 0.0, %v2686
  %2688 = vmatmul.f32.gmra.mxu0 %v2449
  %v2689 = vpop.f32.mrf.mxu0
  %v2690 = vadd.f32 0.0, %v2689
  %2691 = vmatmul.f32.gmra.mxu0 %v2451
  %v2692 = vpop.f32.mrf.mxu0
  %v2693 = vadd.f32 0.0, %v2692
  %2694 = vmatmul.f32.gmra.mxu0 %v2453
  %v2695 = vpop.f32.mrf.mxu0
  %v2696 = vadd.f32 0.0, %v2695
  %2697 = vmatmul.f32.gmra.mxu0 %v2455
  %v2698 = vpop.f32.mrf.mxu0
  %v2699 = vadd.f32 0.0, %v2698
  %2700 = vmatmul.f32.gmra.mxu0 %v2457
  %v2701 = vpop.f32.mrf.mxu0
  %v2702 = vadd.f32 0.0, %v2701
  %2703 = vmatmul.f32.gmra.mxu0 %v2459
  %v2704 = vpop.f32.mrf.mxu0
  %v2705 = vadd.f32 0.0, %v2704
  %2706 = vmatmul.f32.gmra.mxu0 %v2461
  %v2707 = vpop.f32.mrf.mxu0
  %v2708 = vadd.f32 0.0, %v2707
  %2709 = vmatmul.f32.gmra.mxu0 %v2463
  %v2710 = vpop.f32.mrf.mxu0
  %v2711 = vadd.f32 0.0, %v2710
  %2712 = vdwg.mxu0
  %v2713 = vadd.f32 %v2080, %v2483
  %v2714 = vadd.f32 %v2081, %v2486
  %v2715 = vadd.f32 %v2082, %v2489
  %v2716 = vadd.f32 %v2083, %v2492
  %v2717 = vadd.f32 %v2084, %v2495
  %v2718 = vadd.f32 %v2085, %v2498
  %v2719 = vadd.f32 %v2086, %v2501
  %v2720 = vadd.f32 %v2087, %v2504
  %v2721 = vadd.f32 %v2088, %v2507
  %v2722 = vadd.f32 %v2089, %v2510
  %v2723 = vadd.f32 %v2090, %v2513
  %v2724 = vadd.f32 %v2091, %v2516
  %v2725 = vadd.f32 %v2092, %v2519
  %v2726 = vadd.f32 %v2093, %v2522
  %v2727 = vadd.f32 %v2094, %v2525
  %v2728 = vadd.f32 %v2095, %v2528
  %v2729 = vadd.f32 %v2096, %v2531
  %v2730 = vadd.f32 %v2097, %v2534
  %v2731 = vadd.f32 %v2098, %v2537
  %v2732 = vadd.f32 %v2099, %v2540
  %v2733 = vadd.f32 %v2100, %v2543
  %v2734 = vadd.f32 %v2101, %v2546
  %v2735 = vadd.f32 %v2102, %v2549
  %v2736 = vadd.f32 %v2103, %v2552
  %v2737 = vadd.f32 %v2104, %v2555
  %v2738 = vadd.f32 %v2105, %v2558
  %v2739 = vadd.f32 %v2106, %v2561
  %v2740 = vadd.f32 %v2107, %v2564
  %v2741 = vadd.f32 %v2108, %v2567
  %v2742 = vadd.f32 %v2109, %v2570
  %v2743 = vadd.f32 %v2110, %v2573
  %v2744 = vadd.f32 %v2111, %v2576
  %v2745 = vadd.f32 %v2112, %v2579
  %v2746 = vadd.f32 %v2113, %v2582
  %v2747 = vadd.f32 %v2114, %v2585
  %v2748 = vadd.f32 %v2115, %v2588
  %v2749 = vadd.f32 %v2116, %v2591
  %v2750 = vadd.f32 %v2117, %v2594
  %v2751 = vadd.f32 %v2118, %v2597
  %v2752 = vadd.f32 %v2119, %v2600
  %v2753 = vadd.f32 %v2120, %v2603
  %v2754 = vadd.f32 %v2121, %v2606
  %v2755 = vadd.f32 %v2122, %v2609
  %v2756 = vadd.f32 %v2123, %v2612
  %v2757 = vadd.f32 %v2124, %v2615
  %v2758 = vadd.f32 %v2125, %v2618
  %v2759 = vadd.f32 %v2126, %v2621
  %v2760 = vadd.f32 %v2127, %v2624
  %v2761 = vadd.f32 %v2128, %v2627
  %v2762 = vadd.f32 %v2129, %v2630
  %v2763 = vadd.f32 %v2130, %v2633
  %v2764 = vadd.f32 %v2131, %v2636
  %v2765 = vadd.f32 %v2132, %v2639
  %v2766 = vadd.f32 %v2133, %v2642
  %v2767 = vadd.f32 %v2134, %v2645
  %v2768 = vadd.f32 %v2135, %v2648
  %v2769 = vadd.f32 %v2136, %v2651
  %v2770 = vadd.f32 %v2137, %v2654
  %v2771 = vadd.f32 %v2138, %v2657
  %v2772 = vadd.f32 %v2139, %v2660
  %v2773 = vadd.f32 %v2140, %v2663
  %v2774 = vadd.f32 %v2141, %v2666
  %v2775 = vadd.f32 %v2142, %v2669
  %v2776 = vadd.f32 %v2143, %v2672
  %v2777 = vadd.f32 %v2144, %v2675
  %v2778 = vadd.f32 %v2145, %v2678
  %v2779 = vadd.f32 %v2146, %v2681
  %v2780 = vadd.f32 %v2147, %v2684
  %v2781 = vadd.f32 %v2148, %v2687
  %v2782 = vadd.f32 %v2149, %v2690
  %v2783 = vadd.f32 %v2150, %v2693
  %v2784 = vadd.f32 %v2151, %v2696
  %v2785 = vadd.f32 %v2152, %v2699
  %v2786 = vadd.f32 %v2153, %v2702
  %v2787 = vadd.f32 %v2154, %v2705
  %v2788 = vadd.f32 %v2155, %v2708
  %v2789 = vadd.f32 %v2156, %v2711
  %vm2790 = vcmask 1043456
  %v2791 = vrot.slane %v62, 4
  %v2792 = vrot.slane %v63, 4
  %v2793 = vsel %vm2790, %v2791, %v2792
  %v2794 = vrot.slane %v64, 4
  %v2795 = vsel %vm2790, %v2792, %v2794
  %v2796 = vrot.slane %v65, 4
  %v2797 = vsel %vm2790, %v2794, %v2796
  %v2798 = vrot.slane %v66, 4
  %v2799 = vsel %vm2790, %v2796, %v2798
  %v2800 = vrot.slane %v67, 4
  %v2801 = vsel %vm2790, %v2798, %v2800
  %v2802 = vrot.slane %v68, 4
  %v2803 = vsel %vm2790, %v2800, %v2802
  %v2804 = vrot.slane %v69, 4
  %v2805 = vsel %vm2790, %v2802, %v2804
  %v2806 = vrot.slane %v70, 4
  %v2807 = vsel %vm2790, %v2804, %v2806
  %v2808 = vrot.slane %v71, 4
  %v2809 = vsel %vm2790, %v2806, %v2808
  %v2810 = vrot.slane %v72, 4
  %v2811 = vsel %vm2790, %v2808, %v2810
  %v2812 = vrot.slane %v73, 4
  %v2813 = vsel %vm2790, %v2810, %v2812
  %v2814 = vrot.slane %v74, 4
  %v2815 = vsel %vm2790, %v2812, %v2814
  %v2816 = vrot.slane %v75, 4
  %v2817 = vsel %vm2790, %v2814, %v2816
  %v2818 = vrot.slane %v76, 4
  %v2819 = vsel %vm2790, %v2816, %v2818
  %v2820 = vrot.slane %v77, 4
  %v2821 = vsel %vm2790, %v2818, %v2820
  %v2822 = vrot.slane %v78, 4
  %v2823 = vsel %vm2790, %v2820, %v2822
  %v2824 = vrot.slane %v79, 4
  %v2825 = vsel %vm2790, %v2822, %v2824
  %v2826 = vrot.slane %v80, 4
  %v2827 = vsel %vm2790, %v2824, %v2826
  %v2828 = vrot.slane %v81, 4
  %v2829 = vsel %vm2790, %v2826, %v2828
  %v2830 = vrot.slane %v82, 4
  %v2831 = vsel %vm2790, %v2828, %v2830
  %v2832 = vrot.slane %v83, 4
  %v2833 = vsel %vm2790, %v2830, %v2832
  %v2834 = vrot.slane %v84, 4
  %v2835 = vsel %vm2790, %v2832, %v2834
  %v2836 = vrot.slane %v85, 4
  %v2837 = vsel %vm2790, %v2834, %v2836
  %v2838 = vrot.slane %v86, 4
  %v2839 = vsel %vm2790, %v2836, %v2838
  %v2840 = vrot.slane %v87, 4
  %v2841 = vsel %vm2790, %v2838, %v2840
  %v2842 = vrot.slane %v88, 4
  %v2843 = vsel %vm2790, %v2840, %v2842
  %v2844 = vrot.slane %v89, 4
  %v2845 = vsel %vm2790, %v2842, %v2844
  %v2846 = vrot.slane %v90, 4
  %v2847 = vsel %vm2790, %v2844, %v2846
  %v2848 = vrot.slane %v91, 4
  %v2849 = vsel %vm2790, %v2846, %v2848
  %v2850 = vrot.slane %v92, 4
  %v2851 = vsel %vm2790, %v2848, %v2850
  %v2852 = vrot.slane %v93, 4
  %v2853 = vsel %vm2790, %v2850, %v2852
  %v2854 = vrot.slane %v94, 4
  %v2855 = vsel %vm2790, %v2852, %v2854
  %v2856 = vrot.slane %v95, 4
  %v2857 = vsel %vm2790, %v2854, %v2856
  %v2858 = vrot.slane %v96, 4
  %v2859 = vsel %vm2790, %v2856, %v2858
  %v2860 = vrot.slane %v97, 4
  %v2861 = vsel %vm2790, %v2858, %v2860
  %v2862 = vrot.slane %v98, 4
  %v2863 = vsel %vm2790, %v2860, %v2862
  %v2864 = vrot.slane %v99, 4
  %v2865 = vsel %vm2790, %v2862, %v2864
  %v2866 = vrot.slane %v100, 4
  %v2867 = vsel %vm2790, %v2864, %v2866
  %v2868 = vrot.slane %v101, 4
  %v2869 = vsel %vm2790, %v2866, %v2868
  %v2870 = vrot.slane %v102, 4
  %v2871 = vsel %vm2790, %v2868, %v2870
  %v2872 = vrot.slane %v103, 4
  %v2873 = vsel %vm2790, %v2870, %v2872
  %v2874 = vrot.slane %v104, 4
  %v2875 = vsel %vm2790, %v2872, %v2874
  %v2876 = vrot.slane %v105, 4
  %v2877 = vsel %vm2790, %v2874, %v2876
  %v2878 = vrot.slane %v106, 4
  %v2879 = vsel %vm2790, %v2876, %v2878
  %v2880 = vrot.slane %v107, 4
  %v2881 = vsel %vm2790, %v2878, %v2880
  %v2882 = vrot.slane %v108, 4
  %v2883 = vsel %vm2790, %v2880, %v2882
  %v2884 = vrot.slane %v109, 4
  %v2885 = vsel %vm2790, %v2882, %v2884
  %v2886 = vrot.slane %v110, 4
  %v2887 = vsel %vm2790, %v2884, %v2886
  %v2888 = vrot.slane %v111, 4
  %v2889 = vsel %vm2790, %v2886, %v2888
  %v2890 = vrot.slane %v112, 4
  %v2891 = vsel %vm2790, %v2888, %v2890
  %v2892 = vrot.slane %v113, 4
  %v2893 = vsel %vm2790, %v2890, %v2892
  %v2894 = vrot.slane %v114, 4
  %v2895 = vsel %vm2790, %v2892, %v2894
  %v2896 = vrot.slane %v115, 4
  %v2897 = vsel %vm2790, %v2894, %v2896
  %v2898 = vrot.slane %v116, 4
  %v2899 = vsel %vm2790, %v2896, %v2898
  %v2900 = vrot.slane %v117, 4
  %v2901 = vsel %vm2790, %v2898, %v2900
  %v2902 = vrot.slane %v118, 4
  %v2903 = vsel %vm2790, %v2900, %v2902
  %v2904 = vrot.slane %v119, 4
  %v2905 = vsel %vm2790, %v2902, %v2904
  %v2906 = vrot.slane %v120, 4
  %v2907 = vsel %vm2790, %v2904, %v2906
  %v2908 = vrot.slane %v121, 4
  %v2909 = vsel %vm2790, %v2906, %v2908
  %v2910 = vrot.slane %v122, 4
  %v2911 = vsel %vm2790, %v2908, %v2910
  %v2912 = vrot.slane %v123, 4
  %v2913 = vsel %vm2790, %v2910, %v2912
  %v2914 = vrot.slane %v124, 4
  %v2915 = vsel %vm2790, %v2912, %v2914
  %v2916 = vrot.slane %v125, 4
  %v2917 = vsel %vm2790, %v2914, %v2916
  %v2918 = vrot.slane %v126, 4
  %v2919 = vsel %vm2790, %v2916, %v2918
  %v2920 = vrot.slane %v127, 4
  %v2921 = vsel %vm2790, %v2918, %v2920
  %v2922 = vrot.slane %v128, 4
  %v2923 = vsel %vm2790, %v2920, %v2922
  %v2924 = vrot.slane %v129, 4
  %v2925 = vsel %vm2790, %v2922, %v2924
  %v2926 = vrot.slane %v130, 4
  %v2927 = vsel %vm2790, %v2924, %v2926
  %v2928 = vrot.slane %v131, 4
  %v2929 = vsel %vm2790, %v2926, %v2928
  %v2930 = vrot.slane %v132, 4
  %v2931 = vsel %vm2790, %v2928, %v2930
  %v2932 = vrot.slane %v133, 4
  %v2933 = vsel %vm2790, %v2930, %v2932
  %v2934 = vrot.slane %v134, 4
  %v2935 = vsel %vm2790, %v2932, %v2934
  %v2936 = vrot.slane %v135, 4
  %v2937 = vsel %vm2790, %v2934, %v2936
  %v2938 = vrot.slane %v136, 4
  %v2939 = vsel %vm2790, %v2936, %v2938
  %v2940 = vrot.slane %v137, 4
  %v2941 = vsel %vm2790, %v2938, %v2940
  %v2942 = vrot.slane %v138, 4
  %v2943 = vsel %vm2790, %v2940, %v2942
  %v2944 = vsel %vm382, %v2793, 0
  %v2946 = vsel %vm382, %v2795, 0
  %v2948 = vsel %vm382, %v2797, 0
  %v2950 = vsel %vm382, %v2799, 0
  %v2952 = vsel %vm382, %v2801, 0
  %v2954 = vsel %vm382, %v2803, 0
  %v2956 = vsel %vm382, %v2805, 0
  %v2958 = vsel %vm382, %v2807, 0
  %v2960 = vsel %vm382, %v2809, 0
  %v2962 = vsel %vm382, %v2811, 0
  %v2964 = vsel %vm382, %v2813, 0
  %v2966 = vsel %vm382, %v2815, 0
  %v2968 = vsel %vm382, %v2817, 0
  %v2970 = vsel %vm382, %v2819, 0
  %v2972 = vsel %vm382, %v2821, 0
  %v2974 = vsel %vm382, %v2823, 0
  %v2976 = vsel %vm382, %v2825, 0
  %v2978 = vsel %vm382, %v2827, 0
  %v2980 = vsel %vm382, %v2829, 0
  %v2982 = vsel %vm382, %v2831, 0
  %v2984 = vsel %vm382, %v2833, 0
  %v2986 = vsel %vm382, %v2835, 0
  %v2988 = vsel %vm382, %v2837, 0
  %v2990 = vsel %vm382, %v2839, 0
  %v2992 = vsel %vm382, %v2841, 0
  %v2994 = vsel %vm382, %v2843, 0
  %v2996 = vsel %vm382, %v2845, 0
  %v2998 = vsel %vm382, %v2847, 0
  %v3000 = vsel %vm382, %v2849, 0
  %v3002 = vsel %vm382, %v2851, 0
  %v3004 = vsel %vm382, %v2853, 0
  %v3006 = vsel %vm382, %v2855, 0
  %v3008 = vsel %vm382, %v2857, 0
  %v3010 = vsel %vm382, %v2859, 0
  %v3012 = vsel %vm382, %v2861, 0
  %v3014 = vsel %vm382, %v2863, 0
  %v3016 = vsel %vm382, %v2865, 0
  %v3018 = vsel %vm382, %v2867, 0
  %v3020 = vsel %vm382, %v2869, 0
  %v3022 = vsel %vm382, %v2871, 0
  %v3024 = vsel %vm382, %v2873, 0
  %v3026 = vsel %vm382, %v2875, 0
  %v3028 = vsel %vm382, %v2877, 0
  %v3030 = vsel %vm382, %v2879, 0
  %v3032 = vsel %vm382, %v2881, 0
  %v3034 = vsel %vm382, %v2883, 0
  %v3036 = vsel %vm382, %v2885, 0
  %v3038 = vsel %vm382, %v2887, 0
  %v3040 = vsel %vm382, %v2889, 0
  %v3042 = vsel %vm382, %v2891, 0
  %v3044 = vsel %vm382, %v2893, 0
  %v3046 = vsel %vm382, %v2895, 0
  %v3048 = vsel %vm382, %v2897, 0
  %v3050 = vsel %vm382, %v2899, 0
  %v3052 = vsel %vm382, %v2901, 0
  %v3054 = vsel %vm382, %v2903, 0
  %v3056 = vsel %vm382, %v2905, 0
  %v3058 = vsel %vm382, %v2907, 0
  %v3060 = vsel %vm382, %v2909, 0
  %v3062 = vsel %vm382, %v2911, 0
  %v3064 = vsel %vm382, %v2913, 0
  %v3066 = vsel %vm382, %v2915, 0
  %v3068 = vsel %vm382, %v2917, 0
  %v3070 = vsel %vm382, %v2919, 0
  %v3072 = vsel %vm382, %v2921, 0
  %v3074 = vsel %vm382, %v2923, 0
  %v3076 = vsel %vm382, %v2925, 0
  %v3078 = vsel %vm382, %v2927, 0
  %v3080 = vsel %vm382, %v2929, 0
  %v3082 = vsel %vm382, %v2931, 0
  %v3084 = vsel %vm382, %v2933, 0
  %v3086 = vsel %vm382, %v2935, 0
  %v3088 = vsel %vm382, %v2937, 0
  %v3090 = vsel %vm382, %v2939, 0
  %v3092 = vsel %vm382, %v2941, 0
  %v3094 = vsel %vm382, %v2943, 0
  %v3096 = vsel %vm382, %v2942, 0
  %3098 = vmatpush.msra.mxu0 0.0
  %3099 = vmatpush.msra.mxu0 0.0
  %3100 = vmatpush.msra.mxu0 0.0
  %3101 = vmatpush.msra.mxu0 0.0
  %3102 = vmatpush.msra.mxu0 0.0
  %3103 = vmatpush.msra.mxu0 0.0
  %3104 = vmatpush.msra.mxu0 0.0
  %3105 = vmatpush.msra.mxu0 0.0
  %3106 = vmatpush.msra.mxu0 0.0
  %3107 = vmatpush.msra.mxu0 0.0
  %3108 = vmatpush.msra.mxu0 0.0
  %3109 = vmatpush.msra.mxu0 0.0
  %3110 = vmatpush.msra.mxu0 0.0
  %3111 = vmatpush.msra.mxu0 0.0
  %3112 = vmatpush.msra.mxu0 0.0
  %3113 = vmatpush.msra.mxu0 %v146
  %3114 = vmatmul.f32.gmra.mxu0 %v2944
  %v3115 = vpop.f32.mrf.mxu0
  %v3116 = vadd.f32 0.0, %v3115
  %3117 = vmatmul.f32.gmra.mxu0 %v2946
  %v3118 = vpop.f32.mrf.mxu0
  %v3119 = vadd.f32 0.0, %v3118
  %3120 = vmatmul.f32.gmra.mxu0 %v2948
  %v3121 = vpop.f32.mrf.mxu0
  %v3122 = vadd.f32 0.0, %v3121
  %3123 = vmatmul.f32.gmra.mxu0 %v2950
  %v3124 = vpop.f32.mrf.mxu0
  %v3125 = vadd.f32 0.0, %v3124
  %3126 = vmatmul.f32.gmra.mxu0 %v2952
  %v3127 = vpop.f32.mrf.mxu0
  %v3128 = vadd.f32 0.0, %v3127
  %3129 = vmatmul.f32.gmra.mxu0 %v2954
  %v3130 = vpop.f32.mrf.mxu0
  %v3131 = vadd.f32 0.0, %v3130
  %3132 = vmatmul.f32.gmra.mxu0 %v2956
  %v3133 = vpop.f32.mrf.mxu0
  %v3134 = vadd.f32 0.0, %v3133
  %3135 = vmatmul.f32.gmra.mxu0 %v2958
  %v3136 = vpop.f32.mrf.mxu0
  %v3137 = vadd.f32 0.0, %v3136
  %3138 = vmatmul.f32.gmra.mxu0 %v2960
  %v3139 = vpop.f32.mrf.mxu0
  %v3140 = vadd.f32 0.0, %v3139
  %3141 = vmatmul.f32.gmra.mxu0 %v2962
  %v3142 = vpop.f32.mrf.mxu0
  %v3143 = vadd.f32 0.0, %v3142
  %3144 = vmatmul.f32.gmra.mxu0 %v2964
  %v3145 = vpop.f32.mrf.mxu0
  %v3146 = vadd.f32 0.0, %v3145
  %3147 = vmatmul.f32.gmra.mxu0 %v2966
  %v3148 = vpop.f32.mrf.mxu0
  %v3149 = vadd.f32 0.0, %v3148
  %3150 = vmatmul.f32.gmra.mxu0 %v2968
  %v3151 = vpop.f32.mrf.mxu0
  %v3152 = vadd.f32 0.0, %v3151
  %3153 = vmatmul.f32.gmra.mxu0 %v2970
  %v3154 = vpop.f32.mrf.mxu0
  %v3155 = vadd.f32 0.0, %v3154
  %3156 = vmatmul.f32.gmra.mxu0 %v2972
  %v3157 = vpop.f32.mrf.mxu0
  %v3158 = vadd.f32 0.0, %v3157
  %3159 = vmatmul.f32.gmra.mxu0 %v2974
  %v3160 = vpop.f32.mrf.mxu0
  %v3161 = vadd.f32 0.0, %v3160
  %3162 = vmatmul.f32.gmra.mxu0 %v2976
  %v3163 = vpop.f32.mrf.mxu0
  %v3164 = vadd.f32 0.0, %v3163
  %3165 = vmatmul.f32.gmra.mxu0 %v2978
  %v3166 = vpop.f32.mrf.mxu0
  %v3167 = vadd.f32 0.0, %v3166
  %3168 = vmatmul.f32.gmra.mxu0 %v2980
  %v3169 = vpop.f32.mrf.mxu0
  %v3170 = vadd.f32 0.0, %v3169
  %3171 = vmatmul.f32.gmra.mxu0 %v2982
  %v3172 = vpop.f32.mrf.mxu0
  %v3173 = vadd.f32 0.0, %v3172
  %3174 = vmatmul.f32.gmra.mxu0 %v2984
  %v3175 = vpop.f32.mrf.mxu0
  %v3176 = vadd.f32 0.0, %v3175
  %3177 = vmatmul.f32.gmra.mxu0 %v2986
  %v3178 = vpop.f32.mrf.mxu0
  %v3179 = vadd.f32 0.0, %v3178
  %3180 = vmatmul.f32.gmra.mxu0 %v2988
  %v3181 = vpop.f32.mrf.mxu0
  %v3182 = vadd.f32 0.0, %v3181
  %3183 = vmatmul.f32.gmra.mxu0 %v2990
  %v3184 = vpop.f32.mrf.mxu0
  %v3185 = vadd.f32 0.0, %v3184
  %3186 = vmatmul.f32.gmra.mxu0 %v2992
  %v3187 = vpop.f32.mrf.mxu0
  %v3188 = vadd.f32 0.0, %v3187
  %3189 = vmatmul.f32.gmra.mxu0 %v2994
  %v3190 = vpop.f32.mrf.mxu0
  %v3191 = vadd.f32 0.0, %v3190
  %3192 = vmatmul.f32.gmra.mxu0 %v2996
  %v3193 = vpop.f32.mrf.mxu0
  %v3194 = vadd.f32 0.0, %v3193
  %3195 = vmatmul.f32.gmra.mxu0 %v2998
  %v3196 = vpop.f32.mrf.mxu0
  %v3197 = vadd.f32 0.0, %v3196
  %3198 = vmatmul.f32.gmra.mxu0 %v3000
  %v3199 = vpop.f32.mrf.mxu0
  %v3200 = vadd.f32 0.0, %v3199
  %3201 = vmatmul.f32.gmra.mxu0 %v3002
  %v3202 = vpop.f32.mrf.mxu0
  %v3203 = vadd.f32 0.0, %v3202
  %3204 = vmatmul.f32.gmra.mxu0 %v3004
  %v3205 = vpop.f32.mrf.mxu0
  %v3206 = vadd.f32 0.0, %v3205
  %3207 = vmatmul.f32.gmra.mxu0 %v3006
  %v3208 = vpop.f32.mrf.mxu0
  %v3209 = vadd.f32 0.0, %v3208
  %3210 = vmatmul.f32.gmra.mxu0 %v3008
  %v3211 = vpop.f32.mrf.mxu0
  %v3212 = vadd.f32 0.0, %v3211
  %3213 = vmatmul.f32.gmra.mxu0 %v3010
  %v3214 = vpop.f32.mrf.mxu0
  %v3215 = vadd.f32 0.0, %v3214
  %3216 = vmatmul.f32.gmra.mxu0 %v3012
  %v3217 = vpop.f32.mrf.mxu0
  %v3218 = vadd.f32 0.0, %v3217
  %3219 = vmatmul.f32.gmra.mxu0 %v3014
  %v3220 = vpop.f32.mrf.mxu0
  %v3221 = vadd.f32 0.0, %v3220
  %3222 = vmatmul.f32.gmra.mxu0 %v3016
  %v3223 = vpop.f32.mrf.mxu0
  %v3224 = vadd.f32 0.0, %v3223
  %3225 = vmatmul.f32.gmra.mxu0 %v3018
  %v3226 = vpop.f32.mrf.mxu0
  %v3227 = vadd.f32 0.0, %v3226
  %3228 = vmatmul.f32.gmra.mxu0 %v3020
  %v3229 = vpop.f32.mrf.mxu0
  %v3230 = vadd.f32 0.0, %v3229
  %3231 = vmatmul.f32.gmra.mxu0 %v3022
  %v3232 = vpop.f32.mrf.mxu0
  %v3233 = vadd.f32 0.0, %v3232
  %3234 = vmatmul.f32.gmra.mxu0 %v3024
  %v3235 = vpop.f32.mrf.mxu0
  %v3236 = vadd.f32 0.0, %v3235
  %3237 = vmatmul.f32.gmra.mxu0 %v3026
  %v3238 = vpop.f32.mrf.mxu0
  %v3239 = vadd.f32 0.0, %v3238
  %3240 = vmatmul.f32.gmra.mxu0 %v3028
  %v3241 = vpop.f32.mrf.mxu0
  %v3242 = vadd.f32 0.0, %v3241
  %3243 = vmatmul.f32.gmra.mxu0 %v3030
  %v3244 = vpop.f32.mrf.mxu0
  %v3245 = vadd.f32 0.0, %v3244
  %3246 = vmatmul.f32.gmra.mxu0 %v3032
  %v3247 = vpop.f32.mrf.mxu0
  %v3248 = vadd.f32 0.0, %v3247
  %3249 = vmatmul.f32.gmra.mxu0 %v3034
  %v3250 = vpop.f32.mrf.mxu0
  %v3251 = vadd.f32 0.0, %v3250
  %3252 = vmatmul.f32.gmra.mxu0 %v3036
  %v3253 = vpop.f32.mrf.mxu0
  %v3254 = vadd.f32 0.0, %v3253
  %3255 = vmatmul.f32.gmra.mxu0 %v3038
  %v3256 = vpop.f32.mrf.mxu0
  %v3257 = vadd.f32 0.0, %v3256
  %3258 = vmatmul.f32.gmra.mxu0 %v3040
  %v3259 = vpop.f32.mrf.mxu0
  %v3260 = vadd.f32 0.0, %v3259
  %3261 = vmatmul.f32.gmra.mxu0 %v3042
  %v3262 = vpop.f32.mrf.mxu0
  %v3263 = vadd.f32 0.0, %v3262
  %3264 = vmatmul.f32.gmra.mxu0 %v3044
  %v3265 = vpop.f32.mrf.mxu0
  %v3266 = vadd.f32 0.0, %v3265
  %3267 = vmatmul.f32.gmra.mxu0 %v3046
  %v3268 = vpop.f32.mrf.mxu0
  %v3269 = vadd.f32 0.0, %v3268
  %3270 = vmatmul.f32.gmra.mxu0 %v3048
  %v3271 = vpop.f32.mrf.mxu0
  %v3272 = vadd.f32 0.0, %v3271
  %3273 = vmatmul.f32.gmra.mxu0 %v3050
  %v3274 = vpop.f32.mrf.mxu0
  %v3275 = vadd.f32 0.0, %v3274
  %3276 = vmatmul.f32.gmra.mxu0 %v3052
  %v3277 = vpop.f32.mrf.mxu0
  %v3278 = vadd.f32 0.0, %v3277
  %3279 = vmatmul.f32.gmra.mxu0 %v3054
  %v3280 = vpop.f32.mrf.mxu0
  %v3281 = vadd.f32 0.0, %v3280
  %3282 = vmatmul.f32.gmra.mxu0 %v3056
  %v3283 = vpop.f32.mrf.mxu0
  %v3284 = vadd.f32 0.0, %v3283
  %3285 = vmatmul.f32.gmra.mxu0 %v3058
  %v3286 = vpop.f32.mrf.mxu0
  %v3287 = vadd.f32 0.0, %v3286
  %3288 = vmatmul.f32.gmra.mxu0 %v3060
  %v3289 = vpop.f32.mrf.mxu0
  %v3290 = vadd.f32 0.0, %v3289
  %3291 = vmatmul.f32.gmra.mxu0 %v3062
  %v3292 = vpop.f32.mrf.mxu0
  %v3293 = vadd.f32 0.0, %v3292
  %3294 = vmatmul.f32.gmra.mxu0 %v3064
  %v3295 = vpop.f32.mrf.mxu0
  %v3296 = vadd.f32 0.0, %v3295
  %3297 = vmatmul.f32.gmra.mxu0 %v3066
  %v3298 = vpop.f32.mrf.mxu0
  %v3299 = vadd.f32 0.0, %v3298
  %3300 = vmatmul.f32.gmra.mxu0 %v3068
  %v3301 = vpop.f32.mrf.mxu0
  %v3302 = vadd.f32 0.0, %v3301
  %3303 = vmatmul.f32.gmra.mxu0 %v3070
  %v3304 = vpop.f32.mrf.mxu0
  %v3305 = vadd.f32 0.0, %v3304
  %3306 = vmatmul.f32.gmra.mxu0 %v3072
  %v3307 = vpop.f32.mrf.mxu0
  %v3308 = vadd.f32 0.0, %v3307
  %3309 = vmatmul.f32.gmra.mxu0 %v3074
  %v3310 = vpop.f32.mrf.mxu0
  %v3311 = vadd.f32 0.0, %v3310
  %3312 = vmatmul.f32.gmra.mxu0 %v3076
  %v3313 = vpop.f32.mrf.mxu0
  %v3314 = vadd.f32 0.0, %v3313
  %3315 = vmatmul.f32.gmra.mxu0 %v3078
  %v3316 = vpop.f32.mrf.mxu0
  %v3317 = vadd.f32 0.0, %v3316
  %3318 = vmatmul.f32.gmra.mxu0 %v3080
  %v3319 = vpop.f32.mrf.mxu0
  %v3320 = vadd.f32 0.0, %v3319
  %3321 = vmatmul.f32.gmra.mxu0 %v3082
  %v3322 = vpop.f32.mrf.mxu0
  %v3323 = vadd.f32 0.0, %v3322
  %3324 = vmatmul.f32.gmra.mxu0 %v3084
  %v3325 = vpop.f32.mrf.mxu0
  %v3326 = vadd.f32 0.0, %v3325
  %3327 = vmatmul.f32.gmra.mxu0 %v3086
  %v3328 = vpop.f32.mrf.mxu0
  %v3329 = vadd.f32 0.0, %v3328
  %3330 = vmatmul.f32.gmra.mxu0 %v3088
  %v3331 = vpop.f32.mrf.mxu0
  %v3332 = vadd.f32 0.0, %v3331
  %3333 = vmatmul.f32.gmra.mxu0 %v3090
  %v3334 = vpop.f32.mrf.mxu0
  %v3335 = vadd.f32 0.0, %v3334
  %3336 = vmatmul.f32.gmra.mxu0 %v3092
  %v3337 = vpop.f32.mrf.mxu0
  %v3338 = vadd.f32 0.0, %v3337
  %3339 = vmatmul.f32.gmra.mxu0 %v3094
  %v3340 = vpop.f32.mrf.mxu0
  %v3341 = vadd.f32 0.0, %v3340
  %3342 = vmatmul.f32.gmra.mxu0 %v3096
  %v3343 = vpop.f32.mrf.mxu0
  %v3344 = vadd.f32 0.0, %v3343
  %3345 = vdwg.mxu0
  %v3346 = vadd.f32 %v2713, %v3116
  %v3347 = vadd.f32 %v2714, %v3119
  %v3348 = vadd.f32 %v2715, %v3122
  %v3349 = vadd.f32 %v2716, %v3125
  %v3350 = vadd.f32 %v2717, %v3128
  %v3351 = vadd.f32 %v2718, %v3131
  %v3352 = vadd.f32 %v2719, %v3134
  %v3353 = vadd.f32 %v2720, %v3137
  %v3354 = vadd.f32 %v2721, %v3140
  %v3355 = vadd.f32 %v2722, %v3143
  %v3356 = vadd.f32 %v2723, %v3146
  %v3357 = vadd.f32 %v2724, %v3149
  %v3358 = vadd.f32 %v2725, %v3152
  %v3359 = vadd.f32 %v2726, %v3155
  %v3360 = vadd.f32 %v2727, %v3158
  %v3361 = vadd.f32 %v2728, %v3161
  %v3362 = vadd.f32 %v2729, %v3164
  %v3363 = vadd.f32 %v2730, %v3167
  %v3364 = vadd.f32 %v2731, %v3170
  %v3365 = vadd.f32 %v2732, %v3173
  %v3366 = vadd.f32 %v2733, %v3176
  %v3367 = vadd.f32 %v2734, %v3179
  %v3368 = vadd.f32 %v2735, %v3182
  %v3369 = vadd.f32 %v2736, %v3185
  %v3370 = vadd.f32 %v2737, %v3188
  %v3371 = vadd.f32 %v2738, %v3191
  %v3372 = vadd.f32 %v2739, %v3194
  %v3373 = vadd.f32 %v2740, %v3197
  %v3374 = vadd.f32 %v2741, %v3200
  %v3375 = vadd.f32 %v2742, %v3203
  %v3376 = vadd.f32 %v2743, %v3206
  %v3377 = vadd.f32 %v2744, %v3209
  %v3378 = vadd.f32 %v2745, %v3212
  %v3379 = vadd.f32 %v2746, %v3215
  %v3380 = vadd.f32 %v2747, %v3218
  %v3381 = vadd.f32 %v2748, %v3221
  %v3382 = vadd.f32 %v2749, %v3224
  %v3383 = vadd.f32 %v2750, %v3227
  %v3384 = vadd.f32 %v2751, %v3230
  %v3385 = vadd.f32 %v2752, %v3233
  %v3386 = vadd.f32 %v2753, %v3236
  %v3387 = vadd.f32 %v2754, %v3239
  %v3388 = vadd.f32 %v2755, %v3242
  %v3389 = vadd.f32 %v2756, %v3245
  %v3390 = vadd.f32 %v2757, %v3248
  %v3391 = vadd.f32 %v2758, %v3251
  %v3392 = vadd.f32 %v2759, %v3254
  %v3393 = vadd.f32 %v2760, %v3257
  %v3394 = vadd.f32 %v2761, %v3260
  %v3395 = vadd.f32 %v2762, %v3263
  %v3396 = vadd.f32 %v2763, %v3266
  %v3397 = vadd.f32 %v2764, %v3269
  %v3398 = vadd.f32 %v2765, %v3272
  %v3399 = vadd.f32 %v2766, %v3275
  %v3400 = vadd.f32 %v2767, %v3278
  %v3401 = vadd.f32 %v2768, %v3281
  %v3402 = vadd.f32 %v2769, %v3284
  %v3403 = vadd.f32 %v2770, %v3287
  %v3404 = vadd.f32 %v2771, %v3290
  %v3405 = vadd.f32 %v2772, %v3293
  %v3406 = vadd.f32 %v2773, %v3296
  %v3407 = vadd.f32 %v2774, %v3299
  %v3408 = vadd.f32 %v2775, %v3302
  %v3409 = vadd.f32 %v2776, %v3305
  %v3410 = vadd.f32 %v2777, %v3308
  %v3411 = vadd.f32 %v2778, %v3311
  %v3412 = vadd.f32 %v2779, %v3314
  %v3413 = vadd.f32 %v2780, %v3317
  %v3414 = vadd.f32 %v2781, %v3320
  %v3415 = vadd.f32 %v2782, %v3323
  %v3416 = vadd.f32 %v2783, %v3326
  %v3417 = vadd.f32 %v2784, %v3329
  %v3418 = vadd.f32 %v2785, %v3332
  %v3419 = vadd.f32 %v2786, %v3335
  %v3420 = vadd.f32 %v2787, %v3338
  %v3421 = vadd.f32 %v2788, %v3341
  %v3422 = vadd.f32 %v2789, %v3344
  %v3425 = vrot.slane %v139, 4
  %v3426 = vsel %vm2790, %v2942, %v3425
  %v3427 = vrot.slane %v140, 4
  %v3428 = vsel %vm2790, %v3425, %v3427
  %v3429 = vsel %vm382, %v3426, 0
  %v3431 = vsel %vm382, %v3428, 0
  %v3433 = vsel %vm382, %v3427, 0
  %3435 = vmatpush.msra.mxu0 0.0
  %3436 = vmatpush.msra.mxu0 0.0
  %3437 = vmatpush.msra.mxu0 0.0
  %3438 = vmatpush.msra.mxu0 0.0
  %3439 = vmatpush.msra.mxu0 0.0
  %3440 = vmatpush.msra.mxu0 0.0
  %3441 = vmatpush.msra.mxu0 0.0
  %3442 = vmatpush.msra.mxu0 0.0
  %3443 = vmatpush.msra.mxu0 0.0
  %3444 = vmatpush.msra.mxu0 0.0
  %3445 = vmatpush.msra.mxu0 0.0
  %3446 = vmatpush.msra.mxu0 0.0
  %3447 = vmatpush.msra.mxu0 0.0
  %3448 = vmatpush.msra.mxu0 0.0
  %3449 = vmatpush.msra.mxu0 0.0
  %3450 = vmatpush.msra.mxu0 %v147
  %3451 = vmatmul.f32.gmra.mxu0 %v2948
  %v3452 = vpop.f32.mrf.mxu0
  %v3453 = vadd.f32 0.0, %v3452
  %3454 = vmatmul.f32.gmra.mxu0 %v2950
  %v3455 = vpop.f32.mrf.mxu0
  %v3456 = vadd.f32 0.0, %v3455
  %3457 = vmatmul.f32.gmra.mxu0 %v2952
  %v3458 = vpop.f32.mrf.mxu0
  %v3459 = vadd.f32 0.0, %v3458
  %3460 = vmatmul.f32.gmra.mxu0 %v2954
  %v3461 = vpop.f32.mrf.mxu0
  %v3462 = vadd.f32 0.0, %v3461
  %3463 = vmatmul.f32.gmra.mxu0 %v2956
  %v3464 = vpop.f32.mrf.mxu0
  %v3465 = vadd.f32 0.0, %v3464
  %3466 = vmatmul.f32.gmra.mxu0 %v2958
  %v3467 = vpop.f32.mrf.mxu0
  %v3468 = vadd.f32 0.0, %v3467
  %3469 = vmatmul.f32.gmra.mxu0 %v2960
  %v3470 = vpop.f32.mrf.mxu0
  %v3471 = vadd.f32 0.0, %v3470
  %3472 = vmatmul.f32.gmra.mxu0 %v2962
  %v3473 = vpop.f32.mrf.mxu0
  %v3474 = vadd.f32 0.0, %v3473
  %3475 = vmatmul.f32.gmra.mxu0 %v2964
  %v3476 = vpop.f32.mrf.mxu0
  %v3477 = vadd.f32 0.0, %v3476
  %3478 = vmatmul.f32.gmra.mxu0 %v2966
  %v3479 = vpop.f32.mrf.mxu0
  %v3480 = vadd.f32 0.0, %v3479
  %3481 = vmatmul.f32.gmra.mxu0 %v2968
  %v3482 = vpop.f32.mrf.mxu0
  %v3483 = vadd.f32 0.0, %v3482
  %3484 = vmatmul.f32.gmra.mxu0 %v2970
  %v3485 = vpop.f32.mrf.mxu0
  %v3486 = vadd.f32 0.0, %v3485
  %3487 = vmatmul.f32.gmra.mxu0 %v2972
  %v3488 = vpop.f32.mrf.mxu0
  %v3489 = vadd.f32 0.0, %v3488
  %3490 = vmatmul.f32.gmra.mxu0 %v2974
  %v3491 = vpop.f32.mrf.mxu0
  %v3492 = vadd.f32 0.0, %v3491
  %3493 = vmatmul.f32.gmra.mxu0 %v2976
  %v3494 = vpop.f32.mrf.mxu0
  %v3495 = vadd.f32 0.0, %v3494
  %3496 = vmatmul.f32.gmra.mxu0 %v2978
  %v3497 = vpop.f32.mrf.mxu0
  %v3498 = vadd.f32 0.0, %v3497
  %3499 = vmatmul.f32.gmra.mxu0 %v2980
  %v3500 = vpop.f32.mrf.mxu0
  %v3501 = vadd.f32 0.0, %v3500
  %3502 = vmatmul.f32.gmra.mxu0 %v2982
  %v3503 = vpop.f32.mrf.mxu0
  %v3504 = vadd.f32 0.0, %v3503
  %3505 = vmatmul.f32.gmra.mxu0 %v2984
  %v3506 = vpop.f32.mrf.mxu0
  %v3507 = vadd.f32 0.0, %v3506
  %3508 = vmatmul.f32.gmra.mxu0 %v2986
  %v3509 = vpop.f32.mrf.mxu0
  %v3510 = vadd.f32 0.0, %v3509
  %3511 = vmatmul.f32.gmra.mxu0 %v2988
  %v3512 = vpop.f32.mrf.mxu0
  %v3513 = vadd.f32 0.0, %v3512
  %3514 = vmatmul.f32.gmra.mxu0 %v2990
  %v3515 = vpop.f32.mrf.mxu0
  %v3516 = vadd.f32 0.0, %v3515
  %3517 = vmatmul.f32.gmra.mxu0 %v2992
  %v3518 = vpop.f32.mrf.mxu0
  %v3519 = vadd.f32 0.0, %v3518
  %3520 = vmatmul.f32.gmra.mxu0 %v2994
  %v3521 = vpop.f32.mrf.mxu0
  %v3522 = vadd.f32 0.0, %v3521
  %3523 = vmatmul.f32.gmra.mxu0 %v2996
  %v3524 = vpop.f32.mrf.mxu0
  %v3525 = vadd.f32 0.0, %v3524
  %3526 = vmatmul.f32.gmra.mxu0 %v2998
  %v3527 = vpop.f32.mrf.mxu0
  %v3528 = vadd.f32 0.0, %v3527
  %3529 = vmatmul.f32.gmra.mxu0 %v3000
  %v3530 = vpop.f32.mrf.mxu0
  %v3531 = vadd.f32 0.0, %v3530
  %3532 = vmatmul.f32.gmra.mxu0 %v3002
  %v3533 = vpop.f32.mrf.mxu0
  %v3534 = vadd.f32 0.0, %v3533
  %3535 = vmatmul.f32.gmra.mxu0 %v3004
  %v3536 = vpop.f32.mrf.mxu0
  %v3537 = vadd.f32 0.0, %v3536
  %3538 = vmatmul.f32.gmra.mxu0 %v3006
  %v3539 = vpop.f32.mrf.mxu0
  %v3540 = vadd.f32 0.0, %v3539
  %3541 = vmatmul.f32.gmra.mxu0 %v3008
  %v3542 = vpop.f32.mrf.mxu0
  %v3543 = vadd.f32 0.0, %v3542
  %3544 = vmatmul.f32.gmra.mxu0 %v3010
  %v3545 = vpop.f32.mrf.mxu0
  %v3546 = vadd.f32 0.0, %v3545
  %3547 = vmatmul.f32.gmra.mxu0 %v3012
  %v3548 = vpop.f32.mrf.mxu0
  %v3549 = vadd.f32 0.0, %v3548
  %3550 = vmatmul.f32.gmra.mxu0 %v3014
  %v3551 = vpop.f32.mrf.mxu0
  %v3552 = vadd.f32 0.0, %v3551
  %3553 = vmatmul.f32.gmra.mxu0 %v3016
  %v3554 = vpop.f32.mrf.mxu0
  %v3555 = vadd.f32 0.0, %v3554
  %3556 = vmatmul.f32.gmra.mxu0 %v3018
  %v3557 = vpop.f32.mrf.mxu0
  %v3558 = vadd.f32 0.0, %v3557
  %3559 = vmatmul.f32.gmra.mxu0 %v3020
  %v3560 = vpop.f32.mrf.mxu0
  %v3561 = vadd.f32 0.0, %v3560
  %3562 = vmatmul.f32.gmra.mxu0 %v3022
  %v3563 = vpop.f32.mrf.mxu0
  %v3564 = vadd.f32 0.0, %v3563
  %3565 = vmatmul.f32.gmra.mxu0 %v3024
  %v3566 = vpop.f32.mrf.mxu0
  %v3567 = vadd.f32 0.0, %v3566
  %3568 = vmatmul.f32.gmra.mxu0 %v3026
  %v3569 = vpop.f32.mrf.mxu0
  %v3570 = vadd.f32 0.0, %v3569
  %3571 = vmatmul.f32.gmra.mxu0 %v3028
  %v3572 = vpop.f32.mrf.mxu0
  %v3573 = vadd.f32 0.0, %v3572
  %3574 = vmatmul.f32.gmra.mxu0 %v3030
  %v3575 = vpop.f32.mrf.mxu0
  %v3576 = vadd.f32 0.0, %v3575
  %3577 = vmatmul.f32.gmra.mxu0 %v3032
  %v3578 = vpop.f32.mrf.mxu0
  %v3579 = vadd.f32 0.0, %v3578
  %3580 = vmatmul.f32.gmra.mxu0 %v3034
  %v3581 = vpop.f32.mrf.mxu0
  %v3582 = vadd.f32 0.0, %v3581
  %3583 = vmatmul.f32.gmra.mxu0 %v3036
  %v3584 = vpop.f32.mrf.mxu0
  %v3585 = vadd.f32 0.0, %v3584
  %3586 = vmatmul.f32.gmra.mxu0 %v3038
  %v3587 = vpop.f32.mrf.mxu0
  %v3588 = vadd.f32 0.0, %v3587
  %3589 = vmatmul.f32.gmra.mxu0 %v3040
  %v3590 = vpop.f32.mrf.mxu0
  %v3591 = vadd.f32 0.0, %v3590
  %3592 = vmatmul.f32.gmra.mxu0 %v3042
  %v3593 = vpop.f32.mrf.mxu0
  %v3594 = vadd.f32 0.0, %v3593
  %3595 = vmatmul.f32.gmra.mxu0 %v3044
  %v3596 = vpop.f32.mrf.mxu0
  %v3597 = vadd.f32 0.0, %v3596
  %3598 = vmatmul.f32.gmra.mxu0 %v3046
  %v3599 = vpop.f32.mrf.mxu0
  %v3600 = vadd.f32 0.0, %v3599
  %3601 = vmatmul.f32.gmra.mxu0 %v3048
  %v3602 = vpop.f32.mrf.mxu0
  %v3603 = vadd.f32 0.0, %v3602
  %3604 = vmatmul.f32.gmra.mxu0 %v3050
  %v3605 = vpop.f32.mrf.mxu0
  %v3606 = vadd.f32 0.0, %v3605
  %3607 = vmatmul.f32.gmra.mxu0 %v3052
  %v3608 = vpop.f32.mrf.mxu0
  %v3609 = vadd.f32 0.0, %v3608
  %3610 = vmatmul.f32.gmra.mxu0 %v3054
  %v3611 = vpop.f32.mrf.mxu0
  %v3612 = vadd.f32 0.0, %v3611
  %3613 = vmatmul.f32.gmra.mxu0 %v3056
  %v3614 = vpop.f32.mrf.mxu0
  %v3615 = vadd.f32 0.0, %v3614
  %3616 = vmatmul.f32.gmra.mxu0 %v3058
  %v3617 = vpop.f32.mrf.mxu0
  %v3618 = vadd.f32 0.0, %v3617
  %3619 = vmatmul.f32.gmra.mxu0 %v3060
  %v3620 = vpop.f32.mrf.mxu0
  %v3621 = vadd.f32 0.0, %v3620
  %3622 = vmatmul.f32.gmra.mxu0 %v3062
  %v3623 = vpop.f32.mrf.mxu0
  %v3624 = vadd.f32 0.0, %v3623
  %3625 = vmatmul.f32.gmra.mxu0 %v3064
  %v3626 = vpop.f32.mrf.mxu0
  %v3627 = vadd.f32 0.0, %v3626
  %3628 = vmatmul.f32.gmra.mxu0 %v3066
  %v3629 = vpop.f32.mrf.mxu0
  %v3630 = vadd.f32 0.0, %v3629
  %3631 = vmatmul.f32.gmra.mxu0 %v3068
  %v3632 = vpop.f32.mrf.mxu0
  %v3633 = vadd.f32 0.0, %v3632
  %3634 = vmatmul.f32.gmra.mxu0 %v3070
  %v3635 = vpop.f32.mrf.mxu0
  %v3636 = vadd.f32 0.0, %v3635
  %3637 = vmatmul.f32.gmra.mxu0 %v3072
  %v3638 = vpop.f32.mrf.mxu0
  %v3639 = vadd.f32 0.0, %v3638
  %3640 = vmatmul.f32.gmra.mxu0 %v3074
  %v3641 = vpop.f32.mrf.mxu0
  %v3642 = vadd.f32 0.0, %v3641
  %3643 = vmatmul.f32.gmra.mxu0 %v3076
  %v3644 = vpop.f32.mrf.mxu0
  %v3645 = vadd.f32 0.0, %v3644
  %3646 = vmatmul.f32.gmra.mxu0 %v3078
  %v3647 = vpop.f32.mrf.mxu0
  %v3648 = vadd.f32 0.0, %v3647
  %3649 = vmatmul.f32.gmra.mxu0 %v3080
  %v3650 = vpop.f32.mrf.mxu0
  %v3651 = vadd.f32 0.0, %v3650
  %3652 = vmatmul.f32.gmra.mxu0 %v3082
  %v3653 = vpop.f32.mrf.mxu0
  %v3654 = vadd.f32 0.0, %v3653
  %3655 = vmatmul.f32.gmra.mxu0 %v3084
  %v3656 = vpop.f32.mrf.mxu0
  %v3657 = vadd.f32 0.0, %v3656
  %3658 = vmatmul.f32.gmra.mxu0 %v3086
  %v3659 = vpop.f32.mrf.mxu0
  %v3660 = vadd.f32 0.0, %v3659
  %3661 = vmatmul.f32.gmra.mxu0 %v3088
  %v3662 = vpop.f32.mrf.mxu0
  %v3663 = vadd.f32 0.0, %v3662
  %3664 = vmatmul.f32.gmra.mxu0 %v3090
  %v3665 = vpop.f32.mrf.mxu0
  %v3666 = vadd.f32 0.0, %v3665
  %3667 = vmatmul.f32.gmra.mxu0 %v3092
  %v3668 = vpop.f32.mrf.mxu0
  %v3669 = vadd.f32 0.0, %v3668
  %3670 = vmatmul.f32.gmra.mxu0 %v3094
  %v3671 = vpop.f32.mrf.mxu0
  %v3672 = vadd.f32 0.0, %v3671
  %3673 = vmatmul.f32.gmra.mxu0 %v3429
  %v3674 = vpop.f32.mrf.mxu0
  %v3675 = vadd.f32 0.0, %v3674
  %3676 = vmatmul.f32.gmra.mxu0 %v3431
  %v3677 = vpop.f32.mrf.mxu0
  %v3678 = vadd.f32 0.0, %v3677
  %3679 = vmatmul.f32.gmra.mxu0 %v3433
  %v3680 = vpop.f32.mrf.mxu0
  %v3681 = vadd.f32 0.0, %v3680
  %3682 = vdwg.mxu0
  %v3683 = vadd.f32 %v3346, %v3453
  %v3684 = vadd.f32 %v3347, %v3456
  %v3685 = vadd.f32 %v3348, %v3459
  %v3686 = vadd.f32 %v3349, %v3462
  %v3687 = vadd.f32 %v3350, %v3465
  %v3688 = vadd.f32 %v3351, %v3468
  %v3689 = vadd.f32 %v3352, %v3471
  %v3690 = vadd.f32 %v3353, %v3474
  %v3691 = vadd.f32 %v3354, %v3477
  %v3692 = vadd.f32 %v3355, %v3480
  %v3693 = vadd.f32 %v3356, %v3483
  %v3694 = vadd.f32 %v3357, %v3486
  %v3695 = vadd.f32 %v3358, %v3489
  %v3696 = vadd.f32 %v3359, %v3492
  %v3697 = vadd.f32 %v3360, %v3495
  %v3698 = vadd.f32 %v3361, %v3498
  %v3699 = vadd.f32 %v3362, %v3501
  %v3700 = vadd.f32 %v3363, %v3504
  %v3701 = vadd.f32 %v3364, %v3507
  %v3702 = vadd.f32 %v3365, %v3510
  %v3703 = vadd.f32 %v3366, %v3513
  %v3704 = vadd.f32 %v3367, %v3516
  %v3705 = vadd.f32 %v3368, %v3519
  %v3706 = vadd.f32 %v3369, %v3522
  %v3707 = vadd.f32 %v3370, %v3525
  %v3708 = vadd.f32 %v3371, %v3528
  %v3709 = vadd.f32 %v3372, %v3531
  %v3710 = vadd.f32 %v3373, %v3534
  %v3711 = vadd.f32 %v3374, %v3537
  %v3712 = vadd.f32 %v3375, %v3540
  %v3713 = vadd.f32 %v3376, %v3543
  %v3714 = vadd.f32 %v3377, %v3546
  %v3715 = vadd.f32 %v3378, %v3549
  %v3716 = vadd.f32 %v3379, %v3552
  %v3717 = vadd.f32 %v3380, %v3555
  %v3718 = vadd.f32 %v3381, %v3558
  %v3719 = vadd.f32 %v3382, %v3561
  %v3720 = vadd.f32 %v3383, %v3564
  %v3721 = vadd.f32 %v3384, %v3567
  %v3722 = vadd.f32 %v3385, %v3570
  %v3723 = vadd.f32 %v3386, %v3573
  %v3724 = vadd.f32 %v3387, %v3576
  %v3725 = vadd.f32 %v3388, %v3579
  %v3726 = vadd.f32 %v3389, %v3582
  %v3727 = vadd.f32 %v3390, %v3585
  %v3728 = vadd.f32 %v3391, %v3588
  %v3729 = vadd.f32 %v3392, %v3591
  %v3730 = vadd.f32 %v3393, %v3594
  %v3731 = vadd.f32 %v3394, %v3597
  %v3732 = vadd.f32 %v3395, %v3600
  %v3733 = vadd.f32 %v3396, %v3603
  %v3734 = vadd.f32 %v3397, %v3606
  %v3735 = vadd.f32 %v3398, %v3609
  %v3736 = vadd.f32 %v3399, %v3612
  %v3737 = vadd.f32 %v3400, %v3615
  %v3738 = vadd.f32 %v3401, %v3618
  %v3739 = vadd.f32 %v3402, %v3621
  %v3740 = vadd.f32 %v3403, %v3624
  %v3741 = vadd.f32 %v3404, %v3627
  %v3742 = vadd.f32 %v3405, %v3630
  %v3743 = vadd.f32 %v3406, %v3633
  %v3744 = vadd.f32 %v3407, %v3636
  %v3745 = vadd.f32 %v3408, %v3639
  %v3746 = vadd.f32 %v3409, %v3642
  %v3747 = vadd.f32 %v3410, %v3645
  %v3748 = vadd.f32 %v3411, %v3648
  %v3749 = vadd.f32 %v3412, %v3651
  %v3750 = vadd.f32 %v3413, %v3654
  %v3751 = vadd.f32 %v3414, %v3657
  %v3752 = vadd.f32 %v3415, %v3660
  %v3753 = vadd.f32 %v3416, %v3663
  %v3754 = vadd.f32 %v3417, %v3666
  %v3755 = vadd.f32 %v3418, %v3669
  %v3756 = vadd.f32 %v3419, %v3672
  %v3757 = vadd.f32 %v3420, %v3675
  %v3758 = vadd.f32 %v3421, %v3678
  %v3759 = vadd.f32 %v3422, %v3681
  %vm3760 = vcmask 1042432
  %v3761 = vrot.slane %v64, 5
  %v3762 = vrot.slane %v65, 5
  %v3763 = vsel %vm3760, %v3761, %v3762
  %v3764 = vrot.slane %v66, 5
  %v3765 = vsel %vm3760, %v3762, %v3764
  %v3766 = vrot.slane %v67, 5
  %v3767 = vsel %vm3760, %v3764, %v3766
  %v3768 = vrot.slane %v68, 5
  %v3769 = vsel %vm3760, %v3766, %v3768
  %v3770 = vrot.slane %v69, 5
  %v3771 = vsel %vm3760, %v3768, %v3770
  %v3772 = vrot.slane %v70, 5
  %v3773 = vsel %vm3760, %v3770, %v3772
  %v3774 = vrot.slane %v71, 5
  %v3775 = vsel %vm3760, %v3772, %v3774
  %v3776 = vrot.slane %v72, 5
  %v3777 = vsel %vm3760, %v3774, %v3776
  %v3778 = vrot.slane %v73, 5
  %v3779 = vsel %vm3760, %v3776, %v3778
  %v3780 = vrot.slane %v74, 5
  %v3781 = vsel %vm3760, %v3778, %v3780
  %v3782 = vrot.slane %v75, 5
  %v3783 = vsel %vm3760, %v3780, %v3782
  %v3784 = vrot.slane %v76, 5
  %v3785 = vsel %vm3760, %v3782, %v3784
  %v3786 = vrot.slane %v77, 5
  %v3787 = vsel %vm3760, %v3784, %v3786
  %v3788 = vrot.slane %v78, 5
  %v3789 = vsel %vm3760, %v3786, %v3788
  %v3790 = vrot.slane %v79, 5
  %v3791 = vsel %vm3760, %v3788, %v3790
  %v3792 = vrot.slane %v80, 5
  %v3793 = vsel %vm3760, %v3790, %v3792
  %v3794 = vrot.slane %v81, 5
  %v3795 = vsel %vm3760, %v3792, %v3794
  %v3796 = vrot.slane %v82, 5
  %v3797 = vsel %vm3760, %v3794, %v3796
  %v3798 = vrot.slane %v83, 5
  %v3799 = vsel %vm3760, %v3796, %v3798
  %v3800 = vrot.slane %v84, 5
  %v3801 = vsel %vm3760, %v3798, %v3800
  %v3802 = vrot.slane %v85, 5
  %v3803 = vsel %vm3760, %v3800, %v3802
  %v3804 = vrot.slane %v86, 5
  %v3805 = vsel %vm3760, %v3802, %v3804
  %v3806 = vrot.slane %v87, 5
  %v3807 = vsel %vm3760, %v3804, %v3806
  %v3808 = vrot.slane %v88, 5
  %v3809 = vsel %vm3760, %v3806, %v3808
  %v3810 = vrot.slane %v89, 5
  %v3811 = vsel %vm3760, %v3808, %v3810
  %v3812 = vrot.slane %v90, 5
  %v3813 = vsel %vm3760, %v3810, %v3812
  %v3814 = vrot.slane %v91, 5
  %v3815 = vsel %vm3760, %v3812, %v3814
  %v3816 = vrot.slane %v92, 5
  %v3817 = vsel %vm3760, %v3814, %v3816
  %v3818 = vrot.slane %v93, 5
  %v3819 = vsel %vm3760, %v3816, %v3818
  %v3820 = vrot.slane %v94, 5
  %v3821 = vsel %vm3760, %v3818, %v3820
  %v3822 = vrot.slane %v95, 5
  %v3823 = vsel %vm3760, %v3820, %v3822
  %v3824 = vrot.slane %v96, 5
  %v3825 = vsel %vm3760, %v3822, %v3824
  %v3826 = vrot.slane %v97, 5
  %v3827 = vsel %vm3760, %v3824, %v3826
  %v3828 = vrot.slane %v98, 5
  %v3829 = vsel %vm3760, %v3826, %v3828
  %v3830 = vrot.slane %v99, 5
  %v3831 = vsel %vm3760, %v3828, %v3830
  %v3832 = vrot.slane %v100, 5
  %v3833 = vsel %vm3760, %v3830, %v3832
  %v3834 = vrot.slane %v101, 5
  %v3835 = vsel %vm3760, %v3832, %v3834
  %v3836 = vrot.slane %v102, 5
  %v3837 = vsel %vm3760, %v3834, %v3836
  %v3838 = vrot.slane %v103, 5
  %v3839 = vsel %vm3760, %v3836, %v3838
  %v3840 = vrot.slane %v104, 5
  %v3841 = vsel %vm3760, %v3838, %v3840
  %v3842 = vrot.slane %v105, 5
  %v3843 = vsel %vm3760, %v3840, %v3842
  %v3844 = vrot.slane %v106, 5
  %v3845 = vsel %vm3760, %v3842, %v3844
  %v3846 = vrot.slane %v107, 5
  %v3847 = vsel %vm3760, %v3844, %v3846
  %v3848 = vrot.slane %v108, 5
  %v3849 = vsel %vm3760, %v3846, %v3848
  %v3850 = vrot.slane %v109, 5
  %v3851 = vsel %vm3760, %v3848, %v3850
  %v3852 = vrot.slane %v110, 5
  %v3853 = vsel %vm3760, %v3850, %v3852
  %v3854 = vrot.slane %v111, 5
  %v3855 = vsel %vm3760, %v3852, %v3854
  %v3856 = vrot.slane %v112, 5
  %v3857 = vsel %vm3760, %v3854, %v3856
  %v3858 = vrot.slane %v113, 5
  %v3859 = vsel %vm3760, %v3856, %v3858
  %v3860 = vrot.slane %v114, 5
  %v3861 = vsel %vm3760, %v3858, %v3860
  %v3862 = vrot.slane %v115, 5
  %v3863 = vsel %vm3760, %v3860, %v3862
  %v3864 = vrot.slane %v116, 5
  %v3865 = vsel %vm3760, %v3862, %v3864
  %v3866 = vrot.slane %v117, 5
  %v3867 = vsel %vm3760, %v3864, %v3866
  %v3868 = vrot.slane %v118, 5
  %v3869 = vsel %vm3760, %v3866, %v3868
  %v3870 = vrot.slane %v119, 5
  %v3871 = vsel %vm3760, %v3868, %v3870
  %v3872 = vrot.slane %v120, 5
  %v3873 = vsel %vm3760, %v3870, %v3872
  %v3874 = vrot.slane %v121, 5
  %v3875 = vsel %vm3760, %v3872, %v3874
  %v3876 = vrot.slane %v122, 5
  %v3877 = vsel %vm3760, %v3874, %v3876
  %v3878 = vrot.slane %v123, 5
  %v3879 = vsel %vm3760, %v3876, %v3878
  %v3880 = vrot.slane %v124, 5
  %v3881 = vsel %vm3760, %v3878, %v3880
  %v3882 = vrot.slane %v125, 5
  %v3883 = vsel %vm3760, %v3880, %v3882
  %v3884 = vrot.slane %v126, 5
  %v3885 = vsel %vm3760, %v3882, %v3884
  %v3886 = vrot.slane %v127, 5
  %v3887 = vsel %vm3760, %v3884, %v3886
  %v3888 = vrot.slane %v128, 5
  %v3889 = vsel %vm3760, %v3886, %v3888
  %v3890 = vrot.slane %v129, 5
  %v3891 = vsel %vm3760, %v3888, %v3890
  %v3892 = vrot.slane %v130, 5
  %v3893 = vsel %vm3760, %v3890, %v3892
  %v3894 = vrot.slane %v131, 5
  %v3895 = vsel %vm3760, %v3892, %v3894
  %v3896 = vrot.slane %v132, 5
  %v3897 = vsel %vm3760, %v3894, %v3896
  %v3898 = vrot.slane %v133, 5
  %v3899 = vsel %vm3760, %v3896, %v3898
  %v3900 = vrot.slane %v134, 5
  %v3901 = vsel %vm3760, %v3898, %v3900
  %v3902 = vrot.slane %v135, 5
  %v3903 = vsel %vm3760, %v3900, %v3902
  %v3904 = vrot.slane %v136, 5
  %v3905 = vsel %vm3760, %v3902, %v3904
  %v3906 = vrot.slane %v137, 5
  %v3907 = vsel %vm3760, %v3904, %v3906
  %v3908 = vrot.slane %v138, 5
  %v3909 = vsel %vm3760, %v3906, %v3908
  %v3910 = vrot.slane %v139, 5
  %v3911 = vsel %vm3760, %v3908, %v3910
  %v3912 = vrot.slane %v140, 5
  %v3913 = vsel %vm3760, %v3910, %v3912
  %v3914 = vsel %vm382, %v3763, 0
  %v3916 = vsel %vm382, %v3765, 0
  %v3918 = vsel %vm382, %v3767, 0
  %v3920 = vsel %vm382, %v3769, 0
  %v3922 = vsel %vm382, %v3771, 0
  %v3924 = vsel %vm382, %v3773, 0
  %v3926 = vsel %vm382, %v3775, 0
  %v3928 = vsel %vm382, %v3777, 0
  %v3930 = vsel %vm382, %v3779, 0
  %v3932 = vsel %vm382, %v3781, 0
  %v3934 = vsel %vm382, %v3783, 0
  %v3936 = vsel %vm382, %v3785, 0
  %v3938 = vsel %vm382, %v3787, 0
  %v3940 = vsel %vm382, %v3789, 0
  %v3942 = vsel %vm382, %v3791, 0
  %v3944 = vsel %vm382, %v3793, 0
  %v3946 = vsel %vm382, %v3795, 0
  %v3948 = vsel %vm382, %v3797, 0
  %v3950 = vsel %vm382, %v3799, 0
  %v3952 = vsel %vm382, %v3801, 0
  %v3954 = vsel %vm382, %v3803, 0
  %v3956 = vsel %vm382, %v3805, 0
  %v3958 = vsel %vm382, %v3807, 0
  %v3960 = vsel %vm382, %v3809, 0
  %v3962 = vsel %vm382, %v3811, 0
  %v3964 = vsel %vm382, %v3813, 0
  %v3966 = vsel %vm382, %v3815, 0
  %v3968 = vsel %vm382, %v3817, 0
  %v3970 = vsel %vm382, %v3819, 0
  %v3972 = vsel %vm382, %v3821, 0
  %v3974 = vsel %vm382, %v3823, 0
  %v3976 = vsel %vm382, %v3825, 0
  %v3978 = vsel %vm382, %v3827, 0
  %v3980 = vsel %vm382, %v3829, 0
  %v3982 = vsel %vm382, %v3831, 0
  %v3984 = vsel %vm382, %v3833, 0
  %v3986 = vsel %vm382, %v3835, 0
  %v3988 = vsel %vm382, %v3837, 0
  %v3990 = vsel %vm382, %v3839, 0
  %v3992 = vsel %vm382, %v3841, 0
  %v3994 = vsel %vm382, %v3843, 0
  %v3996 = vsel %vm382, %v3845, 0
  %v3998 = vsel %vm382, %v3847, 0
  %v4000 = vsel %vm382, %v3849, 0
  %v4002 = vsel %vm382, %v3851, 0
  %v4004 = vsel %vm382, %v3853, 0
  %v4006 = vsel %vm382, %v3855, 0
  %v4008 = vsel %vm382, %v3857, 0
  %v4010 = vsel %vm382, %v3859, 0
  %v4012 = vsel %vm382, %v3861, 0
  %v4014 = vsel %vm382, %v3863, 0
  %v4016 = vsel %vm382, %v3865, 0
  %v4018 = vsel %vm382, %v3867, 0
  %v4020 = vsel %vm382, %v3869, 0
  %v4022 = vsel %vm382, %v3871, 0
  %v4024 = vsel %vm382, %v3873, 0
  %v4026 = vsel %vm382, %v3875, 0
  %v4028 = vsel %vm382, %v3877, 0
  %v4030 = vsel %vm382, %v3879, 0
  %v4032 = vsel %vm382, %v3881, 0
  %v4034 = vsel %vm382, %v3883, 0
  %v4036 = vsel %vm382, %v3885, 0
  %v4038 = vsel %vm382, %v3887, 0
  %v4040 = vsel %vm382, %v3889, 0
  %v4042 = vsel %vm382, %v3891, 0
  %v4044 = vsel %vm382, %v3893, 0
  %v4046 = vsel %vm382, %v3895, 0
  %v4048 = vsel %vm382, %v3897, 0
  %v4050 = vsel %vm382, %v3899, 0
  %v4052 = vsel %vm382, %v3901, 0
  %v4054 = vsel %vm382, %v3903, 0
  %v4056 = vsel %vm382, %v3905, 0
  %v4058 = vsel %vm382, %v3907, 0
  %v4060 = vsel %vm382, %v3909, 0
  %v4062 = vsel %vm382, %v3911, 0
  %v4064 = vsel %vm382, %v3913, 0
  %v4066 = vsel %vm382, %v3912, 0
  %4068 = vmatpush.msra.mxu0 0.0
  %4069 = vmatpush.msra.mxu0 0.0
  %4070 = vmatpush.msra.mxu0 0.0
  %4071 = vmatpush.msra.mxu0 0.0
  %4072 = vmatpush.msra.mxu0 0.0
  %4073 = vmatpush.msra.mxu0 0.0
  %4074 = vmatpush.msra.mxu0 0.0
  %4075 = vmatpush.msra.mxu0 0.0
  %4076 = vmatpush.msra.mxu0 0.0
  %4077 = vmatpush.msra.mxu0 0.0
  %4078 = vmatpush.msra.mxu0 0.0
  %4079 = vmatpush.msra.mxu0 0.0
  %4080 = vmatpush.msra.mxu0 0.0
  %4081 = vmatpush.msra.mxu0 0.0
  %4082 = vmatpush.msra.mxu0 0.0
  %4083 = vmatpush.msra.mxu0 %v148
  %4084 = vmatmul.f32.gmra.mxu0 %v3914
  %v4085 = vpop.f32.mrf.mxu0
  %v4086 = vadd.f32 0.0, %v4085
  %4087 = vmatmul.f32.gmra.mxu0 %v3916
  %v4088 = vpop.f32.mrf.mxu0
  %v4089 = vadd.f32 0.0, %v4088
  %4090 = vmatmul.f32.gmra.mxu0 %v3918
  %v4091 = vpop.f32.mrf.mxu0
  %v4092 = vadd.f32 0.0, %v4091
  %4093 = vmatmul.f32.gmra.mxu0 %v3920
  %v4094 = vpop.f32.mrf.mxu0
  %v4095 = vadd.f32 0.0, %v4094
  %4096 = vmatmul.f32.gmra.mxu0 %v3922
  %v4097 = vpop.f32.mrf.mxu0
  %v4098 = vadd.f32 0.0, %v4097
  %4099 = vmatmul.f32.gmra.mxu0 %v3924
  %v4100 = vpop.f32.mrf.mxu0
  %v4101 = vadd.f32 0.0, %v4100
  %4102 = vmatmul.f32.gmra.mxu0 %v3926
  %v4103 = vpop.f32.mrf.mxu0
  %v4104 = vadd.f32 0.0, %v4103
  %4105 = vmatmul.f32.gmra.mxu0 %v3928
  %v4106 = vpop.f32.mrf.mxu0
  %v4107 = vadd.f32 0.0, %v4106
  %4108 = vmatmul.f32.gmra.mxu0 %v3930
  %v4109 = vpop.f32.mrf.mxu0
  %v4110 = vadd.f32 0.0, %v4109
  %4111 = vmatmul.f32.gmra.mxu0 %v3932
  %v4112 = vpop.f32.mrf.mxu0
  %v4113 = vadd.f32 0.0, %v4112
  %4114 = vmatmul.f32.gmra.mxu0 %v3934
  %v4115 = vpop.f32.mrf.mxu0
  %v4116 = vadd.f32 0.0, %v4115
  %4117 = vmatmul.f32.gmra.mxu0 %v3936
  %v4118 = vpop.f32.mrf.mxu0
  %v4119 = vadd.f32 0.0, %v4118
  %4120 = vmatmul.f32.gmra.mxu0 %v3938
  %v4121 = vpop.f32.mrf.mxu0
  %v4122 = vadd.f32 0.0, %v4121
  %4123 = vmatmul.f32.gmra.mxu0 %v3940
  %v4124 = vpop.f32.mrf.mxu0
  %v4125 = vadd.f32 0.0, %v4124
  %4126 = vmatmul.f32.gmra.mxu0 %v3942
  %v4127 = vpop.f32.mrf.mxu0
  %v4128 = vadd.f32 0.0, %v4127
  %4129 = vmatmul.f32.gmra.mxu0 %v3944
  %v4130 = vpop.f32.mrf.mxu0
  %v4131 = vadd.f32 0.0, %v4130
  %4132 = vmatmul.f32.gmra.mxu0 %v3946
  %v4133 = vpop.f32.mrf.mxu0
  %v4134 = vadd.f32 0.0, %v4133
  %4135 = vmatmul.f32.gmra.mxu0 %v3948
  %v4136 = vpop.f32.mrf.mxu0
  %v4137 = vadd.f32 0.0, %v4136
  %4138 = vmatmul.f32.gmra.mxu0 %v3950
  %v4139 = vpop.f32.mrf.mxu0
  %v4140 = vadd.f32 0.0, %v4139
  %4141 = vmatmul.f32.gmra.mxu0 %v3952
  %v4142 = vpop.f32.mrf.mxu0
  %v4143 = vadd.f32 0.0, %v4142
  %4144 = vmatmul.f32.gmra.mxu0 %v3954
  %v4145 = vpop.f32.mrf.mxu0
  %v4146 = vadd.f32 0.0, %v4145
  %4147 = vmatmul.f32.gmra.mxu0 %v3956
  %v4148 = vpop.f32.mrf.mxu0
  %v4149 = vadd.f32 0.0, %v4148
  %4150 = vmatmul.f32.gmra.mxu0 %v3958
  %v4151 = vpop.f32.mrf.mxu0
  %v4152 = vadd.f32 0.0, %v4151
  %4153 = vmatmul.f32.gmra.mxu0 %v3960
  %v4154 = vpop.f32.mrf.mxu0
  %v4155 = vadd.f32 0.0, %v4154
  %4156 = vmatmul.f32.gmra.mxu0 %v3962
  %v4157 = vpop.f32.mrf.mxu0
  %v4158 = vadd.f32 0.0, %v4157
  %4159 = vmatmul.f32.gmra.mxu0 %v3964
  %v4160 = vpop.f32.mrf.mxu0
  %v4161 = vadd.f32 0.0, %v4160
  %4162 = vmatmul.f32.gmra.mxu0 %v3966
  %v4163 = vpop.f32.mrf.mxu0
  %v4164 = vadd.f32 0.0, %v4163
  %4165 = vmatmul.f32.gmra.mxu0 %v3968
  %v4166 = vpop.f32.mrf.mxu0
  %v4167 = vadd.f32 0.0, %v4166
  %4168 = vmatmul.f32.gmra.mxu0 %v3970
  %v4169 = vpop.f32.mrf.mxu0
  %v4170 = vadd.f32 0.0, %v4169
  %4171 = vmatmul.f32.gmra.mxu0 %v3972
  %v4172 = vpop.f32.mrf.mxu0
  %v4173 = vadd.f32 0.0, %v4172
  %4174 = vmatmul.f32.gmra.mxu0 %v3974
  %v4175 = vpop.f32.mrf.mxu0
  %v4176 = vadd.f32 0.0, %v4175
  %4177 = vmatmul.f32.gmra.mxu0 %v3976
  %v4178 = vpop.f32.mrf.mxu0
  %v4179 = vadd.f32 0.0, %v4178
  %4180 = vmatmul.f32.gmra.mxu0 %v3978
  %v4181 = vpop.f32.mrf.mxu0
  %v4182 = vadd.f32 0.0, %v4181
  %4183 = vmatmul.f32.gmra.mxu0 %v3980
  %v4184 = vpop.f32.mrf.mxu0
  %v4185 = vadd.f32 0.0, %v4184
  %4186 = vmatmul.f32.gmra.mxu0 %v3982
  %v4187 = vpop.f32.mrf.mxu0
  %v4188 = vadd.f32 0.0, %v4187
  %4189 = vmatmul.f32.gmra.mxu0 %v3984
  %v4190 = vpop.f32.mrf.mxu0
  %v4191 = vadd.f32 0.0, %v4190
  %4192 = vmatmul.f32.gmra.mxu0 %v3986
  %v4193 = vpop.f32.mrf.mxu0
  %v4194 = vadd.f32 0.0, %v4193
  %4195 = vmatmul.f32.gmra.mxu0 %v3988
  %v4196 = vpop.f32.mrf.mxu0
  %v4197 = vadd.f32 0.0, %v4196
  %4198 = vmatmul.f32.gmra.mxu0 %v3990
  %v4199 = vpop.f32.mrf.mxu0
  %v4200 = vadd.f32 0.0, %v4199
  %4201 = vmatmul.f32.gmra.mxu0 %v3992
  %v4202 = vpop.f32.mrf.mxu0
  %v4203 = vadd.f32 0.0, %v4202
  %4204 = vmatmul.f32.gmra.mxu0 %v3994
  %v4205 = vpop.f32.mrf.mxu0
  %v4206 = vadd.f32 0.0, %v4205
  %4207 = vmatmul.f32.gmra.mxu0 %v3996
  %v4208 = vpop.f32.mrf.mxu0
  %v4209 = vadd.f32 0.0, %v4208
  %4210 = vmatmul.f32.gmra.mxu0 %v3998
  %v4211 = vpop.f32.mrf.mxu0
  %v4212 = vadd.f32 0.0, %v4211
  %4213 = vmatmul.f32.gmra.mxu0 %v4000
  %v4214 = vpop.f32.mrf.mxu0
  %v4215 = vadd.f32 0.0, %v4214
  %4216 = vmatmul.f32.gmra.mxu0 %v4002
  %v4217 = vpop.f32.mrf.mxu0
  %v4218 = vadd.f32 0.0, %v4217
  %4219 = vmatmul.f32.gmra.mxu0 %v4004
  %v4220 = vpop.f32.mrf.mxu0
  %v4221 = vadd.f32 0.0, %v4220
  %4222 = vmatmul.f32.gmra.mxu0 %v4006
  %v4223 = vpop.f32.mrf.mxu0
  %v4224 = vadd.f32 0.0, %v4223
  %4225 = vmatmul.f32.gmra.mxu0 %v4008
  %v4226 = vpop.f32.mrf.mxu0
  %v4227 = vadd.f32 0.0, %v4226
  %4228 = vmatmul.f32.gmra.mxu0 %v4010
  %v4229 = vpop.f32.mrf.mxu0
  %v4230 = vadd.f32 0.0, %v4229
  %4231 = vmatmul.f32.gmra.mxu0 %v4012
  %v4232 = vpop.f32.mrf.mxu0
  %v4233 = vadd.f32 0.0, %v4232
  %4234 = vmatmul.f32.gmra.mxu0 %v4014
  %v4235 = vpop.f32.mrf.mxu0
  %v4236 = vadd.f32 0.0, %v4235
  %4237 = vmatmul.f32.gmra.mxu0 %v4016
  %v4238 = vpop.f32.mrf.mxu0
  %v4239 = vadd.f32 0.0, %v4238
  %4240 = vmatmul.f32.gmra.mxu0 %v4018
  %v4241 = vpop.f32.mrf.mxu0
  %v4242 = vadd.f32 0.0, %v4241
  %4243 = vmatmul.f32.gmra.mxu0 %v4020
  %v4244 = vpop.f32.mrf.mxu0
  %v4245 = vadd.f32 0.0, %v4244
  %4246 = vmatmul.f32.gmra.mxu0 %v4022
  %v4247 = vpop.f32.mrf.mxu0
  %v4248 = vadd.f32 0.0, %v4247
  %4249 = vmatmul.f32.gmra.mxu0 %v4024
  %v4250 = vpop.f32.mrf.mxu0
  %v4251 = vadd.f32 0.0, %v4250
  %4252 = vmatmul.f32.gmra.mxu0 %v4026
  %v4253 = vpop.f32.mrf.mxu0
  %v4254 = vadd.f32 0.0, %v4253
  %4255 = vmatmul.f32.gmra.mxu0 %v4028
  %v4256 = vpop.f32.mrf.mxu0
  %v4257 = vadd.f32 0.0, %v4256
  %4258 = vmatmul.f32.gmra.mxu0 %v4030
  %v4259 = vpop.f32.mrf.mxu0
  %v4260 = vadd.f32 0.0, %v4259
  %4261 = vmatmul.f32.gmra.mxu0 %v4032
  %v4262 = vpop.f32.mrf.mxu0
  %v4263 = vadd.f32 0.0, %v4262
  %4264 = vmatmul.f32.gmra.mxu0 %v4034
  %v4265 = vpop.f32.mrf.mxu0
  %v4266 = vadd.f32 0.0, %v4265
  %4267 = vmatmul.f32.gmra.mxu0 %v4036
  %v4268 = vpop.f32.mrf.mxu0
  %v4269 = vadd.f32 0.0, %v4268
  %4270 = vmatmul.f32.gmra.mxu0 %v4038
  %v4271 = vpop.f32.mrf.mxu0
  %v4272 = vadd.f32 0.0, %v4271
  %4273 = vmatmul.f32.gmra.mxu0 %v4040
  %v4274 = vpop.f32.mrf.mxu0
  %v4275 = vadd.f32 0.0, %v4274
  %4276 = vmatmul.f32.gmra.mxu0 %v4042
  %v4277 = vpop.f32.mrf.mxu0
  %v4278 = vadd.f32 0.0, %v4277
  %4279 = vmatmul.f32.gmra.mxu0 %v4044
  %v4280 = vpop.f32.mrf.mxu0
  %v4281 = vadd.f32 0.0, %v4280
  %4282 = vmatmul.f32.gmra.mxu0 %v4046
  %v4283 = vpop.f32.mrf.mxu0
  %v4284 = vadd.f32 0.0, %v4283
  %4285 = vmatmul.f32.gmra.mxu0 %v4048
  %v4286 = vpop.f32.mrf.mxu0
  %v4287 = vadd.f32 0.0, %v4286
  %4288 = vmatmul.f32.gmra.mxu0 %v4050
  %v4289 = vpop.f32.mrf.mxu0
  %v4290 = vadd.f32 0.0, %v4289
  %4291 = vmatmul.f32.gmra.mxu0 %v4052
  %v4292 = vpop.f32.mrf.mxu0
  %v4293 = vadd.f32 0.0, %v4292
  %4294 = vmatmul.f32.gmra.mxu0 %v4054
  %v4295 = vpop.f32.mrf.mxu0
  %v4296 = vadd.f32 0.0, %v4295
  %4297 = vmatmul.f32.gmra.mxu0 %v4056
  %v4298 = vpop.f32.mrf.mxu0
  %v4299 = vadd.f32 0.0, %v4298
  %4300 = vmatmul.f32.gmra.mxu0 %v4058
  %v4301 = vpop.f32.mrf.mxu0
  %v4302 = vadd.f32 0.0, %v4301
  %4303 = vmatmul.f32.gmra.mxu0 %v4060
  %v4304 = vpop.f32.mrf.mxu0
  %v4305 = vadd.f32 0.0, %v4304
  %4306 = vmatmul.f32.gmra.mxu0 %v4062
  %v4307 = vpop.f32.mrf.mxu0
  %v4308 = vadd.f32 0.0, %v4307
  %4309 = vmatmul.f32.gmra.mxu0 %v4064
  %v4310 = vpop.f32.mrf.mxu0
  %v4311 = vadd.f32 0.0, %v4310
  %4312 = vmatmul.f32.gmra.mxu0 %v4066
  %v4313 = vpop.f32.mrf.mxu0
  %v4314 = vadd.f32 0.0, %v4313
  %4315 = vdwg.mxu0
  %v4316 = vadd.f32 %v3683, %v4086
  %v4317 = vadd.f32 %v3684, %v4089
  %v4318 = vadd.f32 %v3685, %v4092
  %v4319 = vadd.f32 %v3686, %v4095
  %v4320 = vadd.f32 %v3687, %v4098
  %v4321 = vadd.f32 %v3688, %v4101
  %v4322 = vadd.f32 %v3689, %v4104
  %v4323 = vadd.f32 %v3690, %v4107
  %v4324 = vadd.f32 %v3691, %v4110
  %v4325 = vadd.f32 %v3692, %v4113
  %v4326 = vadd.f32 %v3693, %v4116
  %v4327 = vadd.f32 %v3694, %v4119
  %v4328 = vadd.f32 %v3695, %v4122
  %v4329 = vadd.f32 %v3696, %v4125
  %v4330 = vadd.f32 %v3697, %v4128
  %v4331 = vadd.f32 %v3698, %v4131
  %v4332 = vadd.f32 %v3699, %v4134
  %v4333 = vadd.f32 %v3700, %v4137
  %v4334 = vadd.f32 %v3701, %v4140
  %v4335 = vadd.f32 %v3702, %v4143
  %v4336 = vadd.f32 %v3703, %v4146
  %v4337 = vadd.f32 %v3704, %v4149
  %v4338 = vadd.f32 %v3705, %v4152
  %v4339 = vadd.f32 %v3706, %v4155
  %v4340 = vadd.f32 %v3707, %v4158
  %v4341 = vadd.f32 %v3708, %v4161
  %v4342 = vadd.f32 %v3709, %v4164
  %v4343 = vadd.f32 %v3710, %v4167
  %v4344 = vadd.f32 %v3711, %v4170
  %v4345 = vadd.f32 %v3712, %v4173
  %v4346 = vadd.f32 %v3713, %v4176
  %v4347 = vadd.f32 %v3714, %v4179
  %v4348 = vadd.f32 %v3715, %v4182
  %v4349 = vadd.f32 %v3716, %v4185
  %v4350 = vadd.f32 %v3717, %v4188
  %v4351 = vadd.f32 %v3718, %v4191
  %v4352 = vadd.f32 %v3719, %v4194
  %v4353 = vadd.f32 %v3720, %v4197
  %v4354 = vadd.f32 %v3721, %v4200
  %v4355 = vadd.f32 %v3722, %v4203
  %v4356 = vadd.f32 %v3723, %v4206
  %v4357 = vadd.f32 %v3724, %v4209
  %v4358 = vadd.f32 %v3725, %v4212
  %v4359 = vadd.f32 %v3726, %v4215
  %v4360 = vadd.f32 %v3727, %v4218
  %v4361 = vadd.f32 %v3728, %v4221
  %v4362 = vadd.f32 %v3729, %v4224
  %v4363 = vadd.f32 %v3730, %v4227
  %v4364 = vadd.f32 %v3731, %v4230
  %v4365 = vadd.f32 %v3732, %v4233
  %v4366 = vadd.f32 %v3733, %v4236
  %v4367 = vadd.f32 %v3734, %v4239
  %v4368 = vadd.f32 %v3735, %v4242
  %v4369 = vadd.f32 %v3736, %v4245
  %v4370 = vadd.f32 %v3737, %v4248
  %v4371 = vadd.f32 %v3738, %v4251
  %v4372 = vadd.f32 %v3739, %v4254
  %v4373 = vadd.f32 %v3740, %v4257
  %v4374 = vadd.f32 %v3741, %v4260
  %v4375 = vadd.f32 %v3742, %v4263
  %v4376 = vadd.f32 %v3743, %v4266
  %v4377 = vadd.f32 %v3744, %v4269
  %v4378 = vadd.f32 %v3745, %v4272
  %v4379 = vadd.f32 %v3746, %v4275
  %v4380 = vadd.f32 %v3747, %v4278
  %v4381 = vadd.f32 %v3748, %v4281
  %v4382 = vadd.f32 %v3749, %v4284
  %v4383 = vadd.f32 %v3750, %v4287
  %v4384 = vadd.f32 %v3751, %v4290
  %v4385 = vadd.f32 %v3752, %v4293
  %v4386 = vadd.f32 %v3753, %v4296
  %v4387 = vadd.f32 %v3754, %v4299
  %v4388 = vadd.f32 %v3755, %v4302
  %v4389 = vadd.f32 %v3756, %v4305
  %v4390 = vadd.f32 %v3757, %v4308
  %v4391 = vadd.f32 %v3758, %v4311
  %v4392 = vadd.f32 %v3759, %v4314
  %vm4393 = vcmask 1041408
  %v4394 = vrot.slane %v64, 6
  %v4395 = vrot.slane %v65, 6
  %v4396 = vsel %vm4393, %v4394, %v4395
  %v4397 = vrot.slane %v66, 6
  %v4398 = vsel %vm4393, %v4395, %v4397
  %v4399 = vrot.slane %v67, 6
  %v4400 = vsel %vm4393, %v4397, %v4399
  %v4401 = vrot.slane %v68, 6
  %v4402 = vsel %vm4393, %v4399, %v4401
  %v4403 = vrot.slane %v69, 6
  %v4404 = vsel %vm4393, %v4401, %v4403
  %v4405 = vrot.slane %v70, 6
  %v4406 = vsel %vm4393, %v4403, %v4405
  %v4407 = vrot.slane %v71, 6
  %v4408 = vsel %vm4393, %v4405, %v4407
  %v4409 = vrot.slane %v72, 6
  %v4410 = vsel %vm4393, %v4407, %v4409
  %v4411 = vrot.slane %v73, 6
  %v4412 = vsel %vm4393, %v4409, %v4411
  %v4413 = vrot.slane %v74, 6
  %v4414 = vsel %vm4393, %v4411, %v4413
  %v4415 = vrot.slane %v75, 6
  %v4416 = vsel %vm4393, %v4413, %v4415
  %v4417 = vrot.slane %v76, 6
  %v4418 = vsel %vm4393, %v4415, %v4417
  %v4419 = vrot.slane %v77, 6
  %v4420 = vsel %vm4393, %v4417, %v4419
  %v4421 = vrot.slane %v78, 6
  %v4422 = vsel %vm4393, %v4419, %v4421
  %v4423 = vrot.slane %v79, 6
  %v4424 = vsel %vm4393, %v4421, %v4423
  %v4425 = vrot.slane %v80, 6
  %v4426 = vsel %vm4393, %v4423, %v4425
  %v4427 = vrot.slane %v81, 6
  %v4428 = vsel %vm4393, %v4425, %v4427
  %v4429 = vrot.slane %v82, 6
  %v4430 = vsel %vm4393, %v4427, %v4429
  %v4431 = vrot.slane %v83, 6
  %v4432 = vsel %vm4393, %v4429, %v4431
  %v4433 = vrot.slane %v84, 6
  %v4434 = vsel %vm4393, %v4431, %v4433
  %v4435 = vrot.slane %v85, 6
  %v4436 = vsel %vm4393, %v4433, %v4435
  %v4437 = vrot.slane %v86, 6
  %v4438 = vsel %vm4393, %v4435, %v4437
  %v4439 = vrot.slane %v87, 6
  %v4440 = vsel %vm4393, %v4437, %v4439
  %v4441 = vrot.slane %v88, 6
  %v4442 = vsel %vm4393, %v4439, %v4441
  %v4443 = vrot.slane %v89, 6
  %v4444 = vsel %vm4393, %v4441, %v4443
  %v4445 = vrot.slane %v90, 6
  %v4446 = vsel %vm4393, %v4443, %v4445
  %v4447 = vrot.slane %v91, 6
  %v4448 = vsel %vm4393, %v4445, %v4447
  %v4449 = vrot.slane %v92, 6
  %v4450 = vsel %vm4393, %v4447, %v4449
  %v4451 = vrot.slane %v93, 6
  %v4452 = vsel %vm4393, %v4449, %v4451
  %v4453 = vrot.slane %v94, 6
  %v4454 = vsel %vm4393, %v4451, %v4453
  %v4455 = vrot.slane %v95, 6
  %v4456 = vsel %vm4393, %v4453, %v4455
  %v4457 = vrot.slane %v96, 6
  %v4458 = vsel %vm4393, %v4455, %v4457
  %v4459 = vrot.slane %v97, 6
  %v4460 = vsel %vm4393, %v4457, %v4459
  %v4461 = vrot.slane %v98, 6
  %v4462 = vsel %vm4393, %v4459, %v4461
  %v4463 = vrot.slane %v99, 6
  %v4464 = vsel %vm4393, %v4461, %v4463
  %v4465 = vrot.slane %v100, 6
  %v4466 = vsel %vm4393, %v4463, %v4465
  %v4467 = vrot.slane %v101, 6
  %v4468 = vsel %vm4393, %v4465, %v4467
  %v4469 = vrot.slane %v102, 6
  %v4470 = vsel %vm4393, %v4467, %v4469
  %v4471 = vrot.slane %v103, 6
  %v4472 = vsel %vm4393, %v4469, %v4471
  %v4473 = vrot.slane %v104, 6
  %v4474 = vsel %vm4393, %v4471, %v4473
  %v4475 = vrot.slane %v105, 6
  %v4476 = vsel %vm4393, %v4473, %v4475
  %v4477 = vrot.slane %v106, 6
  %v4478 = vsel %vm4393, %v4475, %v4477
  %v4479 = vrot.slane %v107, 6
  %v4480 = vsel %vm4393, %v4477, %v4479
  %v4481 = vrot.slane %v108, 6
  %v4482 = vsel %vm4393, %v4479, %v4481
  %v4483 = vrot.slane %v109, 6
  %v4484 = vsel %vm4393, %v4481, %v4483
  %v4485 = vrot.slane %v110, 6
  %v4486 = vsel %vm4393, %v4483, %v4485
  %v4487 = vrot.slane %v111, 6
  %v4488 = vsel %vm4393, %v4485, %v4487
  %v4489 = vrot.slane %v112, 6
  %v4490 = vsel %vm4393, %v4487, %v4489
  %v4491 = vrot.slane %v113, 6
  %v4492 = vsel %vm4393, %v4489, %v4491
  %v4493 = vrot.slane %v114, 6
  %v4494 = vsel %vm4393, %v4491, %v4493
  %v4495 = vrot.slane %v115, 6
  %v4496 = vsel %vm4393, %v4493, %v4495
  %v4497 = vrot.slane %v116, 6
  %v4498 = vsel %vm4393, %v4495, %v4497
  %v4499 = vrot.slane %v117, 6
  %v4500 = vsel %vm4393, %v4497, %v4499
  %v4501 = vrot.slane %v118, 6
  %v4502 = vsel %vm4393, %v4499, %v4501
  %v4503 = vrot.slane %v119, 6
  %v4504 = vsel %vm4393, %v4501, %v4503
  %v4505 = vrot.slane %v120, 6
  %v4506 = vsel %vm4393, %v4503, %v4505
  %v4507 = vrot.slane %v121, 6
  %v4508 = vsel %vm4393, %v4505, %v4507
  %v4509 = vrot.slane %v122, 6
  %v4510 = vsel %vm4393, %v4507, %v4509
  %v4511 = vrot.slane %v123, 6
  %v4512 = vsel %vm4393, %v4509, %v4511
  %v4513 = vrot.slane %v124, 6
  %v4514 = vsel %vm4393, %v4511, %v4513
  %v4515 = vrot.slane %v125, 6
  %v4516 = vsel %vm4393, %v4513, %v4515
  %v4517 = vrot.slane %v126, 6
  %v4518 = vsel %vm4393, %v4515, %v4517
  %v4519 = vrot.slane %v127, 6
  %v4520 = vsel %vm4393, %v4517, %v4519
  %v4521 = vrot.slane %v128, 6
  %v4522 = vsel %vm4393, %v4519, %v4521
  %v4523 = vrot.slane %v129, 6
  %v4524 = vsel %vm4393, %v4521, %v4523
  %v4525 = vrot.slane %v130, 6
  %v4526 = vsel %vm4393, %v4523, %v4525
  %v4527 = vrot.slane %v131, 6
  %v4528 = vsel %vm4393, %v4525, %v4527
  %v4529 = vrot.slane %v132, 6
  %v4530 = vsel %vm4393, %v4527, %v4529
  %v4531 = vrot.slane %v133, 6
  %v4532 = vsel %vm4393, %v4529, %v4531
  %v4533 = vrot.slane %v134, 6
  %v4534 = vsel %vm4393, %v4531, %v4533
  %v4535 = vrot.slane %v135, 6
  %v4536 = vsel %vm4393, %v4533, %v4535
  %v4537 = vrot.slane %v136, 6
  %v4538 = vsel %vm4393, %v4535, %v4537
  %v4539 = vrot.slane %v137, 6
  %v4540 = vsel %vm4393, %v4537, %v4539
  %v4541 = vrot.slane %v138, 6
  %v4542 = vsel %vm4393, %v4539, %v4541
  %v4543 = vrot.slane %v139, 6
  %v4544 = vsel %vm4393, %v4541, %v4543
  %v4545 = vrot.slane %v140, 6
  %v4546 = vsel %vm4393, %v4543, %v4545
  %v4547 = vsel %vm382, %v4396, 0
  %v4549 = vsel %vm382, %v4398, 0
  %v4551 = vsel %vm382, %v4400, 0
  %v4553 = vsel %vm382, %v4402, 0
  %v4555 = vsel %vm382, %v4404, 0
  %v4557 = vsel %vm382, %v4406, 0
  %v4559 = vsel %vm382, %v4408, 0
  %v4561 = vsel %vm382, %v4410, 0
  %v4563 = vsel %vm382, %v4412, 0
  %v4565 = vsel %vm382, %v4414, 0
  %v4567 = vsel %vm382, %v4416, 0
  %v4569 = vsel %vm382, %v4418, 0
  %v4571 = vsel %vm382, %v4420, 0
  %v4573 = vsel %vm382, %v4422, 0
  %v4575 = vsel %vm382, %v4424, 0
  %v4577 = vsel %vm382, %v4426, 0
  %v4579 = vsel %vm382, %v4428, 0
  %v4581 = vsel %vm382, %v4430, 0
  %v4583 = vsel %vm382, %v4432, 0
  %v4585 = vsel %vm382, %v4434, 0
  %v4587 = vsel %vm382, %v4436, 0
  %v4589 = vsel %vm382, %v4438, 0
  %v4591 = vsel %vm382, %v4440, 0
  %v4593 = vsel %vm382, %v4442, 0
  %v4595 = vsel %vm382, %v4444, 0
  %v4597 = vsel %vm382, %v4446, 0
  %v4599 = vsel %vm382, %v4448, 0
  %v4601 = vsel %vm382, %v4450, 0
  %v4603 = vsel %vm382, %v4452, 0
  %v4605 = vsel %vm382, %v4454, 0
  %v4607 = vsel %vm382, %v4456, 0
  %v4609 = vsel %vm382, %v4458, 0
  %v4611 = vsel %vm382, %v4460, 0
  %v4613 = vsel %vm382, %v4462, 0
  %v4615 = vsel %vm382, %v4464, 0
  %v4617 = vsel %vm382, %v4466, 0
  %v4619 = vsel %vm382, %v4468, 0
  %v4621 = vsel %vm382, %v4470, 0
  %v4623 = vsel %vm382, %v4472, 0
  %v4625 = vsel %vm382, %v4474, 0
  %v4627 = vsel %vm382, %v4476, 0
  %v4629 = vsel %vm382, %v4478, 0
  %v4631 = vsel %vm382, %v4480, 0
  %v4633 = vsel %vm382, %v4482, 0
  %v4635 = vsel %vm382, %v4484, 0
  %v4637 = vsel %vm382, %v4486, 0
  %v4639 = vsel %vm382, %v4488, 0
  %v4641 = vsel %vm382, %v4490, 0
  %v4643 = vsel %vm382, %v4492, 0
  %v4645 = vsel %vm382, %v4494, 0
  %v4647 = vsel %vm382, %v4496, 0
  %v4649 = vsel %vm382, %v4498, 0
  %v4651 = vsel %vm382, %v4500, 0
  %v4653 = vsel %vm382, %v4502, 0
  %v4655 = vsel %vm382, %v4504, 0
  %v4657 = vsel %vm382, %v4506, 0
  %v4659 = vsel %vm382, %v4508, 0
  %v4661 = vsel %vm382, %v4510, 0
  %v4663 = vsel %vm382, %v4512, 0
  %v4665 = vsel %vm382, %v4514, 0
  %v4667 = vsel %vm382, %v4516, 0
  %v4669 = vsel %vm382, %v4518, 0
  %v4671 = vsel %vm382, %v4520, 0
  %v4673 = vsel %vm382, %v4522, 0
  %v4675 = vsel %vm382, %v4524, 0
  %v4677 = vsel %vm382, %v4526, 0
  %v4679 = vsel %vm382, %v4528, 0
  %v4681 = vsel %vm382, %v4530, 0
  %v4683 = vsel %vm382, %v4532, 0
  %v4685 = vsel %vm382, %v4534, 0
  %v4687 = vsel %vm382, %v4536, 0
  %v4689 = vsel %vm382, %v4538, 0
  %v4691 = vsel %vm382, %v4540, 0
  %v4693 = vsel %vm382, %v4542, 0
  %v4695 = vsel %vm382, %v4544, 0
  %v4697 = vsel %vm382, %v4546, 0
  %v4699 = vsel %vm382, %v4545, 0
  %4701 = vmatpush.msra.mxu0 0.0
  %4702 = vmatpush.msra.mxu0 0.0
  %4703 = vmatpush.msra.mxu0 0.0
  %4704 = vmatpush.msra.mxu0 0.0
  %4705 = vmatpush.msra.mxu0 0.0
  %4706 = vmatpush.msra.mxu0 0.0
  %4707 = vmatpush.msra.mxu0 0.0
  %4708 = vmatpush.msra.mxu0 0.0
  %4709 = vmatpush.msra.mxu0 0.0
  %4710 = vmatpush.msra.mxu0 0.0
  %4711 = vmatpush.msra.mxu0 0.0
  %4712 = vmatpush.msra.mxu0 0.0
  %4713 = vmatpush.msra.mxu0 0.0
  %4714 = vmatpush.msra.mxu0 0.0
  %4715 = vmatpush.msra.mxu0 0.0
  %4716 = vmatpush.msra.mxu0 %v149
  %4717 = vmatmul.f32.gmra.mxu0 %v4547
  %v4718 = vpop.f32.mrf.mxu0
  %v4719 = vadd.f32 0.0, %v4718
  %4720 = vmatmul.f32.gmra.mxu0 %v4549
  %v4721 = vpop.f32.mrf.mxu0
  %v4722 = vadd.f32 0.0, %v4721
  %4723 = vmatmul.f32.gmra.mxu0 %v4551
  %v4724 = vpop.f32.mrf.mxu0
  %v4725 = vadd.f32 0.0, %v4724
  %4726 = vmatmul.f32.gmra.mxu0 %v4553
  %v4727 = vpop.f32.mrf.mxu0
  %v4728 = vadd.f32 0.0, %v4727
  %4729 = vmatmul.f32.gmra.mxu0 %v4555
  %v4730 = vpop.f32.mrf.mxu0
  %v4731 = vadd.f32 0.0, %v4730
  %4732 = vmatmul.f32.gmra.mxu0 %v4557
  %v4733 = vpop.f32.mrf.mxu0
  %v4734 = vadd.f32 0.0, %v4733
  %4735 = vmatmul.f32.gmra.mxu0 %v4559
  %v4736 = vpop.f32.mrf.mxu0
  %v4737 = vadd.f32 0.0, %v4736
  %4738 = vmatmul.f32.gmra.mxu0 %v4561
  %v4739 = vpop.f32.mrf.mxu0
  %v4740 = vadd.f32 0.0, %v4739
  %4741 = vmatmul.f32.gmra.mxu0 %v4563
  %v4742 = vpop.f32.mrf.mxu0
  %v4743 = vadd.f32 0.0, %v4742
  %4744 = vmatmul.f32.gmra.mxu0 %v4565
  %v4745 = vpop.f32.mrf.mxu0
  %v4746 = vadd.f32 0.0, %v4745
  %4747 = vmatmul.f32.gmra.mxu0 %v4567
  %v4748 = vpop.f32.mrf.mxu0
  %v4749 = vadd.f32 0.0, %v4748
  %4750 = vmatmul.f32.gmra.mxu0 %v4569
  %v4751 = vpop.f32.mrf.mxu0
  %v4752 = vadd.f32 0.0, %v4751
  %4753 = vmatmul.f32.gmra.mxu0 %v4571
  %v4754 = vpop.f32.mrf.mxu0
  %v4755 = vadd.f32 0.0, %v4754
  %4756 = vmatmul.f32.gmra.mxu0 %v4573
  %v4757 = vpop.f32.mrf.mxu0
  %v4758 = vadd.f32 0.0, %v4757
  %4759 = vmatmul.f32.gmra.mxu0 %v4575
  %v4760 = vpop.f32.mrf.mxu0
  %v4761 = vadd.f32 0.0, %v4760
  %4762 = vmatmul.f32.gmra.mxu0 %v4577
  %v4763 = vpop.f32.mrf.mxu0
  %v4764 = vadd.f32 0.0, %v4763
  %4765 = vmatmul.f32.gmra.mxu0 %v4579
  %v4766 = vpop.f32.mrf.mxu0
  %v4767 = vadd.f32 0.0, %v4766
  %4768 = vmatmul.f32.gmra.mxu0 %v4581
  %v4769 = vpop.f32.mrf.mxu0
  %v4770 = vadd.f32 0.0, %v4769
  %4771 = vmatmul.f32.gmra.mxu0 %v4583
  %v4772 = vpop.f32.mrf.mxu0
  %v4773 = vadd.f32 0.0, %v4772
  %4774 = vmatmul.f32.gmra.mxu0 %v4585
  %v4775 = vpop.f32.mrf.mxu0
  %v4776 = vadd.f32 0.0, %v4775
  %4777 = vmatmul.f32.gmra.mxu0 %v4587
  %v4778 = vpop.f32.mrf.mxu0
  %v4779 = vadd.f32 0.0, %v4778
  %4780 = vmatmul.f32.gmra.mxu0 %v4589
  %v4781 = vpop.f32.mrf.mxu0
  %v4782 = vadd.f32 0.0, %v4781
  %4783 = vmatmul.f32.gmra.mxu0 %v4591
  %v4784 = vpop.f32.mrf.mxu0
  %v4785 = vadd.f32 0.0, %v4784
  %4786 = vmatmul.f32.gmra.mxu0 %v4593
  %v4787 = vpop.f32.mrf.mxu0
  %v4788 = vadd.f32 0.0, %v4787
  %4789 = vmatmul.f32.gmra.mxu0 %v4595
  %v4790 = vpop.f32.mrf.mxu0
  %v4791 = vadd.f32 0.0, %v4790
  %4792 = vmatmul.f32.gmra.mxu0 %v4597
  %v4793 = vpop.f32.mrf.mxu0
  %v4794 = vadd.f32 0.0, %v4793
  %4795 = vmatmul.f32.gmra.mxu0 %v4599
  %v4796 = vpop.f32.mrf.mxu0
  %v4797 = vadd.f32 0.0, %v4796
  %4798 = vmatmul.f32.gmra.mxu0 %v4601
  %v4799 = vpop.f32.mrf.mxu0
  %v4800 = vadd.f32 0.0, %v4799
  %4801 = vmatmul.f32.gmra.mxu0 %v4603
  %v4802 = vpop.f32.mrf.mxu0
  %v4803 = vadd.f32 0.0, %v4802
  %4804 = vmatmul.f32.gmra.mxu0 %v4605
  %v4805 = vpop.f32.mrf.mxu0
  %v4806 = vadd.f32 0.0, %v4805
  %4807 = vmatmul.f32.gmra.mxu0 %v4607
  %v4808 = vpop.f32.mrf.mxu0
  %v4809 = vadd.f32 0.0, %v4808
  %4810 = vmatmul.f32.gmra.mxu0 %v4609
  %v4811 = vpop.f32.mrf.mxu0
  %v4812 = vadd.f32 0.0, %v4811
  %4813 = vmatmul.f32.gmra.mxu0 %v4611
  %v4814 = vpop.f32.mrf.mxu0
  %v4815 = vadd.f32 0.0, %v4814
  %4816 = vmatmul.f32.gmra.mxu0 %v4613
  %v4817 = vpop.f32.mrf.mxu0
  %v4818 = vadd.f32 0.0, %v4817
  %4819 = vmatmul.f32.gmra.mxu0 %v4615
  %v4820 = vpop.f32.mrf.mxu0
  %v4821 = vadd.f32 0.0, %v4820
  %4822 = vmatmul.f32.gmra.mxu0 %v4617
  %v4823 = vpop.f32.mrf.mxu0
  %v4824 = vadd.f32 0.0, %v4823
  %4825 = vmatmul.f32.gmra.mxu0 %v4619
  %v4826 = vpop.f32.mrf.mxu0
  %v4827 = vadd.f32 0.0, %v4826
  %4828 = vmatmul.f32.gmra.mxu0 %v4621
  %v4829 = vpop.f32.mrf.mxu0
  %v4830 = vadd.f32 0.0, %v4829
  %4831 = vmatmul.f32.gmra.mxu0 %v4623
  %v4832 = vpop.f32.mrf.mxu0
  %v4833 = vadd.f32 0.0, %v4832
  %4834 = vmatmul.f32.gmra.mxu0 %v4625
  %v4835 = vpop.f32.mrf.mxu0
  %v4836 = vadd.f32 0.0, %v4835
  %4837 = vmatmul.f32.gmra.mxu0 %v4627
  %v4838 = vpop.f32.mrf.mxu0
  %v4839 = vadd.f32 0.0, %v4838
  %4840 = vmatmul.f32.gmra.mxu0 %v4629
  %v4841 = vpop.f32.mrf.mxu0
  %v4842 = vadd.f32 0.0, %v4841
  %4843 = vmatmul.f32.gmra.mxu0 %v4631
  %v4844 = vpop.f32.mrf.mxu0
  %v4845 = vadd.f32 0.0, %v4844
  %4846 = vmatmul.f32.gmra.mxu0 %v4633
  %v4847 = vpop.f32.mrf.mxu0
  %v4848 = vadd.f32 0.0, %v4847
  %4849 = vmatmul.f32.gmra.mxu0 %v4635
  %v4850 = vpop.f32.mrf.mxu0
  %v4851 = vadd.f32 0.0, %v4850
  %4852 = vmatmul.f32.gmra.mxu0 %v4637
  %v4853 = vpop.f32.mrf.mxu0
  %v4854 = vadd.f32 0.0, %v4853
  %4855 = vmatmul.f32.gmra.mxu0 %v4639
  %v4856 = vpop.f32.mrf.mxu0
  %v4857 = vadd.f32 0.0, %v4856
  %4858 = vmatmul.f32.gmra.mxu0 %v4641
  %v4859 = vpop.f32.mrf.mxu0
  %v4860 = vadd.f32 0.0, %v4859
  %4861 = vmatmul.f32.gmra.mxu0 %v4643
  %v4862 = vpop.f32.mrf.mxu0
  %v4863 = vadd.f32 0.0, %v4862
  %4864 = vmatmul.f32.gmra.mxu0 %v4645
  %v4865 = vpop.f32.mrf.mxu0
  %v4866 = vadd.f32 0.0, %v4865
  %4867 = vmatmul.f32.gmra.mxu0 %v4647
  %v4868 = vpop.f32.mrf.mxu0
  %v4869 = vadd.f32 0.0, %v4868
  %4870 = vmatmul.f32.gmra.mxu0 %v4649
  %v4871 = vpop.f32.mrf.mxu0
  %v4872 = vadd.f32 0.0, %v4871
  %4873 = vmatmul.f32.gmra.mxu0 %v4651
  %v4874 = vpop.f32.mrf.mxu0
  %v4875 = vadd.f32 0.0, %v4874
  %4876 = vmatmul.f32.gmra.mxu0 %v4653
  %v4877 = vpop.f32.mrf.mxu0
  %v4878 = vadd.f32 0.0, %v4877
  %4879 = vmatmul.f32.gmra.mxu0 %v4655
  %v4880 = vpop.f32.mrf.mxu0
  %v4881 = vadd.f32 0.0, %v4880
  %4882 = vmatmul.f32.gmra.mxu0 %v4657
  %v4883 = vpop.f32.mrf.mxu0
  %v4884 = vadd.f32 0.0, %v4883
  %4885 = vmatmul.f32.gmra.mxu0 %v4659
  %v4886 = vpop.f32.mrf.mxu0
  %v4887 = vadd.f32 0.0, %v4886
  %4888 = vmatmul.f32.gmra.mxu0 %v4661
  %v4889 = vpop.f32.mrf.mxu0
  %v4890 = vadd.f32 0.0, %v4889
  %4891 = vmatmul.f32.gmra.mxu0 %v4663
  %v4892 = vpop.f32.mrf.mxu0
  %v4893 = vadd.f32 0.0, %v4892
  %4894 = vmatmul.f32.gmra.mxu0 %v4665
  %v4895 = vpop.f32.mrf.mxu0
  %v4896 = vadd.f32 0.0, %v4895
  %4897 = vmatmul.f32.gmra.mxu0 %v4667
  %v4898 = vpop.f32.mrf.mxu0
  %v4899 = vadd.f32 0.0, %v4898
  %4900 = vmatmul.f32.gmra.mxu0 %v4669
  %v4901 = vpop.f32.mrf.mxu0
  %v4902 = vadd.f32 0.0, %v4901
  %4903 = vmatmul.f32.gmra.mxu0 %v4671
  %v4904 = vpop.f32.mrf.mxu0
  %v4905 = vadd.f32 0.0, %v4904
  %4906 = vmatmul.f32.gmra.mxu0 %v4673
  %v4907 = vpop.f32.mrf.mxu0
  %v4908 = vadd.f32 0.0, %v4907
  %4909 = vmatmul.f32.gmra.mxu0 %v4675
  %v4910 = vpop.f32.mrf.mxu0
  %v4911 = vadd.f32 0.0, %v4910
  %4912 = vmatmul.f32.gmra.mxu0 %v4677
  %v4913 = vpop.f32.mrf.mxu0
  %v4914 = vadd.f32 0.0, %v4913
  %4915 = vmatmul.f32.gmra.mxu0 %v4679
  %v4916 = vpop.f32.mrf.mxu0
  %v4917 = vadd.f32 0.0, %v4916
  %4918 = vmatmul.f32.gmra.mxu0 %v4681
  %v4919 = vpop.f32.mrf.mxu0
  %v4920 = vadd.f32 0.0, %v4919
  %4921 = vmatmul.f32.gmra.mxu0 %v4683
  %v4922 = vpop.f32.mrf.mxu0
  %v4923 = vadd.f32 0.0, %v4922
  %4924 = vmatmul.f32.gmra.mxu0 %v4685
  %v4925 = vpop.f32.mrf.mxu0
  %v4926 = vadd.f32 0.0, %v4925
  %4927 = vmatmul.f32.gmra.mxu0 %v4687
  %v4928 = vpop.f32.mrf.mxu0
  %v4929 = vadd.f32 0.0, %v4928
  %4930 = vmatmul.f32.gmra.mxu0 %v4689
  %v4931 = vpop.f32.mrf.mxu0
  %v4932 = vadd.f32 0.0, %v4931
  %4933 = vmatmul.f32.gmra.mxu0 %v4691
  %v4934 = vpop.f32.mrf.mxu0
  %v4935 = vadd.f32 0.0, %v4934
  %4936 = vmatmul.f32.gmra.mxu0 %v4693
  %v4937 = vpop.f32.mrf.mxu0
  %v4938 = vadd.f32 0.0, %v4937
  %4939 = vmatmul.f32.gmra.mxu0 %v4695
  %v4940 = vpop.f32.mrf.mxu0
  %v4941 = vadd.f32 0.0, %v4940
  %4942 = vmatmul.f32.gmra.mxu0 %v4697
  %v4943 = vpop.f32.mrf.mxu0
  %v4944 = vadd.f32 0.0, %v4943
  %4945 = vmatmul.f32.gmra.mxu0 %v4699
  %v4946 = vpop.f32.mrf.mxu0
  %v4947 = vadd.f32 0.0, %v4946
  %4948 = vdwg.mxu0
  %v4949 = vadd.f32 %v4316, %v4719
  %v4950 = vadd.f32 %v4317, %v4722
  %v4951 = vadd.f32 %v4318, %v4725
  %v4952 = vadd.f32 %v4319, %v4728
  %v4953 = vadd.f32 %v4320, %v4731
  %v4954 = vadd.f32 %v4321, %v4734
  %v4955 = vadd.f32 %v4322, %v4737
  %v4956 = vadd.f32 %v4323, %v4740
  %v4957 = vadd.f32 %v4324, %v4743
  %v4958 = vadd.f32 %v4325, %v4746
  %v4959 = vadd.f32 %v4326, %v4749
  %v4960 = vadd.f32 %v4327, %v4752
  %v4961 = vadd.f32 %v4328, %v4755
  %v4962 = vadd.f32 %v4329, %v4758
  %v4963 = vadd.f32 %v4330, %v4761
  %v4964 = vadd.f32 %v4331, %v4764
  %v4965 = vadd.f32 %v4332, %v4767
  %v4966 = vadd.f32 %v4333, %v4770
  %v4967 = vadd.f32 %v4334, %v4773
  %v4968 = vadd.f32 %v4335, %v4776
  %v4969 = vadd.f32 %v4336, %v4779
  %v4970 = vadd.f32 %v4337, %v4782
  %v4971 = vadd.f32 %v4338, %v4785
  %v4972 = vadd.f32 %v4339, %v4788
  %v4973 = vadd.f32 %v4340, %v4791
  %v4974 = vadd.f32 %v4341, %v4794
  %v4975 = vadd.f32 %v4342, %v4797
  %v4976 = vadd.f32 %v4343, %v4800
  %v4977 = vadd.f32 %v4344, %v4803
  %v4978 = vadd.f32 %v4345, %v4806
  %v4979 = vadd.f32 %v4346, %v4809
  %v4980 = vadd.f32 %v4347, %v4812
  %v4981 = vadd.f32 %v4348, %v4815
  %v4982 = vadd.f32 %v4349, %v4818
  %v4983 = vadd.f32 %v4350, %v4821
  %v4984 = vadd.f32 %v4351, %v4824
  %v4985 = vadd.f32 %v4352, %v4827
  %v4986 = vadd.f32 %v4353, %v4830
  %v4987 = vadd.f32 %v4354, %v4833
  %v4988 = vadd.f32 %v4355, %v4836
  %v4989 = vadd.f32 %v4356, %v4839
  %v4990 = vadd.f32 %v4357, %v4842
  %v4991 = vadd.f32 %v4358, %v4845
  %v4992 = vadd.f32 %v4359, %v4848
  %v4993 = vadd.f32 %v4360, %v4851
  %v4994 = vadd.f32 %v4361, %v4854
  %v4995 = vadd.f32 %v4362, %v4857
  %v4996 = vadd.f32 %v4363, %v4860
  %v4997 = vadd.f32 %v4364, %v4863
  %v4998 = vadd.f32 %v4365, %v4866
  %v4999 = vadd.f32 %v4366, %v4869
  %v5000 = vadd.f32 %v4367, %v4872
  %v5001 = vadd.f32 %v4368, %v4875
  %v5002 = vadd.f32 %v4369, %v4878
  %v5003 = vadd.f32 %v4370, %v4881
  %v5004 = vadd.f32 %v4371, %v4884
  %v5005 = vadd.f32 %v4372, %v4887
  %v5006 = vadd.f32 %v4373, %v4890
  %v5007 = vadd.f32 %v4374, %v4893
  %v5008 = vadd.f32 %v4375, %v4896
  %v5009 = vadd.f32 %v4376, %v4899
  %v5010 = vadd.f32 %v4377, %v4902
  %v5011 = vadd.f32 %v4378, %v4905
  %v5012 = vadd.f32 %v4379, %v4908
  %v5013 = vadd.f32 %v4380, %v4911
  %v5014 = vadd.f32 %v4381, %v4914
  %v5015 = vadd.f32 %v4382, %v4917
  %v5016 = vadd.f32 %v4383, %v4920
  %v5017 = vadd.f32 %v4384, %v4923
  %v5018 = vadd.f32 %v4385, %v4926
  %v5019 = vadd.f32 %v4386, %v4929
  %v5020 = vadd.f32 %v4387, %v4932
  %v5021 = vadd.f32 %v4388, %v4935
  %v5022 = vadd.f32 %v4389, %v4938
  %v5023 = vadd.f32 %v4390, %v4941
  %v5024 = vadd.f32 %v4391, %v4944
  %v5025 = vadd.f32 %v4392, %v4947
  %v5027 = vperm.slane %v150, 0
  %v5029 = vadd.f32 %v4949, %v5027
  %v5030 = vadd.f32 %v4950, %v5027
  %v5031 = vadd.f32 %v4951, %v5027
  %v5032 = vadd.f32 %v4952, %v5027
  %v5033 = vadd.f32 %v4953, %v5027
  %v5034 = vadd.f32 %v4954, %v5027
  %v5035 = vadd.f32 %v4955, %v5027
  %v5036 = vadd.f32 %v4956, %v5027
  %v5037 = vadd.f32 %v4957, %v5027
  %v5038 = vadd.f32 %v4958, %v5027
  %v5039 = vadd.f32 %v4959, %v5027
  %v5040 = vadd.f32 %v4960, %v5027
  %v5041 = vadd.f32 %v4961, %v5027
  %v5042 = vadd.f32 %v4962, %v5027
  %v5043 = vadd.f32 %v4963, %v5027
  %v5044 = vadd.f32 %v4964, %v5027
  %v5045 = vadd.f32 %v4965, %v5027
  %v5046 = vadd.f32 %v4966, %v5027
  %v5047 = vadd.f32 %v4967, %v5027
  %v5048 = vadd.f32 %v4968, %v5027
  %v5049 = vadd.f32 %v4969, %v5027
  %v5050 = vadd.f32 %v4970, %v5027
  %v5051 = vadd.f32 %v4971, %v5027
  %v5052 = vadd.f32 %v4972, %v5027
  %v5053 = vadd.f32 %v4973, %v5027
  %v5054 = vadd.f32 %v4974, %v5027
  %v5055 = vadd.f32 %v4975, %v5027
  %v5056 = vadd.f32 %v4976, %v5027
  %v5057 = vadd.f32 %v4977, %v5027
  %v5058 = vadd.f32 %v4978, %v5027
  %v5059 = vadd.f32 %v4979, %v5027
  %v5060 = vadd.f32 %v4980, %v5027
  %v5061 = vadd.f32 %v4981, %v5027
  %v5062 = vadd.f32 %v4982, %v5027
  %v5063 = vadd.f32 %v4983, %v5027
  %v5064 = vadd.f32 %v4984, %v5027
  %v5065 = vadd.f32 %v4985, %v5027
  %v5066 = vadd.f32 %v4986, %v5027
  %v5067 = vadd.f32 %v4987, %v5027
  %v5068 = vadd.f32 %v4988, %v5027
  %v5069 = vadd.f32 %v4989, %v5027
  %v5070 = vadd.f32 %v4990, %v5027
  %v5071 = vadd.f32 %v4991, %v5027
  %v5072 = vadd.f32 %v4992, %v5027
  %v5073 = vadd.f32 %v4993, %v5027
  %v5074 = vadd.f32 %v4994, %v5027
  %v5075 = vadd.f32 %v4995, %v5027
  %v5076 = vadd.f32 %v4996, %v5027
  %v5077 = vadd.f32 %v4997, %v5027
  %v5078 = vadd.f32 %v4998, %v5027
  %v5079 = vadd.f32 %v4999, %v5027
  %v5080 = vadd.f32 %v5000, %v5027
  %v5081 = vadd.f32 %v5001, %v5027
  %v5082 = vadd.f32 %v5002, %v5027
  %v5083 = vadd.f32 %v5003, %v5027
  %v5084 = vadd.f32 %v5004, %v5027
  %v5085 = vadd.f32 %v5005, %v5027
  %v5086 = vadd.f32 %v5006, %v5027
  %v5087 = vadd.f32 %v5007, %v5027
  %v5088 = vadd.f32 %v5008, %v5027
  %v5089 = vadd.f32 %v5009, %v5027
  %v5090 = vadd.f32 %v5010, %v5027
  %v5091 = vadd.f32 %v5011, %v5027
  %v5092 = vadd.f32 %v5012, %v5027
  %v5093 = vadd.f32 %v5013, %v5027
  %v5094 = vadd.f32 %v5014, %v5027
  %v5095 = vadd.f32 %v5015, %v5027
  %v5096 = vadd.f32 %v5016, %v5027
  %v5097 = vadd.f32 %v5017, %v5027
  %v5098 = vadd.f32 %v5018, %v5027
  %v5099 = vadd.f32 %v5019, %v5027
  %v5100 = vadd.f32 %v5020, %v5027
  %v5101 = vadd.f32 %v5021, %v5027
  %v5102 = vadd.f32 %v5022, %v5027
  %v5103 = vadd.f32 %v5023, %v5027
  %v5104 = vadd.f32 %v5024, %v5027
  %v5105 = vadd.f32 %v5025, %v5027
  %v5106 = vmax.f32 %v5029, 0.0
  %v5107 = vmax.f32 %v5030, 0.0
  %v5108 = vmax.f32 %v5031, 0.0
  %v5109 = vmax.f32 %v5032, 0.0
  %v5110 = vmax.f32 %v5033, 0.0
  %v5111 = vmax.f32 %v5034, 0.0
  %v5112 = vmax.f32 %v5035, 0.0
  %v5113 = vmax.f32 %v5036, 0.0
  %v5114 = vmax.f32 %v5037, 0.0
  %v5115 = vmax.f32 %v5038, 0.0
  %v5116 = vmax.f32 %v5039, 0.0
  %v5117 = vmax.f32 %v5040, 0.0
  %v5118 = vmax.f32 %v5041, 0.0
  %v5119 = vmax.f32 %v5042, 0.0
  %v5120 = vmax.f32 %v5043, 0.0
  %v5121 = vmax.f32 %v5044, 0.0
  %v5122 = vmax.f32 %v5045, 0.0
  %v5123 = vmax.f32 %v5046, 0.0
  %v5124 = vmax.f32 %v5047, 0.0
  %v5125 = vmax.f32 %v5048, 0.0
  %v5126 = vmax.f32 %v5049, 0.0
  %v5127 = vmax.f32 %v5050, 0.0
  %v5128 = vmax.f32 %v5051, 0.0
  %v5129 = vmax.f32 %v5052, 0.0
  %v5130 = vmax.f32 %v5053, 0.0
  %v5131 = vmax.f32 %v5054, 0.0
  %v5132 = vmax.f32 %v5055, 0.0
  %v5133 = vmax.f32 %v5056, 0.0
  %v5134 = vmax.f32 %v5057, 0.0
  %v5135 = vmax.f32 %v5058, 0.0
  %v5136 = vmax.f32 %v5059, 0.0
  %v5137 = vmax.f32 %v5060, 0.0
  %v5138 = vmax.f32 %v5061, 0.0
  %v5139 = vmax.f32 %v5062, 0.0
  %v5140 = vmax.f32 %v5063, 0.0
  %v5141 = vmax.f32 %v5064, 0.0
  %v5142 = vmax.f32 %v5065, 0.0
  %v5143 = vmax.f32 %v5066, 0.0
  %v5144 = vmax.f32 %v5067, 0.0
  %v5145 = vmax.f32 %v5068, 0.0
  %v5146 = vmax.f32 %v5069, 0.0
  %v5147 = vmax.f32 %v5070, 0.0
  %v5148 = vmax.f32 %v5071, 0.0
  %v5149 = vmax.f32 %v5072, 0.0
  %v5150 = vmax.f32 %v5073, 0.0
  %v5151 = vmax.f32 %v5074, 0.0
  %v5152 = vmax.f32 %v5075, 0.0
  %v5153 = vmax.f32 %v5076, 0.0
  %v5154 = vmax.f32 %v5077, 0.0
  %v5155 = vmax.f32 %v5078, 0.0
  %v5156 = vmax.f32 %v5079, 0.0
  %v5157 = vmax.f32 %v5080, 0.0
  %v5158 = vmax.f32 %v5081, 0.0
  %v5159 = vmax.f32 %v5082, 0.0
  %v5160 = vmax.f32 %v5083, 0.0
  %v5161 = vmax.f32 %v5084, 0.0
  %v5162 = vmax.f32 %v5085, 0.0
  %v5163 = vmax.f32 %v5086, 0.0
  %v5164 = vmax.f32 %v5087, 0.0
  %v5165 = vmax.f32 %v5088, 0.0
  %v5166 = vmax.f32 %v5089, 0.0
  %v5167 = vmax.f32 %v5090, 0.0
  %v5168 = vmax.f32 %v5091, 0.0
  %v5169 = vmax.f32 %v5092, 0.0
  %v5170 = vmax.f32 %v5093, 0.0
  %v5171 = vmax.f32 %v5094, 0.0
  %v5172 = vmax.f32 %v5095, 0.0
  %v5173 = vmax.f32 %v5096, 0.0
  %v5174 = vmax.f32 %v5097, 0.0
  %v5175 = vmax.f32 %v5098, 0.0
  %v5176 = vmax.f32 %v5099, 0.0
  %v5177 = vmax.f32 %v5100, 0.0
  %v5178 = vmax.f32 %v5101, 0.0
  %v5179 = vmax.f32 %v5102, 0.0
  %v5180 = vmax.f32 %v5103, 0.0
  %v5181 = vmax.f32 %v5104, 0.0
  %v5182 = vmax.f32 %v5105, 0.0
  %v5183 = vld [vmem:[%s13] sm:$0xff]
  %v5184 = vld [vmem:[%s13 + $0x8] sm:$0xff]
  %v5185 = vld [vmem:[%s13 + $0x10] sm:$0xff]
  %v5186 = vld [vmem:[%s13 + $0x18] sm:$0xff]
  %v5187 = vld [vmem:[%s13 + $0x20] sm:$0xff]
  %v5188 = vld [vmem:[%s13 + $0x28] sm:$0xff]
  %v5189 = vld [vmem:[%s13 + $0x30] sm:$0xff]
  %v5190 = vld [vmem:[%s13 + $0x38] sm:$0xff]
  %v5191 = vld [vmem:[%s13 + $0x40] sm:$0xff]
  %v5192 = vld [vmem:[%s13 + $0x48] sm:$0xff]
  %v5193 = vld [vmem:[%s13 + $0x50] sm:$0xff]
  %v5194 = vld [vmem:[%s13 + $0x58] sm:$0xff]
  %v5195 = vld [vmem:[%s13 + $0x60] sm:$0xff]
  %v5196 = vld [vmem:[%s13 + $0x68] sm:$0xff]
  %v5197 = vld [vmem:[%s13 + $0x70] sm:$0xff]
  %v5198 = vld [vmem:[%s13 + $0x78] sm:$0xff]
  %v5199 = vld [vmem:[%s13 + $0x80] sm:$0xff]
  %v5200 = vld [vmem:[%s13 + $0x88] sm:$0xff]
  %v5201 = vld [vmem:[%s13 + $0x90] sm:$0xff]
  %v5202 = vld [vmem:[%s13 + $0x98] sm:$0xff]
  %v5203 = vld [vmem:[%s13 + $0xa0] sm:$0xff]
  %v5204 = vld [vmem:[%s13 + $0xa8] sm:$0xff]
  %v5205 = vld [vmem:[%s13 + $0xb0] sm:$0xff]
  %v5206 = vld [vmem:[%s13 + $0xb8] sm:$0xff]
  %v5207 = vld [vmem:[%s13 + $0xc0] sm:$0xff]
  %v5208 = vld [vmem:[%s13 + $0xc8] sm:$0xff]
  %v5209 = vld [vmem:[%s13 + $0xd0] sm:$0xff]
  %v5210 = vld [vmem:[%s13 + $0xd8] sm:$0xff]
  %v5211 = vld [vmem:[%s13 + $0xe0] sm:$0xff]
  %v5212 = vld [vmem:[%s13 + $0xe8] sm:$0xff]
  %v5213 = vld [vmem:[%s13 + $0xf0] sm:$0xff]
  %v5214 = vld [vmem:[%s13 + $0xf8] sm:$0xff]
  %v5215 = vld [vmem:[%s13 + $0x100] sm:$0xff]
  %v5216 = vld [vmem:[%s13 + $0x108] sm:$0xff]
  %v5217 = vld [vmem:[%s13 + $0x110] sm:$0xff]
  %v5218 = vld [vmem:[%s13 + $0x118] sm:$0xff]
  %v5219 = vld [vmem:[%s13 + $0x120] sm:$0xff]
  %v5220 = vld [vmem:[%s13 + $0x128] sm:$0xff]
  %v5221 = vld [vmem:[%s13 + $0x130] sm:$0xff]
  %v5222 = vld [vmem:[%s13 + $0x138] sm:$0xff]
  %v5223 = vld [vmem:[%s13 + $0x140] sm:$0xff]
  %v5224 = vld [vmem:[%s13 + $0x148] sm:$0xff]
  %v5225 = vld [vmem:[%s13 + $0x150] sm:$0xff]
  %v5226 = vld [vmem:[%s13 + $0x158] sm:$0xff]
  %v5227 = vld [vmem:[%s13 + $0x160] sm:$0xff]
  %v5228 = vld [vmem:[%s13 + $0x168] sm:$0xff]
  %v5229 = vld [vmem:[%s13 + $0x170] sm:$0xff]
  %v5230 = vld [vmem:[%s13 + $0x178] sm:$0xff]
  %v5231 = vld [vmem:[%s13 + $0x180] sm:$0xff]
  %v5232 = vld [vmem:[%s13 + $0x188] sm:$0xff]
  %v5233 = vld [vmem:[%s13 + $0x190] sm:$0xff]
  %v5234 = vld [vmem:[%s13 + $0x198] sm:$0xff]
  %v5235 = vld [vmem:[%s13 + $0x1a0] sm:$0xff]
  %v5236 = vld [vmem:[%s13 + $0x1a8] sm:$0xff]
  %v5237 = vld [vmem:[%s13 + $0x1b0] sm:$0xff]
  %v5238 = vld [vmem:[%s13 + $0x1b8] sm:$0xff]
  %v5239 = vld [vmem:[%s13 + $0x1c0] sm:$0xff]
  %v5240 = vld [vmem:[%s13 + $0x1c8] sm:$0xff]
  %v5241 = vld [vmem:[%s13 + $0x1d0] sm:$0xff]
  %v5242 = vld [vmem:[%s13 + $0x1d8] sm:$0xff]
  %v5243 = vld [vmem:[%s13 + $0x1e0] sm:$0xff]
  %v5244 = vld [vmem:[%s13 + $0x1e8] sm:$0xff]
  %v5245 = vld [vmem:[%s13 + $0x1f0] sm:$0xff]
  %v5246 = vld [vmem:[%s13 + $0x1f8] sm:$0xff]
  %v5247 = vld [vmem:[%s13 + $0x200] sm:$0xff]
  %v5248 = vld [vmem:[%s13 + $0x208] sm:$0xff]
  %v5249 = vld [vmem:[%s13 + $0x210] sm:$0xff]
  %v5250 = vld [vmem:[%s13 + $0x218] sm:$0xff]
  %v5251 = vld [vmem:[%s13 + $0x220] sm:$0xff]
  %v5252 = vld [vmem:[%s13 + $0x228] sm:$0xff]
  %v5253 = vld [vmem:[%s13 + $0x230] sm:$0xff]
  %v5254 = vld [vmem:[%s13 + $0x238] sm:$0xff]
  %v5255 = vld [vmem:[%s13 + $0x240] sm:$0xff]
  %v5256 = vld [vmem:[%s13 + $0x248] sm:$0xff]
  %v5257 = vld [vmem:[%s13 + $0x250] sm:$0xff]
  %v5258 = vld [vmem:[%s13 + $0x258] sm:$0xff]
  %v5259 = vld [vmem:[%s13 + $0x260] sm:$0xff]
  %v5260 = vld [vmem:[%s13 + $0x268] sm:$0xff]
  %v5261 = vld [vmem:[%s13 + $0x270] sm:$0xff]
  %v5262 = vld [vmem:[%s13 + $0x278] sm:$0xff]
  %v5263 = vld [vmem:[%s13 + $0x280] sm:$0xff]
  %v5264 = vld [vmem:[%s13 + $0x288] sm:$0xff]
  %v5265 = vld [vmem:[%s13 + $0x290] sm:$0xff]
  %v5266 = vld [vmem:[%s13 + $0x298] sm:$0xff]
  %v5267 = vld [vmem:[%s13 + $0x2a0] sm:$0xff]
  %v5268 = vld [vmem:[%s13 + $0x2a8] sm:$0xff]
  %v5269 = vld [vmem:[%s13 + $0x2b0] sm:$0xff]
  %v5270 = vld [vmem:[%s13 + $0x2b8] sm:$0xff]
  %v5271 = vld [vmem:[%s13 + $0x2c0] sm:$0xff]
  %v5272 = vld [vmem:[%s13 + $0x2c8] sm:$0xff]
  %v5273 = vld [vmem:[%s13 + $0x2d0] sm:$0xff]
  %v5274 = vld [vmem:[%s13 + $0x2d8] sm:$0xff]
  %v5275 = vld [vmem:[%s13 + $0x2e0] sm:$0xff]
  %v5276 = vld [vmem:[%s13 + $0x2e8] sm:$0xff]
  %v5277 = vld [vmem:[%s13 + $0x2f0] sm:$0xff]
  %v5278 = vld [vmem:[%s13 + $0x2f8] sm:$0xff]
  %v5279 = vld [vmem:[%s13 + $0x300] sm:$0xff]
  %v5280 = vld [vmem:[%s13 + $0x308] sm:$0xff]
  %v5281 = vld [vmem:[%s13 + $0x310] sm:$0xff]
  %v5282 = vld [vmem:[%s13 + $0x318] sm:$0xff]
  %v5283 = vld [vmem:[%s13 + $0x320] sm:$0xff]
  %v5284 = vld [vmem:[%s13 + $0x328] sm:$0xff]
  %v5285 = vld [vmem:[%s13 + $0x330] sm:$0xff]
  %v5286 = vld [vmem:[%s13 + $0x338] sm:$0xff]
  %v5287 = vld [vmem:[%s13 + $0x340] sm:$0xff]
  %v5288 = vld [vmem:[%s13 + $0x348] sm:$0xff]
  %v5289 = vld [vmem:[%s13 + $0x350] sm:$0xff]
  %v5290 = vld [vmem:[%s13 + $0x358] sm:$0xff]
  %v5291 = vld [vmem:[%s13 + $0x360] sm:$0xff]
  %v5292 = vld [vmem:[%s13 + $0x368] sm:$0xff]
  %v5293 = vld [vmem:[%s13 + $0x370] sm:$0xff]
  %v5294 = vld [vmem:[%s13 + $0x378] sm:$0xff]
  %v5295 = vld [vmem:[%s13 + $0x380] sm:$0xff]
  %v5296 = vld [vmem:[%s13 + $0x388] sm:$0xff]
  %v5297 = vld [vmem:[%s13 + $0x390] sm:$0xff]
  %v5298 = vld [vmem:[%s13 + $0x398] sm:$0xff]
  %v5299 = vld [vmem:[%s13 + $0x3a0] sm:$0xff]
  %v5300 = vld [vmem:[%s13 + $0x3a8] sm:$0xff]
  %v5301 = vld [vmem:[%s13 + $0x3b0] sm:$0xff]
  %v5302 = vld [vmem:[%s13 + $0x3b8] sm:$0xff]
  %v5303 = vld [vmem:[%s13 + $0x3c0] sm:$0xff]
  %v5304 = vld [vmem:[%s13 + $0x3c8] sm:$0xff]
  %v5305 = vld [vmem:[%s13 + $0x3d0] sm:$0xff]
  %v5306 = vld [vmem:[%s13 + $0x3d8] sm:$0xff]
  %v5307 = vld [vmem:[%s13 + $0x3e0] sm:$0xff]
  %vm5308 = vcmask 801792
  %v5310 = vsel %vm5308, %v5187, 0
  %v5313 = vsel %vm5308, %v5192, 0
  %v5316 = vsel %vm5308, %v5197, 0
  %v5319 = vsel %vm5308, %v5202, 0
  %v5322 = vsel %vm5308, %v5207, 0
  %v5325 = vsel %vm5308, %v5212, 0
  %v5328 = vsel %vm5308, %v5217, 0
  %v5331 = vsel %vm5308, %v5222, 0
  %v5334 = vsel %vm5308, %v5227, 0
  %v5337 = vsel %vm5308, %v5232, 0
  %v5340 = vsel %vm5308, %v5237, 0
  %v5343 = vsel %vm5308, %v5242, 0
  %v5346 = vsel %vm5308, %v5247, 0
  %v5349 = vsel %vm5308, %v5252, 0
  %v5352 = vsel %vm5308, %v5257, 0
  %v5355 = vsel %vm5308, %v5262, 0
  %v5358 = vsel %vm5308, %v5267, 0
  %v5361 = vsel %vm5308, %v5272, 0
  %v5364 = vsel %vm5308, %v5277, 0
  %v5367 = vsel %vm5308, %v5282, 0
  %v5370 = vsel %vm5308, %v5287, 0
  %v5373 = vsel %vm5308, %v5292, 0
  %v5376 = vsel %vm5308, %v5297, 0
  %v5379 = vsel %vm5308, %v5302, 0
  %v5382 = vsel %vm5308, %v5307, 0
  %v5385 = vsel %vm4393, %v5182, 0
  %5387 = vmatpush.msra.mxu0 %v5121
  %5388 = vmatpush.msra.mxu0 %v5120
  %5389 = vmatpush.msra.mxu0 %v5119
  %5390 = vmatpush.msra.mxu0 %v5118
  %5391 = vmatpush.msra.mxu0 %v5117
  %5392 = vmatpush.msra.mxu0 %v5116
  %5393 = vmatpush.msra.mxu0 %v5115
  %5394 = vmatpush.msra.mxu0 %v5114
  %5395 = vmatpush.msra.mxu0 %v5113
  %5396 = vmatpush.msra.mxu0 %v5112
  %5397 = vmatpush.msra.mxu0 %v5111
  %5398 = vmatpush.msra.mxu0 %v5110
  %5399 = vmatpush.msra.mxu0 %v5109
  %5400 = vmatpush.msra.mxu0 %v5108
  %5401 = vmatpush.msra.mxu0 %v5107
  %5402 = vmatpush.msra.mxu0 %v5106
  %5403 = vmatmul.f32.gmra.mxu0 %v5183
  %v5404 = vpop.f32.mrf.mxu0
  %v5405 = vadd.f32 0.0, %v5404
  %5406 = vmatmul.f32.gmra.mxu0 %v5188
  %v5407 = vpop.f32.mrf.mxu0
  %v5408 = vadd.f32 0.0, %v5407
  %5409 = vmatmul.f32.gmra.mxu0 %v5193
  %v5410 = vpop.f32.mrf.mxu0
  %v5411 = vadd.f32 0.0, %v5410
  %5412 = vmatmul.f32.gmra.mxu0 %v5198
  %v5413 = vpop.f32.mrf.mxu0
  %v5414 = vadd.f32 0.0, %v5413
  %5415 = vmatmul.f32.gmra.mxu0 %v5203
  %v5416 = vpop.f32.mrf.mxu0
  %v5417 = vadd.f32 0.0, %v5416
  %5418 = vmatmul.f32.gmra.mxu0 %v5208
  %v5419 = vpop.f32.mrf.mxu0
  %v5420 = vadd.f32 0.0, %v5419
  %5421 = vmatmul.f32.gmra.mxu0 %v5213
  %v5422 = vpop.f32.mrf.mxu0
  %v5423 = vadd.f32 0.0, %v5422
  %5424 = vmatmul.f32.gmra.mxu0 %v5218
  %v5425 = vpop.f32.mrf.mxu0
  %v5426 = vadd.f32 0.0, %v5425
  %5427 = vmatmul.f32.gmra.mxu0 %v5223
  %v5428 = vpop.f32.mrf.mxu0
  %v5429 = vadd.f32 0.0, %v5428
  %5430 = vmatmul.f32.gmra.mxu0 %v5228
  %v5431 = vpop.f32.mrf.mxu0
  %v5432 = vadd.f32 0.0, %v5431
  %5433 = vmatmul.f32.gmra.mxu0 %v5233
  %v5434 = vpop.f32.mrf.mxu0
  %v5435 = vadd.f32 0.0, %v5434
  %5436 = vmatmul.f32.gmra.mxu0 %v5238
  %v5437 = vpop.f32.mrf.mxu0
  %v5438 = vadd.f32 0.0, %v5437
  %5439 = vmatmul.f32.gmra.mxu0 %v5243
  %v5440 = vpop.f32.mrf.mxu0
  %v5441 = vadd.f32 0.0, %v5440
  %5442 = vmatmul.f32.gmra.mxu0 %v5248
  %v5443 = vpop.f32.mrf.mxu0
  %v5444 = vadd.f32 0.0, %v5443
  %5445 = vmatmul.f32.gmra.mxu0 %v5253
  %v5446 = vpop.f32.mrf.mxu0
  %v5447 = vadd.f32 0.0, %v5446
  %5448 = vmatmul.f32.gmra.mxu0 %v5258
  %v5449 = vpop.f32.mrf.mxu0
  %v5450 = vadd.f32 0.0, %v5449
  %5451 = vmatmul.f32.gmra.mxu0 %v5263
  %v5452 = vpop.f32.mrf.mxu0
  %v5453 = vadd.f32 0.0, %v5452
  %5454 = vmatmul.f32.gmra.mxu0 %v5268
  %v5455 = vpop.f32.mrf.mxu0
  %v5456 = vadd.f32 0.0, %v5455
  %5457 = vmatmul.f32.gmra.mxu0 %v5273
  %v5458 = vpop.f32.mrf.mxu0
  %v5459 = vadd.f32 0.0, %v5458
  %5460 = vmatmul.f32.gmra.mxu0 %v5278
  %v5461 = vpop.f32.mrf.mxu0
  %v5462 = vadd.f32 0.0, %v5461
  %5463 = vmatmul.f32.gmra.mxu0 %v5283
  %v5464 = vpop.f32.mrf.mxu0
  %v5465 = vadd.f32 0.0, %v5464
  %5466 = vmatmul.f32.gmra.mxu0 %v5288
  %v5467 = vpop.f32.mrf.mxu0
  %v5468 = vadd.f32 0.0, %v5467
  %5469 = vmatmul.f32.gmra.mxu0 %v5293
  %v5470 = vpop.f32.mrf.mxu0
  %v5471 = vadd.f32 0.0, %v5470
  %5472 = vmatmul.f32.gmra.mxu0 %v5298
  %v5473 = vpop.f32.mrf.mxu0
  %v5474 = vadd.f32 0.0, %v5473
  %5475 = vmatmul.f32.gmra.mxu0 %v5303
  %v5476 = vpop.f32.mrf.mxu0
  %v5477 = vadd.f32 0.0, %v5476
  %5478 = vdwg.mxu0
  %5479 = vmatpush.msra.mxu0 %v5137
  %5480 = vmatpush.msra.mxu0 %v5136
  %5481 = vmatpush.msra.mxu0 %v5135
  %5482 = vmatpush.msra.mxu0 %v5134
  %5483 = vmatpush.msra.mxu0 %v5133
  %5484 = vmatpush.msra.mxu0 %v5132
  %5485 = vmatpush.msra.mxu0 %v5131
  %5486 = vmatpush.msra.mxu0 %v5130
  %5487 = vmatpush.msra.mxu0 %v5129
  %5488 = vmatpush.msra.mxu0 %v5128
  %5489 = vmatpush.msra.mxu0 %v5127
  %5490 = vmatpush.msra.mxu0 %v5126
  %5491 = vmatpush.msra.mxu0 %v5125
  %5492 = vmatpush.msra.mxu0 %v5124
  %5493 = vmatpush.msra.mxu0 %v5123
  %5494 = vmatpush.msra.mxu0 %v5122
  %5495 = vmatmul.f32.gmra.mxu0 %v5184
  %v5496 = vpop.f32.mrf.mxu0
  %v5497 = vadd.f32 %v5405, %v5496
  %5498 = vmatmul.f32.gmra.mxu0 %v5189
  %v5499 = vpop.f32.mrf.mxu0
  %v5500 = vadd.f32 %v5408, %v5499
  %5501 = vmatmul.f32.gmra.mxu0 %v5194
  %v5502 = vpop.f32.mrf.mxu0
  %v5503 = vadd.f32 %v5411, %v5502
  %5504 = vmatmul.f32.gmra.mxu0 %v5199
  %v5505 = vpop.f32.mrf.mxu0
  %v5506 = vadd.f32 %v5414, %v5505
  %5507 = vmatmul.f32.gmra.mxu0 %v5204
  %v5508 = vpop.f32.mrf.mxu0
  %v5509 = vadd.f32 %v5417, %v5508
  %5510 = vmatmul.f32.gmra.mxu0 %v5209
  %v5511 = vpop.f32.mrf.mxu0
  %v5512 = vadd.f32 %v5420, %v5511
  %5513 = vmatmul.f32.gmra.mxu0 %v5214
  %v5514 = vpop.f32.mrf.mxu0
  %v5515 = vadd.f32 %v5423, %v5514
  %5516 = vmatmul.f32.gmra.mxu0 %v5219
  %v5517 = vpop.f32.mrf.mxu0
  %v5518 = vadd.f32 %v5426, %v5517
  %5519 = vmatmul.f32.gmra.mxu0 %v5224
  %v5520 = vpop.f32.mrf.mxu0
  %v5521 = vadd.f32 %v5429, %v5520
  %5522 = vmatmul.f32.gmra.mxu0 %v5229
  %v5523 = vpop.f32.mrf.mxu0
  %v5524 = vadd.f32 %v5432, %v5523
  %5525 = vmatmul.f32.gmra.mxu0 %v5234
  %v5526 = vpop.f32.mrf.mxu0
  %v5527 = vadd.f32 %v5435, %v5526
  %5528 = vmatmul.f32.gmra.mxu0 %v5239
  %v5529 = vpop.f32.mrf.mxu0
  %v5530 = vadd.f32 %v5438, %v5529
  %5531 = vmatmul.f32.gmra.mxu0 %v5244
  %v5532 = vpop.f32.mrf.mxu0
  %v5533 = vadd.f32 %v5441, %v5532
  %5534 = vmatmul.f32.gmra.mxu0 %v5249
  %v5535 = vpop.f32.mrf.mxu0
  %v5536 = vadd.f32 %v5444, %v5535
  %5537 = vmatmul.f32.gmra.mxu0 %v5254
  %v5538 = vpop.f32.mrf.mxu0
  %v5539 = vadd.f32 %v5447, %v5538
  %5540 = vmatmul.f32.gmra.mxu0 %v5259
  %v5541 = vpop.f32.mrf.mxu0
  %v5542 = vadd.f32 %v5450, %v5541
  %5543 = vmatmul.f32.gmra.mxu0 %v5264
  %v5544 = vpop.f32.mrf.mxu0
  %v5545 = vadd.f32 %v5453, %v5544
  %5546 = vmatmul.f32.gmra.mxu0 %v5269
  %v5547 = vpop.f32.mrf.mxu0
  %v5548 = vadd.f32 %v5456, %v5547
  %5549 = vmatmul.f32.gmra.mxu0 %v5274
  %v5550 = vpop.f32.mrf.mxu0
  %v5551 = vadd.f32 %v5459, %v5550
  %5552 = vmatmul.f32.gmra.mxu0 %v5279
  %v5553 = vpop.f32.mrf.mxu0
  %v5554 = vadd.f32 %v5462, %v5553
  %5555 = vmatmul.f32.gmra.mxu0 %v5284
  %v5556 = vpop.f32.mrf.mxu0
  %v5557 = vadd.f32 %v5465, %v5556
  %5558 = vmatmul.f32.gmra.mxu0 %v5289
  %v5559 = vpop.f32.mrf.mxu0
  %v5560 = vadd.f32 %v5468, %v5559
  %5561 = vmatmul.f32.gmra.mxu0 %v5294
  %v5562 = vpop.f32.mrf.mxu0
  %v5563 = vadd.f32 %v5471, %v5562
  %5564 = vmatmul.f32.gmra.mxu0 %v5299
  %v5565 = vpop.f32.mrf.mxu0
  %v5566 = vadd.f32 %v5474, %v5565
  %5567 = vmatmul.f32.gmra.mxu0 %v5304
  %v5568 = vpop.f32.mrf.mxu0
  %v5569 = vadd.f32 %v5477, %v5568
  %5570 = vdwg.mxu0
  %5571 = vmatpush.msra.mxu0 %v5153
  %5572 = vmatpush.msra.mxu0 %v5152
  %5573 = vmatpush.msra.mxu0 %v5151
  %5574 = vmatpush.msra.mxu0 %v5150
  %5575 = vmatpush.msra.mxu0 %v5149
  %5576 = vmatpush.msra.mxu0 %v5148
  %5577 = vmatpush.msra.mxu0 %v5147
  %5578 = vmatpush.msra.mxu0 %v5146
  %5579 = vmatpush.msra.mxu0 %v5145
  %5580 = vmatpush.msra.mxu0 %v5144
  %5581 = vmatpush.msra.mxu0 %v5143
  %5582 = vmatpush.msra.mxu0 %v5142
  %5583 = vmatpush.msra.mxu0 %v5141
  %5584 = vmatpush.msra.mxu0 %v5140
  %5585 = vmatpush.msra.mxu0 %v5139
  %5586 = vmatpush.msra.mxu0 %v5138
  %5587 = vmatmul.f32.gmra.mxu0 %v5185
  %v5588 = vpop.f32.mrf.mxu0
  %v5589 = vadd.f32 %v5497, %v5588
  %5590 = vmatmul.f32.gmra.mxu0 %v5190
  %v5591 = vpop.f32.mrf.mxu0
  %v5592 = vadd.f32 %v5500, %v5591
  %5593 = vmatmul.f32.gmra.mxu0 %v5195
  %v5594 = vpop.f32.mrf.mxu0
  %v5595 = vadd.f32 %v5503, %v5594
  %5596 = vmatmul.f32.gmra.mxu0 %v5200
  %v5597 = vpop.f32.mrf.mxu0
  %v5598 = vadd.f32 %v5506, %v5597
  %5599 = vmatmul.f32.gmra.mxu0 %v5205
  %v5600 = vpop.f32.mrf.mxu0
  %v5601 = vadd.f32 %v5509, %v5600
  %5602 = vmatmul.f32.gmra.mxu0 %v5210
  %v5603 = vpop.f32.mrf.mxu0
  %v5604 = vadd.f32 %v5512, %v5603
  %5605 = vmatmul.f32.gmra.mxu0 %v5215
  %v5606 = vpop.f32.mrf.mxu0
  %v5607 = vadd.f32 %v5515, %v5606
  %5608 = vmatmul.f32.gmra.mxu0 %v5220
  %v5609 = vpop.f32.mrf.mxu0
  %v5610 = vadd.f32 %v5518, %v5609
  %5611 = vmatmul.f32.gmra.mxu0 %v5225
  %v5612 = vpop.f32.mrf.mxu0
  %v5613 = vadd.f32 %v5521, %v5612
  %5614 = vmatmul.f32.gmra.mxu0 %v5230
  %v5615 = vpop.f32.mrf.mxu0
  %v5616 = vadd.f32 %v5524, %v5615
  %5617 = vmatmul.f32.gmra.mxu0 %v5235
  %v5618 = vpop.f32.mrf.mxu0
  %v5619 = vadd.f32 %v5527, %v5618
  %5620 = vmatmul.f32.gmra.mxu0 %v5240
  %v5621 = vpop.f32.mrf.mxu0
  %v5622 = vadd.f32 %v5530, %v5621
  %5623 = vmatmul.f32.gmra.mxu0 %v5245
  %v5624 = vpop.f32.mrf.mxu0
  %v5625 = vadd.f32 %v5533, %v5624
  %5626 = vmatmul.f32.gmra.mxu0 %v5250
  %v5627 = vpop.f32.mrf.mxu0
  %v5628 = vadd.f32 %v5536, %v5627
  %5629 = vmatmul.f32.gmra.mxu0 %v5255
  %v5630 = vpop.f32.mrf.mxu0
  %v5631 = vadd.f32 %v5539, %v5630
  %5632 = vmatmul.f32.gmra.mxu0 %v5260
  %v5633 = vpop.f32.mrf.mxu0
  %v5634 = vadd.f32 %v5542, %v5633
  %5635 = vmatmul.f32.gmra.mxu0 %v5265
  %v5636 = vpop.f32.mrf.mxu0
  %v5637 = vadd.f32 %v5545, %v5636
  %5638 = vmatmul.f32.gmra.mxu0 %v5270
  %v5639 = vpop.f32.mrf.mxu0
  %v5640 = vadd.f32 %v5548, %v5639
  %5641 = vmatmul.f32.gmra.mxu0 %v5275
  %v5642 = vpop.f32.mrf.mxu0
  %v5643 = vadd.f32 %v5551, %v5642
  %5644 = vmatmul.f32.gmra.mxu0 %v5280
  %v5645 = vpop.f32.mrf.mxu0
  %v5646 = vadd.f32 %v5554, %v5645
  %5647 = vmatmul.f32.gmra.mxu0 %v5285
  %v5648 = vpop.f32.mrf.mxu0
  %v5649 = vadd.f32 %v5557, %v5648
  %5650 = vmatmul.f32.gmra.mxu0 %v5290
  %v5651 = vpop.f32.mrf.mxu0
  %v5652 = vadd.f32 %v5560, %v5651
  %5653 = vmatmul.f32.gmra.mxu0 %v5295
  %v5654 = vpop.f32.mrf.mxu0
  %v5655 = vadd.f32 %v5563, %v5654
  %5656 = vmatmul.f32.gmra.mxu0 %v5300
  %v5657 = vpop.f32.mrf.mxu0
  %v5658 = vadd.f32 %v5566, %v5657
  %5659 = vmatmul.f32.gmra.mxu0 %v5305
  %v5660 = vpop.f32.mrf.mxu0
  %v5661 = vadd.f32 %v5569, %v5660
  %5662 = vdwg.mxu0
  %5663 = vmatpush.msra.mxu0 %v5169
  %5664 = vmatpush.msra.mxu0 %v5168
  %5665 = vmatpush.msra.mxu0 %v5167
  %5666 = vmatpush.msra.mxu0 %v5166
  %5667 = vmatpush.msra.mxu0 %v5165
  %5668 = vmatpush.msra.mxu0 %v5164
  %5669 = vmatpush.msra.mxu0 %v5163
  %5670 = vmatpush.msra.mxu0 %v5162
  %5671 = vmatpush.msra.mxu0 %v5161
  %5672 = vmatpush.msra.mxu0 %v5160
  %5673 = vmatpush.msra.mxu0 %v5159
  %5674 = vmatpush.msra.mxu0 %v5158
  %5675 = vmatpush.msra.mxu0 %v5157
  %5676 = vmatpush.msra.mxu0 %v5156
  %5677 = vmatpush.msra.mxu0 %v5155
  %5678 = vmatpush.msra.mxu0 %v5154
  %5679 = vmatmul.f32.gmra.mxu0 %v5186
  %v5680 = vpop.f32.mrf.mxu0
  %v5681 = vadd.f32 %v5589, %v5680
  %5682 = vmatmul.f32.gmra.mxu0 %v5191
  %v5683 = vpop.f32.mrf.mxu0
  %v5684 = vadd.f32 %v5592, %v5683
  %5685 = vmatmul.f32.gmra.mxu0 %v5196
  %v5686 = vpop.f32.mrf.mxu0
  %v5687 = vadd.f32 %v5595, %v5686
  %5688 = vmatmul.f32.gmra.mxu0 %v5201
  %v5689 = vpop.f32.mrf.mxu0
  %v5690 = vadd.f32 %v5598, %v5689
  %5691 = vmatmul.f32.gmra.mxu0 %v5206
  %v5692 = vpop.f32.mrf.mxu0
  %v5693 = vadd.f32 %v5601, %v5692
  %5694 = vmatmul.f32.gmra.mxu0 %v5211
  %v5695 = vpop.f32.mrf.mxu0
  %v5696 = vadd.f32 %v5604, %v5695
  %5697 = vmatmul.f32.gmra.mxu0 %v5216
  %v5698 = vpop.f32.mrf.mxu0
  %v5699 = vadd.f32 %v5607, %v5698
  %5700 = vmatmul.f32.gmra.mxu0 %v5221
  %v5701 = vpop.f32.mrf.mxu0
  %v5702 = vadd.f32 %v5610, %v5701
  %5703 = vmatmul.f32.gmra.mxu0 %v5226
  %v5704 = vpop.f32.mrf.mxu0
  %v5705 = vadd.f32 %v5613, %v5704
  %5706 = vmatmul.f32.gmra.mxu0 %v5231
  %v5707 = vpop.f32.mrf.mxu0
  %v5708 = vadd.f32 %v5616, %v5707
  %5709 = vmatmul.f32.gmra.mxu0 %v5236
  %v5710 = vpop.f32.mrf.mxu0
  %v5711 = vadd.f32 %v5619, %v5710
  %5712 = vmatmul.f32.gmra.mxu0 %v5241
  %v5713 = vpop.f32.mrf.mxu0
  %v5714 = vadd.f32 %v5622, %v5713
  %5715 = vmatmul.f32.gmra.mxu0 %v5246
  %v5716 = vpop.f32.mrf.mxu0
  %v5717 = vadd.f32 %v5625, %v5716
  %5718 = vmatmul.f32.gmra.mxu0 %v5251
  %v5719 = vpop.f32.mrf.mxu0
  %v5720 = vadd.f32 %v5628, %v5719
  %5721 = vmatmul.f32.gmra.mxu0 %v5256
  %v5722 = vpop.f32.mrf.mxu0
  %v5723 = vadd.f32 %v5631, %v5722
  %5724 = vmatmul.f32.gmra.mxu0 %v5261
  %v5725 = vpop.f32.mrf.mxu0
  %v5726 = vadd.f32 %v5634, %v5725
  %5727 = vmatmul.f32.gmra.mxu0 %v5266
  %v5728 = vpop.f32.mrf.mxu0
  %v5729 = vadd.f32 %v5637, %v5728
  %5730 = vmatmul.f32.gmra.mxu0 %v5271
  %v5731 = vpop.f32.mrf.mxu0
  %v5732 = vadd.f32 %v5640, %v5731
  %5733 = vmatmul.f32.gmra.mxu0 %v5276
  %v5734 = vpop.f32.mrf.mxu0
  %v5735 = vadd.f32 %v5643, %v5734
  %5736 = vmatmul.f32.gmra.mxu0 %v5281
  %v5737 = vpop.f32.mrf.mxu0
  %v5738 = vadd.f32 %v5646, %v5737
  %5739 = vmatmul.f32.gmra.mxu0 %v5286
  %v5740 = vpop.f32.mrf.mxu0
  %v5741 = vadd.f32 %v5649, %v5740
  %5742 = vmatmul.f32.gmra.mxu0 %v5291
  %v5743 = vpop.f32.mrf.mxu0
  %v5744 = vadd.f32 %v5652, %v5743
  %5745 = vmatmul.f32.gmra.mxu0 %v5296
  %v5746 = vpop.f32.mrf.mxu0
  %v5747 = vadd.f32 %v5655, %v5746
  %5748 = vmatmul.f32.gmra.mxu0 %v5301
  %v5749 = vpop.f32.mrf.mxu0
  %v5750 = vadd.f32 %v5658, %v5749
  %5751 = vmatmul.f32.gmra.mxu0 %v5306
  %v5752 = vpop.f32.mrf.mxu0
  %v5753 = vadd.f32 %v5661, %v5752
  %5754 = vdwg.mxu0
  %5755 = vmatpush.msra.mxu0 0.0
  %5756 = vmatpush.msra.mxu0 0.0
  %5757 = vmatpush.msra.mxu0 0.0
  %5758 = vmatpush.msra.mxu0 %v5385
  %5759 = vmatpush.msra.mxu0 %v5181
  %5760 = vmatpush.msra.mxu0 %v5180
  %5761 = vmatpush.msra.mxu0 %v5179
  %5762 = vmatpush.msra.mxu0 %v5178
  %5763 = vmatpush.msra.mxu0 %v5177
  %5764 = vmatpush.msra.mxu0 %v5176
  %5765 = vmatpush.msra.mxu0 %v5175
  %5766 = vmatpush.msra.mxu0 %v5174
  %5767 = vmatpush.msra.mxu0 %v5173
  %5768 = vmatpush.msra.mxu0 %v5172
  %5769 = vmatpush.msra.mxu0 %v5171
  %5770 = vmatpush.msra.mxu0 %v5170
  %5771 = vmatmul.f32.gmra.mxu0 %v5310
  %v5772 = vpop.f32.mrf.mxu0
  %v5773 = vadd.f32 %v5681, %v5772
  %5774 = vmatmul.f32.gmra.mxu0 %v5313
  %v5775 = vpop.f32.mrf.mxu0
  %v5776 = vadd.f32 %v5684, %v5775
  %5777 = vmatmul.f32.gmra.mxu0 %v5316
  %v5778 = vpop.f32.mrf.mxu0
  %v5779 = vadd.f32 %v5687, %v5778
  %5780 = vmatmul.f32.gmra.mxu0 %v5319
  %v5781 = vpop.f32.mrf.mxu0
  %v5782 = vadd.f32 %v5690, %v5781
  %5783 = vmatmul.f32.gmra.mxu0 %v5322
  %v5784 = vpop.f32.mrf.mxu0
  %v5785 = vadd.f32 %v5693, %v5784
  %5786 = vmatmul.f32.gmra.mxu0 %v5325
  %v5787 = vpop.f32.mrf.mxu0
  %v5788 = vadd.f32 %v5696, %v5787
  %5789 = vmatmul.f32.gmra.mxu0 %v5328
  %v5790 = vpop.f32.mrf.mxu0
  %v5791 = vadd.f32 %v5699, %v5790
  %5792 = vmatmul.f32.gmra.mxu0 %v5331
  %v5793 = vpop.f32.mrf.mxu0
  %v5794 = vadd.f32 %v5702, %v5793
  %5795 = vmatmul.f32.gmra.mxu0 %v5334
  %v5796 = vpop.f32.mrf.mxu0
  %v5797 = vadd.f32 %v5705, %v5796
  %5798 = vmatmul.f32.gmra.mxu0 %v5337
  %v5799 = vpop.f32.mrf.mxu0
  %v5800 = vadd.f32 %v5708, %v5799
  %5801 = vmatmul.f32.gmra.mxu0 %v5340
  %v5802 = vpop.f32.mrf.mxu0
  %v5803 = vadd.f32 %v5711, %v5802
  %5804 = vmatmul.f32.gmra.mxu0 %v5343
  %v5805 = vpop.f32.mrf.mxu0
  %v5806 = vadd.f32 %v5714, %v5805
  %5807 = vmatmul.f32.gmra.mxu0 %v5346
  %v5808 = vpop.f32.mrf.mxu0
  %v5809 = vadd.f32 %v5717, %v5808
  %5810 = vmatmul.f32.gmra.mxu0 %v5349
  %v5811 = vpop.f32.mrf.mxu0
  %v5812 = vadd.f32 %v5720, %v5811
  %5813 = vmatmul.f32.gmra.mxu0 %v5352
  %v5814 = vpop.f32.mrf.mxu0
  %v5815 = vadd.f32 %v5723, %v5814
  %5816 = vmatmul.f32.gmra.mxu0 %v5355
  %v5817 = vpop.f32.mrf.mxu0
  %v5818 = vadd.f32 %v5726, %v5817
  %5819 = vmatmul.f32.gmra.mxu0 %v5358
  %v5820 = vpop.f32.mrf.mxu0
  %v5821 = vadd.f32 %v5729, %v5820
  %5822 = vmatmul.f32.gmra.mxu0 %v5361
  %v5823 = vpop.f32.mrf.mxu0
  %v5824 = vadd.f32 %v5732, %v5823
  %5825 = vmatmul.f32.gmra.mxu0 %v5364
  %v5826 = vpop.f32.mrf.mxu0
  %v5827 = vadd.f32 %v5735, %v5826
  %5828 = vmatmul.f32.gmra.mxu0 %v5367
  %v5829 = vpop.f32.mrf.mxu0
  %v5830 = vadd.f32 %v5738, %v5829
  %5831 = vmatmul.f32.gmra.mxu0 %v5370
  %v5832 = vpop.f32.mrf.mxu0
  %v5833 = vadd.f32 %v5741, %v5832
  %5834 = vmatmul.f32.gmra.mxu0 %v5373
  %v5835 = vpop.f32.mrf.mxu0
  %v5836 = vadd.f32 %v5744, %v5835
  %5837 = vmatmul.f32.gmra.mxu0 %v5376
  %v5838 = vpop.f32.mrf.mxu0
  %v5839 = vadd.f32 %v5747, %v5838
  %5840 = vmatmul.f32.gmra.mxu0 %v5379
  %v5841 = vpop.f32.mrf.mxu0
  %v5842 = vadd.f32 %v5750, %v5841
  %5843 = vmatmul.f32.gmra.mxu0 %v5382
  %v5844 = vpop.f32.mrf.mxu0
  %v5845 = vadd.f32 %v5753, %v5844
  %5846 = vdwg.mxu0
  %v5847 = vld [vmem:[%s3] sm:$0xff]
  %v5848 = vld [vmem:[%s3 + $0x8] sm:$0xff]
  %v5849 = vld [vmem:[%s3 + $0x10] sm:$0xff]
  %v5850 = vld [vmem:[%s3 + $0x18] sm:$0xff]
  %v5851 = vld [vmem:[%s3 + $0x20] sm:$0xff]
  %v5852 = vld [vmem:[%s3 + $0x28] sm:$0xff]
  %v5853 = vld [vmem:[%s3 + $0x30] sm:$0xff]
  %v5854 = vld [vmem:[%s3 + $0x38] sm:$0xff]
  %v5855 = vld [vmem:[%s3 + $0x40] sm:$0xff]
  %v5856 = vld [vmem:[%s3 + $0x48] sm:$0xff]
  %v5857 = vld [vmem:[%s3 + $0x50] sm:$0xff]
  %v5858 = vld [vmem:[%s3 + $0x58] sm:$0xff]
  %v5859 = vld [vmem:[%s3 + $0x60] sm:$0xff]
  %v5860 = vld [vmem:[%s3 + $0x68] sm:$0xff]
  %v5861 = vld [vmem:[%s3 + $0x70] sm:$0xff]
  %v5862 = vld [vmem:[%s3 + $0x78] sm:$0xff]
  %v5863 = vld [vmem:[%s3 + $0x80] sm:$0xff]
  %v5864 = vld [vmem:[%s3 + $0x88] sm:$0xff]
  %v5865 = vld [vmem:[%s4] sm:$0x1]
  %v5889 = vrot.slane %v5773, 1
  %v5890 = vrot.slane %v5776, 1
  %v5891 = vsel %vm228, %v5889, %v5890
  %v5892 = vrot.slane %v5779, 1
  %v5893 = vsel %vm228, %v5890, %v5892
  %v5894 = vrot.slane %v5782, 1
  %v5895 = vsel %vm228, %v5892, %v5894
  %v5896 = vrot.slane %v5785, 1
  %v5897 = vsel %vm228, %v5894, %v5896
  %v5898 = vrot.slane %v5788, 1
  %v5899 = vsel %vm228, %v5896, %v5898
  %v5900 = vrot.slane %v5791, 1
  %v5901 = vsel %vm228, %v5898, %v5900
  %v5902 = vrot.slane %v5794, 1
  %v5903 = vsel %vm228, %v5900, %v5902
  %v5904 = vrot.slane %v5797, 1
  %v5905 = vsel %vm228, %v5902, %v5904
  %v5906 = vrot.slane %v5800, 1
  %v5907 = vsel %vm228, %v5904, %v5906
  %v5908 = vrot.slane %v5803, 1
  %v5909 = vsel %vm228, %v5906, %v5908
  %v5910 = vrot.slane %v5806, 1
  %v5911 = vsel %vm228, %v5908, %v5910
  %v5912 = vrot.slane %v5809, 1
  %v5913 = vsel %vm228, %v5910, %v5912
  %v5914 = vrot.slane %v5812, 1
  %v5915 = vsel %vm228, %v5912, %v5914
  %v5916 = vrot.slane %v5815, 1
  %v5917 = vsel %vm228, %v5914, %v5916
  %v5918 = vrot.slane %v5818, 1
  %v5919 = vsel %vm228, %v5916, %v5918
  %v5920 = vrot.slane %v5821, 1
  %v5921 = vsel %vm228, %v5918, %v5920
  %v5922 = vrot.slane %v5824, 1
  %v5923 = vsel %vm228, %v5920, %v5922
  %v5924 = vrot.slane %v5827, 1
  %v5925 = vsel %vm228, %v5922, %v5924
  %v5926 = vrot.slane %v5830, 1
  %v5927 = vsel %vm228, %v5924, %v5926
  %v5928 = vrot.slane %v5833, 1
  %v5929 = vsel %vm228, %v5926, %v5928
  %v5930 = vrot.slane %v5836, 1
  %v5931 = vsel %vm228, %v5928, %v5930
  %v5932 = vrot.slane %v5839, 1
  %v5933 = vsel %vm228, %v5930, %v5932
  %vm5934 = vcmask 130048
  %v5935 = vsel %vm5934, %v5891, 0
  %v5937 = vsel %vm5934, %v5893, 0
  %v5939 = vsel %vm5934, %v5895, 0
  %v5941 = vsel %vm5934, %v5897, 0
  %v5943 = vsel %vm5934, %v5899, 0
  %v5945 = vsel %vm5934, %v5901, 0
  %v5947 = vsel %vm5934, %v5903, 0
  %v5949 = vsel %vm5934, %v5905, 0
  %v5951 = vsel %vm5934, %v5907, 0
  %v5953 = vsel %vm5934, %v5909, 0
  %v5955 = vsel %vm5934, %v5911, 0
  %v5957 = vsel %vm5934, %v5913, 0
  %v5959 = vsel %vm5934, %v5915, 0
  %v5961 = vsel %vm5934, %v5917, 0
  %v5963 = vsel %vm5934, %v5919, 0
  %v5965 = vsel %vm5934, %v5921, 0
  %v5967 = vsel %vm5934, %v5923, 0
  %v5969 = vsel %vm5934, %v5925, 0
  %v5971 = vsel %vm5934, %v5927, 0
  %v5973 = vsel %vm5934, %v5929, 0
  %v5975 = vsel %vm5934, %v5931, 0
  %v5977 = vsel %vm5934, %v5933, 0
  %v5979 = vsel %vm5934, %v5932, 0
  %5981 = vmatpush.msra.mxu0 0.0
  %5982 = vmatpush.msra.mxu0 0.0
  %5983 = vmatpush.msra.mxu0 0.0
  %5984 = vmatpush.msra.mxu0 0.0
  %5985 = vmatpush.msra.mxu0 0.0
  %5986 = vmatpush.msra.mxu0 0.0
  %5987 = vmatpush.msra.mxu0 0.0
  %5988 = vmatpush.msra.mxu0 0.0
  %5989 = vmatpush.msra.mxu0 0.0
  %5990 = vmatpush.msra.mxu0 0.0
  %5991 = vmatpush.msra.mxu0 0.0
  %5992 = vmatpush.msra.mxu0 0.0
  %5993 = vmatpush.msra.mxu0 0.0
  %5994 = vmatpush.msra.mxu0 0.0
  %5995 = vmatpush.msra.mxu0 %v5850
  %5996 = vmatpush.msra.mxu0 %v5849
  %5997 = vmatmul.f32.gmra.mxu0 %v5935
  %v5998 = vpop.f32.mrf.mxu0
  %v5999 = vadd.f32 0.0, %v5998
  %6000 = vmatmul.f32.gmra.mxu0 %v5937
  %v6001 = vpop.f32.mrf.mxu0
  %v6002 = vadd.f32 0.0, %v6001
  %6003 = vmatmul.f32.gmra.mxu0 %v5939
  %v6004 = vpop.f32.mrf.mxu0
  %v6005 = vadd.f32 0.0, %v6004
  %6006 = vmatmul.f32.gmra.mxu0 %v5941
  %v6007 = vpop.f32.mrf.mxu0
  %v6008 = vadd.f32 0.0, %v6007
  %6009 = vmatmul.f32.gmra.mxu0 %v5943
  %v6010 = vpop.f32.mrf.mxu0
  %v6011 = vadd.f32 0.0, %v6010
  %6012 = vmatmul.f32.gmra.mxu0 %v5945
  %v6013 = vpop.f32.mrf.mxu0
  %v6014 = vadd.f32 0.0, %v6013
  %6015 = vmatmul.f32.gmra.mxu0 %v5947
  %v6016 = vpop.f32.mrf.mxu0
  %v6017 = vadd.f32 0.0, %v6016
  %6018 = vmatmul.f32.gmra.mxu0 %v5949
  %v6019 = vpop.f32.mrf.mxu0
  %v6020 = vadd.f32 0.0, %v6019
  %6021 = vmatmul.f32.gmra.mxu0 %v5951
  %v6022 = vpop.f32.mrf.mxu0
  %v6023 = vadd.f32 0.0, %v6022
  %6024 = vmatmul.f32.gmra.mxu0 %v5953
  %v6025 = vpop.f32.mrf.mxu0
  %v6026 = vadd.f32 0.0, %v6025
  %6027 = vmatmul.f32.gmra.mxu0 %v5955
  %v6028 = vpop.f32.mrf.mxu0
  %v6029 = vadd.f32 0.0, %v6028
  %6030 = vmatmul.f32.gmra.mxu0 %v5957
  %v6031 = vpop.f32.mrf.mxu0
  %v6032 = vadd.f32 0.0, %v6031
  %6033 = vmatmul.f32.gmra.mxu0 %v5959
  %v6034 = vpop.f32.mrf.mxu0
  %v6035 = vadd.f32 0.0, %v6034
  %6036 = vmatmul.f32.gmra.mxu0 %v5961
  %v6037 = vpop.f32.mrf.mxu0
  %v6038 = vadd.f32 0.0, %v6037
  %6039 = vmatmul.f32.gmra.mxu0 %v5963
  %v6040 = vpop.f32.mrf.mxu0
  %v6041 = vadd.f32 0.0, %v6040
  %6042 = vmatmul.f32.gmra.mxu0 %v5965
  %v6043 = vpop.f32.mrf.mxu0
  %v6044 = vadd.f32 0.0, %v6043
  %6045 = vmatmul.f32.gmra.mxu0 %v5967
  %v6046 = vpop.f32.mrf.mxu0
  %v6047 = vadd.f32 0.0, %v6046
  %6048 = vmatmul.f32.gmra.mxu0 %v5969
  %v6049 = vpop.f32.mrf.mxu0
  %v6050 = vadd.f32 0.0, %v6049
  %6051 = vmatmul.f32.gmra.mxu0 %v5971
  %v6052 = vpop.f32.mrf.mxu0
  %v6053 = vadd.f32 0.0, %v6052
  %6054 = vmatmul.f32.gmra.mxu0 %v5973
  %v6055 = vpop.f32.mrf.mxu0
  %v6056 = vadd.f32 0.0, %v6055
  %6057 = vmatmul.f32.gmra.mxu0 %v5975
  %v6058 = vpop.f32.mrf.mxu0
  %v6059 = vadd.f32 0.0, %v6058
  %6060 = vmatmul.f32.gmra.mxu0 %v5977
  %v6061 = vpop.f32.mrf.mxu0
  %v6062 = vadd.f32 0.0, %v6061
  %6063 = vmatmul.f32.gmra.mxu0 %v5979
  %v6064 = vpop.f32.mrf.mxu0
  %v6065 = vadd.f32 0.0, %v6064
  %6066 = vdwg.mxu0
  %v6067 = vsel %vm5934, %v5773, 0
  %v6069 = vsel %vm5934, %v5776, 0
  %v6071 = vsel %vm5934, %v5779, 0
  %v6073 = vsel %vm5934, %v5782, 0
  %v6075 = vsel %vm5934, %v5785, 0
  %v6077 = vsel %vm5934, %v5788, 0
  %v6079 = vsel %vm5934, %v5791, 0
  %v6081 = vsel %vm5934, %v5794, 0
  %v6083 = vsel %vm5934, %v5797, 0
  %v6085 = vsel %vm5934, %v5800, 0
  %v6087 = vsel %vm5934, %v5803, 0
  %v6089 = vsel %vm5934, %v5806, 0
  %v6091 = vsel %vm5934, %v5809, 0
  %v6093 = vsel %vm5934, %v5812, 0
  %v6095 = vsel %vm5934, %v5815, 0
  %v6097 = vsel %vm5934, %v5818, 0
  %v6099 = vsel %vm5934, %v5821, 0
  %v6101 = vsel %vm5934, %v5824, 0
  %v6103 = vsel %vm5934, %v5827, 0
  %v6105 = vsel %vm5934, %v5830, 0
  %v6107 = vsel %vm5934, %v5833, 0
  %v6109 = vsel %vm5934, %v5836, 0
  %v6111 = vsel %vm5934, %v5839, 0
  %6113 = vmatpush.msra.mxu0 0.0
  %6114 = vmatpush.msra.mxu0 0.0
  %6115 = vmatpush.msra.mxu0 0.0
  %6116 = vmatpush.msra.mxu0 0.0
  %6117 = vmatpush.msra.mxu0 0.0
  %6118 = vmatpush.msra.mxu0 0.0
  %6119 = vmatpush.msra.mxu0 0.0
  %6120 = vmatpush.msra.mxu0 0.0
  %6121 = vmatpush.msra.mxu0 0.0
  %6122 = vmatpush.msra.mxu0 0.0
  %6123 = vmatpush.msra.mxu0 0.0
  %6124 = vmatpush.msra.mxu0 0.0
  %6125 = vmatpush.msra.mxu0 0.0
  %6126 = vmatpush.msra.mxu0 0.0
  %6127 = vmatpush.msra.mxu0 %v5848
  %6128 = vmatpush.msra.mxu0 %v5847
  %6129 = vmatmul.f32.gmra.mxu0 %v6067
  %v6130 = vpop.f32.mrf.mxu0
  %v6131 = vadd.f32 %v5999, %v6130
  %6132 = vmatmul.f32.gmra.mxu0 %v6069
  %v6133 = vpop.f32.mrf.mxu0
  %v6134 = vadd.f32 %v6002, %v6133
  %6135 = vmatmul.f32.gmra.mxu0 %v6071
  %v6136 = vpop.f32.mrf.mxu0
  %v6137 = vadd.f32 %v6005, %v6136
  %6138 = vmatmul.f32.gmra.mxu0 %v6073
  %v6139 = vpop.f32.mrf.mxu0
  %v6140 = vadd.f32 %v6008, %v6139
  %6141 = vmatmul.f32.gmra.mxu0 %v6075
  %v6142 = vpop.f32.mrf.mxu0
  %v6143 = vadd.f32 %v6011, %v6142
  %6144 = vmatmul.f32.gmra.mxu0 %v6077
  %v6145 = vpop.f32.mrf.mxu0
  %v6146 = vadd.f32 %v6014, %v6145
  %6147 = vmatmul.f32.gmra.mxu0 %v6079
  %v6148 = vpop.f32.mrf.mxu0
  %v6149 = vadd.f32 %v6017, %v6148
  %6150 = vmatmul.f32.gmra.mxu0 %v6081
  %v6151 = vpop.f32.mrf.mxu0
  %v6152 = vadd.f32 %v6020, %v6151
  %6153 = vmatmul.f32.gmra.mxu0 %v6083
  %v6154 = vpop.f32.mrf.mxu0
  %v6155 = vadd.f32 %v6023, %v6154
  %6156 = vmatmul.f32.gmra.mxu0 %v6085
  %v6157 = vpop.f32.mrf.mxu0
  %v6158 = vadd.f32 %v6026, %v6157
  %6159 = vmatmul.f32.gmra.mxu0 %v6087
  %v6160 = vpop.f32.mrf.mxu0
  %v6161 = vadd.f32 %v6029, %v6160
  %6162 = vmatmul.f32.gmra.mxu0 %v6089
  %v6163 = vpop.f32.mrf.mxu0
  %v6164 = vadd.f32 %v6032, %v6163
  %6165 = vmatmul.f32.gmra.mxu0 %v6091
  %v6166 = vpop.f32.mrf.mxu0
  %v6167 = vadd.f32 %v6035, %v6166
  %6168 = vmatmul.f32.gmra.mxu0 %v6093
  %v6169 = vpop.f32.mrf.mxu0
  %v6170 = vadd.f32 %v6038, %v6169
  %6171 = vmatmul.f32.gmra.mxu0 %v6095
  %v6172 = vpop.f32.mrf.mxu0
  %v6173 = vadd.f32 %v6041, %v6172
  %6174 = vmatmul.f32.gmra.mxu0 %v6097
  %v6175 = vpop.f32.mrf.mxu0
  %v6176 = vadd.f32 %v6044, %v6175
  %6177 = vmatmul.f32.gmra.mxu0 %v6099
  %v6178 = vpop.f32.mrf.mxu0
  %v6179 = vadd.f32 %v6047, %v6178
  %6180 = vmatmul.f32.gmra.mxu0 %v6101
  %v6181 = vpop.f32.mrf.mxu0
  %v6182 = vadd.f32 %v6050, %v6181
  %6183 = vmatmul.f32.gmra.mxu0 %v6103
  %v6184 = vpop.f32.mrf.mxu0
  %v6185 = vadd.f32 %v6053, %v6184
  %6186 = vmatmul.f32.gmra.mxu0 %v6105
  %v6187 = vpop.f32.mrf.mxu0
  %v6188 = vadd.f32 %v6056, %v6187
  %6189 = vmatmul.f32.gmra.mxu0 %v6107
  %v6190 = vpop.f32.mrf.mxu0
  %v6191 = vadd.f32 %v6059, %v6190
  %6192 = vmatmul.f32.gmra.mxu0 %v6109
  %v6193 = vpop.f32.mrf.mxu0
  %v6194 = vadd.f32 %v6062, %v6193
  %6195 = vmatmul.f32.gmra.mxu0 %v6111
  %v6196 = vpop.f32.mrf.mxu0
  %v6197 = vadd.f32 %v6065, %v6196
  %6198 = vdwg.mxu0
  %v6199 = vrot.slane %v5773, 2
  %v6200 = vrot.slane %v5776, 2
  %v6201 = vsel %vm1187, %v6199, %v6200
  %v6202 = vrot.slane %v5779, 2
  %v6203 = vsel %vm1187, %v6200, %v6202
  %v6204 = vrot.slane %v5782, 2
  %v6205 = vsel %vm1187, %v6202, %v6204
  %v6206 = vrot.slane %v5785, 2
  %v6207 = vsel %vm1187, %v6204, %v6206
  %v6208 = vrot.slane %v5788, 2
  %v6209 = vsel %vm1187, %v6206, %v6208
  %v6210 = vrot.slane %v5791, 2
  %v6211 = vsel %vm1187, %v6208, %v6210
  %v6212 = vrot.slane %v5794, 2
  %v6213 = vsel %vm1187, %v6210, %v6212
  %v6214 = vrot.slane %v5797, 2
  %v6215 = vsel %vm1187, %v6212, %v6214
  %v6216 = vrot.slane %v5800, 2
  %v6217 = vsel %vm1187, %v6214, %v6216
  %v6218 = vrot.slane %v5803, 2
  %v6219 = vsel %vm1187, %v6216, %v6218
  %v6220 = vrot.slane %v5806, 2
  %v6221 = vsel %vm1187, %v6218, %v6220
  %v6222 = vrot.slane %v5809, 2
  %v6223 = vsel %vm1187, %v6220, %v6222
  %v6224 = vrot.slane %v5812, 2
  %v6225 = vsel %vm1187, %v6222, %v6224
  %v6226 = vrot.slane %v5815, 2
  %v6227 = vsel %vm1187, %v6224, %v6226
  %v6228 = vrot.slane %v5818, 2
  %v6229 = vsel %vm1187, %v6226, %v6228
  %v6230 = vrot.slane %v5821, 2
  %v6231 = vsel %vm1187, %v6228, %v6230
  %v6232 = vrot.slane %v5824, 2
  %v6233 = vsel %vm1187, %v6230, %v6232
  %v6234 = vrot.slane %v5827, 2
  %v6235 = vsel %vm1187, %v6232, %v6234
  %v6236 = vrot.slane %v5830, 2
  %v6237 = vsel %vm1187, %v6234, %v6236
  %v6238 = vrot.slane %v5833, 2
  %v6239 = vsel %vm1187, %v6236, %v6238
  %v6240 = vrot.slane %v5836, 2
  %v6241 = vsel %vm1187, %v6238, %v6240
  %v6242 = vrot.slane %v5839, 2
  %v6243 = vsel %vm1187, %v6240, %v6242
  %v6244 = vsel %vm5934, %v6201, 0
  %v6246 = vsel %vm5934, %v6203, 0
  %v6248 = vsel %vm5934, %v6205, 0
  %v6250 = vsel %vm5934, %v6207, 0
  %v6252 = vsel %vm5934, %v6209, 0
  %v6254 = vsel %vm5934, %v6211, 0
  %v6256 = vsel %vm5934, %v6213, 0
  %v6258 = vsel %vm5934, %v6215, 0
  %v6260 = vsel %vm5934, %v6217, 0
  %v6262 = vsel %vm5934, %v6219, 0
  %v6264 = vsel %vm5934, %v6221, 0
  %v6266 = vsel %vm5934, %v6223, 0
  %v6268 = vsel %vm5934, %v6225, 0
  %v6270 = vsel %vm5934, %v6227, 0
  %v6272 = vsel %vm5934, %v6229, 0
  %v6274 = vsel %vm5934, %v6231, 0
  %v6276 = vsel %vm5934, %v6233, 0
  %v6278 = vsel %vm5934, %v6235, 0
  %v6280 = vsel %vm5934, %v6237, 0
  %v6282 = vsel %vm5934, %v6239, 0
  %v6284 = vsel %vm5934, %v6241, 0
  %v6286 = vsel %vm5934, %v6243, 0
  %v6288 = vsel %vm5934, %v6242, 0
  %6290 = vmatpush.msra.mxu0 0.0
  %6291 = vmatpush.msra.mxu0 0.0
  %6292 = vmatpush.msra.mxu0 0.0
  %6293 = vmatpush.msra.mxu0 0.0
  %6294 = vmatpush.msra.mxu0 0.0
  %6295 = vmatpush.msra.mxu0 0.0
  %6296 = vmatpush.msra.mxu0 0.0
  %6297 = vmatpush.msra.mxu0 0.0
  %6298 = vmatpush.msra.mxu0 0.0
  %6299 = vmatpush.msra.mxu0 0.0
  %6300 = vmatpush.msra.mxu0 0.0
  %6301 = vmatpush.msra.mxu0 0.0
  %6302 = vmatpush.msra.mxu0 0.0
  %6303 = vmatpush.msra.mxu0 0.0
  %6304 = vmatpush.msra.mxu0 %v5852
  %6305 = vmatpush.msra.mxu0 %v5851
  %6306 = vmatmul.f32.gmra.mxu0 %v6244
  %v6307 = vpop.f32.mrf.mxu0
  %v6308 = vadd.f32 0.0, %v6307
  %6309 = vmatmul.f32.gmra.mxu0 %v6246
  %v6310 = vpop.f32.mrf.mxu0
  %v6311 = vadd.f32 0.0, %v6310
  %6312 = vmatmul.f32.gmra.mxu0 %v6248
  %v6313 = vpop.f32.mrf.mxu0
  %v6314 = vadd.f32 0.0, %v6313
  %6315 = vmatmul.f32.gmra.mxu0 %v6250
  %v6316 = vpop.f32.mrf.mxu0
  %v6317 = vadd.f32 0.0, %v6316
  %6318 = vmatmul.f32.gmra.mxu0 %v6252
  %v6319 = vpop.f32.mrf.mxu0
  %v6320 = vadd.f32 0.0, %v6319
  %6321 = vmatmul.f32.gmra.mxu0 %v6254
  %v6322 = vpop.f32.mrf.mxu0
  %v6323 = vadd.f32 0.0, %v6322
  %6324 = vmatmul.f32.gmra.mxu0 %v6256
  %v6325 = vpop.f32.mrf.mxu0
  %v6326 = vadd.f32 0.0, %v6325
  %6327 = vmatmul.f32.gmra.mxu0 %v6258
  %v6328 = vpop.f32.mrf.mxu0
  %v6329 = vadd.f32 0.0, %v6328
  %6330 = vmatmul.f32.gmra.mxu0 %v6260
  %v6331 = vpop.f32.mrf.mxu0
  %v6332 = vadd.f32 0.0, %v6331
  %6333 = vmatmul.f32.gmra.mxu0 %v6262
  %v6334 = vpop.f32.mrf.mxu0
  %v6335 = vadd.f32 0.0, %v6334
  %6336 = vmatmul.f32.gmra.mxu0 %v6264
  %v6337 = vpop.f32.mrf.mxu0
  %v6338 = vadd.f32 0.0, %v6337
  %6339 = vmatmul.f32.gmra.mxu0 %v6266
  %v6340 = vpop.f32.mrf.mxu0
  %v6341 = vadd.f32 0.0, %v6340
  %6342 = vmatmul.f32.gmra.mxu0 %v6268
  %v6343 = vpop.f32.mrf.mxu0
  %v6344 = vadd.f32 0.0, %v6343
  %6345 = vmatmul.f32.gmra.mxu0 %v6270
  %v6346 = vpop.f32.mrf.mxu0
  %v6347 = vadd.f32 0.0, %v6346
  %6348 = vmatmul.f32.gmra.mxu0 %v6272
  %v6349 = vpop.f32.mrf.mxu0
  %v6350 = vadd.f32 0.0, %v6349
  %6351 = vmatmul.f32.gmra.mxu0 %v6274
  %v6352 = vpop.f32.mrf.mxu0
  %v6353 = vadd.f32 0.0, %v6352
  %6354 = vmatmul.f32.gmra.mxu0 %v6276
  %v6355 = vpop.f32.mrf.mxu0
  %v6356 = vadd.f32 0.0, %v6355
  %6357 = vmatmul.f32.gmra.mxu0 %v6278
  %v6358 = vpop.f32.mrf.mxu0
  %v6359 = vadd.f32 0.0, %v6358
  %6360 = vmatmul.f32.gmra.mxu0 %v6280
  %v6361 = vpop.f32.mrf.mxu0
  %v6362 = vadd.f32 0.0, %v6361
  %6363 = vmatmul.f32.gmra.mxu0 %v6282
  %v6364 = vpop.f32.mrf.mxu0
  %v6365 = vadd.f32 0.0, %v6364
  %6366 = vmatmul.f32.gmra.mxu0 %v6284
  %v6367 = vpop.f32.mrf.mxu0
  %v6368 = vadd.f32 0.0, %v6367
  %6369 = vmatmul.f32.gmra.mxu0 %v6286
  %v6370 = vpop.f32.mrf.mxu0
  %v6371 = vadd.f32 0.0, %v6370
  %6372 = vmatmul.f32.gmra.mxu0 %v6288
  %v6373 = vpop.f32.mrf.mxu0
  %v6374 = vadd.f32 0.0, %v6373
  %6375 = vdwg.mxu0
  %v6376 = vadd.f32 %v6131, %v6308
  %v6377 = vadd.f32 %v6134, %v6311
  %v6378 = vadd.f32 %v6137, %v6314
  %v6379 = vadd.f32 %v6140, %v6317
  %v6380 = vadd.f32 %v6143, %v6320
  %v6381 = vadd.f32 %v6146, %v6323
  %v6382 = vadd.f32 %v6149, %v6326
  %v6383 = vadd.f32 %v6152, %v6329
  %v6384 = vadd.f32 %v6155, %v6332
  %v6385 = vadd.f32 %v6158, %v6335
  %v6386 = vadd.f32 %v6161, %v6338
  %v6387 = vadd.f32 %v6164, %v6341
  %v6388 = vadd.f32 %v6167, %v6344
  %v6389 = vadd.f32 %v6170, %v6347
  %v6390 = vadd.f32 %v6173, %v6350
  %v6391 = vadd.f32 %v6176, %v6353
  %v6392 = vadd.f32 %v6179, %v6356
  %v6393 = vadd.f32 %v6182, %v6359
  %v6394 = vadd.f32 %v6185, %v6362
  %v6395 = vadd.f32 %v6188, %v6365
  %v6396 = vadd.f32 %v6191, %v6368
  %v6397 = vadd.f32 %v6194, %v6371
  %v6398 = vadd.f32 %v6197, %v6374
  %v6400 = vrot.slane %v5842, 2
  %v6401 = vsel %vm1187, %v6242, %v6400
  %v6402 = vsel %vm5934, %v6401, 0
  %v6404 = vsel %vm5934, %v6400, 0
  %6406 = vmatpush.msra.mxu0 0.0
  %6407 = vmatpush.msra.mxu0 0.0
  %6408 = vmatpush.msra.mxu0 0.0
  %6409 = vmatpush.msra.mxu0 0.0
  %6410 = vmatpush.msra.mxu0 0.0
  %6411 = vmatpush.msra.mxu0 0.0
  %6412 = vmatpush.msra.mxu0 0.0
  %6413 = vmatpush.msra.mxu0 0.0
  %6414 = vmatpush.msra.mxu0 0.0
  %6415 = vmatpush.msra.mxu0 0.0
  %6416 = vmatpush.msra.mxu0 0.0
  %6417 = vmatpush.msra.mxu0 0.0
  %6418 = vmatpush.msra.mxu0 0.0
  %6419 = vmatpush.msra.mxu0 0.0
  %6420 = vmatpush.msra.mxu0 %v5854
  %6421 = vmatpush.msra.mxu0 %v5853
  %6422 = vmatmul.f32.gmra.mxu0 %v6246
  %v6423 = vpop.f32.mrf.mxu0
  %v6424 = vadd.f32 0.0, %v6423
  %6425 = vmatmul.f32.gmra.mxu0 %v6248
  %v6426 = vpop.f32.mrf.mxu0
  %v6427 = vadd.f32 0.0, %v6426
  %6428 = vmatmul.f32.gmra.mxu0 %v6250
  %v6429 = vpop.f32.mrf.mxu0
  %v6430 = vadd.f32 0.0, %v6429
  %6431 = vmatmul.f32.gmra.mxu0 %v6252
  %v6432 = vpop.f32.mrf.mxu0
  %v6433 = vadd.f32 0.0, %v6432
  %6434 = vmatmul.f32.gmra.mxu0 %v6254
  %v6435 = vpop.f32.mrf.mxu0
  %v6436 = vadd.f32 0.0, %v6435
  %6437 = vmatmul.f32.gmra.mxu0 %v6256
  %v6438 = vpop.f32.mrf.mxu0
  %v6439 = vadd.f32 0.0, %v6438
  %6440 = vmatmul.f32.gmra.mxu0 %v6258
  %v6441 = vpop.f32.mrf.mxu0
  %v6442 = vadd.f32 0.0, %v6441
  %6443 = vmatmul.f32.gmra.mxu0 %v6260
  %v6444 = vpop.f32.mrf.mxu0
  %v6445 = vadd.f32 0.0, %v6444
  %6446 = vmatmul.f32.gmra.mxu0 %v6262
  %v6447 = vpop.f32.mrf.mxu0
  %v6448 = vadd.f32 0.0, %v6447
  %6449 = vmatmul.f32.gmra.mxu0 %v6264
  %v6450 = vpop.f32.mrf.mxu0
  %v6451 = vadd.f32 0.0, %v6450
  %6452 = vmatmul.f32.gmra.mxu0 %v6266
  %v6453 = vpop.f32.mrf.mxu0
  %v6454 = vadd.f32 0.0, %v6453
  %6455 = vmatmul.f32.gmra.mxu0 %v6268
  %v6456 = vpop.f32.mrf.mxu0
  %v6457 = vadd.f32 0.0, %v6456
  %6458 = vmatmul.f32.gmra.mxu0 %v6270
  %v6459 = vpop.f32.mrf.mxu0
  %v6460 = vadd.f32 0.0, %v6459
  %6461 = vmatmul.f32.gmra.mxu0 %v6272
  %v6462 = vpop.f32.mrf.mxu0
  %v6463 = vadd.f32 0.0, %v6462
  %6464 = vmatmul.f32.gmra.mxu0 %v6274
  %v6465 = vpop.f32.mrf.mxu0
  %v6466 = vadd.f32 0.0, %v6465
  %6467 = vmatmul.f32.gmra.mxu0 %v6276
  %v6468 = vpop.f32.mrf.mxu0
  %v6469 = vadd.f32 0.0, %v6468
  %6470 = vmatmul.f32.gmra.mxu0 %v6278
  %v6471 = vpop.f32.mrf.mxu0
  %v6472 = vadd.f32 0.0, %v6471
  %6473 = vmatmul.f32.gmra.mxu0 %v6280
  %v6474 = vpop.f32.mrf.mxu0
  %v6475 = vadd.f32 0.0, %v6474
  %6476 = vmatmul.f32.gmra.mxu0 %v6282
  %v6477 = vpop.f32.mrf.mxu0
  %v6478 = vadd.f32 0.0, %v6477
  %6479 = vmatmul.f32.gmra.mxu0 %v6284
  %v6480 = vpop.f32.mrf.mxu0
  %v6481 = vadd.f32 0.0, %v6480
  %6482 = vmatmul.f32.gmra.mxu0 %v6286
  %v6483 = vpop.f32.mrf.mxu0
  %v6484 = vadd.f32 0.0, %v6483
  %6485 = vmatmul.f32.gmra.mxu0 %v6402
  %v6486 = vpop.f32.mrf.mxu0
  %v6487 = vadd.f32 0.0, %v6486
  %6488 = vmatmul.f32.gmra.mxu0 %v6404
  %v6489 = vpop.f32.mrf.mxu0
  %v6490 = vadd.f32 0.0, %v6489
  %6491 = vdwg.mxu0
  %v6492 = vadd.f32 %v6376, %v6424
  %v6493 = vadd.f32 %v6377, %v6427
  %v6494 = vadd.f32 %v6378, %v6430
  %v6495 = vadd.f32 %v6379, %v6433
  %v6496 = vadd.f32 %v6380, %v6436
  %v6497 = vadd.f32 %v6381, %v6439
  %v6498 = vadd.f32 %v6382, %v6442
  %v6499 = vadd.f32 %v6383, %v6445
  %v6500 = vadd.f32 %v6384, %v6448
  %v6501 = vadd.f32 %v6385, %v6451
  %v6502 = vadd.f32 %v6386, %v6454
  %v6503 = vadd.f32 %v6387, %v6457
  %v6504 = vadd.f32 %v6388, %v6460
  %v6505 = vadd.f32 %v6389, %v6463
  %v6506 = vadd.f32 %v6390, %v6466
  %v6507 = vadd.f32 %v6391, %v6469
  %v6508 = vadd.f32 %v6392, %v6472
  %v6509 = vadd.f32 %v6393, %v6475
  %v6510 = vadd.f32 %v6394, %v6478
  %v6511 = vadd.f32 %v6395, %v6481
  %v6512 = vadd.f32 %v6396, %v6484
  %v6513 = vadd.f32 %v6397, %v6487
  %v6514 = vadd.f32 %v6398, %v6490
  %v6515 = vrot.slane %v5776, 3
  %v6516 = vrot.slane %v5779, 3
  %v6517 = vsel %vm2157, %v6515, %v6516
  %v6518 = vrot.slane %v5782, 3
  %v6519 = vsel %vm2157, %v6516, %v6518
  %v6520 = vrot.slane %v5785, 3
  %v6521 = vsel %vm2157, %v6518, %v6520
  %v6522 = vrot.slane %v5788, 3
  %v6523 = vsel %vm2157, %v6520, %v6522
  %v6524 = vrot.slane %v5791, 3
  %v6525 = vsel %vm2157, %v6522, %v6524
  %v6526 = vrot.slane %v5794, 3
  %v6527 = vsel %vm2157, %v6524, %v6526
  %v6528 = vrot.slane %v5797, 3
  %v6529 = vsel %vm2157, %v6526, %v6528
  %v6530 = vrot.slane %v5800, 3
  %v6531 = vsel %vm2157, %v6528, %v6530
  %v6532 = vrot.slane %v5803, 3
  %v6533 = vsel %vm2157, %v6530, %v6532
  %v6534 = vrot.slane %v5806, 3
  %v6535 = vsel %vm2157, %v6532, %v6534
  %v6536 = vrot.slane %v5809, 3
  %v6537 = vsel %vm2157, %v6534, %v6536
  %v6538 = vrot.slane %v5812, 3
  %v6539 = vsel %vm2157, %v6536, %v6538
  %v6540 = vrot.slane %v5815, 3
  %v6541 = vsel %vm2157, %v6538, %v6540
  %v6542 = vrot.slane %v5818, 3
  %v6543 = vsel %vm2157, %v6540, %v6542
  %v6544 = vrot.slane %v5821, 3
  %v6545 = vsel %vm2157, %v6542, %v6544
  %v6546 = vrot.slane %v5824, 3
  %v6547 = vsel %vm2157, %v6544, %v6546
  %v6548 = vrot.slane %v5827, 3
  %v6549 = vsel %vm2157, %v6546, %v6548
  %v6550 = vrot.slane %v5830, 3
  %v6551 = vsel %vm2157, %v6548, %v6550
  %v6552 = vrot.slane %v5833, 3
  %v6553 = vsel %vm2157, %v6550, %v6552
  %v6554 = vrot.slane %v5836, 3
  %v6555 = vsel %vm2157, %v6552, %v6554
  %v6556 = vrot.slane %v5839, 3
  %v6557 = vsel %vm2157, %v6554, %v6556
  %v6558 = vrot.slane %v5842, 3
  %v6559 = vsel %vm2157, %v6556, %v6558
  %v6560 = vsel %vm5934, %v6517, 0
  %v6562 = vsel %vm5934, %v6519, 0
  %v6564 = vsel %vm5934, %v6521, 0
  %v6566 = vsel %vm5934, %v6523, 0
  %v6568 = vsel %vm5934, %v6525, 0
  %v6570 = vsel %vm5934, %v6527, 0
  %v6572 = vsel %vm5934, %v6529, 0
  %v6574 = vsel %vm5934, %v6531, 0
  %v6576 = vsel %vm5934, %v6533, 0
  %v6578 = vsel %vm5934, %v6535, 0
  %v6580 = vsel %vm5934, %v6537, 0
  %v6582 = vsel %vm5934, %v6539, 0
  %v6584 = vsel %vm5934, %v6541, 0
  %v6586 = vsel %vm5934, %v6543, 0
  %v6588 = vsel %vm5934, %v6545, 0
  %v6590 = vsel %vm5934, %v6547, 0
  %v6592 = vsel %vm5934, %v6549, 0
  %v6594 = vsel %vm5934, %v6551, 0
  %v6596 = vsel %vm5934, %v6553, 0
  %v6598 = vsel %vm5934, %v6555, 0
  %v6600 = vsel %vm5934, %v6557, 0
  %v6602 = vsel %vm5934, %v6559, 0
  %v6604 = vsel %vm5934, %v6558, 0
  %6606 = vmatpush.msra.mxu0 0.0
  %6607 = vmatpush.msra.mxu0 0.0
  %6608 = vmatpush.msra.mxu0 0.0
  %6609 = vmatpush.msra.mxu0 0.0
  %6610 = vmatpush.msra.mxu0 0.0
  %6611 = vmatpush.msra.mxu0 0.0
  %6612 = vmatpush.msra.mxu0 0.0
  %6613 = vmatpush.msra.mxu0 0.0
  %6614 = vmatpush.msra.mxu0 0.0
  %6615 = vmatpush.msra.mxu0 0.0
  %6616 = vmatpush.msra.mxu0 0.0
  %6617 = vmatpush.msra.mxu0 0.0
  %6618 = vmatpush.msra.mxu0 0.0
  %6619 = vmatpush.msra.mxu0 0.0
  %6620 = vmatpush.msra.mxu0 %v5856
  %6621 = vmatpush.msra.mxu0 %v5855
  %6622 = vmatmul.f32.gmra.mxu0 %v6560
  %v6623 = vpop.f32.mrf.mxu0
  %v6624 = vadd.f32 0.0, %v6623
  %6625 = vmatmul.f32.gmra.mxu0 %v6562
  %v6626 = vpop.f32.mrf.mxu0
  %v6627 = vadd.f32 0.0, %v6626
  %6628 = vmatmul.f32.gmra.mxu0 %v6564
  %v6629 = vpop.f32.mrf.mxu0
  %v6630 = vadd.f32 0.0, %v6629
  %6631 = vmatmul.f32.gmra.mxu0 %v6566
  %v6632 = vpop.f32.mrf.mxu0
  %v6633 = vadd.f32 0.0, %v6632
  %6634 = vmatmul.f32.gmra.mxu0 %v6568
  %v6635 = vpop.f32.mrf.mxu0
  %v6636 = vadd.f32 0.0, %v6635
  %6637 = vmatmul.f32.gmra.mxu0 %v6570
  %v6638 = vpop.f32.mrf.mxu0
  %v6639 = vadd.f32 0.0, %v6638
  %6640 = vmatmul.f32.gmra.mxu0 %v6572
  %v6641 = vpop.f32.mrf.mxu0
  %v6642 = vadd.f32 0.0, %v6641
  %6643 = vmatmul.f32.gmra.mxu0 %v6574
  %v6644 = vpop.f32.mrf.mxu0
  %v6645 = vadd.f32 0.0, %v6644
  %6646 = vmatmul.f32.gmra.mxu0 %v6576
  %v6647 = vpop.f32.mrf.mxu0
  %v6648 = vadd.f32 0.0, %v6647
  %6649 = vmatmul.f32.gmra.mxu0 %v6578
  %v6650 = vpop.f32.mrf.mxu0
  %v6651 = vadd.f32 0.0, %v6650
  %6652 = vmatmul.f32.gmra.mxu0 %v6580
  %v6653 = vpop.f32.mrf.mxu0
  %v6654 = vadd.f32 0.0, %v6653
  %6655 = vmatmul.f32.gmra.mxu0 %v6582
  %v6656 = vpop.f32.mrf.mxu0
  %v6657 = vadd.f32 0.0, %v6656
  %6658 = vmatmul.f32.gmra.mxu0 %v6584
  %v6659 = vpop.f32.mrf.mxu0
  %v6660 = vadd.f32 0.0, %v6659
  %6661 = vmatmul.f32.gmra.mxu0 %v6586
  %v6662 = vpop.f32.mrf.mxu0
  %v6663 = vadd.f32 0.0, %v6662
  %6664 = vmatmul.f32.gmra.mxu0 %v6588
  %v6665 = vpop.f32.mrf.mxu0
  %v6666 = vadd.f32 0.0, %v6665
  %6667 = vmatmul.f32.gmra.mxu0 %v6590
  %v6668 = vpop.f32.mrf.mxu0
  %v6669 = vadd.f32 0.0, %v6668
  %6670 = vmatmul.f32.gmra.mxu0 %v6592
  %v6671 = vpop.f32.mrf.mxu0
  %v6672 = vadd.f32 0.0, %v6671
  %6673 = vmatmul.f32.gmra.mxu0 %v6594
  %v6674 = vpop.f32.mrf.mxu0
  %v6675 = vadd.f32 0.0, %v6674
  %6676 = vmatmul.f32.gmra.mxu0 %v6596
  %v6677 = vpop.f32.mrf.mxu0
  %v6678 = vadd.f32 0.0, %v6677
  %6679 = vmatmul.f32.gmra.mxu0 %v6598
  %v6680 = vpop.f32.mrf.mxu0
  %v6681 = vadd.f32 0.0, %v6680
  %6682 = vmatmul.f32.gmra.mxu0 %v6600
  %v6683 = vpop.f32.mrf.mxu0
  %v6684 = vadd.f32 0.0, %v6683
  %6685 = vmatmul.f32.gmra.mxu0 %v6602
  %v6686 = vpop.f32.mrf.mxu0
  %v6687 = vadd.f32 0.0, %v6686
  %6688 = vmatmul.f32.gmra.mxu0 %v6604
  %v6689 = vpop.f32.mrf.mxu0
  %v6690 = vadd.f32 0.0, %v6689
  %6691 = vdwg.mxu0
  %v6692 = vadd.f32 %v6492, %v6624
  %v6693 = vadd.f32 %v6493, %v6627
  %v6694 = vadd.f32 %v6494, %v6630
  %v6695 = vadd.f32 %v6495, %v6633
  %v6696 = vadd.f32 %v6496, %v6636
  %v6697 = vadd.f32 %v6497, %v6639
  %v6698 = vadd.f32 %v6498, %v6642
  %v6699 = vadd.f32 %v6499, %v6645
  %v6700 = vadd.f32 %v6500, %v6648
  %v6701 = vadd.f32 %v6501, %v6651
  %v6702 = vadd.f32 %v6502, %v6654
  %v6703 = vadd.f32 %v6503, %v6657
  %v6704 = vadd.f32 %v6504, %v6660
  %v6705 = vadd.f32 %v6505, %v6663
  %v6706 = vadd.f32 %v6506, %v6666
  %v6707 = vadd.f32 %v6507, %v6669
  %v6708 = vadd.f32 %v6508, %v6672
  %v6709 = vadd.f32 %v6509, %v6675
  %v6710 = vadd.f32 %v6510, %v6678
  %v6711 = vadd.f32 %v6511, %v6681
  %v6712 = vadd.f32 %v6512, %v6684
  %v6713 = vadd.f32 %v6513, %v6687
  %v6714 = vadd.f32 %v6514, %v6690
  %v6715 = vrot.slane %v5776, 4
  %v6716 = vrot.slane %v5779, 4
  %v6717 = vsel %vm2790, %v6715, %v6716
  %v6718 = vrot.slane %v5782, 4
  %v6719 = vsel %vm2790, %v6716, %v6718
  %v6720 = vrot.slane %v5785, 4
  %v6721 = vsel %vm2790, %v6718, %v6720
  %v6722 = vrot.slane %v5788, 4
  %v6723 = vsel %vm2790, %v6720, %v6722
  %v6724 = vrot.slane %v5791, 4
  %v6725 = vsel %vm2790, %v6722, %v6724
  %v6726 = vrot.slane %v5794, 4
  %v6727 = vsel %vm2790, %v6724, %v6726
  %v6728 = vrot.slane %v5797, 4
  %v6729 = vsel %vm2790, %v6726, %v6728
  %v6730 = vrot.slane %v5800, 4
  %v6731 = vsel %vm2790, %v6728, %v6730
  %v6732 = vrot.slane %v5803, 4
  %v6733 = vsel %vm2790, %v6730, %v6732
  %v6734 = vrot.slane %v5806, 4
  %v6735 = vsel %vm2790, %v6732, %v6734
  %v6736 = vrot.slane %v5809, 4
  %v6737 = vsel %vm2790, %v6734, %v6736
  %v6738 = vrot.slane %v5812, 4
  %v6739 = vsel %vm2790, %v6736, %v6738
  %v6740 = vrot.slane %v5815, 4
  %v6741 = vsel %vm2790, %v6738, %v6740
  %v6742 = vrot.slane %v5818, 4
  %v6743 = vsel %vm2790, %v6740, %v6742
  %v6744 = vrot.slane %v5821, 4
  %v6745 = vsel %vm2790, %v6742, %v6744
  %v6746 = vrot.slane %v5824, 4
  %v6747 = vsel %vm2790, %v6744, %v6746
  %v6748 = vrot.slane %v5827, 4
  %v6749 = vsel %vm2790, %v6746, %v6748
  %v6750 = vrot.slane %v5830, 4
  %v6751 = vsel %vm2790, %v6748, %v6750
  %v6752 = vrot.slane %v5833, 4
  %v6753 = vsel %vm2790, %v6750, %v6752
  %v6754 = vrot.slane %v5836, 4
  %v6755 = vsel %vm2790, %v6752, %v6754
  %v6756 = vrot.slane %v5839, 4
  %v6757 = vsel %vm2790, %v6754, %v6756
  %v6758 = vrot.slane %v5842, 4
  %v6759 = vsel %vm2790, %v6756, %v6758
  %v6760 = vsel %vm5934, %v6717, 0
  %v6762 = vsel %vm5934, %v6719, 0
  %v6764 = vsel %vm5934, %v6721, 0
  %v6766 = vsel %vm5934, %v6723, 0
  %v6768 = vsel %vm5934, %v6725, 0
  %v6770 = vsel %vm5934, %v6727, 0
  %v6772 = vsel %vm5934, %v6729, 0
  %v6774 = vsel %vm5934, %v6731, 0
  %v6776 = vsel %vm5934, %v6733, 0
  %v6778 = vsel %vm5934, %v6735, 0
  %v6780 = vsel %vm5934, %v6737, 0
  %v6782 = vsel %vm5934, %v6739, 0
  %v6784 = vsel %vm5934, %v6741, 0
  %v6786 = vsel %vm5934, %v6743, 0
  %v6788 = vsel %vm5934, %v6745, 0
  %v6790 = vsel %vm5934, %v6747, 0
  %v6792 = vsel %vm5934, %v6749, 0
  %v6794 = vsel %vm5934, %v6751, 0
  %v6796 = vsel %vm5934, %v6753, 0
  %v6798 = vsel %vm5934, %v6755, 0
  %v6800 = vsel %vm5934, %v6757, 0
  %v6802 = vsel %vm5934, %v6759, 0
  %v6804 = vsel %vm5934, %v6758, 0
  %6806 = vmatpush.msra.mxu0 0.0
  %6807 = vmatpush.msra.mxu0 0.0
  %6808 = vmatpush.msra.mxu0 0.0
  %6809 = vmatpush.msra.mxu0 0.0
  %6810 = vmatpush.msra.mxu0 0.0
  %6811 = vmatpush.msra.mxu0 0.0
  %6812 = vmatpush.msra.mxu0 0.0
  %6813 = vmatpush.msra.mxu0 0.0
  %6814 = vmatpush.msra.mxu0 0.0
  %6815 = vmatpush.msra.mxu0 0.0
  %6816 = vmatpush.msra.mxu0 0.0
  %6817 = vmatpush.msra.mxu0 0.0
  %6818 = vmatpush.msra.mxu0 0.0
  %6819 = vmatpush.msra.mxu0 0.0
  %6820 = vmatpush.msra.mxu0 %v5858
  %6821 = vmatpush.msra.mxu0 %v5857
  %6822 = vmatmul.f32.gmra.mxu0 %v6760
  %v6823 = vpop.f32.mrf.mxu0
  %v6824 = vadd.f32 0.0, %v6823
  %6825 = vmatmul.f32.gmra.mxu0 %v6762
  %v6826 = vpop.f32.mrf.mxu0
  %v6827 = vadd.f32 0.0, %v6826
  %6828 = vmatmul.f32.gmra.mxu0 %v6764
  %v6829 = vpop.f32.mrf.mxu0
  %v6830 = vadd.f32 0.0, %v6829
  %6831 = vmatmul.f32.gmra.mxu0 %v6766
  %v6832 = vpop.f32.mrf.mxu0
  %v6833 = vadd.f32 0.0, %v6832
  %6834 = vmatmul.f32.gmra.mxu0 %v6768
  %v6835 = vpop.f32.mrf.mxu0
  %v6836 = vadd.f32 0.0, %v6835
  %6837 = vmatmul.f32.gmra.mxu0 %v6770
  %v6838 = vpop.f32.mrf.mxu0
  %v6839 = vadd.f32 0.0, %v6838
  %6840 = vmatmul.f32.gmra.mxu0 %v6772
  %v6841 = vpop.f32.mrf.mxu0
  %v6842 = vadd.f32 0.0, %v6841
  %6843 = vmatmul.f32.gmra.mxu0 %v6774
  %v6844 = vpop.f32.mrf.mxu0
  %v6845 = vadd.f32 0.0, %v6844
  %6846 = vmatmul.f32.gmra.mxu0 %v6776
  %v6847 = vpop.f32.mrf.mxu0
  %v6848 = vadd.f32 0.0, %v6847
  %6849 = vmatmul.f32.gmra.mxu0 %v6778
  %v6850 = vpop.f32.mrf.mxu0
  %v6851 = vadd.f32 0.0, %v6850
  %6852 = vmatmul.f32.gmra.mxu0 %v6780
  %v6853 = vpop.f32.mrf.mxu0
  %v6854 = vadd.f32 0.0, %v6853
  %6855 = vmatmul.f32.gmra.mxu0 %v6782
  %v6856 = vpop.f32.mrf.mxu0
  %v6857 = vadd.f32 0.0, %v6856
  %6858 = vmatmul.f32.gmra.mxu0 %v6784
  %v6859 = vpop.f32.mrf.mxu0
  %v6860 = vadd.f32 0.0, %v6859
  %6861 = vmatmul.f32.gmra.mxu0 %v6786
  %v6862 = vpop.f32.mrf.mxu0
  %v6863 = vadd.f32 0.0, %v6862
  %6864 = vmatmul.f32.gmra.mxu0 %v6788
  %v6865 = vpop.f32.mrf.mxu0
  %v6866 = vadd.f32 0.0, %v6865
  %6867 = vmatmul.f32.gmra.mxu0 %v6790
  %v6868 = vpop.f32.mrf.mxu0
  %v6869 = vadd.f32 0.0, %v6868
  %6870 = vmatmul.f32.gmra.mxu0 %v6792
  %v6871 = vpop.f32.mrf.mxu0
  %v6872 = vadd.f32 0.0, %v6871
  %6873 = vmatmul.f32.gmra.mxu0 %v6794
  %v6874 = vpop.f32.mrf.mxu0
  %v6875 = vadd.f32 0.0, %v6874
  %6876 = vmatmul.f32.gmra.mxu0 %v6796
  %v6877 = vpop.f32.mrf.mxu0
  %v6878 = vadd.f32 0.0, %v6877
  %6879 = vmatmul.f32.gmra.mxu0 %v6798
  %v6880 = vpop.f32.mrf.mxu0
  %v6881 = vadd.f32 0.0, %v6880
  %6882 = vmatmul.f32.gmra.mxu0 %v6800
  %v6883 = vpop.f32.mrf.mxu0
  %v6884 = vadd.f32 0.0, %v6883
  %6885 = vmatmul.f32.gmra.mxu0 %v6802
  %v6886 = vpop.f32.mrf.mxu0
  %v6887 = vadd.f32 0.0, %v6886
  %6888 = vmatmul.f32.gmra.mxu0 %v6804
  %v6889 = vpop.f32.mrf.mxu0
  %v6890 = vadd.f32 0.0, %v6889
  %6891 = vdwg.mxu0
  %v6892 = vadd.f32 %v6692, %v6824
  %v6893 = vadd.f32 %v6693, %v6827
  %v6894 = vadd.f32 %v6694, %v6830
  %v6895 = vadd.f32 %v6695, %v6833
  %v6896 = vadd.f32 %v6696, %v6836
  %v6897 = vadd.f32 %v6697, %v6839
  %v6898 = vadd.f32 %v6698, %v6842
  %v6899 = vadd.f32 %v6699, %v6845
  %v6900 = vadd.f32 %v6700, %v6848
  %v6901 = vadd.f32 %v6701, %v6851
  %v6902 = vadd.f32 %v6702, %v6854
  %v6903 = vadd.f32 %v6703, %v6857
  %v6904 = vadd.f32 %v6704, %v6860
  %v6905 = vadd.f32 %v6705, %v6863
  %v6906 = vadd.f32 %v6706, %v6866
  %v6907 = vadd.f32 %v6707, %v6869
  %v6908 = vadd.f32 %v6708, %v6872
  %v6909 = vadd.f32 %v6709, %v6875
  %v6910 = vadd.f32 %v6710, %v6878
  %v6911 = vadd.f32 %v6711, %v6881
  %v6912 = vadd.f32 %v6712, %v6884
  %v6913 = vadd.f32 %v6713, %v6887
  %v6914 = vadd.f32 %v6714, %v6890
  %v6916 = vrot.slane %v5845, 4
  %v6917 = vsel %vm2790, %v6758, %v6916
  %v6918 = vsel %vm5934, %v6917, 0
  %v6920 = vsel %vm5934, %v6916, 0
  %6922 = vmatpush.msra.mxu0 0.0
  %6923 = vmatpush.msra.mxu0 0.0
  %6924 = vmatpush.msra.mxu0 0.0
  %6925 = vmatpush.msra.mxu0 0.0
  %6926 = vmatpush.msra.mxu0 0.0
  %6927 = vmatpush.msra.mxu0 0.0
  %6928 = vmatpush.msra.mxu0 0.0
  %6929 = vmatpush.msra.mxu0 0.0
  %6930 = vmatpush.msra.mxu0 0.0
  %6931 = vmatpush.msra.mxu0 0.0
  %6932 = vmatpush.msra.mxu0 0.0
  %6933 = vmatpush.msra.mxu0 0.0
  %6934 = vmatpush.msra.mxu0 0.0
  %6935 = vmatpush.msra.mxu0 0.0
  %6936 = vmatpush.msra.mxu0 %v5860
  %6937 = vmatpush.msra.mxu0 %v5859
  %6938 = vmatmul.f32.gmra.mxu0 %v6762
  %v6939 = vpop.f32.mrf.mxu0
  %v6940 = vadd.f32 0.0, %v6939
  %6941 = vmatmul.f32.gmra.mxu0 %v6764
  %v6942 = vpop.f32.mrf.mxu0
  %v6943 = vadd.f32 0.0, %v6942
  %6944 = vmatmul.f32.gmra.mxu0 %v6766
  %v6945 = vpop.f32.mrf.mxu0
  %v6946 = vadd.f32 0.0, %v6945
  %6947 = vmatmul.f32.gmra.mxu0 %v6768
  %v6948 = vpop.f32.mrf.mxu0
  %v6949 = vadd.f32 0.0, %v6948
  %6950 = vmatmul.f32.gmra.mxu0 %v6770
  %v6951 = vpop.f32.mrf.mxu0
  %v6952 = vadd.f32 0.0, %v6951
  %6953 = vmatmul.f32.gmra.mxu0 %v6772
  %v6954 = vpop.f32.mrf.mxu0
  %v6955 = vadd.f32 0.0, %v6954
  %6956 = vmatmul.f32.gmra.mxu0 %v6774
  %v6957 = vpop.f32.mrf.mxu0
  %v6958 = vadd.f32 0.0, %v6957
  %6959 = vmatmul.f32.gmra.mxu0 %v6776
  %v6960 = vpop.f32.mrf.mxu0
  %v6961 = vadd.f32 0.0, %v6960
  %6962 = vmatmul.f32.gmra.mxu0 %v6778
  %v6963 = vpop.f32.mrf.mxu0
  %v6964 = vadd.f32 0.0, %v6963
  %6965 = vmatmul.f32.gmra.mxu0 %v6780
  %v6966 = vpop.f32.mrf.mxu0
  %v6967 = vadd.f32 0.0, %v6966
  %6968 = vmatmul.f32.gmra.mxu0 %v6782
  %v6969 = vpop.f32.mrf.mxu0
  %v6970 = vadd.f32 0.0, %v6969
  %6971 = vmatmul.f32.gmra.mxu0 %v6784
  %v6972 = vpop.f32.mrf.mxu0
  %v6973 = vadd.f32 0.0, %v6972
  %6974 = vmatmul.f32.gmra.mxu0 %v6786
  %v6975 = vpop.f32.mrf.mxu0
  %v6976 = vadd.f32 0.0, %v6975
  %6977 = vmatmul.f32.gmra.mxu0 %v6788
  %v6978 = vpop.f32.mrf.mxu0
  %v6979 = vadd.f32 0.0, %v6978
  %6980 = vmatmul.f32.gmra.mxu0 %v6790
  %v6981 = vpop.f32.mrf.mxu0
  %v6982 = vadd.f32 0.0, %v6981
  %6983 = vmatmul.f32.gmra.mxu0 %v6792
  %v6984 = vpop.f32.mrf.mxu0
  %v6985 = vadd.f32 0.0, %v6984
  %6986 = vmatmul.f32.gmra.mxu0 %v6794
  %v6987 = vpop.f32.mrf.mxu0
  %v6988 = vadd.f32 0.0, %v6987
  %6989 = vmatmul.f32.gmra.mxu0 %v6796
  %v6990 = vpop.f32.mrf.mxu0
  %v6991 = vadd.f32 0.0, %v6990
  %6992 = vmatmul.f32.gmra.mxu0 %v6798
  %v6993 = vpop.f32.mrf.mxu0
  %v6994 = vadd.f32 0.0, %v6993
  %6995 = vmatmul.f32.gmra.mxu0 %v6800
  %v6996 = vpop.f32.mrf.mxu0
  %v6997 = vadd.f32 0.0, %v6996
  %6998 = vmatmul.f32.gmra.mxu0 %v6802
  %v6999 = vpop.f32.mrf.mxu0
  %v7000 = vadd.f32 0.0, %v6999
  %7001 = vmatmul.f32.gmra.mxu0 %v6918
  %v7002 = vpop.f32.mrf.mxu0
  %v7003 = vadd.f32 0.0, %v7002
  %7004 = vmatmul.f32.gmra.mxu0 %v6920
  %v7005 = vpop.f32.mrf.mxu0
  %v7006 = vadd.f32 0.0, %v7005
  %7007 = vdwg.mxu0
  %v7008 = vadd.f32 %v6892, %v6940
  %v7009 = vadd.f32 %v6893, %v6943
  %v7010 = vadd.f32 %v6894, %v6946
  %v7011 = vadd.f32 %v6895, %v6949
  %v7012 = vadd.f32 %v6896, %v6952
  %v7013 = vadd.f32 %v6897, %v6955
  %v7014 = vadd.f32 %v6898, %v6958
  %v7015 = vadd.f32 %v6899, %v6961
  %v7016 = vadd.f32 %v6900, %v6964
  %v7017 = vadd.f32 %v6901, %v6967
  %v7018 = vadd.f32 %v6902, %v6970
  %v7019 = vadd.f32 %v6903, %v6973
  %v7020 = vadd.f32 %v6904, %v6976
  %v7021 = vadd.f32 %v6905, %v6979
  %v7022 = vadd.f32 %v6906, %v6982
  %v7023 = vadd.f32 %v6907, %v6985
  %v7024 = vadd.f32 %v6908, %v6988
  %v7025 = vadd.f32 %v6909, %v6991
  %v7026 = vadd.f32 %v6910, %v6994
  %v7027 = vadd.f32 %v6911, %v6997
  %v7028 = vadd.f32 %v6912, %v7000
  %v7029 = vadd.f32 %v6913, %v7003
  %v7030 = vadd.f32 %v6914, %v7006
  %v7031 = vrot.slane %v5779, 5
  %v7032 = vrot.slane %v5782, 5
  %v7033 = vsel %vm3760, %v7031, %v7032
  %v7034 = vrot.slane %v5785, 5
  %v7035 = vsel %vm3760, %v7032, %v7034
  %v7036 = vrot.slane %v5788, 5
  %v7037 = vsel %vm3760, %v7034, %v7036
  %v7038 = vrot.slane %v5791, 5
  %v7039 = vsel %vm3760, %v7036, %v7038
  %v7040 = vrot.slane %v5794, 5
  %v7041 = vsel %vm3760, %v7038, %v7040
  %v7042 = vrot.slane %v5797, 5
  %v7043 = vsel %vm3760, %v7040, %v7042
  %v7044 = vrot.slane %v5800, 5
  %v7045 = vsel %vm3760, %v7042, %v7044
  %v7046 = vrot.slane %v5803, 5
  %v7047 = vsel %vm3760, %v7044, %v7046
  %v7048 = vrot.slane %v5806, 5
  %v7049 = vsel %vm3760, %v7046, %v7048
  %v7050 = vrot.slane %v5809, 5
  %v7051 = vsel %vm3760, %v7048, %v7050
  %v7052 = vrot.slane %v5812, 5
  %v7053 = vsel %vm3760, %v7050, %v7052
  %v7054 = vrot.slane %v5815, 5
  %v7055 = vsel %vm3760, %v7052, %v7054
  %v7056 = vrot.slane %v5818, 5
  %v7057 = vsel %vm3760, %v7054, %v7056
  %v7058 = vrot.slane %v5821, 5
  %v7059 = vsel %vm3760, %v7056, %v7058
  %v7060 = vrot.slane %v5824, 5
  %v7061 = vsel %vm3760, %v7058, %v7060
  %v7062 = vrot.slane %v5827, 5
  %v7063 = vsel %vm3760, %v7060, %v7062
  %v7064 = vrot.slane %v5830, 5
  %v7065 = vsel %vm3760, %v7062, %v7064
  %v7066 = vrot.slane %v5833, 5
  %v7067 = vsel %vm3760, %v7064, %v7066
  %v7068 = vrot.slane %v5836, 5
  %v7069 = vsel %vm3760, %v7066, %v7068
  %v7070 = vrot.slane %v5839, 5
  %v7071 = vsel %vm3760, %v7068, %v7070
  %v7072 = vrot.slane %v5842, 5
  %v7073 = vsel %vm3760, %v7070, %v7072
  %v7074 = vrot.slane %v5845, 5
  %v7075 = vsel %vm3760, %v7072, %v7074
  %v7076 = vsel %vm5934, %v7033, 0
  %v7078 = vsel %vm5934, %v7035, 0
  %v7080 = vsel %vm5934, %v7037, 0
  %v7082 = vsel %vm5934, %v7039, 0
  %v7084 = vsel %vm5934, %v7041, 0
  %v7086 = vsel %vm5934, %v7043, 0
  %v7088 = vsel %vm5934, %v7045, 0
  %v7090 = vsel %vm5934, %v7047, 0
  %v7092 = vsel %vm5934, %v7049, 0
  %v7094 = vsel %vm5934, %v7051, 0
  %v7096 = vsel %vm5934, %v7053, 0
  %v7098 = vsel %vm5934, %v7055, 0
  %v7100 = vsel %vm5934, %v7057, 0
  %v7102 = vsel %vm5934, %v7059, 0
  %v7104 = vsel %vm5934, %v7061, 0
  %v7106 = vsel %vm5934, %v7063, 0
  %v7108 = vsel %vm5934, %v7065, 0
  %v7110 = vsel %vm5934, %v7067, 0
  %v7112 = vsel %vm5934, %v7069, 0
  %v7114 = vsel %vm5934, %v7071, 0
  %v7116 = vsel %vm5934, %v7073, 0
  %v7118 = vsel %vm5934, %v7075, 0
  %v7120 = vsel %vm5934, %v7074, 0
  %7122 = vmatpush.msra.mxu0 0.0
  %7123 = vmatpush.msra.mxu0 0.0
  %7124 = vmatpush.msra.mxu0 0.0
  %7125 = vmatpush.msra.mxu0 0.0
  %7126 = vmatpush.msra.mxu0 0.0
  %7127 = vmatpush.msra.mxu0 0.0
  %7128 = vmatpush.msra.mxu0 0.0
  %7129 = vmatpush.msra.mxu0 0.0
  %7130 = vmatpush.msra.mxu0 0.0
  %7131 = vmatpush.msra.mxu0 0.0
  %7132 = vmatpush.msra.mxu0 0.0
  %7133 = vmatpush.msra.mxu0 0.0
  %7134 = vmatpush.msra.mxu0 0.0
  %7135 = vmatpush.msra.mxu0 0.0
  %7136 = vmatpush.msra.mxu0 %v5862
  %7137 = vmatpush.msra.mxu0 %v5861
  %7138 = vmatmul.f32.gmra.mxu0 %v7076
  %v7139 = vpop.f32.mrf.mxu0
  %v7140 = vadd.f32 0.0, %v7139
  %7141 = vmatmul.f32.gmra.mxu0 %v7078
  %v7142 = vpop.f32.mrf.mxu0
  %v7143 = vadd.f32 0.0, %v7142
  %7144 = vmatmul.f32.gmra.mxu0 %v7080
  %v7145 = vpop.f32.mrf.mxu0
  %v7146 = vadd.f32 0.0, %v7145
  %7147 = vmatmul.f32.gmra.mxu0 %v7082
  %v7148 = vpop.f32.mrf.mxu0
  %v7149 = vadd.f32 0.0, %v7148
  %7150 = vmatmul.f32.gmra.mxu0 %v7084
  %v7151 = vpop.f32.mrf.mxu0
  %v7152 = vadd.f32 0.0, %v7151
  %7153 = vmatmul.f32.gmra.mxu0 %v7086
  %v7154 = vpop.f32.mrf.mxu0
  %v7155 = vadd.f32 0.0, %v7154
  %7156 = vmatmul.f32.gmra.mxu0 %v7088
  %v7157 = vpop.f32.mrf.mxu0
  %v7158 = vadd.f32 0.0, %v7157
  %7159 = vmatmul.f32.gmra.mxu0 %v7090
  %v7160 = vpop.f32.mrf.mxu0
  %v7161 = vadd.f32 0.0, %v7160
  %7162 = vmatmul.f32.gmra.mxu0 %v7092
  %v7163 = vpop.f32.mrf.mxu0
  %v7164 = vadd.f32 0.0, %v7163
  %7165 = vmatmul.f32.gmra.mxu0 %v7094
  %v7166 = vpop.f32.mrf.mxu0
  %v7167 = vadd.f32 0.0, %v7166
  %7168 = vmatmul.f32.gmra.mxu0 %v7096
  %v7169 = vpop.f32.mrf.mxu0
  %v7170 = vadd.f32 0.0, %v7169
  %7171 = vmatmul.f32.gmra.mxu0 %v7098
  %v7172 = vpop.f32.mrf.mxu0
  %v7173 = vadd.f32 0.0, %v7172
  %7174 = vmatmul.f32.gmra.mxu0 %v7100
  %v7175 = vpop.f32.mrf.mxu0
  %v7176 = vadd.f32 0.0, %v7175
  %7177 = vmatmul.f32.gmra.mxu0 %v7102
  %v7178 = vpop.f32.mrf.mxu0
  %v7179 = vadd.f32 0.0, %v7178
  %7180 = vmatmul.f32.gmra.mxu0 %v7104
  %v7181 = vpop.f32.mrf.mxu0
  %v7182 = vadd.f32 0.0, %v7181
  %7183 = vmatmul.f32.gmra.mxu0 %v7106
  %v7184 = vpop.f32.mrf.mxu0
  %v7185 = vadd.f32 0.0, %v7184
  %7186 = vmatmul.f32.gmra.mxu0 %v7108
  %v7187 = vpop.f32.mrf.mxu0
  %v7188 = vadd.f32 0.0, %v7187
  %7189 = vmatmul.f32.gmra.mxu0 %v7110
  %v7190 = vpop.f32.mrf.mxu0
  %v7191 = vadd.f32 0.0, %v7190
  %7192 = vmatmul.f32.gmra.mxu0 %v7112
  %v7193 = vpop.f32.mrf.mxu0
  %v7194 = vadd.f32 0.0, %v7193
  %7195 = vmatmul.f32.gmra.mxu0 %v7114
  %v7196 = vpop.f32.mrf.mxu0
  %v7197 = vadd.f32 0.0, %v7196
  %7198 = vmatmul.f32.gmra.mxu0 %v7116
  %v7199 = vpop.f32.mrf.mxu0
  %v7200 = vadd.f32 0.0, %v7199
  %7201 = vmatmul.f32.gmra.mxu0 %v7118
  %v7202 = vpop.f32.mrf.mxu0
  %v7203 = vadd.f32 0.0, %v7202
  %7204 = vmatmul.f32.gmra.mxu0 %v7120
  %v7205 = vpop.f32.mrf.mxu0
  %v7206 = vadd.f32 0.0, %v7205
  %7207 = vdwg.mxu0
  %v7208 = vadd.f32 %v7008, %v7140
  %v7209 = vadd.f32 %v7009, %v7143
  %v7210 = vadd.f32 %v7010, %v7146
  %v7211 = vadd.f32 %v7011, %v7149
  %v7212 = vadd.f32 %v7012, %v7152
  %v7213 = vadd.f32 %v7013, %v7155
  %v7214 = vadd.f32 %v7014, %v7158
  %v7215 = vadd.f32 %v7015, %v7161
  %v7216 = vadd.f32 %v7016, %v7164
  %v7217 = vadd.f32 %v7017, %v7167
  %v7218 = vadd.f32 %v7018, %v7170
  %v7219 = vadd.f32 %v7019, %v7173
  %v7220 = vadd.f32 %v7020, %v7176
  %v7221 = vadd.f32 %v7021, %v7179
  %v7222 = vadd.f32 %v7022, %v7182
  %v7223 = vadd.f32 %v7023, %v7185
  %v7224 = vadd.f32 %v7024, %v7188
  %v7225 = vadd.f32 %v7025, %v7191
  %v7226 = vadd.f32 %v7026, %v7194
  %v7227 = vadd.f32 %v7027, %v7197
  %v7228 = vadd.f32 %v7028, %v7200
  %v7229 = vadd.f32 %v7029, %v7203
  %v7230 = vadd.f32 %v7030, %v7206
  %v7231 = vrot.slane %v5779, 6
  %v7232 = vrot.slane %v5782, 6
  %v7233 = vsel %vm4393, %v7231, %v7232
  %v7234 = vrot.slane %v5785, 6
  %v7235 = vsel %vm4393, %v7232, %v7234
  %v7236 = vrot.slane %v5788, 6
  %v7237 = vsel %vm4393, %v7234, %v7236
  %v7238 = vrot.slane %v5791, 6
  %v7239 = vsel %vm4393, %v7236, %v7238
  %v7240 = vrot.slane %v5794, 6
  %v7241 = vsel %vm4393, %v7238, %v7240
  %v7242 = vrot.slane %v5797, 6
  %v7243 = vsel %vm4393, %v7240, %v7242
  %v7244 = vrot.slane %v5800, 6
  %v7245 = vsel %vm4393, %v7242, %v7244
  %v7246 = vrot.slane %v5803, 6
  %v7247 = vsel %vm4393, %v7244, %v7246
  %v7248 = vrot.slane %v5806, 6
  %v7249 = vsel %vm4393, %v7246, %v7248
  %v7250 = vrot.slane %v5809, 6
  %v7251 = vsel %vm4393, %v7248, %v7250
  %v7252 = vrot.slane %v5812, 6
  %v7253 = vsel %vm4393, %v7250, %v7252
  %v7254 = vrot.slane %v5815, 6
  %v7255 = vsel %vm4393, %v7252, %v7254
  %v7256 = vrot.slane %v5818, 6
  %v7257 = vsel %vm4393, %v7254, %v7256
  %v7258 = vrot.slane %v5821, 6
  %v7259 = vsel %vm4393, %v7256, %v7258
  %v7260 = vrot.slane %v5824, 6
  %v7261 = vsel %vm4393, %v7258, %v7260
  %v7262 = vrot.slane %v5827, 6
  %v7263 = vsel %vm4393, %v7260, %v7262
  %v7264 = vrot.slane %v5830, 6
  %v7265 = vsel %vm4393, %v7262, %v7264
  %v7266 = vrot.slane %v5833, 6
  %v7267 = vsel %vm4393, %v7264, %v7266
  %v7268 = vrot.slane %v5836, 6
  %v7269 = vsel %vm4393, %v7266, %v7268
  %v7270 = vrot.slane %v5839, 6
  %v7271 = vsel %vm4393, %v7268, %v7270
  %v7272 = vrot.slane %v5842, 6
  %v7273 = vsel %vm4393, %v7270, %v7272
  %v7274 = vrot.slane %v5845, 6
  %v7275 = vsel %vm4393, %v7272, %v7274
  %v7276 = vsel %vm5934, %v7233, 0
  %v7278 = vsel %vm5934, %v7235, 0
  %v7280 = vsel %vm5934, %v7237, 0
  %v7282 = vsel %vm5934, %v7239, 0
  %v7284 = vsel %vm5934, %v7241, 0
  %v7286 = vsel %vm5934, %v7243, 0
  %v7288 = vsel %vm5934, %v7245, 0
  %v7290 = vsel %vm5934, %v7247, 0
  %v7292 = vsel %vm5934, %v7249, 0
  %v7294 = vsel %vm5934, %v7251, 0
  %v7296 = vsel %vm5934, %v7253, 0
  %v7298 = vsel %vm5934, %v7255, 0
  %v7300 = vsel %vm5934, %v7257, 0
  %v7302 = vsel %vm5934, %v7259, 0
  %v7304 = vsel %vm5934, %v7261, 0
  %v7306 = vsel %vm5934, %v7263, 0
  %v7308 = vsel %vm5934, %v7265, 0
  %v7310 = vsel %vm5934, %v7267, 0
  %v7312 = vsel %vm5934, %v7269, 0
  %v7314 = vsel %vm5934, %v7271, 0
  %v7316 = vsel %vm5934, %v7273, 0
  %v7318 = vsel %vm5934, %v7275, 0
  %v7320 = vsel %vm5934, %v7274, 0
  %7322 = vmatpush.msra.mxu0 0.0
  %7323 = vmatpush.msra.mxu0 0.0
  %7324 = vmatpush.msra.mxu0 0.0
  %7325 = vmatpush.msra.mxu0 0.0
  %7326 = vmatpush.msra.mxu0 0.0
  %7327 = vmatpush.msra.mxu0 0.0
  %7328 = vmatpush.msra.mxu0 0.0
  %7329 = vmatpush.msra.mxu0 0.0
  %7330 = vmatpush.msra.mxu0 0.0
  %7331 = vmatpush.msra.mxu0 0.0
  %7332 = vmatpush.msra.mxu0 0.0
  %7333 = vmatpush.msra.mxu0 0.0
  %7334 = vmatpush.msra.mxu0 0.0
  %7335 = vmatpush.msra.mxu0 0.0
  %7336 = vmatpush.msra.mxu0 %v5864
  %7337 = vmatpush.msra.mxu0 %v5863
  %7338 = vmatmul.f32.gmra.mxu0 %v7276
  %v7339 = vpop.f32.mrf.mxu0
  %v7340 = vadd.f32 0.0, %v7339
  %7341 = vmatmul.f32.gmra.mxu0 %v7278
  %v7342 = vpop.f32.mrf.mxu0
  %v7343 = vadd.f32 0.0, %v7342
  %7344 = vmatmul.f32.gmra.mxu0 %v7280
  %v7345 = vpop.f32.mrf.mxu0
  %v7346 = vadd.f32 0.0, %v7345
  %7347 = vmatmul.f32.gmra.mxu0 %v7282
  %v7348 = vpop.f32.mrf.mxu0
  %v7349 = vadd.f32 0.0, %v7348
  %7350 = vmatmul.f32.gmra.mxu0 %v7284
  %v7351 = vpop.f32.mrf.mxu0
  %v7352 = vadd.f32 0.0, %v7351
  %7353 = vmatmul.f32.gmra.mxu0 %v7286
  %v7354 = vpop.f32.mrf.mxu0
  %v7355 = vadd.f32 0.0, %v7354
  %7356 = vmatmul.f32.gmra.mxu0 %v7288
  %v7357 = vpop.f32.mrf.mxu0
  %v7358 = vadd.f32 0.0, %v7357
  %7359 = vmatmul.f32.gmra.mxu0 %v7290
  %v7360 = vpop.f32.mrf.mxu0
  %v7361 = vadd.f32 0.0, %v7360
  %7362 = vmatmul.f32.gmra.mxu0 %v7292
  %v7363 = vpop.f32.mrf.mxu0
  %v7364 = vadd.f32 0.0, %v7363
  %7365 = vmatmul.f32.gmra.mxu0 %v7294
  %v7366 = vpop.f32.mrf.mxu0
  %v7367 = vadd.f32 0.0, %v7366
  %7368 = vmatmul.f32.gmra.mxu0 %v7296
  %v7369 = vpop.f32.mrf.mxu0
  %v7370 = vadd.f32 0.0, %v7369
  %7371 = vmatmul.f32.gmra.mxu0 %v7298
  %v7372 = vpop.f32.mrf.mxu0
  %v7373 = vadd.f32 0.0, %v7372
  %7374 = vmatmul.f32.gmra.mxu0 %v7300
  %v7375 = vpop.f32.mrf.mxu0
  %v7376 = vadd.f32 0.0, %v7375
  %7377 = vmatmul.f32.gmra.mxu0 %v7302
  %v7378 = vpop.f32.mrf.mxu0
  %v7379 = vadd.f32 0.0, %v7378
  %7380 = vmatmul.f32.gmra.mxu0 %v7304
  %v7381 = vpop.f32.mrf.mxu0
  %v7382 = vadd.f32 0.0, %v7381
  %7383 = vmatmul.f32.gmra.mxu0 %v7306
  %v7384 = vpop.f32.mrf.mxu0
  %v7385 = vadd.f32 0.0, %v7384
  %7386 = vmatmul.f32.gmra.mxu0 %v7308
  %v7387 = vpop.f32.mrf.mxu0
  %v7388 = vadd.f32 0.0, %v7387
  %7389 = vmatmul.f32.gmra.mxu0 %v7310
  %v7390 = vpop.f32.mrf.mxu0
  %v7391 = vadd.f32 0.0, %v7390
  %7392 = vmatmul.f32.gmra.mxu0 %v7312
  %v7393 = vpop.f32.mrf.mxu0
  %v7394 = vadd.f32 0.0, %v7393
  %7395 = vmatmul.f32.gmra.mxu0 %v7314
  %v7396 = vpop.f32.mrf.mxu0
  %v7397 = vadd.f32 0.0, %v7396
  %7398 = vmatmul.f32.gmra.mxu0 %v7316
  %v7399 = vpop.f32.mrf.mxu0
  %v7400 = vadd.f32 0.0, %v7399
  %7401 = vmatmul.f32.gmra.mxu0 %v7318
  %v7402 = vpop.f32.mrf.mxu0
  %v7403 = vadd.f32 0.0, %v7402
  %7404 = vmatmul.f32.gmra.mxu0 %v7320
  %v7405 = vpop.f32.mrf.mxu0
  %v7406 = vadd.f32 0.0, %v7405
  %7407 = vdwg.mxu0
  %v7408 = vadd.f32 %v7208, %v7340
  %v7409 = vadd.f32 %v7209, %v7343
  %v7410 = vadd.f32 %v7210, %v7346
  %v7411 = vadd.f32 %v7211, %v7349
  %v7412 = vadd.f32 %v7212, %v7352
  %v7413 = vadd.f32 %v7213, %v7355
  %v7414 = vadd.f32 %v7214, %v7358
  %v7415 = vadd.f32 %v7215, %v7361
  %v7416 = vadd.f32 %v7216, %v7364
  %v7417 = vadd.f32 %v7217, %v7367
  %v7418 = vadd.f32 %v7218, %v7370
  %v7419 = vadd.f32 %v7219, %v7373
  %v7420 = vadd.f32 %v7220, %v7376
  %v7421 = vadd.f32 %v7221, %v7379
  %v7422 = vadd.f32 %v7222, %v7382
  %v7423 = vadd.f32 %v7223, %v7385
  %v7424 = vadd.f32 %v7224, %v7388
  %v7425 = vadd.f32 %v7225, %v7391
  %v7426 = vadd.f32 %v7226, %v7394
  %v7427 = vadd.f32 %v7227, %v7397
  %v7428 = vadd.f32 %v7228, %v7400
  %v7429 = vadd.f32 %v7229, %v7403
  %v7430 = vadd.f32 %v7230, %v7406
  %v7432 = vperm.slane %v5865, 0
  %v7434 = vadd.f32 %v7408, %v7432
  %v7435 = vadd.f32 %v7409, %v7432
  %v7436 = vadd.f32 %v7410, %v7432
  %v7437 = vadd.f32 %v7411, %v7432
  %v7438 = vadd.f32 %v7412, %v7432
  %v7439 = vadd.f32 %v7413, %v7432
  %v7440 = vadd.f32 %v7414, %v7432
  %v7441 = vadd.f32 %v7415, %v7432
  %v7442 = vadd.f32 %v7416, %v7432
  %v7443 = vadd.f32 %v7417, %v7432
  %v7444 = vadd.f32 %v7418, %v7432
  %v7445 = vadd.f32 %v7419, %v7432
  %v7446 = vadd.f32 %v7420, %v7432
  %v7447 = vadd.f32 %v7421, %v7432
  %v7448 = vadd.f32 %v7422, %v7432
  %v7449 = vadd.f32 %v7423, %v7432
  %v7450 = vadd.f32 %v7424, %v7432
  %v7451 = vadd.f32 %v7425, %v7432
  %v7452 = vadd.f32 %v7426, %v7432
  %v7453 = vadd.f32 %v7427, %v7432
  %v7454 = vadd.f32 %v7428, %v7432
  %v7455 = vadd.f32 %v7429, %v7432
  %v7456 = vadd.f32 %v7430, %v7432
  %v7457 = vmax.f32 %v7434, 0.0
  %v7458 = vmax.f32 %v7435, 0.0
  %v7459 = vmax.f32 %v7436, 0.0
  %v7460 = vmax.f32 %v7437, 0.0
  %v7461 = vmax.f32 %v7438, 0.0
  %v7462 = vmax.f32 %v7439, 0.0
  %v7463 = vmax.f32 %v7440, 0.0
  %v7464 = vmax.f32 %v7441, 0.0
  %v7465 = vmax.f32 %v7442, 0.0
  %v7466 = vmax.f32 %v7443, 0.0
  %v7467 = vmax.f32 %v7444, 0.0
  %v7468 = vmax.f32 %v7445, 0.0
  %v7469 = vmax.f32 %v7446, 0.0
  %v7470 = vmax.f32 %v7447, 0.0
  %v7471 = vmax.f32 %v7448, 0.0
  %v7472 = vmax.f32 %v7449, 0.0
  %v7473 = vmax.f32 %v7450, 0.0
  %v7474 = vmax.f32 %v7451, 0.0
  %v7475 = vmax.f32 %v7452, 0.0
  %v7476 = vmax.f32 %v7453, 0.0
  %v7477 = vmax.f32 %v7454, 0.0
  %v7478 = vmax.f32 %v7455, 0.0
  %v7479 = vmax.f32 %v7456, 0.0
  %v7480 = vld [vmem:[%s14] sm:$0xff]
  %v7481 = vld [vmem:[%s14 + $0x8] sm:$0xff]
  %v7482 = vld [vmem:[%s14 + $0x10] sm:$0xff]
  %v7483 = vld [vmem:[%s14 + $0x18] sm:$0xff]
  %v7484 = vld [vmem:[%s14 + $0x20] sm:$0xff]
  %v7485 = vld [vmem:[%s14 + $0x28] sm:$0xff]
  %v7486 = vld [vmem:[%s14 + $0x30] sm:$0xff]
  %v7487 = vld [vmem:[%s14 + $0x38] sm:$0xff]
  %vm7488 = vcmask 408576
  %v7490 = vsel %vm7488, %v7481, 0
  %v7493 = vsel %vm7488, %v7483, 0
  %v7496 = vsel %vm7488, %v7485, 0
  %v7499 = vsel %vm7488, %v7487, 0
  %v7502 = vsel %vm4393, %v7479, 0
  %7504 = vmatpush.msra.mxu0 %v7472
  %7505 = vmatpush.msra.mxu0 %v7471
  %7506 = vmatpush.msra.mxu0 %v7470
  %7507 = vmatpush.msra.mxu0 %v7469
  %7508 = vmatpush.msra.mxu0 %v7468
  %7509 = vmatpush.msra.mxu0 %v7467
  %7510 = vmatpush.msra.mxu0 %v7466
  %7511 = vmatpush.msra.mxu0 %v7465
  %7512 = vmatpush.msra.mxu0 %v7464
  %7513 = vmatpush.msra.mxu0 %v7463
  %7514 = vmatpush.msra.mxu0 %v7462
  %7515 = vmatpush.msra.mxu0 %v7461
  %7516 = vmatpush.msra.mxu0 %v7460
  %7517 = vmatpush.msra.mxu0 %v7459
  %7518 = vmatpush.msra.mxu0 %v7458
  %7519 = vmatpush.msra.mxu0 %v7457
  %7520 = vmatmul.f32.gmra.mxu0 %v7480
  %v7521 = vpop.f32.mrf.mxu0
  %v7522 = vadd.f32 0.0, %v7521
  %7523 = vmatmul.f32.gmra.mxu0 %v7482
  %v7524 = vpop.f32.mrf.mxu0
  %v7525 = vadd.f32 0.0, %v7524
  %7526 = vmatmul.f32.gmra.mxu0 %v7484
  %v7527 = vpop.f32.mrf.mxu0
  %v7528 = vadd.f32 0.0, %v7527
  %7529 = vmatmul.f32.gmra.mxu0 %v7486
  %v7530 = vpop.f32.mrf.mxu0
  %v7531 = vadd.f32 0.0, %v7530
  %7532 = vdwg.mxu0
  %7533 = vmatpush.msra.mxu0 0.0
  %7534 = vmatpush.msra.mxu0 0.0
  %7535 = vmatpush.msra.mxu0 0.0
  %7536 = vmatpush.msra.mxu0 0.0
  %7537 = vmatpush.msra.mxu0 0.0
  %7538 = vmatpush.msra.mxu0 0.0
  %7539 = vmatpush.msra.mxu0 0.0
  %7540 = vmatpush.msra.mxu0 0.0
  %7541 = vmatpush.msra.mxu0 0.0
  %7542 = vmatpush.msra.mxu0 %v7502
  %7543 = vmatpush.msra.mxu0 %v7478
  %7544 = vmatpush.msra.mxu0 %v7477
  %7545 = vmatpush.msra.mxu0 %v7476
  %7546 = vmatpush.msra.mxu0 %v7475
  %7547 = vmatpush.msra.mxu0 %v7474
  %7548 = vmatpush.msra.mxu0 %v7473
  %7549 = vmatmul.f32.gmra.mxu0 %v7490
  %v7550 = vpop.f32.mrf.mxu0
  %v7551 = vadd.f32 %v7522, %v7550
  %7552 = vmatmul.f32.gmra.mxu0 %v7493
  %v7553 = vpop.f32.mrf.mxu0
  %v7554 = vadd.f32 %v7525, %v7553
  %7555 = vmatmul.f32.gmra.mxu0 %v7496
  %v7556 = vpop.f32.mrf.mxu0
  %v7557 = vadd.f32 %v7528, %v7556
  %7558 = vmatmul.f32.gmra.mxu0 %v7499
  %v7559 = vpop.f32.mrf.mxu0
  %v7560 = vadd.f32 %v7531, %v7559
  %7561 = vdwg.mxu0
  %v7562 = vld [vmem:[%s7] sm:$0xff]
  %v7563 = vld [vmem:[%s7 + $0x8] sm:$0xff]
  %v7564 = vld [vmem:[%s7 + $0x10] sm:$0xff]
  %v7565 = vld [vmem:[%s7 + $0x18] sm:$0xff]
  %v7566 = vld [vmem:[%s8] sm:$0x1]
  %v7568 = vperm.slane %v7566, 0
  %vm7570 = vcmask 261120
  %v7572 = vsel %vm7570, %v7551, 0
  %v7575 = vsel %vm7570, %v7554, 0
  %v7578 = vsel %vm7570, %v7557, 0
  %v7581 = vsel %vm7570, %v7560, 0
  %7583 = vmatpush.msra.mxu0 0.0
  %7584 = vmatpush.msra.mxu0 0.0
  %7585 = vmatpush.msra.mxu0 0.0
  %7586 = vmatpush.msra.mxu0 0.0
  %7587 = vmatpush.msra.mxu0 0.0
  %7588 = vmatpush.msra.mxu0 0.0
  %7589 = vmatpush.msra.mxu0 0.0
  %7590 = vmatpush.msra.mxu0 0.0
  %7591 = vmatpush.msra.mxu0 0.0
  %7592 = vmatpush.msra.mxu0 0.0
  %7593 = vmatpush.msra.mxu0 0.0
  %7594 = vmatpush.msra.mxu0 0.0
  %7595 = vmatpush.msra.mxu0 %v7565
  %7596 = vmatpush.msra.mxu0 %v7564
  %7597 = vmatpush.msra.mxu0 %v7563
  %7598 = vmatpush.msra.mxu0 %v7562
  %7599 = vmatmul.f32.gmra.mxu0 %v7572
  %v7600 = vpop.f32.mrf.mxu0
  %v7601 = vadd.f32 %v7568, %v7600
  %7602 = vmatmul.f32.gmra.mxu0 %v7575
  %v7603 = vpop.f32.mrf.mxu0
  %v7604 = vadd.f32 %v7568, %v7603
  %7605 = vmatmul.f32.gmra.mxu0 %v7578
  %v7606 = vpop.f32.mrf.mxu0
  %v7607 = vadd.f32 %v7568, %v7606
  %7608 = vmatmul.f32.gmra.mxu0 %v7581
  %v7609 = vpop.f32.mrf.mxu0
  %v7610 = vadd.f32 %v7568, %v7609
  %7611 = vdwg.mxu0
  %v7612 = vld [vmem:[#allocation2] sm:$0x1]
  %v7613 = vld [vmem:[%s15] sm:$0xff]
  %v7614 = vld [vmem:[%s15 + $0x8] sm:$0xff]
  %v7615 = vld [vmem:[%s15 + $0x10] sm:$0xff]
  %v7616 = vld [vmem:[%s15 + $0x18] sm:$0xff]
  %v7617 = vld [vmem:[%s15 + $0x20] sm:$0xff]
  %v7618 = vld [vmem:[%s15 + $0x28] sm:$0xff]
  %v7619 = vld [vmem:[%s15 + $0x30] sm:$0xff]
  %v7620 = vld [vmem:[%s15 + $0x38] sm:$0xff]
  %v7621 = vld [vmem:[%s15 + $0x40] sm:$0xff]
  %7624 = vrot.lane.b32.xlu0 %v7601, 124
  %v7625 = vpop.permute.xlu0 %7624
  %7626 = vrot.lane.b32.xlu0 %v7604, 124
  %v7627 = vpop.permute.xlu0 %7626
  %vm7628 = vcmask 31744
  %v7629 = vsel %vm7628, %v7601, 0
  %v7631 = vsel %vm7628, %v7604, 0
  %v7633 = vsel %vm7628, %v7625, 0
  %v7635 = vsel %vm7628, %v7627, 0
  %7637 = vmatpush.xpose.msra.mxu0 0.0
  %7638 = vmatpush.xpose.msra.mxu0 0.0
  %7639 = vmatpush.xpose.msra.mxu0 0.0
  %7640 = vmatpush.xpose.msra.mxu0 0.0
  %7641 = vmatpush.xpose.msra.mxu0 0.0
  %7642 = vmatpush.xpose.msra.mxu0 0.0
  %7643 = vmatpush.xpose.msra.mxu0 0.0
  %7644 = vmatpush.xpose.msra.mxu0 0.0
  %7645 = vmatpush.xpose.msra.mxu0 0.0
  %7646 = vmatpush.xpose.msra.mxu0 0.0
  %7647 = vmatpush.xpose.msra.mxu0 0.0
  %7648 = vmatpush.xpose.msra.mxu0 0.0
  %7649 = vmatpush.xpose.msra.mxu0 0.0
  %7650 = vmatpush.xpose.msra.mxu0 0.0
  %7651 = vmatpush.xpose.msra.mxu0 %v7635
  %7652 = vmatpush.xpose.msra.mxu0 %v7633
  %7653 = vmatmul.f32.gmra.mxu0 %v7629
  %v7654 = vpop.f32.mrf.mxu0
  %v7655 = vadd.f32 0.0, %v7654
  %7656 = vmatmul.f32.gmra.mxu0 %v7631
  %v7657 = vpop.f32.mrf.mxu0
  %v7658 = vadd.f32 0.0, %v7657
  %7659 = vdwg.mxu0
  %v7660 = vsel %vm5934, %v7655, -inf
  %7661 = vmax.xlane.f32.xlu0 %v7660
  %v7662 = vpop.xlane.xlu0 %7661
  %v7663 = vsel %vm5934, %v7658, -inf
  %7664 = vmax.xlane.f32.xlu0 %v7663
  %v7665 = vpop.xlane.xlu0 %7664
  %v7666 = vsub.f32 %v7655, %v7662
  %v7667 = vsub.f32 %v7658, %v7665
  %v7668 = vmul.f32 %v7666, 1.442695
  %v7669 = vpow.pop %v7668
  %v7670 = vmul.f32 %v7667, 1.442695
  %v7671 = vpow.pop %v7670
  %v7672 = vsel %vm5934, %v7669, 0.0
  %7673 = vadd.xlane.f32.xlu0 %v7672
  %v7674 = vpop.xlane.xlu0 %7673
  %v7675 = vsel %vm5934, %v7671, 0.0
  %7676 = vadd.xlane.f32.xlu0 %v7675
  %v7677 = vpop.xlane.xlu0 %7676
  %v7678 = vrcp.pop %v7674
  %v7679 = vrcp.pop %v7677
  %v7680 = vmul.f32 %v7669, %v7678
  %v7681 = vmul.f32 %v7671, %v7679
  %7682 = vrot.lane.b32.xlu0 %v7601, 120
  %v7683 = vpop.permute.xlu0 %7682
  %7684 = vrot.lane.b32.xlu0 %v7604, 120
  %v7685 = vpop.permute.xlu0 %7684
  %v7689 = vsel %vm5934, %v7680, 0
  %v7692 = vsel %vm5934, %v7681, 0
  %7694 = vmatpush.msra.mxu0 0.0
  %7695 = vmatpush.msra.mxu0 0.0
  %7696 = vmatpush.msra.mxu0 0.0
  %7697 = vmatpush.msra.mxu0 0.0
  %7698 = vmatpush.msra.mxu0 0.0
  %7699 = vmatpush.msra.mxu0 0.0
  %7700 = vmatpush.msra.mxu0 0.0
  %7701 = vmatpush.msra.mxu0 0.0
  %7702 = vmatpush.msra.mxu0 0.0
  %7703 = vmatpush.msra.mxu0 0.0
  %7704 = vmatpush.msra.mxu0 0.0
  %7705 = vmatpush.msra.mxu0 0.0
  %7706 = vmatpush.msra.mxu0 0.0
  %7707 = vmatpush.msra.mxu0 0.0
  %7708 = vmatpush.msra.mxu0 %v7685
  %7709 = vmatpush.msra.mxu0 %v7683
  %7710 = vmatmul.f32.gmra.mxu0 %v7689
  %v7711 = vpop.f32.mrf.mxu0
  %v7712 = vadd.f32 0.0, %v7711
  %7713 = vmatmul.f32.gmra.mxu0 %v7692
  %v7714 = vpop.f32.mrf.mxu0
  %v7715 = vadd.f32 0.0, %v7714
  %7716 = vdwg.mxu0
  %v7718 = vperm.slane %v7612, 0
  %7719 = vset.pattern.permute.xlu0 0
  %7720 = vperm.xlu0 %7719, %v7718
  %v7721 = vpop.permute.xlu0 %7720
  %v7723 = vmul.f32 %v7721, %v7712
  %v7724 = vmul.f32 %v7721, %v7715
  %v7725 = vadd.f32 %v7723, %v7551
  %v7726 = vadd.f32 %v7724, %v7554
  %7729 = vrot.lane.b32.xlu0 %v7607, 124
  %v7730 = vpop.permute.xlu0 %7729
  %7731 = vrot.lane.b32.xlu0 %v7610, 124
  %v7732 = vpop.permute.xlu0 %7731
  %v7733 = vsel %vm7628, %v7607, 0
  %v7735 = vsel %vm7628, %v7610, 0
  %v7737 = vsel %vm7628, %v7730, 0
  %v7739 = vsel %vm7628, %v7732, 0
  %7741 = vmatpush.xpose.msra.mxu0 0.0
  %7742 = vmatpush.xpose.msra.mxu0 0.0
  %7743 = vmatpush.xpose.msra.mxu0 0.0
  %7744 = vmatpush.xpose.msra.mxu0 0.0
  %7745 = vmatpush.xpose.msra.mxu0 0.0
  %7746 = vmatpush.xpose.msra.mxu0 0.0
  %7747 = vmatpush.xpose.msra.mxu0 0.0
  %7748 = vmatpush.xpose.msra.mxu0 0.0
  %7749 = vmatpush.xpose.msra.mxu0 0.0
  %7750 = vmatpush.xpose.msra.mxu0 0.0
  %7751 = vmatpush.xpose.msra.mxu0 0.0
  %7752 = vmatpush.xpose.msra.mxu0 0.0
  %7753 = vmatpush.xpose.msra.mxu0 0.0
  %7754 = vmatpush.xpose.msra.mxu0 0.0
  %7755 = vmatpush.xpose.msra.mxu0 %v7739
  %7756 = vmatpush.xpose.msra.mxu0 %v7737
  %7757 = vmatmul.f32.gmra.mxu0 %v7733
  %v7758 = vpop.f32.mrf.mxu0
  %v7759 = vadd.f32 0.0, %v7758
  %7760 = vmatmul.f32.gmra.mxu0 %v7735
  %v7761 = vpop.f32.mrf.mxu0
  %v7762 = vadd.f32 0.0, %v7761
  %7763 = vdwg.mxu0
  %v7764 = vsel %vm5934, %v7759, -inf
  %7765 = vmax.xlane.f32.xlu0 %v7764
  %v7766 = vpop.xlane.xlu0 %7765
  %v7767 = vsel %vm5934, %v7762, -inf
  %7768 = vmax.xlane.f32.xlu0 %v7767
  %v7769 = vpop.xlane.xlu0 %7768
  %v7770 = vsub.f32 %v7759, %v7766
  %v7771 = vsub.f32 %v7762, %v7769
  %v7772 = vmul.f32 %v7770, 1.442695
  %v7773 = vpow.pop %v7772
  %v7774 = vmul.f32 %v7771, 1.442695
  %v7775 = vpow.pop %v7774
  %v7776 = vsel %vm5934, %v7773, 0.0
  %7777 = vadd.xlane.f32.xlu0 %v7776
  %v7778 = vpop.xlane.xlu0 %7777
  %v7779 = vsel %vm5934, %v7775, 0.0
  %7780 = vadd.xlane.f32.xlu0 %v7779
  %v7781 = vpop.xlane.xlu0 %7780
  %v7782 = vrcp.pop %v7778
  %v7783 = vrcp.pop %v7781
  %v7784 = vmul.f32 %v7773, %v7782
  %v7785 = vmul.f32 %v7775, %v7783
  %7786 = vrot.lane.b32.xlu0 %v7607, 120
  %v7787 = vpop.permute.xlu0 %7786
  %7788 = vrot.lane.b32.xlu0 %v7610, 120
  %v7789 = vpop.permute.xlu0 %7788
  %v7793 = vsel %vm5934, %v7784, 0
  %v7796 = vsel %vm5934, %v7785, 0
  %7798 = vmatpush.msra.mxu0 0.0
  %7799 = vmatpush.msra.mxu0 0.0
  %7800 = vmatpush.msra.mxu0 0.0
  %7801 = vmatpush.msra.mxu0 0.0
  %7802 = vmatpush.msra.mxu0 0.0
  %7803 = vmatpush.msra.mxu0 0.0
  %7804 = vmatpush.msra.mxu0 0.0
  %7805 = vmatpush.msra.mxu0 0.0
  %7806 = vmatpush.msra.mxu0 0.0
  %7807 = vmatpush.msra.mxu0 0.0
  %7808 = vmatpush.msra.mxu0 0.0
  %7809 = vmatpush.msra.mxu0 0.0
  %7810 = vmatpush.msra.mxu0 0.0
  %7811 = vmatpush.msra.mxu0 0.0
  %7812 = vmatpush.msra.mxu0 %v7789
  %7813 = vmatpush.msra.mxu0 %v7787
  %7814 = vmatmul.f32.gmra.mxu0 %v7793
  %v7815 = vpop.f32.mrf.mxu0
  %v7816 = vadd.f32 0.0, %v7815
  %7817 = vmatmul.f32.gmra.mxu0 %v7796
  %v7818 = vpop.f32.mrf.mxu0
  %v7819 = vadd.f32 0.0, %v7818
  %7820 = vdwg.mxu0
  %v7821 = vmul.f32 %v7721, %v7816
  %v7822 = vmul.f32 %v7721, %v7819
  %v7823 = vadd.f32 %v7821, %v7557
  %v7824 = vadd.f32 %v7822, %v7560
  %7834 = vrot.lane.b32.xlu0 %v7613, 112
  %v7835 = vpop.permute.xlu0 %7834
  %7836 = vrot.lane.b32.xlu0 %v7614, 112
  %v7837 = vpop.permute.xlu0 %7836
  %7838 = vrot.lane.b32.xlu0 %v7615, 112
  %v7839 = vpop.permute.xlu0 %7838
  %7840 = vrot.lane.b32.xlu0 %v7616, 112
  %v7841 = vpop.permute.xlu0 %7840
  %7842 = vrot.lane.b32.xlu0 %v7617, 112
  %v7843 = vpop.permute.xlu0 %7842
  %7844 = vrot.lane.b32.xlu0 %v7618, 112
  %v7845 = vpop.permute.xlu0 %7844
  %7846 = vrot.lane.b32.xlu0 %v7619, 112
  %v7847 = vpop.permute.xlu0 %7846
  %7848 = vrot.lane.b32.xlu0 %v7620, 112
  %v7849 = vpop.permute.xlu0 %7848
  %7850 = vrot.lane.b32.xlu0 %v7621, 112
  %v7851 = vpop.permute.xlu0 %7850
  %v7852 = vsel %vm5934, %v7835, 0
  %v7854 = vsel %vm5934, %v7837, 0
  %v7856 = vsel %vm5934, %v7839, 0
  %v7858 = vsel %vm5934, %v7841, 0
  %v7860 = vsel %vm5934, %v7843, 0
  %v7862 = vsel %vm5934, %v7845, 0
  %v7864 = vsel %vm5934, %v7847, 0
  %v7866 = vsel %vm5934, %v7849, 0
  %v7868 = vsel %vm5934, %v7851, 0
  %7870 = vmatpush.msra.mxu0 0.0
  %7871 = vmatpush.msra.mxu0 0.0
  %7872 = vmatpush.msra.mxu0 0.0
  %7873 = vmatpush.msra.mxu0 0.0
  %7874 = vmatpush.msra.mxu0 0.0
  %7875 = vmatpush.msra.mxu0 0.0
  %7876 = vmatpush.msra.mxu0 0.0
  %7877 = vmatpush.msra.mxu0 0.0
  %7878 = vmatpush.msra.mxu0 0.0
  %7879 = vmatpush.msra.mxu0 0.0
  %7880 = vmatpush.msra.mxu0 0.0
  %7881 = vmatpush.msra.mxu0 0.0
  %7882 = vmatpush.msra.mxu0 0.0
  %7883 = vmatpush.msra.mxu0 0.0
  %7884 = vmatpush.msra.mxu0 %v7824
  %7885 = vmatpush.msra.mxu0 %v7823
  %7886 = vmatmul.f32.gmra.mxu0 %v7852
  %v7887 = vpop.f32.mrf.mxu0
  %v7888 = vadd.f32 0.0, %v7887
  %7889 = vmatmul.f32.gmra.mxu0 %v7854
  %v7890 = vpop.f32.mrf.mxu0
  %v7891 = vadd.f32 0.0, %v7890
  %7892 = vmatmul.f32.gmra.mxu0 %v7856
  %v7893 = vpop.f32.mrf.mxu0
  %v7894 = vadd.f32 0.0, %v7893
  %7895 = vmatmul.f32.gmra.mxu0 %v7858
  %v7896 = vpop.f32.mrf.mxu0
  %v7897 = vadd.f32 0.0, %v7896
  %7898 = vmatmul.f32.gmra.mxu0 %v7860
  %v7899 = vpop.f32.mrf.mxu0
  %v7900 = vadd.f32 0.0, %v7899
  %7901 = vmatmul.f32.gmra.mxu0 %v7862
  %v7902 = vpop.f32.mrf.mxu0
  %v7903 = vadd.f32 0.0, %v7902
  %7904 = vmatmul.f32.gmra.mxu0 %v7864
  %v7905 = vpop.f32.mrf.mxu0
  %v7906 = vadd.f32 0.0, %v7905
  %7907 = vmatmul.f32.gmra.mxu0 %v7866
  %v7908 = vpop.f32.mrf.mxu0
  %v7909 = vadd.f32 0.0, %v7908
  %7910 = vmatmul.f32.gmra.mxu0 %v7868
  %v7911 = vpop.f32.mrf.mxu0
  %v7912 = vadd.f32 0.0, %v7911
  %7913 = vdwg.mxu0
  %v7914 = vsel %vm5934, %v7613, 0
  %v7916 = vsel %vm5934, %v7614, 0
  %v7918 = vsel %vm5934, %v7615, 0
  %v7920 = vsel %vm5934, %v7616, 0
  %v7922 = vsel %vm5934, %v7617, 0
  %v7924 = vsel %vm5934, %v7618, 0
  %v7926 = vsel %vm5934, %v7619, 0
  %v7928 = vsel %vm5934, %v7620, 0
  %v7930 = vsel %vm5934, %v7621, 0
  %7932 = vmatpush.msra.mxu0 0.0
  %7933 = vmatpush.msra.mxu0 0.0
  %7934 = vmatpush.msra.mxu0 0.0
  %7935 = vmatpush.msra.mxu0 0.0
  %7936 = vmatpush.msra.mxu0 0.0
  %7937 = vmatpush.msra.mxu0 0.0
  %7938 = vmatpush.msra.mxu0 0.0
  %7939 = vmatpush.msra.mxu0 0.0
  %7940 = vmatpush.msra.mxu0 0.0
  %7941 = vmatpush.msra.mxu0 0.0
  %7942 = vmatpush.msra.mxu0 0.0
  %7943 = vmatpush.msra.mxu0 0.0
  %7944 = vmatpush.msra.mxu0 0.0
  %7945 = vmatpush.msra.mxu0 0.0
  %7946 = vmatpush.msra.mxu0 %v7726
  %7947 = vmatpush.msra.mxu0 %v7725
  %7948 = vmatmul.f32.gmra.mxu0 %v7914
  %v7949 = vpop.f32.mrf.mxu0
  %v7950 = vadd.f32 %v7888, %v7949
  %7951 = vmatmul.f32.gmra.mxu0 %v7916
  %v7952 = vpop.f32.mrf.mxu0
  %v7953 = vadd.f32 %v7891, %v7952
  %7954 = vmatmul.f32.gmra.mxu0 %v7918
  %v7955 = vpop.f32.mrf.mxu0
  %v7956 = vadd.f32 %v7894, %v7955
  %7957 = vmatmul.f32.gmra.mxu0 %v7920
  %v7958 = vpop.f32.mrf.mxu0
  %v7959 = vadd.f32 %v7897, %v7958
  %7960 = vmatmul.f32.gmra.mxu0 %v7922
  %v7961 = vpop.f32.mrf.mxu0
  %v7962 = vadd.f32 %v7900, %v7961
  %7963 = vmatmul.f32.gmra.mxu0 %v7924
  %v7964 = vpop.f32.mrf.mxu0
  %v7965 = vadd.f32 %v7903, %v7964
  %7966 = vmatmul.f32.gmra.mxu0 %v7926
  %v7967 = vpop.f32.mrf.mxu0
  %v7968 = vadd.f32 %v7906, %v7967
  %7969 = vmatmul.f32.gmra.mxu0 %v7928
  %v7970 = vpop.f32.mrf.mxu0
  %v7971 = vadd.f32 %v7909, %v7970
  %7972 = vmatmul.f32.gmra.mxu0 %v7930
  %v7973 = vpop.f32.mrf.mxu0
  %v7974 = vadd.f32 %v7912, %v7973
  %7975 = vdwg.mxu0
  %v7976 = vld [vmem:[%s5] sm:$0xff]
  %v7977 = vld [vmem:[%s5 + $0x8] sm:$0xff]
  %v7978 = vld [vmem:[%s5 + $0x10] sm:$0xff]
  %v7979 = vld [vmem:[%s5 + $0x18] sm:$0xff]
  %v7980 = vld [vmem:[%s5 + $0x20] sm:$0xff]
  %v7981 = vld [vmem:[%s5 + $0x28] sm:$0xff]
  %v7982 = vld [vmem:[%s5 + $0x30] sm:$0xff]
  %v7983 = vld [vmem:[%s5 + $0x38] sm:$0xff]
  %v7984 = vld [vmem:[%s5 + $0x40] sm:$0xff]
  %v7985 = vld [vmem:[%s5 + $0x48] sm:$0xff]
  %v7986 = vld [vmem:[%s5 + $0x50] sm:$0xff]
  %v7987 = vld [vmem:[%s5 + $0x58] sm:$0xff]
  %v7988 = vld [vmem:[%s5 + $0x60] sm:$0xff]
  %v7989 = vld [vmem:[%s5 + $0x68] sm:$0xff]
  %v7990 = vld [vmem:[%s5 + $0x70] sm:$0xff]
  %v7991 = vld [vmem:[%s5 + $0x78] sm:$0xff]
  %v7992 = vld [vmem:[%s5 + $0x80] sm:$0xff]
  %v7993 = vld [vmem:[%s5 + $0x88] sm:$0xff]
  %v7994 = vld [vmem:[%s5 + $0x90] sm:$0xff]
  %v7995 = vld [vmem:[%s5 + $0x98] sm:$0xff]
  %v7996 = vld [vmem:[%s5 + $0xa0] sm:$0xff]
  %v7997 = vld [vmem:[%s5 + $0xa8] sm:$0xff]
  %v7998 = vld [vmem:[%s5 + $0xb0] sm:$0xff]
  %v7999 = vld [vmem:[%s5 + $0xb8] sm:$0xff]
  %v8000 = vld [vmem:[%s5 + $0xc0] sm:$0xff]
  %v8001 = vld [vmem:[%s5 + $0xc8] sm:$0xff]
  %v8002 = vld [vmem:[%s5 + $0xd0] sm:$0xff]
  %v8003 = vld [vmem:[%s5 + $0xd8] sm:$0xff]
  %v8004 = vld [vmem:[%s5 + $0xe0] sm:$0xff]
  %v8005 = vld [vmem:[%s5 + $0xe8] sm:$0xff]
  %v8006 = vld [vmem:[%s5 + $0xf0] sm:$0xff]
  %v8007 = vld [vmem:[%s5 + $0xf8] sm:$0xff]
  %v8008 = vld [vmem:[%s5 + $0x100] sm:$0xff]
  %v8009 = vld [vmem:[%s5 + $0x108] sm:$0xff]
  %v8010 = vld [vmem:[%s5 + $0x110] sm:$0xff]
  %v8011 = vld [vmem:[%s5 + $0x118] sm:$0xff]
  %v8012 = vld [vmem:[%s6] sm:$0x1]
  %v8021 = vrot.slane %v7950, 1
  %v8022 = vrot.slane %v7953, 1
  %v8023 = vsel %vm228, %v8021, %v8022
  %v8024 = vrot.slane %v7956, 1
  %v8025 = vsel %vm228, %v8022, %v8024
  %v8026 = vrot.slane %v7959, 1
  %v8027 = vsel %vm228, %v8024, %v8026
  %v8028 = vrot.slane %v7962, 1
  %v8029 = vsel %vm228, %v8026, %v8028
  %v8030 = vrot.slane %v7965, 1
  %v8031 = vsel %vm228, %v8028, %v8030
  %v8032 = vrot.slane %v7968, 1
  %v8033 = vsel %vm228, %v8030, %v8032
  %v8034 = vrot.slane %v7971, 1
  %v8035 = vsel %vm228, %v8032, %v8034
  %v8036 = vsel %vm7570, %v8023, 0
  %v8038 = vsel %vm7570, %v8025, 0
  %v8040 = vsel %vm7570, %v8027, 0
  %v8042 = vsel %vm7570, %v8029, 0
  %v8044 = vsel %vm7570, %v8031, 0
  %v8046 = vsel %vm7570, %v8033, 0
  %v8048 = vsel %vm7570, %v8035, 0
  %v8050 = vsel %vm7570, %v8034, 0
  %8052 = vmatpush.msra.mxu0 0.0
  %8053 = vmatpush.msra.mxu0 0.0
  %8054 = vmatpush.msra.mxu0 0.0
  %8055 = vmatpush.msra.mxu0 0.0
  %8056 = vmatpush.msra.mxu0 0.0
  %8057 = vmatpush.msra.mxu0 0.0
  %8058 = vmatpush.msra.mxu0 0.0
  %8059 = vmatpush.msra.mxu0 0.0
  %8060 = vmatpush.msra.mxu0 0.0
  %8061 = vmatpush.msra.mxu0 0.0
  %8062 = vmatpush.msra.mxu0 0.0
  %8063 = vmatpush.msra.mxu0 0.0
  %8064 = vmatpush.msra.mxu0 %v7983
  %8065 = vmatpush.msra.mxu0 %v7982
  %8066 = vmatpush.msra.mxu0 %v7981
  %8067 = vmatpush.msra.mxu0 %v7980
  %8068 = vmatmul.f32.gmra.mxu0 %v8036
  %v8069 = vpop.f32.mrf.mxu0
  %v8070 = vadd.f32 0.0, %v8069
  %8071 = vmatmul.f32.gmra.mxu0 %v8038
  %v8072 = vpop.f32.mrf.mxu0
  %v8073 = vadd.f32 0.0, %v8072
  %8074 = vmatmul.f32.gmra.mxu0 %v8040
  %v8075 = vpop.f32.mrf.mxu0
  %v8076 = vadd.f32 0.0, %v8075
  %8077 = vmatmul.f32.gmra.mxu0 %v8042
  %v8078 = vpop.f32.mrf.mxu0
  %v8079 = vadd.f32 0.0, %v8078
  %8080 = vmatmul.f32.gmra.mxu0 %v8044
  %v8081 = vpop.f32.mrf.mxu0
  %v8082 = vadd.f32 0.0, %v8081
  %8083 = vmatmul.f32.gmra.mxu0 %v8046
  %v8084 = vpop.f32.mrf.mxu0
  %v8085 = vadd.f32 0.0, %v8084
  %8086 = vmatmul.f32.gmra.mxu0 %v8048
  %v8087 = vpop.f32.mrf.mxu0
  %v8088 = vadd.f32 0.0, %v8087
  %8089 = vmatmul.f32.gmra.mxu0 %v8050
  %v8090 = vpop.f32.mrf.mxu0
  %v8091 = vadd.f32 0.0, %v8090
  %8092 = vdwg.mxu0
  %v8093 = vsel %vm7570, %v7950, 0
  %v8095 = vsel %vm7570, %v7953, 0
  %v8097 = vsel %vm7570, %v7956, 0
  %v8099 = vsel %vm7570, %v7959, 0
  %v8101 = vsel %vm7570, %v7962, 0
  %v8103 = vsel %vm7570, %v7965, 0
  %v8105 = vsel %vm7570, %v7968, 0
  %v8107 = vsel %vm7570, %v7971, 0
  %8109 = vmatpush.msra.mxu0 0.0
  %8110 = vmatpush.msra.mxu0 0.0
  %8111 = vmatpush.msra.mxu0 0.0
  %8112 = vmatpush.msra.mxu0 0.0
  %8113 = vmatpush.msra.mxu0 0.0
  %8114 = vmatpush.msra.mxu0 0.0
  %8115 = vmatpush.msra.mxu0 0.0
  %8116 = vmatpush.msra.mxu0 0.0
  %8117 = vmatpush.msra.mxu0 0.0
  %8118 = vmatpush.msra.mxu0 0.0
  %8119 = vmatpush.msra.mxu0 0.0
  %8120 = vmatpush.msra.mxu0 0.0
  %8121 = vmatpush.msra.mxu0 %v7979
  %8122 = vmatpush.msra.mxu0 %v7978
  %8123 = vmatpush.msra.mxu0 %v7977
  %8124 = vmatpush.msra.mxu0 %v7976
  %8125 = vmatmul.f32.gmra.mxu0 %v8093
  %v8126 = vpop.f32.mrf.mxu0
  %v8127 = vadd.f32 %v8070, %v8126
  %8128 = vmatmul.f32.gmra.mxu0 %v8095
  %v8129 = vpop.f32.mrf.mxu0
  %v8130 = vadd.f32 %v8073, %v8129
  %8131 = vmatmul.f32.gmra.mxu0 %v8097
  %v8132 = vpop.f32.mrf.mxu0
  %v8133 = vadd.f32 %v8076, %v8132
  %8134 = vmatmul.f32.gmra.mxu0 %v8099
  %v8135 = vpop.f32.mrf.mxu0
  %v8136 = vadd.f32 %v8079, %v8135
  %8137 = vmatmul.f32.gmra.mxu0 %v8101
  %v8138 = vpop.f32.mrf.mxu0
  %v8139 = vadd.f32 %v8082, %v8138
  %8140 = vmatmul.f32.gmra.mxu0 %v8103
  %v8141 = vpop.f32.mrf.mxu0
  %v8142 = vadd.f32 %v8085, %v8141
  %8143 = vmatmul.f32.gmra.mxu0 %v8105
  %v8144 = vpop.f32.mrf.mxu0
  %v8145 = vadd.f32 %v8088, %v8144
  %8146 = vmatmul.f32.gmra.mxu0 %v8107
  %v8147 = vpop.f32.mrf.mxu0
  %v8148 = vadd.f32 %v8091, %v8147
  %8149 = vdwg.mxu0
  %v8150 = vrot.slane %v7950, 2
  %v8151 = vrot.slane %v7953, 2
  %v8152 = vsel %vm1187, %v8150, %v8151
  %v8153 = vrot.slane %v7956, 2
  %v8154 = vsel %vm1187, %v8151, %v8153
  %v8155 = vrot.slane %v7959, 2
  %v8156 = vsel %vm1187, %v8153, %v8155
  %v8157 = vrot.slane %v7962, 2
  %v8158 = vsel %vm1187, %v8155, %v8157
  %v8159 = vrot.slane %v7965, 2
  %v8160 = vsel %vm1187, %v8157, %v8159
  %v8161 = vrot.slane %v7968, 2
  %v8162 = vsel %vm1187, %v8159, %v8161
  %v8163 = vrot.slane %v7971, 2
  %v8164 = vsel %vm1187, %v8161, %v8163
  %v8165 = vsel %vm7570, %v8152, 0
  %v8167 = vsel %vm7570, %v8154, 0
  %v8169 = vsel %vm7570, %v8156, 0
  %v8171 = vsel %vm7570, %v8158, 0
  %v8173 = vsel %vm7570, %v8160, 0
  %v8175 = vsel %vm7570, %v8162, 0
  %v8177 = vsel %vm7570, %v8164, 0
  %v8179 = vsel %vm7570, %v8163, 0
  %8181 = vmatpush.msra.mxu0 0.0
  %8182 = vmatpush.msra.mxu0 0.0
  %8183 = vmatpush.msra.mxu0 0.0
  %8184 = vmatpush.msra.mxu0 0.0
  %8185 = vmatpush.msra.mxu0 0.0
  %8186 = vmatpush.msra.mxu0 0.0
  %8187 = vmatpush.msra.mxu0 0.0
  %8188 = vmatpush.msra.mxu0 0.0
  %8189 = vmatpush.msra.mxu0 0.0
  %8190 = vmatpush.msra.mxu0 0.0
  %8191 = vmatpush.msra.mxu0 0.0
  %8192 = vmatpush.msra.mxu0 0.0
  %8193 = vmatpush.msra.mxu0 %v7987
  %8194 = vmatpush.msra.mxu0 %v7986
  %8195 = vmatpush.msra.mxu0 %v7985
  %8196 = vmatpush.msra.mxu0 %v7984
  %8197 = vmatmul.f32.gmra.mxu0 %v8165
  %v8198 = vpop.f32.mrf.mxu0
  %v8199 = vadd.f32 0.0, %v8198
  %8200 = vmatmul.f32.gmra.mxu0 %v8167
  %v8201 = vpop.f32.mrf.mxu0
  %v8202 = vadd.f32 0.0, %v8201
  %8203 = vmatmul.f32.gmra.mxu0 %v8169
  %v8204 = vpop.f32.mrf.mxu0
  %v8205 = vadd.f32 0.0, %v8204
  %8206 = vmatmul.f32.gmra.mxu0 %v8171
  %v8207 = vpop.f32.mrf.mxu0
  %v8208 = vadd.f32 0.0, %v8207
  %8209 = vmatmul.f32.gmra.mxu0 %v8173
  %v8210 = vpop.f32.mrf.mxu0
  %v8211 = vadd.f32 0.0, %v8210
  %8212 = vmatmul.f32.gmra.mxu0 %v8175
  %v8213 = vpop.f32.mrf.mxu0
  %v8214 = vadd.f32 0.0, %v8213
  %8215 = vmatmul.f32.gmra.mxu0 %v8177
  %v8216 = vpop.f32.mrf.mxu0
  %v8217 = vadd.f32 0.0, %v8216
  %8218 = vmatmul.f32.gmra.mxu0 %v8179
  %v8219 = vpop.f32.mrf.mxu0
  %v8220 = vadd.f32 0.0, %v8219
  %8221 = vdwg.mxu0
  %v8222 = vadd.f32 %v8127, %v8199
  %v8223 = vadd.f32 %v8130, %v8202
  %v8224 = vadd.f32 %v8133, %v8205
  %v8225 = vadd.f32 %v8136, %v8208
  %v8226 = vadd.f32 %v8139, %v8211
  %v8227 = vadd.f32 %v8142, %v8214
  %v8228 = vadd.f32 %v8145, %v8217
  %v8229 = vadd.f32 %v8148, %v8220
  %v8230 = vrot.slane %v7950, 6
  %v8231 = vrot.slane %v7953, 6
  %v8232 = vsel %vm4393, %v8230, %v8231
  %v8233 = vrot.slane %v7956, 6
  %v8234 = vsel %vm4393, %v8231, %v8233
  %v8235 = vrot.slane %v7959, 6
  %v8236 = vsel %vm4393, %v8233, %v8235
  %v8237 = vrot.slane %v7962, 6
  %v8238 = vsel %vm4393, %v8235, %v8237
  %v8239 = vrot.slane %v7965, 6
  %v8240 = vsel %vm4393, %v8237, %v8239
  %v8241 = vrot.slane %v7968, 6
  %v8242 = vsel %vm4393, %v8239, %v8241
  %v8243 = vrot.slane %v7971, 6
  %v8244 = vsel %vm4393, %v8241, %v8243
  %v8245 = vsel %vm7570, %v8232, 0
  %v8247 = vsel %vm7570, %v8234, 0
  %v8249 = vsel %vm7570, %v8236, 0
  %v8251 = vsel %vm7570, %v8238, 0
  %v8253 = vsel %vm7570, %v8240, 0
  %v8255 = vsel %vm7570, %v8242, 0
  %v8257 = vsel %vm7570, %v8244, 0
  %v8259 = vsel %vm7570, %v8243, 0
  %8261 = vmatpush.msra.mxu0 0.0
  %8262 = vmatpush.msra.mxu0 0.0
  %8263 = vmatpush.msra.mxu0 0.0
  %8264 = vmatpush.msra.mxu0 0.0
  %8265 = vmatpush.msra.mxu0 0.0
  %8266 = vmatpush.msra.mxu0 0.0
  %8267 = vmatpush.msra.mxu0 0.0
  %8268 = vmatpush.msra.mxu0 0.0
  %8269 = vmatpush.msra.mxu0 0.0
  %8270 = vmatpush.msra.mxu0 0.0
  %8271 = vmatpush.msra.mxu0 0.0
  %8272 = vmatpush.msra.mxu0 0.0
  %8273 = vmatpush.msra.mxu0 %v7991
  %8274 = vmatpush.msra.mxu0 %v7990
  %8275 = vmatpush.msra.mxu0 %v7989
  %8276 = vmatpush.msra.mxu0 %v7988
  %8277 = vmatmul.f32.gmra.mxu0 %v8245
  %v8278 = vpop.f32.mrf.mxu0
  %v8279 = vadd.f32 0.0, %v8278
  %8280 = vmatmul.f32.gmra.mxu0 %v8247
  %v8281 = vpop.f32.mrf.mxu0
  %v8282 = vadd.f32 0.0, %v8281
  %8283 = vmatmul.f32.gmra.mxu0 %v8249
  %v8284 = vpop.f32.mrf.mxu0
  %v8285 = vadd.f32 0.0, %v8284
  %8286 = vmatmul.f32.gmra.mxu0 %v8251
  %v8287 = vpop.f32.mrf.mxu0
  %v8288 = vadd.f32 0.0, %v8287
  %8289 = vmatmul.f32.gmra.mxu0 %v8253
  %v8290 = vpop.f32.mrf.mxu0
  %v8291 = vadd.f32 0.0, %v8290
  %8292 = vmatmul.f32.gmra.mxu0 %v8255
  %v8293 = vpop.f32.mrf.mxu0
  %v8294 = vadd.f32 0.0, %v8293
  %8295 = vmatmul.f32.gmra.mxu0 %v8257
  %v8296 = vpop.f32.mrf.mxu0
  %v8297 = vadd.f32 0.0, %v8296
  %8298 = vmatmul.f32.gmra.mxu0 %v8259
  %v8299 = vpop.f32.mrf.mxu0
  %v8300 = vadd.f32 0.0, %v8299
  %8301 = vdwg.mxu0
  %v8302 = vadd.f32 %v8222, %v8279
  %v8303 = vadd.f32 %v8223, %v8282
  %v8304 = vadd.f32 %v8224, %v8285
  %v8305 = vadd.f32 %v8225, %v8288
  %v8306 = vadd.f32 %v8226, %v8291
  %v8307 = vadd.f32 %v8227, %v8294
  %v8308 = vadd.f32 %v8228, %v8297
  %v8309 = vadd.f32 %v8229, %v8300
  %vm8311 = vcmask 1040384
  %v8312 = vrot.slane %v7950, 7
  %v8313 = vrot.slane %v7953, 7
  %v8314 = vsel %vm8311, %v8312, %v8313
  %v8315 = vrot.slane %v7956, 7
  %v8316 = vsel %vm8311, %v8313, %v8315
  %v8317 = vrot.slane %v7959, 7
  %v8318 = vsel %vm8311, %v8315, %v8317
  %v8319 = vrot.slane %v7962, 7
  %v8320 = vsel %vm8311, %v8317, %v8319
  %v8321 = vrot.slane %v7965, 7
  %v8322 = vsel %vm8311, %v8319, %v8321
  %v8323 = vrot.slane %v7968, 7
  %v8324 = vsel %vm8311, %v8321, %v8323
  %v8325 = vrot.slane %v7971, 7
  %v8326 = vsel %vm8311, %v8323, %v8325
  %v8327 = vrot.slane %v7974, 7
  %v8328 = vsel %vm8311, %v8325, %v8327
  %v8329 = vsel %vm7570, %v8314, 0
  %v8331 = vsel %vm7570, %v8316, 0
  %v8333 = vsel %vm7570, %v8318, 0
  %v8335 = vsel %vm7570, %v8320, 0
  %v8337 = vsel %vm7570, %v8322, 0
  %v8339 = vsel %vm7570, %v8324, 0
  %v8341 = vsel %vm7570, %v8326, 0
  %v8343 = vsel %vm7570, %v8328, 0
  %8345 = vmatpush.msra.mxu0 0.0
  %8346 = vmatpush.msra.mxu0 0.0
  %8347 = vmatpush.msra.mxu0 0.0
  %8348 = vmatpush.msra.mxu0 0.0
  %8349 = vmatpush.msra.mxu0 0.0
  %8350 = vmatpush.msra.mxu0 0.0
  %8351 = vmatpush.msra.mxu0 0.0
  %8352 = vmatpush.msra.mxu0 0.0
  %8353 = vmatpush.msra.mxu0 0.0
  %8354 = vmatpush.msra.mxu0 0.0
  %8355 = vmatpush.msra.mxu0 0.0
  %8356 = vmatpush.msra.mxu0 0.0
  %8357 = vmatpush.msra.mxu0 %v7995
  %8358 = vmatpush.msra.mxu0 %v7994
  %8359 = vmatpush.msra.mxu0 %v7993
  %8360 = vmatpush.msra.mxu0 %v7992
  %8361 = vmatmul.f32.gmra.mxu0 %v8329
  %v8362 = vpop.f32.mrf.mxu0
  %v8363 = vadd.f32 0.0, %v8362
  %8364 = vmatmul.f32.gmra.mxu0 %v8331
  %v8365 = vpop.f32.mrf.mxu0
  %v8366 = vadd.f32 0.0, %v8365
  %8367 = vmatmul.f32.gmra.mxu0 %v8333
  %v8368 = vpop.f32.mrf.mxu0
  %v8369 = vadd.f32 0.0, %v8368
  %8370 = vmatmul.f32.gmra.mxu0 %v8335
  %v8371 = vpop.f32.mrf.mxu0
  %v8372 = vadd.f32 0.0, %v8371
  %8373 = vmatmul.f32.gmra.mxu0 %v8337
  %v8374 = vpop.f32.mrf.mxu0
  %v8375 = vadd.f32 0.0, %v8374
  %8376 = vmatmul.f32.gmra.mxu0 %v8339
  %v8377 = vpop.f32.mrf.mxu0
  %v8378 = vadd.f32 0.0, %v8377
  %8379 = vmatmul.f32.gmra.mxu0 %v8341
  %v8380 = vpop.f32.mrf.mxu0
  %v8381 = vadd.f32 0.0, %v8380
  %8382 = vmatmul.f32.gmra.mxu0 %v8343
  %v8383 = vpop.f32.mrf.mxu0
  %v8384 = vadd.f32 0.0, %v8383
  %8385 = vdwg.mxu0
  %v8386 = vadd.f32 %v8302, %v8363
  %v8387 = vadd.f32 %v8303, %v8366
  %v8388 = vadd.f32 %v8304, %v8369
  %v8389 = vadd.f32 %v8305, %v8372
  %v8390 = vadd.f32 %v8306, %v8375
  %v8391 = vadd.f32 %v8307, %v8378
  %v8392 = vadd.f32 %v8308, %v8381
  %v8393 = vadd.f32 %v8309, %v8384
  %v8394 = vsel %vm7570, %v7974, 0
  %8396 = vmatpush.msra.mxu0 0.0
  %8397 = vmatpush.msra.mxu0 0.0
  %8398 = vmatpush.msra.mxu0 0.0
  %8399 = vmatpush.msra.mxu0 0.0
  %8400 = vmatpush.msra.mxu0 0.0
  %8401 = vmatpush.msra.mxu0 0.0
  %8402 = vmatpush.msra.mxu0 0.0
  %8403 = vmatpush.msra.mxu0 0.0
  %8404 = vmatpush.msra.mxu0 0.0
  %8405 = vmatpush.msra.mxu0 0.0
  %8406 = vmatpush.msra.mxu0 0.0
  %8407 = vmatpush.msra.mxu0 0.0
  %8408 = vmatpush.msra.mxu0 %v7999
  %8409 = vmatpush.msra.mxu0 %v7998
  %8410 = vmatpush.msra.mxu0 %v7997
  %8411 = vmatpush.msra.mxu0 %v7996
  %8412 = vmatmul.f32.gmra.mxu0 %v8095
  %v8413 = vpop.f32.mrf.mxu0
  %v8414 = vadd.f32 0.0, %v8413
  %8415 = vmatmul.f32.gmra.mxu0 %v8097
  %v8416 = vpop.f32.mrf.mxu0
  %v8417 = vadd.f32 0.0, %v8416
  %8418 = vmatmul.f32.gmra.mxu0 %v8099
  %v8419 = vpop.f32.mrf.mxu0
  %v8420 = vadd.f32 0.0, %v8419
  %8421 = vmatmul.f32.gmra.mxu0 %v8101
  %v8422 = vpop.f32.mrf.mxu0
  %v8423 = vadd.f32 0.0, %v8422
  %8424 = vmatmul.f32.gmra.mxu0 %v8103
  %v8425 = vpop.f32.mrf.mxu0
  %v8426 = vadd.f32 0.0, %v8425
  %8427 = vmatmul.f32.gmra.mxu0 %v8105
  %v8428 = vpop.f32.mrf.mxu0
  %v8429 = vadd.f32 0.0, %v8428
  %8430 = vmatmul.f32.gmra.mxu0 %v8107
  %v8431 = vpop.f32.mrf.mxu0
  %v8432 = vadd.f32 0.0, %v8431
  %8433 = vmatmul.f32.gmra.mxu0 %v8394
  %v8434 = vpop.f32.mrf.mxu0
  %v8435 = vadd.f32 0.0, %v8434
  %8436 = vdwg.mxu0
  %v8437 = vadd.f32 %v8386, %v8414
  %v8438 = vadd.f32 %v8387, %v8417
  %v8439 = vadd.f32 %v8388, %v8420
  %v8440 = vadd.f32 %v8389, %v8423
  %v8441 = vadd.f32 %v8390, %v8426
  %v8442 = vadd.f32 %v8391, %v8429
  %v8443 = vadd.f32 %v8392, %v8432
  %v8444 = vadd.f32 %v8393, %v8435
  %v8445 = vrot.slane %v7953, 4
  %v8446 = vrot.slane %v7956, 4
  %v8447 = vsel %vm2790, %v8445, %v8446
  %v8448 = vrot.slane %v7959, 4
  %v8449 = vsel %vm2790, %v8446, %v8448
  %v8450 = vrot.slane %v7962, 4
  %v8451 = vsel %vm2790, %v8448, %v8450
  %v8452 = vrot.slane %v7965, 4
  %v8453 = vsel %vm2790, %v8450, %v8452
  %v8454 = vrot.slane %v7968, 4
  %v8455 = vsel %vm2790, %v8452, %v8454
  %v8456 = vrot.slane %v7971, 4
  %v8457 = vsel %vm2790, %v8454, %v8456
  %v8458 = vrot.slane %v7974, 4
  %v8459 = vsel %vm2790, %v8456, %v8458
  %v8460 = vsel %vm7570, %v8447, 0
  %v8462 = vsel %vm7570, %v8449, 0
  %v8464 = vsel %vm7570, %v8451, 0
  %v8466 = vsel %vm7570, %v8453, 0
  %v8468 = vsel %vm7570, %v8455, 0
  %v8470 = vsel %vm7570, %v8457, 0
  %v8472 = vsel %vm7570, %v8459, 0
  %v8474 = vsel %vm7570, %v8458, 0
  %8476 = vmatpush.msra.mxu0 0.0
  %8477 = vmatpush.msra.mxu0 0.0
  %8478 = vmatpush.msra.mxu0 0.0
  %8479 = vmatpush.msra.mxu0 0.0
  %8480 = vmatpush.msra.mxu0 0.0
  %8481 = vmatpush.msra.mxu0 0.0
  %8482 = vmatpush.msra.mxu0 0.0
  %8483 = vmatpush.msra.mxu0 0.0
  %8484 = vmatpush.msra.mxu0 0.0
  %8485 = vmatpush.msra.mxu0 0.0
  %8486 = vmatpush.msra.mxu0 0.0
  %8487 = vmatpush.msra.mxu0 0.0
  %8488 = vmatpush.msra.mxu0 %v8003
  %8489 = vmatpush.msra.mxu0 %v8002
  %8490 = vmatpush.msra.mxu0 %v8001
  %8491 = vmatpush.msra.mxu0 %v8000
  %8492 = vmatmul.f32.gmra.mxu0 %v8460
  %v8493 = vpop.f32.mrf.mxu0
  %v8494 = vadd.f32 0.0, %v8493
  %8495 = vmatmul.f32.gmra.mxu0 %v8462
  %v8496 = vpop.f32.mrf.mxu0
  %v8497 = vadd.f32 0.0, %v8496
  %8498 = vmatmul.f32.gmra.mxu0 %v8464
  %v8499 = vpop.f32.mrf.mxu0
  %v8500 = vadd.f32 0.0, %v8499
  %8501 = vmatmul.f32.gmra.mxu0 %v8466
  %v8502 = vpop.f32.mrf.mxu0
  %v8503 = vadd.f32 0.0, %v8502
  %8504 = vmatmul.f32.gmra.mxu0 %v8468
  %v8505 = vpop.f32.mrf.mxu0
  %v8506 = vadd.f32 0.0, %v8505
  %8507 = vmatmul.f32.gmra.mxu0 %v8470
  %v8508 = vpop.f32.mrf.mxu0
  %v8509 = vadd.f32 0.0, %v8508
  %8510 = vmatmul.f32.gmra.mxu0 %v8472
  %v8511 = vpop.f32.mrf.mxu0
  %v8512 = vadd.f32 0.0, %v8511
  %8513 = vmatmul.f32.gmra.mxu0 %v8474
  %v8514 = vpop.f32.mrf.mxu0
  %v8515 = vadd.f32 0.0, %v8514
  %8516 = vdwg.mxu0
  %v8517 = vadd.f32 %v8437, %v8494
  %v8518 = vadd.f32 %v8438, %v8497
  %v8519 = vadd.f32 %v8439, %v8500
  %v8520 = vadd.f32 %v8440, %v8503
  %v8521 = vadd.f32 %v8441, %v8506
  %v8522 = vadd.f32 %v8442, %v8509
  %v8523 = vadd.f32 %v8443, %v8512
  %v8524 = vadd.f32 %v8444, %v8515
  %v8525 = vrot.slane %v7953, 5
  %v8526 = vrot.slane %v7956, 5
  %v8527 = vsel %vm3760, %v8525, %v8526
  %v8528 = vrot.slane %v7959, 5
  %v8529 = vsel %vm3760, %v8526, %v8528
  %v8530 = vrot.slane %v7962, 5
  %v8531 = vsel %vm3760, %v8528, %v8530
  %v8532 = vrot.slane %v7965, 5
  %v8533 = vsel %vm3760, %v8530, %v8532
  %v8534 = vrot.slane %v7968, 5
  %v8535 = vsel %vm3760, %v8532, %v8534
  %v8536 = vrot.slane %v7971, 5
  %v8537 = vsel %vm3760, %v8534, %v8536
  %v8538 = vrot.slane %v7974, 5
  %v8539 = vsel %vm3760, %v8536, %v8538
  %v8540 = vsel %vm7570, %v8527, 0
  %v8542 = vsel %vm7570, %v8529, 0
  %v8544 = vsel %vm7570, %v8531, 0
  %v8546 = vsel %vm7570, %v8533, 0
  %v8548 = vsel %vm7570, %v8535, 0
  %v8550 = vsel %vm7570, %v8537, 0
  %v8552 = vsel %vm7570, %v8539, 0
  %v8554 = vsel %vm7570, %v8538, 0
  %8556 = vmatpush.msra.mxu0 0.0
  %8557 = vmatpush.msra.mxu0 0.0
  %8558 = vmatpush.msra.mxu0 0.0
  %8559 = vmatpush.msra.mxu0 0.0
  %8560 = vmatpush.msra.mxu0 0.0
  %8561 = vmatpush.msra.mxu0 0.0
  %8562 = vmatpush.msra.mxu0 0.0
  %8563 = vmatpush.msra.mxu0 0.0
  %8564 = vmatpush.msra.mxu0 0.0
  %8565 = vmatpush.msra.mxu0 0.0
  %8566 = vmatpush.msra.mxu0 0.0
  %8567 = vmatpush.msra.mxu0 0.0
  %8568 = vmatpush.msra.mxu0 %v8007
  %8569 = vmatpush.msra.mxu0 %v8006
  %8570 = vmatpush.msra.mxu0 %v8005
  %8571 = vmatpush.msra.mxu0 %v8004
  %8572 = vmatmul.f32.gmra.mxu0 %v8540
  %v8573 = vpop.f32.mrf.mxu0
  %v8574 = vadd.f32 0.0, %v8573
  %8575 = vmatmul.f32.gmra.mxu0 %v8542
  %v8576 = vpop.f32.mrf.mxu0
  %v8577 = vadd.f32 0.0, %v8576
  %8578 = vmatmul.f32.gmra.mxu0 %v8544
  %v8579 = vpop.f32.mrf.mxu0
  %v8580 = vadd.f32 0.0, %v8579
  %8581 = vmatmul.f32.gmra.mxu0 %v8546
  %v8582 = vpop.f32.mrf.mxu0
  %v8583 = vadd.f32 0.0, %v8582
  %8584 = vmatmul.f32.gmra.mxu0 %v8548
  %v8585 = vpop.f32.mrf.mxu0
  %v8586 = vadd.f32 0.0, %v8585
  %8587 = vmatmul.f32.gmra.mxu0 %v8550
  %v8588 = vpop.f32.mrf.mxu0
  %v8589 = vadd.f32 0.0, %v8588
  %8590 = vmatmul.f32.gmra.mxu0 %v8552
  %v8591 = vpop.f32.mrf.mxu0
  %v8592 = vadd.f32 0.0, %v8591
  %8593 = vmatmul.f32.gmra.mxu0 %v8554
  %v8594 = vpop.f32.mrf.mxu0
  %v8595 = vadd.f32 0.0, %v8594
  %8596 = vdwg.mxu0
  %v8597 = vadd.f32 %v8517, %v8574
  %v8598 = vadd.f32 %v8518, %v8577
  %v8599 = vadd.f32 %v8519, %v8580
  %v8600 = vadd.f32 %v8520, %v8583
  %v8601 = vadd.f32 %v8521, %v8586
  %v8602 = vadd.f32 %v8522, %v8589
  %v8603 = vadd.f32 %v8523, %v8592
  %v8604 = vadd.f32 %v8524, %v8595
  %v8605 = vrot.slane %v7974, 6
  %v8606 = vsel %vm4393, %v8243, %v8605
  %v8607 = vsel %vm7570, %v8606, 0
  %v8609 = vsel %vm7570, %v8605, 0
  %8611 = vmatpush.msra.mxu0 0.0
  %8612 = vmatpush.msra.mxu0 0.0
  %8613 = vmatpush.msra.mxu0 0.0
  %8614 = vmatpush.msra.mxu0 0.0
  %8615 = vmatpush.msra.mxu0 0.0
  %8616 = vmatpush.msra.mxu0 0.0
  %8617 = vmatpush.msra.mxu0 0.0
  %8618 = vmatpush.msra.mxu0 0.0
  %8619 = vmatpush.msra.mxu0 0.0
  %8620 = vmatpush.msra.mxu0 0.0
  %8621 = vmatpush.msra.mxu0 0.0
  %8622 = vmatpush.msra.mxu0 0.0
  %8623 = vmatpush.msra.mxu0 %v8011
  %8624 = vmatpush.msra.mxu0 %v8010
  %8625 = vmatpush.msra.mxu0 %v8009
  %8626 = vmatpush.msra.mxu0 %v8008
  %8627 = vmatmul.f32.gmra.mxu0 %v8247
  %v8628 = vpop.f32.mrf.mxu0
  %v8629 = vadd.f32 0.0, %v8628
  %8630 = vmatmul.f32.gmra.mxu0 %v8249
  %v8631 = vpop.f32.mrf.mxu0
  %v8632 = vadd.f32 0.0, %v8631
  %8633 = vmatmul.f32.gmra.mxu0 %v8251
  %v8634 = vpop.f32.mrf.mxu0
  %v8635 = vadd.f32 0.0, %v8634
  %8636 = vmatmul.f32.gmra.mxu0 %v8253
  %v8637 = vpop.f32.mrf.mxu0
  %v8638 = vadd.f32 0.0, %v8637
  %8639 = vmatmul.f32.gmra.mxu0 %v8255
  %v8640 = vpop.f32.mrf.mxu0
  %v8641 = vadd.f32 0.0, %v8640
  %8642 = vmatmul.f32.gmra.mxu0 %v8257
  %v8643 = vpop.f32.mrf.mxu0
  %v8644 = vadd.f32 0.0, %v8643
  %8645 = vmatmul.f32.gmra.mxu0 %v8607
  %v8646 = vpop.f32.mrf.mxu0
  %v8647 = vadd.f32 0.0, %v8646
  %8648 = vmatmul.f32.gmra.mxu0 %v8609
  %v8649 = vpop.f32.mrf.mxu0
  %v8650 = vadd.f32 0.0, %v8649
  %8651 = vdwg.mxu0
  %v8652 = vadd.f32 %v8597, %v8629
  %v8653 = vadd.f32 %v8598, %v8632
  %v8654 = vadd.f32 %v8599, %v8635
  %v8655 = vadd.f32 %v8600, %v8638
  %v8656 = vadd.f32 %v8601, %v8641
  %v8657 = vadd.f32 %v8602, %v8644
  %v8658 = vadd.f32 %v8603, %v8647
  %v8659 = vadd.f32 %v8604, %v8650
  %v8661 = vperm.slane %v8012, 0
  %v8663 = vadd.f32 %v8652, %v8661
  %v8664 = vadd.f32 %v8653, %v8661
  %v8665 = vadd.f32 %v8654, %v8661
  %v8666 = vadd.f32 %v8655, %v8661
  %v8667 = vadd.f32 %v8656, %v8661
  %v8668 = vadd.f32 %v8657, %v8661
  %v8669 = vadd.f32 %v8658, %v8661
  %v8670 = vadd.f32 %v8659, %v8661
  %v8671 = vld [vmem:[%s16] sm:$0x3]
  %v8672 = vmax.f32 %v8663, 0.0
  %v8673 = vmax.f32 %v8664, 0.0
  %v8674 = vmax.f32 %v8665, 0.0
  %v8675 = vmax.f32 %v8666, 0.0
  %v8676 = vmax.f32 %v8667, 0.0
  %v8677 = vmax.f32 %v8668, 0.0
  %v8678 = vmax.f32 %v8669, 0.0
  %v8679 = vmax.f32 %v8670, 0.0
  %vm8680 = vcmask 474112
  %v8682 = vsel %vm8680, %v8671, 0
  %v8685 = vsel %vm4393, %v8679, 0
  %8687 = vmatpush.msra.mxu0 0.0
  %8688 = vmatpush.msra.mxu0 0.0
  %8689 = vmatpush.msra.mxu0 0.0
  %8690 = vmatpush.msra.mxu0 0.0
  %8691 = vmatpush.msra.mxu0 0.0
  %8692 = vmatpush.msra.mxu0 0.0
  %8693 = vmatpush.msra.mxu0 0.0
  %8694 = vmatpush.msra.mxu0 0.0
  %8695 = vmatpush.msra.mxu0 %v8685
  %8696 = vmatpush.msra.mxu0 %v8678
  %8697 = vmatpush.msra.mxu0 %v8677
  %8698 = vmatpush.msra.mxu0 %v8676
  %8699 = vmatpush.msra.mxu0 %v8675
  %8700 = vmatpush.msra.mxu0 %v8674
  %8701 = vmatpush.msra.mxu0 %v8673
  %8702 = vmatpush.msra.mxu0 %v8672
  %8703 = vmatmul.f32.gmra.mxu0 %v8682
  %v8704 = vpop.f32.mrf.mxu0
  %v8705 = vadd.f32 0.0, %v8704
  %8706 = vdwg.mxu0
  %v8707 = vld [vmem:[%s10] sm:$0x1]
  %v8708 = vld [vmem:[%s12] sm:$0x3]
  %v8710 = vperm.slane %v8707, 0
  %v8712 = vadd.f32 %v8710, %v8708
  %v8713 = vmul.f32 %v8705, %v8712
  %vm8714 = vcmask 517120
  %v8715 = vsel %vm8714, %v8713, 0.0
  %8716 = vadd.xlane.f32.xlu0 %v8715
  %v8717 = vpop.xlane.xlu0 %8716
  %v8718 = vld [vmem:[#allocation3] sm:$0x1]
  %v8720 = vperm.slane %v8718, 0
  %v8722 = vadd.f32 %v8717, %v8720
  %vm8723 = vcmask 1024
  %8724 = vst.msk [vmem:[%s17] sm:$0x3] %vm8723, %v8722
  // Predicated region
  $region70: #{discriminator_forward.1} parent=0 // pred_check
    _
  $region71: #{discriminator_forward.1} parent=0 // pred_check_branch
    %8726 = sbr.rel (0) target = $region73
  $region72: #{discriminator_forward.1} parent=0 // pred_region
    _
  $region73: #{discriminator_forward.1} parent=0 // pred_fallthru
    _
  // Predicated region
  $region74: #{discriminator_forward.1} parent=0 // pred_check
    _
  $region75: #{discriminator_forward.1} parent=0 // pred_check_branch
    %8728 = sbr.rel (0) target = $region77
  $region76: #{discriminator_forward.1} parent=0 // pred_region
    _
  $region77: #{discriminator_forward.1} parent=0 // pred_fallthru
    _

</llo_original>
